<compile_context>
chip_gen: v5e
topology: v5e:2x2
jax: 0.10.0
libtpu: 0.0.40
codegen_flags: <defaults>
</compile_context>

<pallas_src>
import functools

import numpy as np
import jax
import jax.numpy as jnp
from jax import lax
from jax.experimental import pallas as pl
from jax.experimental.pallas import tpu as pltpu

BN_EPS = 1e-5
LANE = 128                      # internal channel dims padded to multiples of this
TILE_M = 1024                   # row tile for the mem-bound 1x1-conv slab kernels
SMALL_M_XLA = 512               # pooled branches with fewer rows than this stay in XLA
VMEM_LIMIT = 40 * 1024 * 1024   # <= 40 MiB scoped VMEM (headroom on v7x's 64 MiB)


def _round_up(x, m):
    return ((x + m - 1) // m) * m


# ---------------------------------------------------------------------------
# Pallas kernel 1:  relu(x * scale + bias) @ W   (scale0 and large pooled branches)
# ---------------------------------------------------------------------------
def _bn_relu_matmul_kernel(x_ref, s_ref, b_ref, w_ref, o_ref):
    a = jnp.maximum(x_ref[...].astype(jnp.float32) * s_ref[...] + b_ref[...], 0.0)
    o_ref[...] = jnp.dot(a.astype(jnp.bfloat16), w_ref[...],
                         preferred_element_type=jnp.float32).astype(o_ref.dtype)


def bn_relu_matmul(x2d, scale, bias, w, out_dtype=jnp.float32, tile_m=TILE_M):
    """x2d: (M, Cin), scale/bias: (1, Cin) f32, w: (Cin, Cout) bf16 -> (M, Cout)."""
    M, Cin = x2d.shape
    Cout = w.shape[1]
    tm = min(tile_m, _round_up(M, 8))
    Mp = _round_up(M, tm)
    if Mp != M:
        x2d = jnp.pad(x2d, ((0, Mp - M), (0, 0)))
    out = pl.pallas_call(
        _bn_relu_matmul_kernel,
        out_shape=jax.ShapeDtypeStruct((Mp, Cout), out_dtype),
        grid_spec=pltpu.PrefetchScalarGridSpec(
            num_scalar_prefetch=0,
            grid=(Mp // tm,),
            in_specs=[pl.BlockSpec((tm, Cin), lambda i: (i, 0)),
                      pl.BlockSpec((1, Cin), lambda i: (0, 0)),
                      pl.BlockSpec((1, Cin), lambda i: (0, 0)),
                      pl.BlockSpec((Cin, Cout), lambda i: (0, 0))],
            out_specs=pl.BlockSpec((tm, Cout), lambda i: (i, 0)),
        ),
        compiler_params=pltpu.CompilerParams(
            dimension_semantics=("parallel",),
            vmem_limit_bytes=VMEM_LIMIT),
    )(x2d, scale, bias, w)
    return out[:M] if Mp != M else out


# ---------------------------------------------------------------------------
# Pallas kernel 2:  fused add + BN + ReLU + 3x3 conv (per image)
#   - bf16 inputs widened to f32 for the elementwise math
#   - bf16 flattened activation with zero halos (halo rows zeroed only)
#   - dx=+/-1 taps served from two pre-shifted, column-masked bf16 buffers
#   - 9 accumulated tap matmuls (bf16 MXU operands, f32 accumulation)
# ---------------------------------------------------------------------------
def _process_kernel(y_ref, p_ref, s_ref, b_ref, w_ref, mnf_ref, mnl_ref, o_ref,
                    flat_ref, left_ref, right_ref, *, W, HW, C, Co, base):
    # act = relu((interp + prev) * scale + bias)   -- f32 math, bf16 storage
    act = jnp.maximum(
        (y_ref[...].astype(jnp.float32) + p_ref[...].astype(jnp.float32))
        * s_ref[...] + b_ref[...], 0.0)

    # zero only the halo rows; store the interior exactly once (bf16)
    flat_ref[:base, :] = jnp.zeros((base, C), jnp.bfloat16)
    flat_ref[base:base + HW, :] = act.astype(jnp.bfloat16)
    flat_ref[base + HW:, :] = jnp.zeros((base, C), jnp.bfloat16)

    # pre-shifted + column-masked copies for the dx = -1 / +1 taps, built once so the
    # 9 tap reads below are all W-aligned windows (sublane-aligned when W % 8 == 0)
    lo = base - W
    nr = HW + 2 * W
    mnf = mnf_ref[...].astype(jnp.bfloat16)          # (nr, 1): output column > 0
    mnl = mnl_ref[...].astype(jnp.bfloat16)          # (nr, 1): output column < W-1
    left_ref[:nr, :] = flat_ref[lo - 1:lo - 1 + nr, :] * mnf     # dx = -1 source
    right_ref[:nr, :] = flat_ref[lo + 1:lo + 1 + nr, :] * mnl    # dx = +1 source

    # 3x3 conv as 9 accumulated tap matmuls; o_ref written once at the end
    acc = jnp.zeros((HW, Co), jnp.float32)
    t = 0
    for dy in (-1, 0, 1):
        for dx in (-1, 0, 1):
            if dx == -1:
                tap = left_ref[(dy + 1) * W:(dy + 1) * W + HW, :]
            elif dx == 1:
                tap = right_ref[(dy + 1) * W:(dy + 1) * W + HW, :]
            else:
                tap = flat_ref[base + dy * W:base + dy * W + HW, :]
            acc = acc + jnp.dot(tap, w_ref[t * C:(t + 1) * C, :],
                                preferred_element_type=jnp.float32)
            t += 1
    o_ref[...] = acc.astype(o_ref.dtype)


def process_branch(y2d, prev2d, scale, bias, w9, mnf, mnl, N, H, W):
    """y2d/prev2d: (N*H*W, C) bf16; scale/bias: (1, C) f32; w9: (9*C, Co) bf16."""
    HW = H * W
    C = y2d.shape[1]
    Co = w9.shape[1]
    base = _round_up(W + 1, 8)           # halo size (>= W+1, sublane aligned)
    nr = HW + 2 * W
    kernel = functools.partial(_process_kernel, W=W, HW=HW, C=C, Co=Co, base=base)
    return pl.pallas_call(
        kernel,
        out_shape=jax.ShapeDtypeStruct((N * HW, Co), jnp.bfloat16),
        grid_spec=pltpu.PrefetchScalarGridSpec(
            num_scalar_prefetch=0,
            grid=(N,),
            in_specs=[pl.BlockSpec((HW, C), lambda n: (n, 0)),
                      pl.BlockSpec((HW, C), lambda n: (n, 0)),
                      pl.BlockSpec((1, C), lambda n: (0, 0)),
                      pl.BlockSpec((1, C), lambda n: (0, 0)),
                      pl.BlockSpec((9 * C, Co), lambda n: (0, 0)),
                      pl.BlockSpec((nr, 1), lambda n: (0, 0)),
                      pl.BlockSpec((nr, 1), lambda n: (0, 0))],
            out_specs=pl.BlockSpec((HW, Co), lambda n: (n, 0)),
            scratch_shapes=[pltpu.VMEM((HW + 2 * base, C), jnp.bfloat16),
                            pltpu.VMEM((_round_up(nr, 8), C), jnp.bfloat16),
                            pltpu.VMEM((_round_up(nr, 8), C), jnp.bfloat16)],
        ),
        compiler_params=pltpu.CompilerParams(
            dimension_semantics=("parallel",),
            vmem_limit_bytes=VMEM_LIMIT),
    )(y2d, prev2d, scale, bias, w9, mnf, mnl)


# ---------------------------------------------------------------------------
# Pallas kernel 3:  compression(cat) + shortcut(x) with NO materialized concat
#   acc = sum_j relu(bn_j(branch_j)) @ Wc_j  +  relu(bn_s(x)) @ Ws
# ---------------------------------------------------------------------------
def _comp_short_kernel(x0_ref, p1_ref, p2_ref, p3_ref, p4_ref, x_ref,
                       sb_ref, bb_ref, ss_ref, bs_ref, wb_ref, ws_ref, o_ref):
    acc = jnp.zeros(o_ref.shape, jnp.float32)
    for j, r in enumerate((x0_ref, p1_ref, p2_ref, p3_ref, p4_ref)):
        a = jnp.maximum(r[...].astype(jnp.float32) * sb_ref[j:j + 1, :]
                        + bb_ref[j:j + 1, :], 0.0)
        acc = acc + jnp.dot(a.astype(jnp.bfloat16), wb_ref[j],
                            preferred_element_type=jnp.float32)
    a = jnp.maximum(x_ref[...] * ss_ref[...] + bs_ref[...], 0.0)
    acc = acc + jnp.dot(a.astype(jnp.bfloat16), ws_ref[...],
                        preferred_element_type=jnp.float32)
    o_ref[...] = acc


def comp_short_matmul(branches, x2d, sb, bb, ss, bs, wb, ws, tile_m=TILE_M):
    """branches: 5 arrays (M, cb) bf16; x2d: (M, Cin) f32 -> (M, coutp) f32."""
    M, Cin = x2d.shape
    cb = branches[0].shape[1]
    coutp = ws.shape[1]
    tm = min(tile_m, _round_up(M, 8))
    Mp = _round_up(M, tm)
    if Mp != M:
        pad = lambda a: jnp.pad(a, ((0, Mp - M), (0, 0)))
        branches = [pad(a) for a in branches]
        x2d = pad(x2d)
    row_b = pl.BlockSpec((tm, cb), lambda i: (i, 0))
    out = pl.pallas_call(
        _comp_short_kernel,
        out_shape=jax.ShapeDtypeStruct((Mp, coutp), jnp.float32),
        grid_spec=pltpu.PrefetchScalarGridSpec(
            num_scalar_prefetch=0,
            grid=(Mp // tm,),
            in_specs=[row_b, row_b, row_b, row_b, row_b,
                      pl.BlockSpec((tm, Cin), lambda i: (i, 0)),
                      pl.BlockSpec((5, cb), lambda i: (0, 0)),
                      pl.BlockSpec((5, cb), lambda i: (0, 0)),
                      pl.BlockSpec((1, Cin), lambda i: (0, 0)),
                      pl.BlockSpec((1, Cin), lambda i: (0, 0)),
                      pl.BlockSpec((5, cb, coutp), lambda i: (0, 0, 0)),
                      pl.BlockSpec((Cin, coutp), lambda i: (0, 0))],
            out_specs=pl.BlockSpec((tm, coutp), lambda i: (i, 0)),
        ),
        compiler_params=pltpu.CompilerParams(
            dimension_semantics=("parallel",),
            vmem_limit_bytes=VMEM_LIMIT),
    )(*branches, x2d, sb, bb, ss, bs, wb, ws)
    return out[:M] if Mp != M else out


# ---------------------------------------------------------------------------
# Plain-JAX glue (pooling, bilinear resize, BN folding)
# ---------------------------------------------------------------------------
def avg_pool_nhwc(x, k, s, p):
    # PyTorch nn.AvgPool2d defaults: count_include_pad=True, ceil_mode=False
    summed = lax.reduce_window(
        x, 0.0, lax.add,
        window_dimensions=(1, k, k, 1),
        window_strides=(1, s, s, 1),
        padding=((0, 0), (p, p), (p, p), (0, 0)),
    )
    return summed / float(k * k)


def interp_matrix(out_size, in_size):
    # torch F.interpolate(mode='bilinear', align_corners=False), precomputed in numpy
    if in_size == 1:
        return jnp.ones((out_size, 1), jnp.float32)
    scale = in_size / out_size
    src = (np.arange(out_size, dtype=np.float64) + 0.5) * scale - 0.5
    src = np.maximum(src, 0.0)
    i0 = np.minimum(np.floor(src).astype(np.int64), in_size - 1)
    i1 = np.minimum(i0 + 1, in_size - 1)
    w1 = src - i0
    w0 = 1.0 - w1
    m = np.zeros((out_size, in_size), np.float64)
    np.add.at(m, (np.arange(out_size), i0), w0)
    np.add.at(m, (np.arange(out_size), i1), w1)
    return jnp.asarray(m, jnp.float32)


def bilinear_resize_nhwc(x, H, W):
    h, w = x.shape[1], x.shape[2]
    Ah = interp_matrix(H, h)
    Aw = interp_matrix(W, w)
    t = jnp.einsum('Oh,nhwc->nOwc', Ah, x)
    return jnp.einsum('Pw,nOwc->nOPc', Aw, t)


def fold_bn(gamma, beta, mean, var):
    scale = gamma / jnp.sqrt(var + BN_EPS)
    bias = beta - mean * scale
    return scale[None, :].astype(jnp.float32), bias[None, :].astype(jnp.float32)


# ---------------------------------------------------------------------------
# Parameters: logical (unpadded, f32) + packed kernel form (padded, bf16 weights)
# ---------------------------------------------------------------------------
def init_params(key, inplanes, branch, outplanes):
    keys = iter(jax.random.split(key, 64))

    def bn(c):
        g = jax.random.uniform(next(keys), (c,), jnp.float32, 0.8, 1.2)
        b = 0.05 * jax.random.normal(next(keys), (c,), jnp.float32)
        m = 0.05 * jax.random.normal(next(keys), (c,), jnp.float32)
        v = jax.random.uniform(next(keys), (c,), jnp.float32, 0.8, 1.2)
        return fold_bn(g, b, m, v)

    def conv1x1(ci, co):
        return 0.1 * jax.random.normal(next(keys), (ci, co), jnp.float32)

    def conv3x3(ci, co):
        # tap index t = 3*ky + kx  <->  input offset (dy, dx) = (ky-1, kx-1)
        return 0.1 * jax.random.normal(next(keys), (9, ci, co), jnp.float32)

    p = {}
    for i in range(5):
        p[f'scale{i}_bn'] = bn(inplanes)
        p[f'scale{i}_w'] = conv1x1(inplanes, branch)
    for i in range(1, 5):
        p[f'process{i}_bn'] = bn(branch)
        p[f'process{i}_w'] = conv3x3(branch, branch)
    p['compression_bn'] = bn(branch * 5)
    p['compression_w'] = conv1x1(branch * 5, outplanes)
    p['shortcut_bn'] = bn(inplanes)
    p['shortcut_w'] = conv1x1(inplanes, outplanes)

    cfg = dict(inplanes=inplanes, branch=branch, outplanes=outplanes,
               cb=_round_up(branch, LANE), cout=_round_up(outplanes, LANE))
    return p, cfg


def pack_params(lp, cfg):
    cb, coutp = cfg['cb'], cfg['cout']
    branch, outplanes = cfg['branch'], cfg['outplanes']

    def pad_cols(a, n):
        return jnp.pad(a, ((0, 0), (0, n - a.shape[1])))

    kp = {}
    for i in range(5):
        kp[f'scale{i}_bn'] = lp[f'scale{i}_bn']                       # (1, inplanes) f32
        kp[f'scale{i}_w'] = pad_cols(lp[f'scale{i}_w'], cb).astype(jnp.bfloat16)

    for i in range(1, 5):
        s, b = lp[f'process{i}_bn']
        kp[f'process{i}_bn'] = (pad_cols(s, cb), pad_cols(b, cb))
        w9 = lp[f'process{i}_w']                                      # (9, branch, branch)
        wp = jnp.zeros((9, cb, cb), jnp.float32).at[:, :branch, :branch].set(w9)
        kp[f'process{i}_w'] = wp.reshape(9 * cb, cb).astype(jnp.bfloat16)

    # compression split per branch component (padded channel slots: scale=bias=weight=0,
    # so relu(0)=0 and the padded slots contribute exactly nothing — keep this invariant)
    sc, bc = lp['compression_bn']                                     # (1, 5*branch)
    wc = lp['compression_w']                                          # (5*branch, outplanes)
    sb = jnp.zeros((5, cb), jnp.float32)
    bb = jnp.zeros((5, cb), jnp.float32)
    wb = jnp.zeros((5, cb, coutp), jnp.float32)
    for j in range(5):
        sb = sb.at[j, :branch].set(sc[0, j * branch:(j + 1) * branch])
        bb = bb.at[j, :branch].set(bc[0, j * branch:(j + 1) * branch])
        wb = wb.at[j, :branch, :outplanes].set(wc[j * branch:(j + 1) * branch, :])
    kp['comp_sb'] = sb
    kp['comp_bb'] = bb
    kp['comp_wb'] = wb.astype(jnp.bfloat16)
    kp['short_bn'] = lp['shortcut_bn']                                # (1, inplanes) f32
    kp['short_w'] = pad_cols(lp['shortcut_w'], coutp).astype(jnp.bfloat16)
    return kp


# ---------------------------------------------------------------------------
# DAPPM forward (Pallas path)
# ---------------------------------------------------------------------------
def dappm_forward(kp, cfg, x_nchw):
    x = jnp.transpose(x_nchw, (0, 2, 3, 1)).astype(jnp.float32)       # NCHW -> NHWC
    N, H, W, Cin = x.shape
    M = N * H * W
    assert N == 1 or (H * W) % 8 == 0, "per-image row block must be sublane aligned"
    x2d = x.reshape(M, Cin)

    # column-wrap masks for the 3x3 conv, precomputed once (resident VMEM input)
    nr = H * W + 2 * W
    q = np.arange(nr)
    mnf = jnp.asarray(((q % W) != 0).astype(np.float32).reshape(nr, 1))
    mnl = jnp.asarray(((q % W) != (W - 1)).astype(np.float32).reshape(nr, 1))

    s0, b0 = kp['scale0_bn']
    x0 = bn_relu_matmul(x2d, s0, b0, kp['scale0_w'], out_dtype=jnp.bfloat16)   # (M, cb)

    pooled = [
        avg_pool_nhwc(x, 5, 2, 2),
        avg_pool_nhwc(x, 9, 4, 4),
        avg_pool_nhwc(x, 17, 8, 8),
        jnp.mean(x, axis=(1, 2), keepdims=True),                      # AdaptiveAvgPool2d((1,1))
    ]
    ys = []
    for i, p in enumerate(pooled):
        n, h, w, c = p.shape
        s, b = kp[f'scale{i + 1}_bn']
        p2d = p.reshape(n * h * w, c)
        if n * h * w >= SMALL_M_XLA:
            z2d = bn_relu_matmul(p2d, s, b, kp[f'scale{i + 1}_w'],
                                 out_dtype=jnp.bfloat16)
        else:
            # tiny pooled maps: pallas_call per-step overhead dominates, leave to XLA
            a = jnp.maximum(p2d * s + b, 0.0)
            z2d = jnp.dot(a.astype(jnp.bfloat16), kp[f'scale{i + 1}_w'],
                          preferred_element_type=jnp.float32).astype(jnp.bfloat16)
        z = z2d.reshape(n, h, w, -1)
        y = bilinear_resize_nhwc(z, H, W).astype(jnp.bfloat16)        # bf16 HBM intermediate
        ys.append(y.reshape(M, -1))

    prev = x0
    outs = [x0]
    for i in range(1, 5):
        s, b = kp[f'process{i}_bn']
        cur = process_branch(ys[i - 1], prev, s, b, kp[f'process{i}_w'],
                             mnf, mnl, N, H, W)                       # (M, cb) bf16
        outs.append(cur)
        prev = cur

    ss, bs = kp['short_bn']
    out2d = comp_short_matmul(outs, x2d, kp['comp_sb'], kp['comp_bb'],
                              ss, bs, kp['comp_wb'], kp['short_w'])   # (M, cout_pad) f32
    out = out2d[:, :cfg['outplanes']].reshape(N, H, W, cfg['outplanes'])
    return jnp.transpose(out, (0, 3, 1, 2))                           # NHWC -> NCHW


# ---------------------------------------------------------------------------
# Pure-JAX reference (f32, unpadded) — numerical sanity check only
# ---------------------------------------------------------------------------
def dappm_reference(lp, cfg, x_nchw):
    x = jnp.transpose(x_nchw, (0, 2, 3, 1)).astype(jnp.float32)
    N, H, W, Cin = x.shape
    M = N * H * W
    branch = cfg['branch']
    x2d = x.reshape(M, Cin)

    def bn_relu_mm(z2d, bn, w):
        s, b = bn
        return jnp.maximum(z2d * s + b, 0.0) @ w

    x0 = bn_relu_mm(x2d, lp['scale0_bn'], lp['scale0_w']).reshape(N, H, W, branch)

    pooled = [avg_pool_nhwc(x, 5, 2, 2), avg_pool_nhwc(x, 9, 4, 4),
              avg_pool_nhwc(x, 17, 8, 8), jnp.mean(x, axis=(1, 2), keepdims=True)]
    ys = []
    for i, p in enumerate(pooled):
        n, h, w, c = p.shape
        z = bn_relu_mm(p.reshape(n * h * w, c), lp[f'scale{i + 1}_bn'],
                       lp[f'scale{i + 1}_w']).reshape(n, h, w, branch)
        ys.append(bilinear_resize_nhwc(z, H, W))

    prev = x0
    outs = [x0]
    for i in range(1, 5):
        s, b = lp[f'process{i}_bn']
        act = jnp.maximum((ys[i - 1] + prev).reshape(M, branch) * s + b, 0.0)
        padded = jnp.pad(act.reshape(N, H, W, branch), ((0, 0), (1, 1), (1, 1), (0, 0)))
        acc = jnp.zeros((M, branch), jnp.float32)
        w9 = lp[f'process{i}_w']
        t = 0
        for ky in range(3):
            for kx in range(3):
                acc = acc + padded[:, ky:ky + H, kx:kx + W, :].reshape(M, branch) @ w9[t]
                t += 1
        cur = acc.reshape(N, H, W, branch)
        outs.append(cur)
        prev = cur

    cat = jnp.concatenate(outs, axis=-1).reshape(M, 5 * branch)
    sc, bc = lp['compression_bn']
    ss, bs = lp['shortcut_bn']
    out2d = (jnp.maximum(cat * sc + bc, 0.0) @ lp['compression_w']
             + jnp.maximum(x2d * ss + bs, 0.0) @ lp['shortcut_w'])
    out = out2d.reshape(N, H, W, cfg['outplanes'])
    return jnp.transpose(out, (0, 3, 1, 2))


if __name__ == "__main__":
    key = jax.random.PRNGKey(0)
    k_x, k_p = jax.random.split(key)

    inplanes, branch_planes, outplanes = 8, 16, 16
    N, H, W = 2, 16, 16

    x = jax.random.normal(k_x, (N, inplanes, H, W), jnp.float32)
    logical_params, cfg = init_params(k_p, inplanes, branch_planes, outplanes)
    kernel_params = pack_params(logical_params, cfg)

    fwd = jax.jit(functools.partial(dappm_forward, kernel_params, cfg))
    out = fwd(x)
    jax.block_until_ready(out)

    assert out.shape == (N, outplanes, H, W), out.shape
    assert bool(jnp.all(jnp.isfinite(out)))

    # sanity check vs pure-JAX reference (loose tolerance: bf16 weights + intermediates)
    ref = jax.jit(functools.partial(dappm_reference, logical_params, cfg))(x)
    err = float(jnp.max(jnp.abs(out - ref)))
    ref_scale = float(jnp.max(jnp.abs(ref))) + 1e-6
    assert err <= 0.05 * ref_scale + 0.05, f"mismatch: max_abs_err={err}, ref_scale={ref_scale}"

    print("KERNEL_OK")
</pallas_src>

<mosaic_0001>
module attributes {stable_mosaic.version = 11 : i64} {
  func.func @_bn_relu_matmul_kernel(%arg0: i32, %arg1: memref<512x8xf32, #tpu.memory_space<vmem>>, %arg2: memref<1x8xf32, #tpu.memory_space<vmem>>, %arg3: memref<1x8xf32, #tpu.memory_space<vmem>>, %arg4: memref<8x128xbf16, #tpu.memory_space<vmem>>, %arg5: memref<512x128xbf16, #tpu.memory_space<vmem>>) attributes {dimension_semantics = [#tpu.dimension_semantics<parallel>], iteration_bounds = array<i64: 1>, scalar_prefetch = 0 : i64, scratch_operands = 0 : i64, tpu.core_type = #tpu.core_type<tc>, window_params = [{transform_indices = @transform_0, window_bounds = array<i64: 512, 8>}, {pipeline_mode = #tpu.pipeline_mode<synchronous>, transform_indices = @transform_1, window_bounds = array<i64: 1, 8>}, {pipeline_mode = #tpu.pipeline_mode<synchronous>, transform_indices = @transform_2, window_bounds = array<i64: 1, 8>}, {pipeline_mode = #tpu.pipeline_mode<synchronous>, transform_indices = @transform_3, window_bounds = array<i64: 8, 128>}, {transform_indices = @transform_4, window_bounds = array<i64: 512, 128>}]} {
    %c0 = arith.constant 0 : index
    %c0_0 = arith.constant 0 : index
    %0 = vector.load %arg1[%c0, %c0_0] : memref<512x8xf32, #tpu.memory_space<vmem>>, vector<512x8xf32>
    %c0_1 = arith.constant 0 : index
    %c0_2 = arith.constant 0 : index
    %1 = vector.load %arg2[%c0_1, %c0_2] : memref<1x8xf32, #tpu.memory_space<vmem>>, vector<1x8xf32>
    %2 = vector.broadcast %1 : vector<1x8xf32> to vector<512x8xf32>
    %3 = arith.mulf %0, %2 : vector<512x8xf32>
    %c0_3 = arith.constant 0 : index
    %c0_4 = arith.constant 0 : index
    %4 = vector.load %arg3[%c0_3, %c0_4] : memref<1x8xf32, #tpu.memory_space<vmem>>, vector<1x8xf32>
    %5 = vector.broadcast %4 : vector<1x8xf32> to vector<512x8xf32>
    %6 = arith.addf %3, %5 : vector<512x8xf32>
    %cst = arith.constant 0.000000e+00 : f32
    %7 = vector.broadcast %cst : f32 to vector<512x8xf32>
    %8 = arith.maximumf %6, %7 : vector<512x8xf32>
    %9 = arith.truncf %8 : vector<512x8xf32> to vector<512x8xbf16>
    %c0_5 = arith.constant 0 : index
    %c0_6 = arith.constant 0 : index
    %10 = vector.load %arg4[%c0_5, %c0_6] : memref<8x128xbf16, #tpu.memory_space<vmem>>, vector<8x128xbf16>
    %cst_7 = arith.constant dense<0.000000e+00> : vector<512x128xf32>
    %11 = tpu.matmul %9, %10, %cst_7 {dimension_numbers = #tpu.dot_dimension_numbers<[1], [0], [0], [1], [0, 0, 1, 1], [], []>} : vector<512x8xbf16>, vector<8x128xbf16>, vector<512x128xf32> -> vector<512x128xf32>
    %12 = arith.truncf %11 : vector<512x128xf32> to vector<512x128xbf16>
    %c0_8 = arith.constant 0 : index
    %c0_9 = arith.constant 0 : index
    %13 = vector.load %arg5[%c0_8, %c0_9] : memref<512x128xbf16, #tpu.memory_space<vmem>>, vector<512x128xbf16>
    tpu.vector_store %arg5[%c0_8, %c0_9], %12 {strides = array<i32>} : memref<512x128xbf16, #tpu.memory_space<vmem>>, vector<512x128xbf16>,
    return
  }
  func.func @transform_0(%arg0: i32) -> (i32, i32) {
    %c0_i32 = arith.constant 0 : i32
    %c0_i32_0 = arith.constant 0 : i32
    return %arg0, %c0_i32 : i32, i32
  }
  func.func @transform_1(%arg0: i32) -> (i32, i32) {
    %c0_i32 = arith.constant 0 : i32
    %c0_i32_0 = arith.constant 0 : i32
    %c0_i32_1 = arith.constant 0 : i32
    return %c0_i32, %c0_i32_0 : i32, i32
  }
  func.func @transform_2(%arg0: i32) -> (i32, i32) {
    %c0_i32 = arith.constant 0 : i32
    %c0_i32_0 = arith.constant 0 : i32
    %c0_i32_1 = arith.constant 0 : i32
    return %c0_i32, %c0_i32_0 : i32, i32
  }
  func.func @transform_3(%arg0: i32) -> (i32, i32) {
    %c0_i32 = arith.constant 0 : i32
    %c0_i32_0 = arith.constant 0 : i32
    %c0_i32_1 = arith.constant 0 : i32
    return %c0_i32, %c0_i32_0 : i32, i32
  }
  func.func @transform_4(%arg0: i32) -> (i32, i32) {
    %c0_i32 = arith.constant 0 : i32
    %c0_i32_0 = arith.constant 0 : i32
    return %arg0, %c0_i32 : i32, i32
  }
}

module attributes {stable_mosaic.version = 11 : i64} {
  func.func @_process_kernel(%arg0: i32, %arg1: memref<256x128xbf16, #tpu.memory_space<vmem>>, %arg2: memref<256x128xbf16, #tpu.memory_space<vmem>>, %arg3: memref<1x128xf32, #tpu.memory_space<vmem>>, %arg4: memref<1x128xf32, #tpu.memory_space<vmem>>, %arg5: memref<1152x128xbf16, #tpu.memory_space<vmem>>, %arg6: memref<288x1xf32, #tpu.memory_space<vmem>>, %arg7: memref<288x1xf32, #tpu.memory_space<vmem>>, %arg8: memref<256x128xbf16, #tpu.memory_space<vmem>>, %arg9: memref<304x128xbf16, #tpu.memory_space<vmem>>, %arg10: memref<288x128xbf16, #tpu.memory_space<vmem>>, %arg11: memref<288x128xbf16, #tpu.memory_space<vmem>>) attributes {dimension_semantics = [#tpu.dimension_semantics<parallel>], iteration_bounds = array<i64: 2>, scalar_prefetch = 0 : i64, scratch_operands = 3 : i64, tpu.core_type = #tpu.core_type<tc>, window_params = [{transform_indices = @transform_0, window_bounds = array<i64: 256, 128>}, {transform_indices = @transform_1, window_bounds = array<i64: 256, 128>}, {pipeline_mode = #tpu.pipeline_mode<synchronous>, transform_indices = @transform_2, window_bounds = array<i64: 1, 128>}, {pipeline_mode = #tpu.pipeline_mode<synchronous>, transform_indices = @transform_3, window_bounds = array<i64: 1, 128>}, {pipeline_mode = #tpu.pipeline_mode<synchronous>, transform_indices = @transform_4, window_bounds = array<i64: 1152, 128>}, {pipeline_mode = #tpu.pipeline_mode<synchronous>, transform_indices = @transform_5, window_bounds = array<i64: 288, 1>}, {pipeline_mode = #tpu.pipeline_mode<synchronous>, transform_indices = @transform_6, window_bounds = array<i64: 288, 1>}, {transform_indices = @transform_7, window_bounds = array<i64: 256, 128>}]} {
    %c0 = arith.constant 0 : index
    %c0_0 = arith.constant 0 : index
    %0 = vector.load %arg1[%c0, %c0_0] : memref<256x128xbf16, #tpu.memory_space<vmem>>, vector<256x128xbf16>
    %1 = arith.extf %0 : vector<256x128xbf16> to vector<256x128xf32>
    %c0_1 = arith.constant 0 : index
    %c0_2 = arith.constant 0 : index
    %2 = vector.load %arg2[%c0_1, %c0_2] : memref<256x128xbf16, #tpu.memory_space<vmem>>, vector<256x128xbf16>
    %3 = arith.extf %2 : vector<256x128xbf16> to vector<256x128xf32>
    %4 = arith.addf %1, %3 : vector<256x128xf32>
    %c0_3 = arith.constant 0 : index
    %c0_4 = arith.constant 0 : index
    %5 = vector.load %arg3[%c0_3, %c0_4] : memref<1x128xf32, #tpu.memory_space<vmem>>, vector<1x128xf32>
    %6 = vector.broadcast %5 : vector<1x128xf32> to vector<256x128xf32>
    %7 = arith.mulf %4, %6 : vector<256x128xf32>
    %c0_5 = arith.constant 0 : index
    %c0_6 = arith.constant 0 : index
    %8 = vector.load %arg4[%c0_5, %c0_6] : memref<1x128xf32, #tpu.memory_space<vmem>>, vector<1x128xf32>
    %9 = vector.broadcast %8 : vector<1x128xf32> to vector<256x128xf32>
    %10 = arith.addf %7, %9 : vector<256x128xf32>
    %cst = arith.constant 0.000000e+00 : f32
    %11 = vector.broadcast %cst : f32 to vector<256x128xf32>
    %12 = arith.maximumf %10, %11 : vector<256x128xf32>
    %cst_7 = arith.constant 0.000000e+00 : bf16
    %13 = vector.broadcast %cst_7 : bf16 to vector<24x128xbf16>
    %c0_8 = arith.constant 0 : index
    %c0_9 = arith.constant 0 : index
    %14 = vector.load %arg9[%c0_8, %c0_9] : memref<304x128xbf16, #tpu.memory_space<vmem>>, vector<24x128xbf16>
    tpu.vector_store %arg9[%c0_8, %c0_9], %13 {strides = array<i32>} : memref<304x128xbf16, #tpu.memory_space<vmem>>, vector<24x128xbf16>,
    %15 = arith.truncf %12 : vector<256x128xf32> to vector<256x128xbf16>
    %c24 = arith.constant 24 : index
    %c0_10 = arith.constant 0 : index
    %16 = vector.load %arg9[%c24, %c0_10] : memref<304x128xbf16, #tpu.memory_space<vmem>>, vector<256x128xbf16>
    tpu.vector_store %arg9[%c24, %c0_10], %15 {strides = array<i32>} : memref<304x128xbf16, #tpu.memory_space<vmem>>, vector<256x128xbf16>,
    %cst_11 = arith.constant 0.000000e+00 : bf16
    %17 = vector.broadcast %cst_11 : bf16 to vector<24x128xbf16>
    %c280 = arith.constant 280 : index
    %c0_12 = arith.constant 0 : index
    %18 = vector.load %arg9[%c280, %c0_12] : memref<304x128xbf16, #tpu.memory_space<vmem>>, vector<24x128xbf16>
    tpu.vector_store %arg9[%c280, %c0_12], %17 {strides = array<i32>} : memref<304x128xbf16, #tpu.memory_space<vmem>>, vector<24x128xbf16>,
    %c0_13 = arith.constant 0 : index
    %c0_14 = arith.constant 0 : index
    %19 = vector.load %arg6[%c0_13, %c0_14] : memref<288x1xf32, #tpu.memory_space<vmem>>, vector<288x1xf32>
    %20 = arith.truncf %19 : vector<288x1xf32> to vector<288x1xbf16>
    %c0_15 = arith.constant 0 : index
    %c0_16 = arith.constant 0 : index
    %21 = vector.load %arg7[%c0_15, %c0_16] : memref<288x1xf32, #tpu.memory_space<vmem>>, vector<288x1xf32>
    %22 = arith.truncf %21 : vector<288x1xf32> to vector<288x1xbf16>
    %c7 = arith.constant 7 : index
    %c0_17 = arith.constant 0 : index
    %23 = vector.load %arg9[%c7, %c0_17] : memref<304x128xbf16, #tpu.memory_space<vmem>>, vector<288x128xbf16>
    %24 = vector.broadcast %20 : vector<288x1xbf16> to vector<288x128xbf16>
    %25 = arith.mulf %23, %24 : vector<288x128xbf16>
    %c0_18 = arith.constant 0 : index
    %c0_19 = arith.constant 0 : index
    %26 = vector.load %arg10[%c0_18, %c0_19] : memref<288x128xbf16, #tpu.memory_space<vmem>>, vector<288x128xbf16>
    tpu.vector_store %arg10[%c0_18, %c0_19], %25 {strides = array<i32>} : memref<288x128xbf16, #tpu.memory_space<vmem>>, vector<288x128xbf16>,
    %c9 = arith.constant 9 : index
    %c0_20 = arith.constant 0 : index
    %27 = vector.load %arg9[%c9, %c0_20] : memref<304x128xbf16, #tpu.memory_space<vmem>>, vector<288x128xbf16>
    %28 = vector.broadcast %22 : vector<288x1xbf16> to vector<288x128xbf16>
    %29 = arith.mulf %27, %28 : vector<288x128xbf16>
    %c0_21 = arith.constant 0 : index
    %c0_22 = arith.constant 0 : index
    %30 = vector.load %arg11[%c0_21, %c0_22] : memref<288x128xbf16, #tpu.memory_space<vmem>>, vector<288x128xbf16>
    tpu.vector_store %arg11[%c0_21, %c0_22], %29 {strides = array<i32>} : memref<288x128xbf16, #tpu.memory_space<vmem>>, vector<288x128xbf16>,
    %cst_23 = arith.constant 0.000000e+00 : f32
    %31 = vector.broadcast %cst_23 : f32 to vector<256x128xf32>
    %c0_24 = arith.constant 0 : index
    %c0_25 = arith.constant 0 : index
    %32 = vector.load %arg10[%c0_24, %c0_25] : memref<288x128xbf16, #tpu.memory_space<vmem>>, vector<256x128xbf16>
    %c0_26 = arith.constant 0 : index
    %c0_27 = arith.constant 0 : index
    %33 = vector.load %arg5[%c0_26, %c0_27] : memref<1152x128xbf16, #tpu.memory_space<vmem>>, vector<128x128xbf16>
    %cst_28 = arith.constant dense<0.000000e+00> : vector<256x128xf32>
    %34 = tpu.matmul %32, %33, %cst_28 {dimension_numbers = #tpu.dot_dimension_numbers<[1], [0], [0], [1], [0, 0, 1, 1], [], []>} : vector<256x128xbf16>, vector<128x128xbf16>, vector<256x128xf32> -> vector<256x128xf32>
    %35 = arith.addf %31, %34 : vector<256x128xf32>
    %c8 = arith.constant 8 : index
    %c0_29 = arith.constant 0 : index
    %36 = vector.load %arg9[%c8, %c0_29] : memref<304x128xbf16, #tpu.memory_space<vmem>>, vector<256x128xbf16>
    %c128 = arith.constant 128 : index
    %c0_30 = arith.constant 0 : index
    %37 = vector.load %arg5[%c128, %c0_30] : memref<1152x128xbf16, #tpu.memory_space<vmem>>, vector<128x128xbf16>
    %cst_31 = arith.constant dense<0.000000e+00> : vector<256x128xf32>
    %38 = tpu.matmul %36, %37, %cst_31 {dimension_numbers = #tpu.dot_dimension_numbers<[1], [0], [0], [1], [0, 0, 1, 1], [], []>} : vector<256x128xbf16>, vector<128x128xbf16>, vector<256x128xf32> -> vector<256x128xf32>
    %39 = arith.addf %35, %38 : vector<256x128xf32>
    %c0_32 = arith.constant 0 : index
    %c0_33 = arith.constant 0 : index
    %40 = vector.load %arg11[%c0_32, %c0_33] : memref<288x128xbf16, #tpu.memory_space<vmem>>, vector<256x128xbf16>
    %c256 = arith.constant 256 : index
    %c0_34 = arith.constant 0 : index
    %41 = vector.load %arg5[%c256, %c0_34] : memref<1152x128xbf16, #tpu.memory_space<vmem>>, vector<128x128xbf16>
    %cst_35 = arith.constant dense<0.000000e+00> : vector<256x128xf32>
    %42 = tpu.matmul %40, %41, %cst_35 {dimension_numbers = #tpu.dot_dimension_numbers<[1], [0], [0], [1], [0, 0, 1, 1], [], []>} : vector<256x128xbf16>, vector<128x128xbf16>, vector<256x128xf32> -> vector<256x128xf32>
    %43 = arith.addf %39, %42 : vector<256x128xf32>
    %c16 = arith.constant 16 : index
    %c0_36 = arith.constant 0 : index
    %44 = vector.load %arg10[%c16, %c0_36] : memref<288x128xbf16, #tpu.memory_space<vmem>>, vector<256x128xbf16>
    %c384 = arith.constant 384 : index
    %c0_37 = arith.constant 0 : index
    %45 = vector.load %arg5[%c384, %c0_37] : memref<1152x128xbf16, #tpu.memory_space<vmem>>, vector<128x128xbf16>
    %cst_38 = arith.constant dense<0.000000e+00> : vector<256x128xf32>
    %46 = tpu.matmul %44, %45, %cst_38 {dimension_numbers = #tpu.dot_dimension_numbers<[1], [0], [0], [1], [0, 0, 1, 1], [], []>} : vector<256x128xbf16>, vector<128x128xbf16>, vector<256x128xf32> -> vector<256x128xf32>
    %47 = arith.addf %43, %46 : vector<256x128xf32>
    %c24_39 = arith.constant 24 : index
    %c0_40 = arith.constant 0 : index
    %48 = vector.load %arg9[%c24_39, %c0_40] : memref<304x128xbf16, #tpu.memory_space<vmem>>, vector<256x128xbf16>
    %c512 = arith.constant 512 : index
    %c0_41 = arith.constant 0 : index
    %49 = vector.load %arg5[%c512, %c0_41] : memref<1152x128xbf16, #tpu.memory_space<vmem>>, vector<128x128xbf16>
    %cst_42 = arith.constant dense<0.000000e+00> : vector<256x128xf32>
    %50 = tpu.matmul %48, %49, %cst_42 {dimension_numbers = #tpu.dot_dimension_numbers<[1], [0], [0], [1], [0, 0, 1, 1], [], []>} : vector<256x128xbf16>, vector<128x128xbf16>, vector<256x128xf32> -> vector<256x128xf32>
    %51 = arith.addf %47, %50 : vector<256x128xf32>
    %c16_43 = arith.constant 16 : index
    %c0_44 = arith.constant 0 : index
    %52 = vector.load %arg11[%c16_43, %c0_44] : memref<288x128xbf16, #tpu.memory_space<vmem>>, vector<256x128xbf16>
    %c640 = arith.constant 640 : index
    %c0_45 = arith.constant 0 : index
    %53 = vector.load %arg5[%c640, %c0_45] : memref<1152x128xbf16, #tpu.memory_space<vmem>>, vector<128x128xbf16>
    %cst_46 = arith.constant dense<0.000000e+00> : vector<256x128xf32>
    %54 = tpu.matmul %52, %53, %cst_46 {dimension_numbers = #tpu.dot_dimension_numbers<[1], [0], [0], [1], [0, 0, 1, 1], [], []>} : vector<256x128xbf16>, vector<128x128xbf16>, vector<256x128xf32> -> vector<256x128xf32>
    %55 = arith.addf %51, %54 : vector<256x128xf32>
    %c32 = arith.constant 32 : index
    %c0_47 = arith.constant 0 : index
    %56 = vector.load %arg10[%c32, %c0_47] : memref<288x128xbf16, #tpu.memory_space<vmem>>, vector<256x128xbf16>
    %c768 = arith.constant 768 : index
    %c0_48 = arith.constant 0 : index
    %57 = vector.load %arg5[%c768, %c0_48] : memref<1152x128xbf16, #tpu.memory_space<vmem>>, vector<128x128xbf16>
    %cst_49 = arith.constant dense<0.000000e+00> : vector<256x128xf32>
    %58 = tpu.matmul %56, %57, %cst_49 {dimension_numbers = #tpu.dot_dimension_numbers<[1], [0], [0], [1], [0, 0, 1, 1], [], []>} : vector<256x128xbf16>, vector<128x128xbf16>, vector<256x128xf32> -> vector<256x128xf32>
    %59 = arith.addf %55, %58 : vector<256x128xf32>
    %c40 = arith.constant 40 : index
    %c0_50 = arith.constant 0 : index
    %60 = vector.load %arg9[%c40, %c0_50] : memref<304x128xbf16, #tpu.memory_space<vmem>>, vector<256x128xbf16>
    %c896 = arith.constant 896 : index
    %c0_51 = arith.constant 0 : index
    %61 = vector.load %arg5[%c896, %c0_51] : memref<1152x128xbf16, #tpu.memory_space<vmem>>, vector<128x128xbf16>
    %cst_52 = arith.constant dense<0.000000e+00> : vector<256x128xf32>
    %62 = tpu.matmul %60, %61, %cst_52 {dimension_numbers = #tpu.dot_dimension_numbers<[1], [0], [0], [1], [0, 0, 1, 1], [], []>} : vector<256x128xbf16>, vector<128x128xbf16>, vector<256x128xf32> -> vector<256x128xf32>
    %63 = arith.addf %59, %62 : vector<256x128xf32>
    %c32_53 = arith.constant 32 : index
    %c0_54 = arith.constant 0 : index
    %64 = vector.load %arg11[%c32_53, %c0_54] : memref<288x128xbf16, #tpu.memory_space<vmem>>, vector<256x128xbf16>
    %c1024 = arith.constant 1024 : index
    %c0_55 = arith.constant 0 : index
    %65 = vector.load %arg5[%c1024, %c0_55] : memref<1152x128xbf16, #tpu.memory_space<vmem>>, vector<128x128xbf16>
    %cst_56 = arith.constant dense<0.000000e+00> : vector<256x128xf32>
    %66 = tpu.matmul %64, %65, %cst_56 {dimension_numbers = #tpu.dot_dimension_numbers<[1], [0], [0], [1], [0, 0, 1, 1], [], []>} : vector<256x128xbf16>, vector<128x128xbf16>, vector<256x128xf32> -> vector<256x128xf32>
    %67 = arith.addf %63, %66 : vector<256x128xf32>
    %68 = arith.truncf %67 : vector<256x128xf32> to vector<256x128xbf16>
    %c0_57 = arith.constant 0 : index
    %c0_58 = arith.constant 0 : index
    %69 = vector.load %arg8[%c0_57, %c0_58] : memref<256x128xbf16, #tpu.memory_space<vmem>>, vector<256x128xbf16>
    tpu.vector_store %arg8[%c0_57, %c0_58], %68 {strides = array<i32>} : memref<256x128xbf16, #tpu.memory_space<vmem>>, vector<256x128xbf16>,
    return
  }
  func.func @transform_0(%arg0: i32) -> (i32, i32) {
    %c0_i32 = arith.constant 0 : i32
    %c0_i32_0 = arith.constant 0 : i32
    return %arg0, %c0_i32 : i32, i32
  }
  func.func @transform_1(%arg0: i32) -> (i32, i32) {
    %c0_i32 = arith.constant 0 : i32
    %c0_i32_0 = arith.constant 0 : i32
    return %arg0, %c0_i32 : i32, i32
  }
  func.func @transform_2(%arg0: i32) -> (i32, i32) {
    %c0_i32 = arith.constant 0 : i32
    %c0_i32_0 = arith.constant 0 : i32
    %c0_i32_1 = arith.constant 0 : i32
    return %c0_i32, %c0_i32_0 : i32, i32
  }
  func.func @transform_3(%arg0: i32) -> (i32, i32) {
    %c0_i32 = arith.constant 0 : i32
    %c0_i32_0 = arith.constant 0 : i32
    %c0_i32_1 = arith.constant 0 : i32
    return %c0_i32, %c0_i32_0 : i32, i32
  }
  func.func @transform_4(%arg0: i32) -> (i32, i32) {
    %c0_i32 = arith.constant 0 : i32
    %c0_i32_0 = arith.constant 0 : i32
    %c0_i32_1 = arith.constant 0 : i32
    return %c0_i32, %c0_i32_0 : i32, i32
  }
  func.func @transform_5(%arg0: i32) -> (i32, i32) {
    %c0_i32 = arith.constant 0 : i32
    %c0_i32_0 = arith.constant 0 : i32
    %c0_i32_1 = arith.constant 0 : i32
    return %c0_i32, %c0_i32_0 : i32, i32
  }
  func.func @transform_6(%arg0: i32) -> (i32, i32) {
    %c0_i32 = arith.constant 0 : i32
    %c0_i32_0 = arith.constant 0 : i32
    %c0_i32_1 = arith.constant 0 : i32
    return %c0_i32, %c0_i32_0 : i32, i32
  }
  func.func @transform_7(%arg0: i32) -> (i32, i32) {
    %c0_i32 = arith.constant 0 : i32
    %c0_i32_0 = arith.constant 0 : i32
    return %arg0, %c0_i32 : i32, i32
  }
}

module attributes {stable_mosaic.version = 11 : i64} {
  func.func @_comp_short_kernel(%arg0: i32, %arg1: memref<512x128xbf16, #tpu.memory_space<vmem>>, %arg2: memref<512x128xbf16, #tpu.memory_space<vmem>>, %arg3: memref<512x128xbf16, #tpu.memory_space<vmem>>, %arg4: memref<512x128xbf16, #tpu.memory_space<vmem>>, %arg5: memref<512x128xbf16, #tpu.memory_space<vmem>>, %arg6: memref<512x8xf32, #tpu.memory_space<vmem>>, %arg7: memref<5x128xf32, #tpu.memory_space<vmem>>, %arg8: memref<5x128xf32, #tpu.memory_space<vmem>>, %arg9: memref<1x8xf32, #tpu.memory_space<vmem>>, %arg10: memref<1x8xf32, #tpu.memory_space<vmem>>, %arg11: memref<5x128x128xbf16, #tpu.memory_space<vmem>>, %arg12: memref<8x128xbf16, #tpu.memory_space<vmem>>, %arg13: memref<512x128xf32, #tpu.memory_space<vmem>>) attributes {dimension_semantics = [#tpu.dimension_semantics<parallel>], iteration_bounds = array<i64: 1>, scalar_prefetch = 0 : i64, scratch_operands = 0 : i64, tpu.core_type = #tpu.core_type<tc>, window_params = [{transform_indices = @transform_0, window_bounds = array<i64: 512, 128>}, {transform_indices = @transform_1, window_bounds = array<i64: 512, 128>}, {transform_indices = @transform_2, window_bounds = array<i64: 512, 128>}, {transform_indices = @transform_3, window_bounds = array<i64: 512, 128>}, {transform_indices = @transform_4, window_bounds = array<i64: 512, 128>}, {transform_indices = @transform_5, window_bounds = array<i64: 512, 8>}, {pipeline_mode = #tpu.pipeline_mode<synchronous>, transform_indices = @transform_6, window_bounds = array<i64: 5, 128>}, {pipeline_mode = #tpu.pipeline_mode<synchronous>, transform_indices = @transform_7, window_bounds = array<i64: 5, 128>}, {pipeline_mode = #tpu.pipeline_mode<synchronous>, transform_indices = @transform_8, window_bounds = array<i64: 1, 8>}, {pipeline_mode = #tpu.pipeline_mode<synchronous>, transform_indices = @transform_9, window_bounds = array<i64: 1, 8>}, {pipeline_mode = #tpu.pipeline_mode<synchronous>, transform_indices = @transform_10, window_bounds = array<i64: 5, 128, 128>}, {pipeline_mode = #tpu.pipeline_mode<synchronous>, transform_indices = @transform_11, window_bounds = array<i64: 8, 128>}, {transform_indices = @transform_12, window_bounds = array<i64: 512, 128>}]} {
    %cst = arith.constant 0.000000e+00 : f32
    %0 = vector.broadcast %cst : f32 to vector<512x128xf32>
    %c0 = arith.constant 0 : index
    %c0_0 = arith.constant 0 : index
    %1 = vector.load %arg1[%c0, %c0_0] : memref<512x128xbf16, #tpu.memory_space<vmem>>, vector<512x128xbf16>
    %2 = arith.extf %1 : vector<512x128xbf16> to vector<512x128xf32>
    %c0_1 = arith.constant 0 : index
    %c0_2 = arith.constant 0 : index
    %3 = vector.load %arg7[%c0_1, %c0_2] : memref<5x128xf32, #tpu.memory_space<vmem>>, vector<1x128xf32>
    %4 = vector.broadcast %3 : vector<1x128xf32> to vector<512x128xf32>
    %5 = arith.mulf %2, %4 : vector<512x128xf32>
    %c0_3 = arith.constant 0 : index
    %c0_4 = arith.constant 0 : index
    %6 = vector.load %arg8[%c0_3, %c0_4] : memref<5x128xf32, #tpu.memory_space<vmem>>, vector<1x128xf32>
    %7 = vector.broadcast %6 : vector<1x128xf32> to vector<512x128xf32>
    %8 = arith.addf %5, %7 : vector<512x128xf32>
    %cst_5 = arith.constant 0.000000e+00 : f32
    %9 = vector.broadcast %cst_5 : f32 to vector<512x128xf32>
    %10 = arith.maximumf %8, %9 : vector<512x128xf32>
    %11 = arith.truncf %10 : vector<512x128xf32> to vector<512x128xbf16>
    %c0_6 = arith.constant 0 : index
    %c0_7 = arith.constant 0 : index
    %c0_8 = arith.constant 0 : index
    %12 = vector.load %arg11[%c0_6, %c0_7, %c0_8] : memref<5x128x128xbf16, #tpu.memory_space<vmem>>, vector<1x128x128xbf16>
    %13 = vector.shape_cast %12 : vector<1x128x128xbf16> to vector<128x128xbf16>
    %cst_9 = arith.constant dense<0.000000e+00> : vector<512x128xf32>
    %14 = tpu.matmul %11, %13, %cst_9 {dimension_numbers = #tpu.dot_dimension_numbers<[1], [0], [0], [1], [0, 0, 1, 1], [], []>} : vector<512x128xbf16>, vector<128x128xbf16>, vector<512x128xf32> -> vector<512x128xf32>
    %15 = arith.addf %0, %14 : vector<512x128xf32>
    %c0_10 = arith.constant 0 : index
    %c0_11 = arith.constant 0 : index
    %16 = vector.load %arg2[%c0_10, %c0_11] : memref<512x128xbf16, #tpu.memory_space<vmem>>, vector<512x128xbf16>
    %17 = arith.extf %16 : vector<512x128xbf16> to vector<512x128xf32>
    %c1 = arith.constant 1 : index
    %c0_12 = arith.constant 0 : index
    %18 = vector.load %arg7[%c1, %c0_12] : memref<5x128xf32, #tpu.memory_space<vmem>>, vector<1x128xf32>
    %19 = vector.broadcast %18 : vector<1x128xf32> to vector<512x128xf32>
    %20 = arith.mulf %17, %19 : vector<512x128xf32>
    %c1_13 = arith.constant 1 : index
    %c0_14 = arith.constant 0 : index
    %21 = vector.load %arg8[%c1_13, %c0_14] : memref<5x128xf32, #tpu.memory_space<vmem>>, vector<1x128xf32>
    %22 = vector.broadcast %21 : vector<1x128xf32> to vector<512x128xf32>
    %23 = arith.addf %20, %22 : vector<512x128xf32>
    %cst_15 = arith.constant 0.000000e+00 : f32
    %24 = vector.broadcast %cst_15 : f32 to vector<512x128xf32>
    %25 = arith.maximumf %23, %24 : vector<512x128xf32>
    %26 = arith.truncf %25 : vector<512x128xf32> to vector<512x128xbf16>
    %c1_16 = arith.constant 1 : index
    %c0_17 = arith.constant 0 : index
    %c0_18 = arith.constant 0 : index
    %27 = vector.load %arg11[%c1_16, %c0_17, %c0_18] : memref<5x128x128xbf16, #tpu.memory_space<vmem>>, vector<1x128x128xbf16>
    %28 = vector.shape_cast %27 : vector<1x128x128xbf16> to vector<128x128xbf16>
    %cst_19 = arith.constant dense<0.000000e+00> : vector<512x128xf32>
    %29 = tpu.matmul %26, %28, %cst_19 {dimension_numbers = #tpu.dot_dimension_numbers<[1], [0], [0], [1], [0, 0, 1, 1], [], []>} : vector<512x128xbf16>, vector<128x128xbf16>, vector<512x128xf32> -> vector<512x128xf32>
    %30 = arith.addf %15, %29 : vector<512x128xf32>
    %c0_20 = arith.constant 0 : index
    %c0_21 = arith.constant 0 : index
    %31 = vector.load %arg3[%c0_20, %c0_21] : memref<512x128xbf16, #tpu.memory_space<vmem>>, vector<512x128xbf16>
    %32 = arith.extf %31 : vector<512x128xbf16> to vector<512x128xf32>
    %c2 = arith.constant 2 : index
    %c0_22 = arith.constant 0 : index
    %33 = vector.load %arg7[%c2, %c0_22] : memref<5x128xf32, #tpu.memory_space<vmem>>, vector<1x128xf32>
    %34 = vector.broadcast %33 : vector<1x128xf32> to vector<512x128xf32>
    %35 = arith.mulf %32, %34 : vector<512x128xf32>
    %c2_23 = arith.constant 2 : index
    %c0_24 = arith.constant 0 : index
    %36 = vector.load %arg8[%c2_23, %c0_24] : memref<5x128xf32, #tpu.memory_space<vmem>>, vector<1x128xf32>
    %37 = vector.broadcast %36 : vector<1x128xf32> to vector<512x128xf32>
    %38 = arith.addf %35, %37 : vector<512x128xf32>
    %cst_25 = arith.constant 0.000000e+00 : f32
    %39 = vector.broadcast %cst_25 : f32 to vector<512x128xf32>
    %40 = arith.maximumf %38, %39 : vector<512x128xf32>
    %41 = arith.truncf %40 : vector<512x128xf32> to vector<512x128xbf16>
    %c2_26 = arith.constant 2 : index
    %c0_27 = arith.constant 0 : index
    %c0_28 = arith.constant 0 : index
    %42 = vector.load %arg11[%c2_26, %c0_27, %c0_28] : memref<5x128x128xbf16, #tpu.memory_space<vmem>>, vector<1x128x128xbf16>
    %43 = vector.shape_cast %42 : vector<1x128x128xbf16> to vector<128x128xbf16>
    %cst_29 = arith.constant dense<0.000000e+00> : vector<512x128xf32>
    %44 = tpu.matmul %41, %43, %cst_29 {dimension_numbers = #tpu.dot_dimension_numbers<[1], [0], [0], [1], [0, 0, 1, 1], [], []>} : vector<512x128xbf16>, vector<128x128xbf16>, vector<512x128xf32> -> vector<512x128xf32>
    %45 = arith.addf %30, %44 : vector<512x128xf32>
    %c0_30 = arith.constant 0 : index
    %c0_31 = arith.constant 0 : index
    %46 = vector.load %arg4[%c0_30, %c0_31] : memref<512x128xbf16, #tpu.memory_space<vmem>>, vector<512x128xbf16>
    %47 = arith.extf %46 : vector<512x128xbf16> to vector<512x128xf32>
    %c3 = arith.constant 3 : index
    %c0_32 = arith.constant 0 : index
    %48 = vector.load %arg7[%c3, %c0_32] : memref<5x128xf32, #tpu.memory_space<vmem>>, vector<1x128xf32>
    %49 = vector.broadcast %48 : vector<1x128xf32> to vector<512x128xf32>
    %50 = arith.mulf %47, %49 : vector<512x128xf32>
    %c3_33 = arith.constant 3 : index
    %c0_34 = arith.constant 0 : index
    %51 = vector.load %arg8[%c3_33, %c0_34] : memref<5x128xf32, #tpu.memory_space<vmem>>, vector<1x128xf32>
    %52 = vector.broadcast %51 : vector<1x128xf32> to vector<512x128xf32>
    %53 = arith.addf %50, %52 : vector<512x128xf32>
    %cst_35 = arith.constant 0.000000e+00 : f32
    %54 = vector.broadcast %cst_35 : f32 to vector<512x128xf32>
    %55 = arith.maximumf %53, %54 : vector<512x128xf32>
    %56 = arith.truncf %55 : vector<512x128xf32> to vector<512x128xbf16>
    %c3_36 = arith.constant 3 : index
    %c0_37 = arith.constant 0 : index
    %c0_38 = arith.constant 0 : index
    %57 = vector.load %arg11[%c3_36, %c0_37, %c0_38] : memref<5x128x128xbf16, #tpu.memory_space<vmem>>, vector<1x128x128xbf16>
    %58 = vector.shape_cast %57 : vector<1x128x128xbf16> to vector<128x128xbf16>
    %cst_39 = arith.constant dense<0.000000e+00> : vector<512x128xf32>
    %59 = tpu.matmul %56, %58, %cst_39 {dimension_numbers = #tpu.dot_dimension_numbers<[1], [0], [0], [1], [0, 0, 1, 1], [], []>} : vector<512x128xbf16>, vector<128x128xbf16>, vector<512x128xf32> -> vector<512x128xf32>
    %60 = arith.addf %45, %59 : vector<512x128xf32>
    %c0_40 = arith.constant 0 : index
    %c0_41 = arith.constant 0 : index
    %61 = vector.load %arg5[%c0_40, %c0_41] : memref<512x128xbf16, #tpu.memory_space<vmem>>, vector<512x128xbf16>
    %62 = arith.extf %61 : vector<512x128xbf16> to vector<512x128xf32>
    %c4 = arith.constant 4 : index
    %c0_42 = arith.constant 0 : index
    %63 = vector.load %arg7[%c4, %c0_42] : memref<5x128xf32, #tpu.memory_space<vmem>>, vector<1x128xf32>
    %64 = vector.broadcast %63 : vector<1x128xf32> to vector<512x128xf32>
    %65 = arith.mulf %62, %64 : vector<512x128xf32>
    %c4_43 = arith.constant 4 : index
    %c0_44 = arith.constant 0 : index
    %66 = vector.load %arg8[%c4_43, %c0_44] : memref<5x128xf32, #tpu.memory_space<vmem>>, vector<1x128xf32>
    %67 = vector.broadcast %66 : vector<1x128xf32> to vector<512x128xf32>
    %68 = arith.addf %65, %67 : vector<512x128xf32>
    %cst_45 = arith.constant 0.000000e+00 : f32
    %69 = vector.broadcast %cst_45 : f32 to vector<512x128xf32>
    %70 = arith.maximumf %68, %69 : vector<512x128xf32>
    %71 = arith.truncf %70 : vector<512x128xf32> to vector<512x128xbf16>
    %c4_46 = arith.constant 4 : index
    %c0_47 = arith.constant 0 : index
    %c0_48 = arith.constant 0 : index
    %72 = vector.load %arg11[%c4_46, %c0_47, %c0_48] : memref<5x128x128xbf16, #tpu.memory_space<vmem>>, vector<1x128x128xbf16>
    %73 = vector.shape_cast %72 : vector<1x128x128xbf16> to vector<128x128xbf16>
    %cst_49 = arith.constant dense<0.000000e+00> : vector<512x128xf32>
    %74 = tpu.matmul %71, %73, %cst_49 {dimension_numbers = #tpu.dot_dimension_numbers<[1], [0], [0], [1], [0, 0, 1, 1], [], []>} : vector<512x128xbf16>, vector<128x128xbf16>, vector<512x128xf32> -> vector<512x128xf32>
    %75 = arith.addf %60, %74 : vector<512x128xf32>
    %c0_50 = arith.constant 0 : index
    %c0_51 = arith.constant 0 : index
    %76 = vector.load %arg6[%c0_50, %c0_51] : memref<512x8xf32, #tpu.memory_space<vmem>>, vector<512x8xf32>
    %c0_52 = arith.constant 0 : index
    %c0_53 = arith.constant 0 : index
    %77 = vector.load %arg9[%c0_52, %c0_53] : memref<1x8xf32, #tpu.memory_space<vmem>>, vector<1x8xf32>
    %78 = vector.broadcast %77 : vector<1x8xf32> to vector<512x8xf32>
    %79 = arith.mulf %76, %78 : vector<512x8xf32>
    %c0_54 = arith.constant 0 : index
    %c0_55 = arith.constant 0 : index
    %80 = vector.load %arg10[%c0_54, %c0_55] : memref<1x8xf32, #tpu.memory_space<vmem>>, vector<1x8xf32>
    %81 = vector.broadcast %80 : vector<1x8xf32> to vector<512x8xf32>
    %82 = arith.addf %79, %81 : vector<512x8xf32>
    %cst_56 = arith.constant 0.000000e+00 : f32
    %83 = vector.broadcast %cst_56 : f32 to vector<512x8xf32>
    %84 = arith.maximumf %82, %83 : vector<512x8xf32>
    %85 = arith.truncf %84 : vector<512x8xf32> to vector<512x8xbf16>
    %c0_57 = arith.constant 0 : index
    %c0_58 = arith.constant 0 : index
    %86 = vector.load %arg12[%c0_57, %c0_58] : memref<8x128xbf16, #tpu.memory_space<vmem>>, vector<8x128xbf16>
    %cst_59 = arith.constant dense<0.000000e+00> : vector<512x128xf32>
    %87 = tpu.matmul %85, %86, %cst_59 {dimension_numbers = #tpu.dot_dimension_numbers<[1], [0], [0], [1], [0, 0, 1, 1], [], []>} : vector<512x8xbf16>, vector<8x128xbf16>, vector<512x128xf32> -> vector<512x128xf32>
    %88 = arith.addf %75, %87 : vector<512x128xf32>
    %c0_60 = arith.constant 0 : index
    %c0_61 = arith.constant 0 : index
    %89 = vector.load %arg13[%c0_60, %c0_61] : memref<512x128xf32, #tpu.memory_space<vmem>>, vector<512x128xf32>
    tpu.vector_store %arg13[%c0_60, %c0_61], %88 {strides = array<i32>} : memref<512x128xf32, #tpu.memory_space<vmem>>, vector<512x128xf32>,
    return
  }
  func.func @transform_0(%arg0: i32) -> (i32, i32) {
    %c0_i32 = arith.constant 0 : i32
    %c0_i32_0 = arith.constant 0 : i32
    return %arg0, %c0_i32 : i32, i32
  }
  func.func @transform_1(%arg0: i32) -> (i32, i32) {
    %c0_i32 = arith.constant 0 : i32
    %c0_i32_0 = arith.constant 0 : i32
    return %arg0, %c0_i32 : i32, i32
  }
  func.func @transform_2(%arg0: i32) -> (i32, i32) {
    %c0_i32 = arith.constant 0 : i32
    %c0_i32_0 = arith.constant 0 : i32
    return %arg0, %c0_i32 : i32, i32
  }
  func.func @transform_3(%arg0: i32) -> (i32, i32) {
    %c0_i32 = arith.constant 0 : i32
    %c0_i32_0 = arith.constant 0 : i32
    return %arg0, %c0_i32 : i32, i32
  }
  func.func @transform_4(%arg0: i32) -> (i32, i32) {
    %c0_i32 = arith.constant 0 : i32
    %c0_i32_0 = arith.constant 0 : i32
    return %arg0, %c0_i32 : i32, i32
  }
  func.func @transform_5(%arg0: i32) -> (i32, i32) {
    %c0_i32 = arith.constant 0 : i32
    %c0_i32_0 = arith.constant 0 : i32
    return %arg0, %c0_i32 : i32, i32
  }
  func.func @transform_6(%arg0: i32) -> (i32, i32) {
    %c0_i32 = arith.constant 0 : i32
    %c0_i32_0 = arith.constant 0 : i32
    %c0_i32_1 = arith.constant 0 : i32
    return %c0_i32, %c0_i32_0 : i32, i32
  }
  func.func @transform_7(%arg0: i32) -> (i32, i32) {
    %c0_i32 = arith.constant 0 : i32
    %c0_i32_0 = arith.constant 0 : i32
    %c0_i32_1 = arith.constant 0 : i32
    return %c0_i32, %c0_i32_0 : i32, i32
  }
  func.func @transform_8(%arg0: i32) -> (i32, i32) {
    %c0_i32 = arith.constant 0 : i32
    %c0_i32_0 = arith.constant 0 : i32
    %c0_i32_1 = arith.constant 0 : i32
    return %c0_i32, %c0_i32_0 : i32, i32
  }
  func.func @transform_9(%arg0: i32) -> (i32, i32) {
    %c0_i32 = arith.constant 0 : i32
    %c0_i32_0 = arith.constant 0 : i32
    %c0_i32_1 = arith.constant 0 : i32
    return %c0_i32, %c0_i32_0 : i32, i32
  }
  func.func @transform_10(%arg0: i32) -> (i32, i32, i32) {
    %c0_i32 = arith.constant 0 : i32
    %c0_i32_0 = arith.constant 0 : i32
    %c0_i32_1 = arith.constant 0 : i32
    %c0_i32_2 = arith.constant 0 : i32
    return %c0_i32, %c0_i32_0, %c0_i32_1 : i32, i32, i32
  }
  func.func @transform_11(%arg0: i32) -> (i32, i32) {
    %c0_i32 = arith.constant 0 : i32
    %c0_i32_0 = arith.constant 0 : i32
    %c0_i32_1 = arith.constant 0 : i32
    return %c0_i32, %c0_i32_0 : i32, i32
  }
  func.func @transform_12(%arg0: i32) -> (i32, i32) {
    %c0_i32 = arith.constant 0 : i32
    %c0_i32_0 = arith.constant 0 : i32
    return %arg0, %c0_i32 : i32, i32
  }
}

</mosaic_0001>

<llo_original>
// kernel: dappm_forward.6
$region0: #{dappm_forward.6}
  #allocation0 [shape = 'u32[]', space=smem, size = 0x4, offset = 0x4, fixed_abs, tag = 'smem constant byte address 0x4 - core index']
  #allocation1 [shape = 'u32[72,128]{1,0:T(1,128)}', space=vmem, size = 0x9000, scoped, tag = 'internal scratch']
  %s0 = inlined_call_operand.vmem [shape: f32[512,8], index: 0, kind: input, shape index: {}]
  %s1 = inlined_call_operand.vmem [shape: f32[1,8], index: 1, kind: input, shape index: {}]
  %s2 = inlined_call_operand.vmem [shape: f32[1,8], index: 2, kind: input, shape index: {}]
  %s3 = inlined_call_operand.vmem [shape: bf16[8,128], index: 3, kind: input, shape index: {}]
  %s4 = inlined_call_operand.vmem [shape: bf16[512,128], index: 4, kind: output, shape index: {}]
  %s5 = sld [smem:[#allocation0]]
  $region26: #{dappm_forward.6} parent=0
    _
  %s7 = ssub.s32 1, %s5
  %s8 = scalar_select 0, %s7, %s5
  // Predicated region
  $region2: #{dappm_forward.6} parent=0 // pred_check
    _
  $region3: #{dappm_forward.6} parent=0 // pred_check_branch
    %10 = sbr.rel (0) target = $region5
  $region4: #{dappm_forward.6} parent=0 // pred_region
    _
  $region5: #{dappm_forward.6} parent=0 // pred_fallthru
    _
  // Predicated region
  $region6: #{dappm_forward.6} parent=0 // pred_check
    _
  $region7: #{dappm_forward.6} parent=0 // pred_check_branch
    %12 = sbr.rel (0) target = $region9
  $region8: #{dappm_forward.6} parent=0 // pred_region
    _
  $region9: #{dappm_forward.6} parent=0 // pred_fallthru
    _
  // Predicated region
  $region10: #{dappm_forward.6} parent=0 // pred_check
    _
  $region11: #{dappm_forward.6} parent=0 // pred_check_branch
    %14 = sbr.rel (0) target = $region13
  $region12: #{dappm_forward.6} parent=0 // pred_region
    _
  $region13: #{dappm_forward.6} parent=0 // pred_fallthru
    _
  // Predicated region
  $region14: #{dappm_forward.6} parent=0 // pred_check
    _
  $region15: #{dappm_forward.6} parent=0 // pred_check_branch
    %16 = sbr.rel (0) target = $region17
  $region16: #{dappm_forward.6} parent=0 // pred_region
    _
  $region17: #{dappm_forward.6} parent=0 // pred_fallthru
    _
  %v18 = vld [vmem:[%s0] sm:$0xff]
  %v19 = vld [vmem:[%s0 + $0x8] sm:$0xff]
  %v20 = vld [vmem:[%s0 + $0x10] sm:$0xff]
  %v21 = vld [vmem:[%s0 + $0x18] sm:$0xff]
  %v22 = vld [vmem:[%s0 + $0x20] sm:$0xff]
  %v23 = vld [vmem:[%s0 + $0x28] sm:$0xff]
  %v24 = vld [vmem:[%s0 + $0x30] sm:$0xff]
  %v25 = vld [vmem:[%s0 + $0x38] sm:$0xff]
  %v26 = vld [vmem:[%s0 + $0x40] sm:$0xff]
  %v27 = vld [vmem:[%s0 + $0x48] sm:$0xff]
  %v28 = vld [vmem:[%s0 + $0x50] sm:$0xff]
  %v29 = vld [vmem:[%s0 + $0x58] sm:$0xff]
  %v30 = vld [vmem:[%s0 + $0x60] sm:$0xff]
  %v31 = vld [vmem:[%s0 + $0x68] sm:$0xff]
  %v32 = vld [vmem:[%s0 + $0x70] sm:$0xff]
  %v33 = vld [vmem:[%s0 + $0x78] sm:$0xff]
  %v34 = vld [vmem:[%s0 + $0x80] sm:$0xff]
  %v35 = vld [vmem:[%s0 + $0x88] sm:$0xff]
  %v36 = vld [vmem:[%s0 + $0x90] sm:$0xff]
  %v37 = vld [vmem:[%s0 + $0x98] sm:$0xff]
  %v38 = vld [vmem:[%s0 + $0xa0] sm:$0xff]
  %v39 = vld [vmem:[%s0 + $0xa8] sm:$0xff]
  %v40 = vld [vmem:[%s0 + $0xb0] sm:$0xff]
  %v41 = vld [vmem:[%s0 + $0xb8] sm:$0xff]
  %v42 = vld [vmem:[%s0 + $0xc0] sm:$0xff]
  %v43 = vld [vmem:[%s0 + $0xc8] sm:$0xff]
  %v44 = vld [vmem:[%s0 + $0xd0] sm:$0xff]
  %v45 = vld [vmem:[%s0 + $0xd8] sm:$0xff]
  %v46 = vld [vmem:[%s0 + $0xe0] sm:$0xff]
  %v47 = vld [vmem:[%s0 + $0xe8] sm:$0xff]
  %v48 = vld [vmem:[%s0 + $0xf0] sm:$0xff]
  %v49 = vld [vmem:[%s0 + $0xf8] sm:$0xff]
  %v50 = vld [vmem:[%s0 + $0x100] sm:$0xff]
  %v51 = vld [vmem:[%s0 + $0x108] sm:$0xff]
  %v52 = vld [vmem:[%s0 + $0x110] sm:$0xff]
  %v53 = vld [vmem:[%s0 + $0x118] sm:$0xff]
  %v54 = vld [vmem:[%s0 + $0x120] sm:$0xff]
  %v55 = vld [vmem:[%s0 + $0x128] sm:$0xff]
  %v56 = vld [vmem:[%s0 + $0x130] sm:$0xff]
  %v57 = vld [vmem:[%s0 + $0x138] sm:$0xff]
  %v58 = vld [vmem:[%s0 + $0x140] sm:$0xff]
  %v59 = vld [vmem:[%s0 + $0x148] sm:$0xff]
  %v60 = vld [vmem:[%s0 + $0x150] sm:$0xff]
  %v61 = vld [vmem:[%s0 + $0x158] sm:$0xff]
  %v62 = vld [vmem:[%s0 + $0x160] sm:$0xff]
  %v63 = vld [vmem:[%s0 + $0x168] sm:$0xff]
  %v64 = vld [vmem:[%s0 + $0x170] sm:$0xff]
  %v65 = vld [vmem:[%s0 + $0x178] sm:$0xff]
  %v66 = vld [vmem:[%s0 + $0x180] sm:$0xff]
  %v67 = vld [vmem:[%s0 + $0x188] sm:$0xff]
  %v68 = vld [vmem:[%s0 + $0x190] sm:$0xff]
  %v69 = vld [vmem:[%s0 + $0x198] sm:$0xff]
  %v70 = vld [vmem:[%s0 + $0x1a0] sm:$0xff]
  %v71 = vld [vmem:[%s0 + $0x1a8] sm:$0xff]
  %v72 = vld [vmem:[%s0 + $0x1b0] sm:$0xff]
  %v73 = vld [vmem:[%s0 + $0x1b8] sm:$0xff]
  %v74 = vld [vmem:[%s0 + $0x1c0] sm:$0xff]
  %v75 = vld [vmem:[%s0 + $0x1c8] sm:$0xff]
  %v76 = vld [vmem:[%s0 + $0x1d0] sm:$0xff]
  %v77 = vld [vmem:[%s0 + $0x1d8] sm:$0xff]
  %v78 = vld [vmem:[%s0 + $0x1e0] sm:$0xff]
  %v79 = vld [vmem:[%s0 + $0x1e8] sm:$0xff]
  %v80 = vld [vmem:[%s0 + $0x1f0] sm:$0xff]
  %v81 = vld [vmem:[%s0 + $0x1f8] sm:$0xff]
  %v82 = vld [vmem:[%s1] sm:$0x1]
  %v84 = vperm.slane %v82, 0
  %v86 = vmul.f32 %v18, %v84
  %v87 = vmul.f32 %v19, %v84
  %v88 = vmul.f32 %v20, %v84
  %v89 = vmul.f32 %v21, %v84
  %v90 = vmul.f32 %v22, %v84
  %v91 = vmul.f32 %v23, %v84
  %v92 = vmul.f32 %v24, %v84
  %v93 = vmul.f32 %v25, %v84
  %v94 = vmul.f32 %v26, %v84
  %v95 = vmul.f32 %v27, %v84
  %v96 = vmul.f32 %v28, %v84
  %v97 = vmul.f32 %v29, %v84
  %v98 = vmul.f32 %v30, %v84
  %v99 = vmul.f32 %v31, %v84
  %v100 = vmul.f32 %v32, %v84
  %v101 = vmul.f32 %v33, %v84
  %v102 = vmul.f32 %v34, %v84
  %v103 = vmul.f32 %v35, %v84
  %v104 = vmul.f32 %v36, %v84
  %v105 = vmul.f32 %v37, %v84
  %v106 = vmul.f32 %v38, %v84
  %v107 = vmul.f32 %v39, %v84
  %v108 = vmul.f32 %v40, %v84
  %v109 = vmul.f32 %v41, %v84
  %v110 = vmul.f32 %v42, %v84
  %v111 = vmul.f32 %v43, %v84
  %v112 = vmul.f32 %v44, %v84
  %v113 = vmul.f32 %v45, %v84
  %v114 = vmul.f32 %v46, %v84
  %v115 = vmul.f32 %v47, %v84
  %v116 = vmul.f32 %v48, %v84
  %v117 = vmul.f32 %v49, %v84
  %v118 = vmul.f32 %v50, %v84
  %v119 = vmul.f32 %v51, %v84
  %v120 = vmul.f32 %v52, %v84
  %v121 = vmul.f32 %v53, %v84
  %v122 = vmul.f32 %v54, %v84
  %v123 = vmul.f32 %v55, %v84
  %v124 = vmul.f32 %v56, %v84
  %v125 = vmul.f32 %v57, %v84
  %v126 = vmul.f32 %v58, %v84
  %v127 = vmul.f32 %v59, %v84
  %v128 = vmul.f32 %v60, %v84
  %v129 = vmul.f32 %v61, %v84
  %v130 = vmul.f32 %v62, %v84
  %v131 = vmul.f32 %v63, %v84
  %v132 = vmul.f32 %v64, %v84
  %v133 = vmul.f32 %v65, %v84
  %v134 = vmul.f32 %v66, %v84
  %v135 = vmul.f32 %v67, %v84
  %v136 = vmul.f32 %v68, %v84
  %v137 = vmul.f32 %v69, %v84
  %v138 = vmul.f32 %v70, %v84
  %v139 = vmul.f32 %v71, %v84
  %v140 = vmul.f32 %v72, %v84
  %v141 = vmul.f32 %v73, %v84
  %v142 = vmul.f32 %v74, %v84
  %v143 = vmul.f32 %v75, %v84
  %v144 = vmul.f32 %v76, %v84
  %v145 = vmul.f32 %v77, %v84
  %v146 = vmul.f32 %v78, %v84
  %v147 = vmul.f32 %v79, %v84
  %v148 = vmul.f32 %v80, %v84
  %v149 = vmul.f32 %v81, %v84
  %v150 = vld [vmem:[%s2] sm:$0x1]
  %v152 = vperm.slane %v150, 0
  %v154 = vadd.f32 %v86, %v152
  %v155 = vadd.f32 %v87, %v152
  %v156 = vadd.f32 %v88, %v152
  %v157 = vadd.f32 %v89, %v152
  %v158 = vadd.f32 %v90, %v152
  %v159 = vadd.f32 %v91, %v152
  %v160 = vadd.f32 %v92, %v152
  %v161 = vadd.f32 %v93, %v152
  %v162 = vadd.f32 %v94, %v152
  %v163 = vadd.f32 %v95, %v152
  %v164 = vadd.f32 %v96, %v152
  %v165 = vadd.f32 %v97, %v152
  %v166 = vadd.f32 %v98, %v152
  %v167 = vadd.f32 %v99, %v152
  %v168 = vadd.f32 %v100, %v152
  %v169 = vadd.f32 %v101, %v152
  %v170 = vadd.f32 %v102, %v152
  %v171 = vadd.f32 %v103, %v152
  %v172 = vadd.f32 %v104, %v152
  %v173 = vadd.f32 %v105, %v152
  %v174 = vadd.f32 %v106, %v152
  %v175 = vadd.f32 %v107, %v152
  %v176 = vadd.f32 %v108, %v152
  %v177 = vadd.f32 %v109, %v152
  %v178 = vadd.f32 %v110, %v152
  %v179 = vadd.f32 %v111, %v152
  %v180 = vadd.f32 %v112, %v152
  %v181 = vadd.f32 %v113, %v152
  %v182 = vadd.f32 %v114, %v152
  %v183 = vadd.f32 %v115, %v152
  %v184 = vadd.f32 %v116, %v152
  %v185 = vadd.f32 %v117, %v152
  %v186 = vadd.f32 %v118, %v152
  %v187 = vadd.f32 %v119, %v152
  %v188 = vadd.f32 %v120, %v152
  %v189 = vadd.f32 %v121, %v152
  %v190 = vadd.f32 %v122, %v152
  %v191 = vadd.f32 %v123, %v152
  %v192 = vadd.f32 %v124, %v152
  %v193 = vadd.f32 %v125, %v152
  %v194 = vadd.f32 %v126, %v152
  %v195 = vadd.f32 %v127, %v152
  %v196 = vadd.f32 %v128, %v152
  %v197 = vadd.f32 %v129, %v152
  %v198 = vadd.f32 %v130, %v152
  %v199 = vadd.f32 %v131, %v152
  %v200 = vadd.f32 %v132, %v152
  %v201 = vadd.f32 %v133, %v152
  %v202 = vadd.f32 %v134, %v152
  %v203 = vadd.f32 %v135, %v152
  %v204 = vadd.f32 %v136, %v152
  %v205 = vadd.f32 %v137, %v152
  %v206 = vadd.f32 %v138, %v152
  %v207 = vadd.f32 %v139, %v152
  %v208 = vadd.f32 %v140, %v152
  %v209 = vadd.f32 %v141, %v152
  %v210 = vadd.f32 %v142, %v152
  %v211 = vadd.f32 %v143, %v152
  %v212 = vadd.f32 %v144, %v152
  %v213 = vadd.f32 %v145, %v152
  %v214 = vadd.f32 %v146, %v152
  %v215 = vadd.f32 %v147, %v152
  %v216 = vadd.f32 %v148, %v152
  %v217 = vadd.f32 %v149, %v152
  %v218 = vmax.f32 %v154, 0.0
  %v219 = vmax.f32 %v155, 0.0
  %v220 = vmax.f32 %v156, 0.0
  %v221 = vmax.f32 %v157, 0.0
  %v222 = vmax.f32 %v158, 0.0
  %v223 = vmax.f32 %v159, 0.0
  %v224 = vmax.f32 %v160, 0.0
  %v225 = vmax.f32 %v161, 0.0
  %v226 = vmax.f32 %v162, 0.0
  %v227 = vmax.f32 %v163, 0.0
  %v228 = vmax.f32 %v164, 0.0
  %v229 = vmax.f32 %v165, 0.0
  %v230 = vmax.f32 %v166, 0.0
  %v231 = vmax.f32 %v167, 0.0
  %v232 = vmax.f32 %v168, 0.0
  %v233 = vmax.f32 %v169, 0.0
  %v234 = vmax.f32 %v170, 0.0
  %v235 = vmax.f32 %v171, 0.0
  %v236 = vmax.f32 %v172, 0.0
  %v237 = vmax.f32 %v173, 0.0
  %v238 = vmax.f32 %v174, 0.0
  %v239 = vmax.f32 %v175, 0.0
  %v240 = vmax.f32 %v176, 0.0
  %v241 = vmax.f32 %v177, 0.0
  %v242 = vmax.f32 %v178, 0.0
  %v243 = vmax.f32 %v179, 0.0
  %v244 = vmax.f32 %v180, 0.0
  %v245 = vmax.f32 %v181, 0.0
  %v246 = vmax.f32 %v182, 0.0
  %v247 = vmax.f32 %v183, 0.0
  %v248 = vmax.f32 %v184, 0.0
  %v249 = vmax.f32 %v185, 0.0
  %v250 = vmax.f32 %v186, 0.0
  %v251 = vmax.f32 %v187, 0.0
  %v252 = vmax.f32 %v188, 0.0
  %v253 = vmax.f32 %v189, 0.0
  %v254 = vmax.f32 %v190, 0.0
  %v255 = vmax.f32 %v191, 0.0
  %v256 = vmax.f32 %v192, 0.0
  %v257 = vmax.f32 %v193, 0.0
  %v258 = vmax.f32 %v194, 0.0
  %v259 = vmax.f32 %v195, 0.0
  %v260 = vmax.f32 %v196, 0.0
  %v261 = vmax.f32 %v197, 0.0
  %v262 = vmax.f32 %v198, 0.0
  %v263 = vmax.f32 %v199, 0.0
  %v264 = vmax.f32 %v200, 0.0
  %v265 = vmax.f32 %v201, 0.0
  %v266 = vmax.f32 %v202, 0.0
  %v267 = vmax.f32 %v203, 0.0
  %v268 = vmax.f32 %v204, 0.0
  %v269 = vmax.f32 %v205, 0.0
  %v270 = vmax.f32 %v206, 0.0
  %v271 = vmax.f32 %v207, 0.0
  %v272 = vmax.f32 %v208, 0.0
  %v273 = vmax.f32 %v209, 0.0
  %v274 = vmax.f32 %v210, 0.0
  %v275 = vmax.f32 %v211, 0.0
  %v276 = vmax.f32 %v212, 0.0
  %v277 = vmax.f32 %v213, 0.0
  %v278 = vmax.f32 %v214, 0.0
  %v279 = vmax.f32 %v215, 0.0
  %v280 = vmax.f32 %v216, 0.0
  %v281 = vmax.f32 %v217, 0.0
  %v282 = vpack.c.bf16 %v219, %v218
  %v283 = vpack.c.bf16 %v221, %v220
  %v284 = vpack.c.bf16 %v223, %v222
  %v285 = vpack.c.bf16 %v225, %v224
  %v286 = vpack.c.bf16 %v227, %v226
  %v287 = vpack.c.bf16 %v229, %v228
  %v288 = vpack.c.bf16 %v231, %v230
  %v289 = vpack.c.bf16 %v233, %v232
  %v290 = vpack.c.bf16 %v235, %v234
  %v291 = vpack.c.bf16 %v237, %v236
  %v292 = vpack.c.bf16 %v239, %v238
  %v293 = vpack.c.bf16 %v241, %v240
  %v294 = vpack.c.bf16 %v243, %v242
  %v295 = vpack.c.bf16 %v245, %v244
  %v296 = vpack.c.bf16 %v247, %v246
  %v297 = vpack.c.bf16 %v249, %v248
  %v298 = vpack.c.bf16 %v251, %v250
  %v299 = vpack.c.bf16 %v253, %v252
  %v300 = vpack.c.bf16 %v255, %v254
  %v301 = vpack.c.bf16 %v257, %v256
  %v302 = vpack.c.bf16 %v259, %v258
  %v303 = vpack.c.bf16 %v261, %v260
  %v304 = vpack.c.bf16 %v263, %v262
  %v305 = vpack.c.bf16 %v265, %v264
  %v306 = vpack.c.bf16 %v267, %v266
  %v307 = vpack.c.bf16 %v269, %v268
  %v308 = vpack.c.bf16 %v271, %v270
  %v309 = vpack.c.bf16 %v273, %v272
  %v310 = vpack.c.bf16 %v275, %v274
  %v311 = vpack.c.bf16 %v277, %v276
  %v312 = vpack.c.bf16 %v279, %v278
  %v313 = vpack.c.bf16 %v281, %v280
  %v314 = vld [vmem:[%s3] sm:$0xf]
  %vm315 = vcmask 64512
  %v317 = vsel %vm315, %v282, 0
  %v320 = vsel %vm315, %v283, 0
  %v323 = vsel %vm315, %v284, 0
  %v326 = vsel %vm315, %v285, 0
  %v329 = vsel %vm315, %v286, 0
  %v332 = vsel %vm315, %v287, 0
  %v335 = vsel %vm315, %v288, 0
  %v338 = vsel %vm315, %v289, 0
  %v341 = vsel %vm315, %v290, 0
  %v344 = vsel %vm315, %v291, 0
  %v347 = vsel %vm315, %v292, 0
  %v350 = vsel %vm315, %v293, 0
  %v353 = vsel %vm315, %v294, 0
  %v356 = vsel %vm315, %v295, 0
  %v359 = vsel %vm315, %v296, 0
  %v362 = vsel %vm315, %v297, 0
  %v365 = vsel %vm315, %v298, 0
  %v368 = vsel %vm315, %v299, 0
  %v371 = vsel %vm315, %v300, 0
  %v374 = vsel %vm315, %v301, 0
  %v377 = vsel %vm315, %v302, 0
  %v380 = vsel %vm315, %v303, 0
  %v383 = vsel %vm315, %v304, 0
  %v386 = vsel %vm315, %v305, 0
  %v389 = vsel %vm315, %v306, 0
  %v392 = vsel %vm315, %v307, 0
  %v395 = vsel %vm315, %v308, 0
  %v398 = vsel %vm315, %v309, 0
  %v401 = vsel %vm315, %v310, 0
  %v404 = vsel %vm315, %v311, 0
  %v407 = vsel %vm315, %v312, 0
  %v410 = vsel %vm315, %v313, 0
  %vm412 = vcmask 1043456
  %v414 = vsel %vm412, %v314, 0
  %416 = vmatpush.bf16.msra.mxu0 0
  %417 = vmatpush.bf16.msra.mxu0 0
  %418 = vmatpush.bf16.msra.mxu0 0
  %419 = vmatpush.bf16.msra.mxu0 0
  %420 = vmatpush.bf16.msra.mxu0 0
  %421 = vmatpush.bf16.msra.mxu0 0
  %422 = vmatpush.bf16.msra.mxu0 0
  %423 = vmatpush.bf16.msra.mxu0 %v414
  %424 = vmatmul.bf16.gmra.mxu0 %v317
  %v425 = vpop.f32.mrf.mxu0
  %v426 = vadd.f32 0.0, %v425
  %v427 = vpop.f32.mrf.mxu0
  %v428 = vadd.f32 0.0, %v427
  %429 = vmatmul.bf16.gmra.mxu0 %v320
  %v430 = vpop.f32.mrf.mxu0
  %v431 = vadd.f32 0.0, %v430
  %v432 = vpop.f32.mrf.mxu0
  %v433 = vadd.f32 0.0, %v432
  %434 = vmatmul.bf16.gmra.mxu0 %v323
  %v435 = vpop.f32.mrf.mxu0
  %v436 = vadd.f32 0.0, %v435
  %v437 = vpop.f32.mrf.mxu0
  %v438 = vadd.f32 0.0, %v437
  %439 = vmatmul.bf16.gmra.mxu0 %v326
  %v440 = vpop.f32.mrf.mxu0
  %v441 = vadd.f32 0.0, %v440
  %v442 = vpop.f32.mrf.mxu0
  %v443 = vadd.f32 0.0, %v442
  %444 = vmatmul.bf16.gmra.mxu0 %v329
  %v445 = vpop.f32.mrf.mxu0
  %v446 = vadd.f32 0.0, %v445
  %v447 = vpop.f32.mrf.mxu0
  %v448 = vadd.f32 0.0, %v447
  %449 = vmatmul.bf16.gmra.mxu0 %v332
  %v450 = vpop.f32.mrf.mxu0
  %v451 = vadd.f32 0.0, %v450
  %v452 = vpop.f32.mrf.mxu0
  %v453 = vadd.f32 0.0, %v452
  %454 = vmatmul.bf16.gmra.mxu0 %v335
  %v455 = vpop.f32.mrf.mxu0
  %v456 = vadd.f32 0.0, %v455
  %v457 = vpop.f32.mrf.mxu0
  %v458 = vadd.f32 0.0, %v457
  %459 = vmatmul.bf16.gmra.mxu0 %v338
  %v460 = vpop.f32.mrf.mxu0
  %v461 = vadd.f32 0.0, %v460
  %v462 = vpop.f32.mrf.mxu0
  %v463 = vadd.f32 0.0, %v462
  %464 = vmatmul.bf16.gmra.mxu0 %v341
  %v465 = vpop.f32.mrf.mxu0
  %v466 = vadd.f32 0.0, %v465
  %v467 = vpop.f32.mrf.mxu0
  %v468 = vadd.f32 0.0, %v467
  %469 = vmatmul.bf16.gmra.mxu0 %v344
  %v470 = vpop.f32.mrf.mxu0
  %v471 = vadd.f32 0.0, %v470
  %v472 = vpop.f32.mrf.mxu0
  %v473 = vadd.f32 0.0, %v472
  %474 = vmatmul.bf16.gmra.mxu0 %v347
  %v475 = vpop.f32.mrf.mxu0
  %v476 = vadd.f32 0.0, %v475
  %v477 = vpop.f32.mrf.mxu0
  %v478 = vadd.f32 0.0, %v477
  %479 = vmatmul.bf16.gmra.mxu0 %v350
  %v480 = vpop.f32.mrf.mxu0
  %v481 = vadd.f32 0.0, %v480
  %v482 = vpop.f32.mrf.mxu0
  %v483 = vadd.f32 0.0, %v482
  %484 = vmatmul.bf16.gmra.mxu0 %v353
  %v485 = vpop.f32.mrf.mxu0
  %v486 = vadd.f32 0.0, %v485
  %v487 = vpop.f32.mrf.mxu0
  %v488 = vadd.f32 0.0, %v487
  %489 = vmatmul.bf16.gmra.mxu0 %v356
  %v490 = vpop.f32.mrf.mxu0
  %v491 = vadd.f32 0.0, %v490
  %v492 = vpop.f32.mrf.mxu0
  %v493 = vadd.f32 0.0, %v492
  %494 = vmatmul.bf16.gmra.mxu0 %v359
  %v495 = vpop.f32.mrf.mxu0
  %v496 = vadd.f32 0.0, %v495
  %v497 = vpop.f32.mrf.mxu0
  %v498 = vadd.f32 0.0, %v497
  %499 = vmatmul.bf16.gmra.mxu0 %v362
  %v500 = vpop.f32.mrf.mxu0
  %v501 = vadd.f32 0.0, %v500
  %v502 = vpop.f32.mrf.mxu0
  %v503 = vadd.f32 0.0, %v502
  %504 = vmatmul.bf16.gmra.mxu0 %v365
  %v505 = vpop.f32.mrf.mxu0
  %v506 = vadd.f32 0.0, %v505
  %v507 = vpop.f32.mrf.mxu0
  %v508 = vadd.f32 0.0, %v507
  %509 = vmatmul.bf16.gmra.mxu0 %v368
  %v510 = vpop.f32.mrf.mxu0
  %v511 = vadd.f32 0.0, %v510
  %v512 = vpop.f32.mrf.mxu0
  %v513 = vadd.f32 0.0, %v512
  %514 = vmatmul.bf16.gmra.mxu0 %v371
  %v515 = vpop.f32.mrf.mxu0
  %v516 = vadd.f32 0.0, %v515
  %v517 = vpop.f32.mrf.mxu0
  %v518 = vadd.f32 0.0, %v517
  %519 = vmatmul.bf16.gmra.mxu0 %v374
  %v520 = vpop.f32.mrf.mxu0
  %v521 = vadd.f32 0.0, %v520
  %v522 = vpop.f32.mrf.mxu0
  %v523 = vadd.f32 0.0, %v522
  %524 = vmatmul.bf16.gmra.mxu0 %v377
  %v525 = vpop.f32.mrf.mxu0
  %v526 = vadd.f32 0.0, %v525
  %v527 = vpop.f32.mrf.mxu0
  %v528 = vadd.f32 0.0, %v527
  %529 = vmatmul.bf16.gmra.mxu0 %v380
  %v530 = vpop.f32.mrf.mxu0
  %v531 = vadd.f32 0.0, %v530
  %v532 = vpop.f32.mrf.mxu0
  %v533 = vadd.f32 0.0, %v532
  %534 = vmatmul.bf16.gmra.mxu0 %v383
  %v535 = vpop.f32.mrf.mxu0
  %v536 = vadd.f32 0.0, %v535
  %v537 = vpop.f32.mrf.mxu0
  %v538 = vadd.f32 0.0, %v537
  %539 = vmatmul.bf16.gmra.mxu0 %v386
  %v540 = vpop.f32.mrf.mxu0
  %v541 = vadd.f32 0.0, %v540
  %v542 = vpop.f32.mrf.mxu0
  %v543 = vadd.f32 0.0, %v542
  %544 = vmatmul.bf16.gmra.mxu0 %v389
  %v545 = vpop.f32.mrf.mxu0
  %v546 = vadd.f32 0.0, %v545
  %v547 = vpop.f32.mrf.mxu0
  %v548 = vadd.f32 0.0, %v547
  %549 = vmatmul.bf16.gmra.mxu0 %v392
  %v550 = vpop.f32.mrf.mxu0
  %v551 = vadd.f32 0.0, %v550
  %v552 = vpop.f32.mrf.mxu0
  %v553 = vadd.f32 0.0, %v552
  %554 = vmatmul.bf16.gmra.mxu0 %v395
  %v555 = vpop.f32.mrf.mxu0
  %v556 = vadd.f32 0.0, %v555
  %v557 = vpop.f32.mrf.mxu0
  %v558 = vadd.f32 0.0, %v557
  %559 = vmatmul.bf16.gmra.mxu0 %v398
  %v560 = vpop.f32.mrf.mxu0
  %v561 = vadd.f32 0.0, %v560
  %v562 = vpop.f32.mrf.mxu0
  %v563 = vadd.f32 0.0, %v562
  %564 = vmatmul.bf16.gmra.mxu0 %v401
  %v565 = vpop.f32.mrf.mxu0
  %v566 = vadd.f32 0.0, %v565
  %v567 = vpop.f32.mrf.mxu0
  %v568 = vadd.f32 0.0, %v567
  %569 = vmatmul.bf16.gmra.mxu0 %v404
  %v570 = vpop.f32.mrf.mxu0
  %v571 = vadd.f32 0.0, %v570
  %v572 = vpop.f32.mrf.mxu0
  %v573 = vadd.f32 0.0, %v572
  %574 = vmatmul.bf16.gmra.mxu0 %v407
  %v575 = vpop.f32.mrf.mxu0
  %v576 = vadd.f32 0.0, %v575
  %v577 = vpop.f32.mrf.mxu0
  %v578 = vadd.f32 0.0, %v577
  %579 = vmatmul.bf16.gmra.mxu0 %v410
  %v580 = vpop.f32.mrf.mxu0
  %v581 = vadd.f32 0.0, %v580
  %v582 = vpop.f32.mrf.mxu0
  %v583 = vadd.f32 0.0, %v582
  %584 = vdwg.mxu0
  %v585 = vpack.c.bf16 %v426, %v426
  %v586 = vpack.c.bf16 %v428, %v428
  %v587 = vpack.c.bf16 %v431, %v431
  %v588 = vpack.c.bf16 %v433, %v433
  %v589 = vpack.c.bf16 %v436, %v436
  %v590 = vpack.c.bf16 %v438, %v438
  %v591 = vpack.c.bf16 %v441, %v441
  %v592 = vpack.c.bf16 %v443, %v443
  %v593 = vpack.c.bf16 %v446, %v446
  %v594 = vpack.c.bf16 %v448, %v448
  %v595 = vpack.c.bf16 %v451, %v451
  %v596 = vpack.c.bf16 %v453, %v453
  %v597 = vpack.c.bf16 %v456, %v456
  %v598 = vpack.c.bf16 %v458, %v458
  %v599 = vpack.c.bf16 %v461, %v461
  %v600 = vpack.c.bf16 %v463, %v463
  %v601 = vpack.c.bf16 %v466, %v466
  %v602 = vpack.c.bf16 %v468, %v468
  %v603 = vpack.c.bf16 %v471, %v471
  %v604 = vpack.c.bf16 %v473, %v473
  %v605 = vpack.c.bf16 %v476, %v476
  %v606 = vpack.c.bf16 %v478, %v478
  %v607 = vpack.c.bf16 %v481, %v481
  %v608 = vpack.c.bf16 %v483, %v483
  %v609 = vpack.c.bf16 %v486, %v486
  %v610 = vpack.c.bf16 %v488, %v488
  %v611 = vpack.c.bf16 %v491, %v491
  %v612 = vpack.c.bf16 %v493, %v493
  %v613 = vpack.c.bf16 %v496, %v496
  %v614 = vpack.c.bf16 %v498, %v498
  %v615 = vpack.c.bf16 %v501, %v501
  %v616 = vpack.c.bf16 %v503, %v503
  %v617 = vpack.c.bf16 %v506, %v506
  %v618 = vpack.c.bf16 %v508, %v508
  %v619 = vpack.c.bf16 %v511, %v511
  %v620 = vpack.c.bf16 %v513, %v513
  %v621 = vpack.c.bf16 %v516, %v516
  %v622 = vpack.c.bf16 %v518, %v518
  %v623 = vpack.c.bf16 %v521, %v521
  %v624 = vpack.c.bf16 %v523, %v523
  %v625 = vpack.c.bf16 %v526, %v526
  %v626 = vpack.c.bf16 %v528, %v528
  %v627 = vpack.c.bf16 %v531, %v531
  %v628 = vpack.c.bf16 %v533, %v533
  %v629 = vpack.c.bf16 %v536, %v536
  %v630 = vpack.c.bf16 %v538, %v538
  %v631 = vpack.c.bf16 %v541, %v541
  %v632 = vpack.c.bf16 %v543, %v543
  %v633 = vpack.c.bf16 %v546, %v546
  %v634 = vpack.c.bf16 %v548, %v548
  %v635 = vpack.c.bf16 %v551, %v551
  %v636 = vpack.c.bf16 %v553, %v553
  %v637 = vpack.c.bf16 %v556, %v556
  %v638 = vpack.c.bf16 %v558, %v558
  %v639 = vpack.c.bf16 %v561, %v561
  %v640 = vpack.c.bf16 %v563, %v563
  %v641 = vpack.c.bf16 %v566, %v566
  %v642 = vpack.c.bf16 %v568, %v568
  %v643 = vpack.c.bf16 %v571, %v571
  %v644 = vpack.c.bf16 %v573, %v573
  %v645 = vpack.c.bf16 %v576, %v576
  %v646 = vpack.c.bf16 %v578, %v578
  %v647 = vpack.c.bf16 %v581, %v581
  %v648 = vpack.c.bf16 %v583, %v583
  %649 = vst [vmem:[%s4] sm:$0xf] %v585
  %650 = vst [vmem:[%s4 + $0x4] sm:$0xf] %v586
  %651 = vst [vmem:[%s4 + $0x8] sm:$0xf] %v587
  %652 = vst [vmem:[%s4 + $0xc] sm:$0xf] %v588
  %653 = vst [vmem:[%s4 + $0x10] sm:$0xf] %v589
  %654 = vst [vmem:[%s4 + $0x14] sm:$0xf] %v590
  %655 = vst [vmem:[%s4 + $0x18] sm:$0xf] %v591
  %656 = vst [vmem:[%s4 + $0x1c] sm:$0xf] %v592
  %657 = vst [vmem:[%s4 + $0x20] sm:$0xf] %v593
  %658 = vst [vmem:[%s4 + $0x24] sm:$0xf] %v594
  %659 = vst [vmem:[%s4 + $0x28] sm:$0xf] %v595
  %660 = vst [vmem:[%s4 + $0x2c] sm:$0xf] %v596
  %661 = vst [vmem:[%s4 + $0x30] sm:$0xf] %v597
  %662 = vst [vmem:[%s4 + $0x34] sm:$0xf] %v598
  %663 = vst [vmem:[%s4 + $0x38] sm:$0xf] %v599
  %664 = vst [vmem:[%s4 + $0x3c] sm:$0xf] %v600
  %665 = vst [vmem:[%s4 + $0x40] sm:$0xf] %v601
  %666 = vst [vmem:[%s4 + $0x44] sm:$0xf] %v602
  %667 = vst [vmem:[%s4 + $0x48] sm:$0xf] %v603
  %668 = vst [vmem:[%s4 + $0x4c] sm:$0xf] %v604
  %669 = vst [vmem:[%s4 + $0x50] sm:$0xf] %v605
  %670 = vst [vmem:[%s4 + $0x54] sm:$0xf] %v606
  %671 = vst [vmem:[%s4 + $0x58] sm:$0xf] %v607
  %672 = vst [vmem:[%s4 + $0x5c] sm:$0xf] %v608
  %673 = vst [vmem:[%s4 + $0x60] sm:$0xf] %v609
  %674 = vst [vmem:[%s4 + $0x64] sm:$0xf] %v610
  %675 = vst [vmem:[%s4 + $0x68] sm:$0xf] %v611
  %676 = vst [vmem:[%s4 + $0x6c] sm:$0xf] %v612
  %677 = vst [vmem:[%s4 + $0x70] sm:$0xf] %v613
  %678 = vst [vmem:[%s4 + $0x74] sm:$0xf] %v614
  %679 = vst [vmem:[%s4 + $0x78] sm:$0xf] %v615
  %680 = vst [vmem:[%s4 + $0x7c] sm:$0xf] %v616
  %681 = vst [vmem:[%s4 + $0x80] sm:$0xf] %v617
  %682 = vst [vmem:[%s4 + $0x84] sm:$0xf] %v618
  %683 = vst [vmem:[%s4 + $0x88] sm:$0xf] %v619
  %684 = vst [vmem:[%s4 + $0x8c] sm:$0xf] %v620
  %685 = vst [vmem:[%s4 + $0x90] sm:$0xf] %v621
  %686 = vst [vmem:[%s4 + $0x94] sm:$0xf] %v622
  %687 = vst [vmem:[%s4 + $0x98] sm:$0xf] %v623
  %688 = vst [vmem:[%s4 + $0x9c] sm:$0xf] %v624
  %689 = vst [vmem:[%s4 + $0xa0] sm:$0xf] %v625
  %690 = vst [vmem:[%s4 + $0xa4] sm:$0xf] %v626
  %691 = vst [vmem:[%s4 + $0xa8] sm:$0xf] %v627
  %692 = vst [vmem:[%s4 + $0xac] sm:$0xf] %v628
  %693 = vst [vmem:[%s4 + $0xb0] sm:$0xf] %v629
  %694 = vst [vmem:[%s4 + $0xb4] sm:$0xf] %v630
  %695 = vst [vmem:[%s4 + $0xb8] sm:$0xf] %v631
  %696 = vst [vmem:[%s4 + $0xbc] sm:$0xf] %v632
  %697 = vst [vmem:[%s4 + $0xc0] sm:$0xf] %v633
  %698 = vst [vmem:[%s4 + $0xc4] sm:$0xf] %v634
  %699 = vst [vmem:[%s4 + $0xc8] sm:$0xf] %v635
  %700 = vst [vmem:[%s4 + $0xcc] sm:$0xf] %v636
  %701 = vst [vmem:[%s4 + $0xd0] sm:$0xf] %v637
  %702 = vst [vmem:[%s4 + $0xd4] sm:$0xf] %v638
  %703 = vst [vmem:[%s4 + $0xd8] sm:$0xf] %v639
  %704 = vst [vmem:[%s4 + $0xdc] sm:$0xf] %v640
  %705 = vst [vmem:[%s4 + $0xe0] sm:$0xf] %v641
  %706 = vst [vmem:[%s4 + $0xe4] sm:$0xf] %v642
  %707 = vst [vmem:[%s4 + $0xe8] sm:$0xf] %v643
  %708 = vst [vmem:[%s4 + $0xec] sm:$0xf] %v644
  %709 = vst [vmem:[%s4 + $0xf0] sm:$0xf] %v645
  %710 = vst [vmem:[%s4 + $0xf4] sm:$0xf] %v646
  %711 = vst [vmem:[%s4 + $0xf8] sm:$0xf] %v647
  %712 = vst [vmem:[%s4 + $0xfc] sm:$0xf] %v648
  // Predicated region
  $region18: #{dappm_forward.6} parent=0 // pred_check
    _
  $region19: #{dappm_forward.6} parent=0 // pred_check_branch
    %714 = sbr.rel (0) target = $region21
  $region20: #{dappm_forward.6} parent=0 // pred_region
    _
  $region21: #{dappm_forward.6} parent=0 // pred_fallthru
    _
  // Predicated region
  $region22: #{dappm_forward.6} parent=0 // pred_check
    _
  $region23: #{dappm_forward.6} parent=0 // pred_check_branch
    %716 = sbr.rel (0) target = $region25
  $region24: #{dappm_forward.6} parent=0 // pred_region
    _
  $region25: #{dappm_forward.6} parent=0 // pred_fallthru
    _

// kernel: dappm_forward.11
$region0: #{dappm_forward.11}
  #allocation0 [shape = 'u32[]', space=smem, size = 0x4, offset = 0x4, fixed_abs, tag = 'smem constant byte address 0x4 - core index']
  #allocation1 [shape = 'u32[72,128]{1,0:T(1,128)}', space=vmem, size = 0x9000, scoped, tag = 'internal scratch']
  %s0 = inlined_call_operand.vmem [shape: bf16[512,128], index: 0, kind: input, shape index: {}]
  %s1 = inlined_call_operand.vmem [shape: bf16[512,128], index: 1, kind: input, shape index: {}]
  %s2 = inlined_call_operand.vmem [shape: bf16[512,128], index: 2, kind: input, shape index: {}]
  %s3 = inlined_call_operand.vmem [shape: bf16[512,128], index: 3, kind: input, shape index: {}]
  %s4 = inlined_call_operand.vmem [shape: bf16[512,128], index: 4, kind: input, shape index: {}]
  %s5 = inlined_call_operand.vmem [shape: f32[512,8], index: 5, kind: input, shape index: {}]
  %s6 = inlined_call_operand.vmem [shape: f32[5,128], index: 6, kind: input, shape index: {}]
  %s7 = inlined_call_operand.vmem [shape: f32[5,128], index: 7, kind: input, shape index: {}]
  %s8 = inlined_call_operand.vmem [shape: f32[1,8], index: 8, kind: input, shape index: {}]
  %s9 = inlined_call_operand.vmem [shape: f32[1,8], index: 9, kind: input, shape index: {}]
  %s10 = inlined_call_operand.vmem [shape: bf16[5,128,128], index: 10, kind: input, shape index: {}]
  %s11 = inlined_call_operand.vmem [shape: bf16[8,128], index: 11, kind: input, shape index: {}]
  %s12 = inlined_call_operand.vmem [shape: f32[512,128], index: 12, kind: output, shape index: {}]
  %s13 = sld [smem:[#allocation0]]
  $region58: #{dappm_forward.11} parent=0
    _
  %s15 = ssub.s32 1, %s13
  %s16 = scalar_select 0, %s15, %s13
  // Predicated region
  $region2: #{dappm_forward.11} parent=0 // pred_check
    _
  $region3: #{dappm_forward.11} parent=0 // pred_check_branch
    %18 = sbr.rel (0) target = $region5
  $region4: #{dappm_forward.11} parent=0 // pred_region
    _
  $region5: #{dappm_forward.11} parent=0 // pred_fallthru
    _
  // Predicated region
  $region6: #{dappm_forward.11} parent=0 // pred_check
    _
  $region7: #{dappm_forward.11} parent=0 // pred_check_branch
    %20 = sbr.rel (0) target = $region9
  $region8: #{dappm_forward.11} parent=0 // pred_region
    _
  $region9: #{dappm_forward.11} parent=0 // pred_fallthru
    _
  // Predicated region
  $region10: #{dappm_forward.11} parent=0 // pred_check
    _
  $region11: #{dappm_forward.11} parent=0 // pred_check_branch
    %22 = sbr.rel (0) target = $region13
  $region12: #{dappm_forward.11} parent=0 // pred_region
    _
  $region13: #{dappm_forward.11} parent=0 // pred_fallthru
    _
  // Predicated region
  $region14: #{dappm_forward.11} parent=0 // pred_check
    _
  $region15: #{dappm_forward.11} parent=0 // pred_check_branch
    %24 = sbr.rel (0) target = $region17
  $region16: #{dappm_forward.11} parent=0 // pred_region
    _
  $region17: #{dappm_forward.11} parent=0 // pred_fallthru
    _
  // Predicated region
  $region18: #{dappm_forward.11} parent=0 // pred_check
    _
  $region19: #{dappm_forward.11} parent=0 // pred_check_branch
    %26 = sbr.rel (0) target = $region21
  $region20: #{dappm_forward.11} parent=0 // pred_region
    _
  $region21: #{dappm_forward.11} parent=0 // pred_fallthru
    _
  // Predicated region
  $region22: #{dappm_forward.11} parent=0 // pred_check
    _
  $region23: #{dappm_forward.11} parent=0 // pred_check_branch
    %28 = sbr.rel (0) target = $region25
  $region24: #{dappm_forward.11} parent=0 // pred_region
    _
  $region25: #{dappm_forward.11} parent=0 // pred_fallthru
    _
  // Predicated region
  $region26: #{dappm_forward.11} parent=0 // pred_check
    _
  $region27: #{dappm_forward.11} parent=0 // pred_check_branch
    %30 = sbr.rel (0) target = $region29
  $region28: #{dappm_forward.11} parent=0 // pred_region
    _
  $region29: #{dappm_forward.11} parent=0 // pred_fallthru
    _
  // Predicated region
  $region30: #{dappm_forward.11} parent=0 // pred_check
    _
  $region31: #{dappm_forward.11} parent=0 // pred_check_branch
    %32 = sbr.rel (0) target = $region33
  $region32: #{dappm_forward.11} parent=0 // pred_region
    _
  $region33: #{dappm_forward.11} parent=0 // pred_fallthru
    _
  // Predicated region
  $region34: #{dappm_forward.11} parent=0 // pred_check
    _
  $region35: #{dappm_forward.11} parent=0 // pred_check_branch
    %34 = sbr.rel (0) target = $region37
  $region36: #{dappm_forward.11} parent=0 // pred_region
    _
  $region37: #{dappm_forward.11} parent=0 // pred_fallthru
    _
  // Predicated region
  $region38: #{dappm_forward.11} parent=0 // pred_check
    _
  $region39: #{dappm_forward.11} parent=0 // pred_check_branch
    %36 = sbr.rel (0) target = $region41
  $region40: #{dappm_forward.11} parent=0 // pred_region
    _
  $region41: #{dappm_forward.11} parent=0 // pred_fallthru
    _
  // Predicated region
  $region42: #{dappm_forward.11} parent=0 // pred_check
    _
  $region43: #{dappm_forward.11} parent=0 // pred_check_branch
    %38 = sbr.rel (0) target = $region45
  $region44: #{dappm_forward.11} parent=0 // pred_region
    _
  $region45: #{dappm_forward.11} parent=0 // pred_fallthru
    _
  // Predicated region
  $region46: #{dappm_forward.11} parent=0 // pred_check
    _
  $region47: #{dappm_forward.11} parent=0 // pred_check_branch
    %40 = sbr.rel (0) target = $region49
  $region48: #{dappm_forward.11} parent=0 // pred_region
    _
  $region49: #{dappm_forward.11} parent=0 // pred_fallthru
    _
  %v42 = vld [vmem:[%s0] sm:$0xf]
  %v43 = vld [vmem:[%s0 + $0x4] sm:$0xf]
  %v44 = vld [vmem:[%s0 + $0x8] sm:$0xf]
  %v45 = vld [vmem:[%s0 + $0xc] sm:$0xf]
  %v46 = vld [vmem:[%s0 + $0x10] sm:$0xf]
  %v47 = vld [vmem:[%s0 + $0x14] sm:$0xf]
  %v48 = vld [vmem:[%s0 + $0x18] sm:$0xf]
  %v49 = vld [vmem:[%s0 + $0x1c] sm:$0xf]
  %v50 = vld [vmem:[%s0 + $0x20] sm:$0xf]
  %v51 = vld [vmem:[%s0 + $0x24] sm:$0xf]
  %v52 = vld [vmem:[%s0 + $0x28] sm:$0xf]
  %v53 = vld [vmem:[%s0 + $0x2c] sm:$0xf]
  %v54 = vld [vmem:[%s0 + $0x30] sm:$0xf]
  %v55 = vld [vmem:[%s0 + $0x34] sm:$0xf]
  %v56 = vld [vmem:[%s0 + $0x38] sm:$0xf]
  %v57 = vld [vmem:[%s0 + $0x3c] sm:$0xf]
  %v58 = vld [vmem:[%s0 + $0x40] sm:$0xf]
  %v59 = vld [vmem:[%s0 + $0x44] sm:$0xf]
  %v60 = vld [vmem:[%s0 + $0x48] sm:$0xf]
  %v61 = vld [vmem:[%s0 + $0x4c] sm:$0xf]
  %v62 = vld [vmem:[%s0 + $0x50] sm:$0xf]
  %v63 = vld [vmem:[%s0 + $0x54] sm:$0xf]
  %v64 = vld [vmem:[%s0 + $0x58] sm:$0xf]
  %v65 = vld [vmem:[%s0 + $0x5c] sm:$0xf]
  %v66 = vld [vmem:[%s0 + $0x60] sm:$0xf]
  %v67 = vld [vmem:[%s0 + $0x64] sm:$0xf]
  %v68 = vld [vmem:[%s0 + $0x68] sm:$0xf]
  %v69 = vld [vmem:[%s0 + $0x6c] sm:$0xf]
  %v70 = vld [vmem:[%s0 + $0x70] sm:$0xf]
  %v71 = vld [vmem:[%s0 + $0x74] sm:$0xf]
  %v72 = vld [vmem:[%s0 + $0x78] sm:$0xf]
  %v73 = vld [vmem:[%s0 + $0x7c] sm:$0xf]
  %v74 = vld [vmem:[%s0 + $0x80] sm:$0xf]
  %v75 = vld [vmem:[%s0 + $0x84] sm:$0xf]
  %v76 = vld [vmem:[%s0 + $0x88] sm:$0xf]
  %v77 = vld [vmem:[%s0 + $0x8c] sm:$0xf]
  %v78 = vld [vmem:[%s0 + $0x90] sm:$0xf]
  %v79 = vld [vmem:[%s0 + $0x94] sm:$0xf]
  %v80 = vld [vmem:[%s0 + $0x98] sm:$0xf]
  %v81 = vld [vmem:[%s0 + $0x9c] sm:$0xf]
  %v82 = vld [vmem:[%s0 + $0xa0] sm:$0xf]
  %v83 = vld [vmem:[%s0 + $0xa4] sm:$0xf]
  %v84 = vld [vmem:[%s0 + $0xa8] sm:$0xf]
  %v85 = vld [vmem:[%s0 + $0xac] sm:$0xf]
  %v86 = vld [vmem:[%s0 + $0xb0] sm:$0xf]
  %v87 = vld [vmem:[%s0 + $0xb4] sm:$0xf]
  %v88 = vld [vmem:[%s0 + $0xb8] sm:$0xf]
  %v89 = vld [vmem:[%s0 + $0xbc] sm:$0xf]
  %v90 = vld [vmem:[%s0 + $0xc0] sm:$0xf]
  %v91 = vld [vmem:[%s0 + $0xc4] sm:$0xf]
  %v92 = vld [vmem:[%s0 + $0xc8] sm:$0xf]
  %v93 = vld [vmem:[%s0 + $0xcc] sm:$0xf]
  %v94 = vld [vmem:[%s0 + $0xd0] sm:$0xf]
  %v95 = vld [vmem:[%s0 + $0xd4] sm:$0xf]
  %v96 = vld [vmem:[%s0 + $0xd8] sm:$0xf]
  %v97 = vld [vmem:[%s0 + $0xdc] sm:$0xf]
  %v98 = vld [vmem:[%s0 + $0xe0] sm:$0xf]
  %v99 = vld [vmem:[%s0 + $0xe4] sm:$0xf]
  %v100 = vld [vmem:[%s0 + $0xe8] sm:$0xf]
  %v101 = vld [vmem:[%s0 + $0xec] sm:$0xf]
  %v102 = vld [vmem:[%s0 + $0xf0] sm:$0xf]
  %v103 = vld [vmem:[%s0 + $0xf4] sm:$0xf]
  %v104 = vld [vmem:[%s0 + $0xf8] sm:$0xf]
  %v105 = vld [vmem:[%s0 + $0xfc] sm:$0xf]
  %v106 = vunpack.c.l.bf16 %v42
  %v107 = vunpack.c.l.bf16 %v43
  %v108 = vunpack.c.l.bf16 %v44
  %v109 = vunpack.c.l.bf16 %v45
  %v110 = vunpack.c.l.bf16 %v46
  %v111 = vunpack.c.l.bf16 %v47
  %v112 = vunpack.c.l.bf16 %v48
  %v113 = vunpack.c.l.bf16 %v49
  %v114 = vunpack.c.l.bf16 %v50
  %v115 = vunpack.c.l.bf16 %v51
  %v116 = vunpack.c.l.bf16 %v52
  %v117 = vunpack.c.l.bf16 %v53
  %v118 = vunpack.c.l.bf16 %v54
  %v119 = vunpack.c.l.bf16 %v55
  %v120 = vunpack.c.l.bf16 %v56
  %v121 = vunpack.c.l.bf16 %v57
  %v122 = vunpack.c.l.bf16 %v58
  %v123 = vunpack.c.l.bf16 %v59
  %v124 = vunpack.c.l.bf16 %v60
  %v125 = vunpack.c.l.bf16 %v61
  %v126 = vunpack.c.l.bf16 %v62
  %v127 = vunpack.c.l.bf16 %v63
  %v128 = vunpack.c.l.bf16 %v64
  %v129 = vunpack.c.l.bf16 %v65
  %v130 = vunpack.c.l.bf16 %v66
  %v131 = vunpack.c.l.bf16 %v67
  %v132 = vunpack.c.l.bf16 %v68
  %v133 = vunpack.c.l.bf16 %v69
  %v134 = vunpack.c.l.bf16 %v70
  %v135 = vunpack.c.l.bf16 %v71
  %v136 = vunpack.c.l.bf16 %v72
  %v137 = vunpack.c.l.bf16 %v73
  %v138 = vunpack.c.l.bf16 %v74
  %v139 = vunpack.c.l.bf16 %v75
  %v140 = vunpack.c.l.bf16 %v76
  %v141 = vunpack.c.l.bf16 %v77
  %v142 = vunpack.c.l.bf16 %v78
  %v143 = vunpack.c.l.bf16 %v79
  %v144 = vunpack.c.l.bf16 %v80
  %v145 = vunpack.c.l.bf16 %v81
  %v146 = vunpack.c.l.bf16 %v82
  %v147 = vunpack.c.l.bf16 %v83
  %v148 = vunpack.c.l.bf16 %v84
  %v149 = vunpack.c.l.bf16 %v85
  %v150 = vunpack.c.l.bf16 %v86
  %v151 = vunpack.c.l.bf16 %v87
  %v152 = vunpack.c.l.bf16 %v88
  %v153 = vunpack.c.l.bf16 %v89
  %v154 = vunpack.c.l.bf16 %v90
  %v155 = vunpack.c.l.bf16 %v91
  %v156 = vunpack.c.l.bf16 %v92
  %v157 = vunpack.c.l.bf16 %v93
  %v158 = vunpack.c.l.bf16 %v94
  %v159 = vunpack.c.l.bf16 %v95
  %v160 = vunpack.c.l.bf16 %v96
  %v161 = vunpack.c.l.bf16 %v97
  %v162 = vunpack.c.l.bf16 %v98
  %v163 = vunpack.c.l.bf16 %v99
  %v164 = vunpack.c.l.bf16 %v100
  %v165 = vunpack.c.l.bf16 %v101
  %v166 = vunpack.c.l.bf16 %v102
  %v167 = vunpack.c.l.bf16 %v103
  %v168 = vunpack.c.l.bf16 %v104
  %v169 = vunpack.c.l.bf16 %v105
  %v170 = vld [vmem:[%s6] sm:$0x1]
  %v171 = vperm.slane %v170, 0
  %v172 = vmul.f32 %v106, %v171
  %v173 = vmul.f32 %v107, %v171
  %v174 = vmul.f32 %v108, %v171
  %v175 = vmul.f32 %v109, %v171
  %v176 = vmul.f32 %v110, %v171
  %v177 = vmul.f32 %v111, %v171
  %v178 = vmul.f32 %v112, %v171
  %v179 = vmul.f32 %v113, %v171
  %v180 = vmul.f32 %v114, %v171
  %v181 = vmul.f32 %v115, %v171
  %v182 = vmul.f32 %v116, %v171
  %v183 = vmul.f32 %v117, %v171
  %v184 = vmul.f32 %v118, %v171
  %v185 = vmul.f32 %v119, %v171
  %v186 = vmul.f32 %v120, %v171
  %v187 = vmul.f32 %v121, %v171
  %v188 = vmul.f32 %v122, %v171
  %v189 = vmul.f32 %v123, %v171
  %v190 = vmul.f32 %v124, %v171
  %v191 = vmul.f32 %v125, %v171
  %v192 = vmul.f32 %v126, %v171
  %v193 = vmul.f32 %v127, %v171
  %v194 = vmul.f32 %v128, %v171
  %v195 = vmul.f32 %v129, %v171
  %v196 = vmul.f32 %v130, %v171
  %v197 = vmul.f32 %v131, %v171
  %v198 = vmul.f32 %v132, %v171
  %v199 = vmul.f32 %v133, %v171
  %v200 = vmul.f32 %v134, %v171
  %v201 = vmul.f32 %v135, %v171
  %v202 = vmul.f32 %v136, %v171
  %v203 = vmul.f32 %v137, %v171
  %v204 = vmul.f32 %v138, %v171
  %v205 = vmul.f32 %v139, %v171
  %v206 = vmul.f32 %v140, %v171
  %v207 = vmul.f32 %v141, %v171
  %v208 = vmul.f32 %v142, %v171
  %v209 = vmul.f32 %v143, %v171
  %v210 = vmul.f32 %v144, %v171
  %v211 = vmul.f32 %v145, %v171
  %v212 = vmul.f32 %v146, %v171
  %v213 = vmul.f32 %v147, %v171
  %v214 = vmul.f32 %v148, %v171
  %v215 = vmul.f32 %v149, %v171
  %v216 = vmul.f32 %v150, %v171
  %v217 = vmul.f32 %v151, %v171
  %v218 = vmul.f32 %v152, %v171
  %v219 = vmul.f32 %v153, %v171
  %v220 = vmul.f32 %v154, %v171
  %v221 = vmul.f32 %v155, %v171
  %v222 = vmul.f32 %v156, %v171
  %v223 = vmul.f32 %v157, %v171
  %v224 = vmul.f32 %v158, %v171
  %v225 = vmul.f32 %v159, %v171
  %v226 = vmul.f32 %v160, %v171
  %v227 = vmul.f32 %v161, %v171
  %v228 = vmul.f32 %v162, %v171
  %v229 = vmul.f32 %v163, %v171
  %v230 = vmul.f32 %v164, %v171
  %v231 = vmul.f32 %v165, %v171
  %v232 = vmul.f32 %v166, %v171
  %v233 = vmul.f32 %v167, %v171
  %v234 = vmul.f32 %v168, %v171
  %v235 = vmul.f32 %v169, %v171
  %v236 = vld [vmem:[%s7] sm:$0x1]
  %v237 = vperm.slane %v236, 0
  %v238 = vadd.f32 %v172, %v237
  %v239 = vadd.f32 %v173, %v237
  %v240 = vadd.f32 %v174, %v237
  %v241 = vadd.f32 %v175, %v237
  %v242 = vadd.f32 %v176, %v237
  %v243 = vadd.f32 %v177, %v237
  %v244 = vadd.f32 %v178, %v237
  %v245 = vadd.f32 %v179, %v237
  %v246 = vadd.f32 %v180, %v237
  %v247 = vadd.f32 %v181, %v237
  %v248 = vadd.f32 %v182, %v237
  %v249 = vadd.f32 %v183, %v237
  %v250 = vadd.f32 %v184, %v237
  %v251 = vadd.f32 %v185, %v237
  %v252 = vadd.f32 %v186, %v237
  %v253 = vadd.f32 %v187, %v237
  %v254 = vadd.f32 %v188, %v237
  %v255 = vadd.f32 %v189, %v237
  %v256 = vadd.f32 %v190, %v237
  %v257 = vadd.f32 %v191, %v237
  %v258 = vadd.f32 %v192, %v237
  %v259 = vadd.f32 %v193, %v237
  %v260 = vadd.f32 %v194, %v237
  %v261 = vadd.f32 %v195, %v237
  %v262 = vadd.f32 %v196, %v237
  %v263 = vadd.f32 %v197, %v237
  %v264 = vadd.f32 %v198, %v237
  %v265 = vadd.f32 %v199, %v237
  %v266 = vadd.f32 %v200, %v237
  %v267 = vadd.f32 %v201, %v237
  %v268 = vadd.f32 %v202, %v237
  %v269 = vadd.f32 %v203, %v237
  %v270 = vadd.f32 %v204, %v237
  %v271 = vadd.f32 %v205, %v237
  %v272 = vadd.f32 %v206, %v237
  %v273 = vadd.f32 %v207, %v237
  %v274 = vadd.f32 %v208, %v237
  %v275 = vadd.f32 %v209, %v237
  %v276 = vadd.f32 %v210, %v237
  %v277 = vadd.f32 %v211, %v237
  %v278 = vadd.f32 %v212, %v237
  %v279 = vadd.f32 %v213, %v237
  %v280 = vadd.f32 %v214, %v237
  %v281 = vadd.f32 %v215, %v237
  %v282 = vadd.f32 %v216, %v237
  %v283 = vadd.f32 %v217, %v237
  %v284 = vadd.f32 %v218, %v237
  %v285 = vadd.f32 %v219, %v237
  %v286 = vadd.f32 %v220, %v237
  %v287 = vadd.f32 %v221, %v237
  %v288 = vadd.f32 %v222, %v237
  %v289 = vadd.f32 %v223, %v237
  %v290 = vadd.f32 %v224, %v237
  %v291 = vadd.f32 %v225, %v237
  %v292 = vadd.f32 %v226, %v237
  %v293 = vadd.f32 %v227, %v237
  %v294 = vadd.f32 %v228, %v237
  %v295 = vadd.f32 %v229, %v237
  %v296 = vadd.f32 %v230, %v237
  %v297 = vadd.f32 %v231, %v237
  %v298 = vadd.f32 %v232, %v237
  %v299 = vadd.f32 %v233, %v237
  %v300 = vadd.f32 %v234, %v237
  %v301 = vadd.f32 %v235, %v237
  %v302 = vmax.f32 %v238, 0.0
  %v303 = vmax.f32 %v239, 0.0
  %v304 = vmax.f32 %v240, 0.0
  %v305 = vmax.f32 %v241, 0.0
  %v306 = vmax.f32 %v242, 0.0
  %v307 = vmax.f32 %v243, 0.0
  %v308 = vmax.f32 %v244, 0.0
  %v309 = vmax.f32 %v245, 0.0
  %v310 = vmax.f32 %v246, 0.0
  %v311 = vmax.f32 %v247, 0.0
  %v312 = vmax.f32 %v248, 0.0
  %v313 = vmax.f32 %v249, 0.0
  %v314 = vmax.f32 %v250, 0.0
  %v315 = vmax.f32 %v251, 0.0
  %v316 = vmax.f32 %v252, 0.0
  %v317 = vmax.f32 %v253, 0.0
  %v318 = vmax.f32 %v254, 0.0
  %v319 = vmax.f32 %v255, 0.0
  %v320 = vmax.f32 %v256, 0.0
  %v321 = vmax.f32 %v257, 0.0
  %v322 = vmax.f32 %v258, 0.0
  %v323 = vmax.f32 %v259, 0.0
  %v324 = vmax.f32 %v260, 0.0
  %v325 = vmax.f32 %v261, 0.0
  %v326 = vmax.f32 %v262, 0.0
  %v327 = vmax.f32 %v263, 0.0
  %v328 = vmax.f32 %v264, 0.0
  %v329 = vmax.f32 %v265, 0.0
  %v330 = vmax.f32 %v266, 0.0
  %v331 = vmax.f32 %v267, 0.0
  %v332 = vmax.f32 %v268, 0.0
  %v333 = vmax.f32 %v269, 0.0
  %v334 = vmax.f32 %v270, 0.0
  %v335 = vmax.f32 %v271, 0.0
  %v336 = vmax.f32 %v272, 0.0
  %v337 = vmax.f32 %v273, 0.0
  %v338 = vmax.f32 %v274, 0.0
  %v339 = vmax.f32 %v275, 0.0
  %v340 = vmax.f32 %v276, 0.0
  %v341 = vmax.f32 %v277, 0.0
  %v342 = vmax.f32 %v278, 0.0
  %v343 = vmax.f32 %v279, 0.0
  %v344 = vmax.f32 %v280, 0.0
  %v345 = vmax.f32 %v281, 0.0
  %v346 = vmax.f32 %v282, 0.0
  %v347 = vmax.f32 %v283, 0.0
  %v348 = vmax.f32 %v284, 0.0
  %v349 = vmax.f32 %v285, 0.0
  %v350 = vmax.f32 %v286, 0.0
  %v351 = vmax.f32 %v287, 0.0
  %v352 = vmax.f32 %v288, 0.0
  %v353 = vmax.f32 %v289, 0.0
  %v354 = vmax.f32 %v290, 0.0
  %v355 = vmax.f32 %v291, 0.0
  %v356 = vmax.f32 %v292, 0.0
  %v357 = vmax.f32 %v293, 0.0
  %v358 = vmax.f32 %v294, 0.0
  %v359 = vmax.f32 %v295, 0.0
  %v360 = vmax.f32 %v296, 0.0
  %v361 = vmax.f32 %v297, 0.0
  %v362 = vmax.f32 %v298, 0.0
  %v363 = vmax.f32 %v299, 0.0
  %v364 = vmax.f32 %v300, 0.0
  %v365 = vmax.f32 %v301, 0.0
  %v366 = vpack.c.bf16 %v303, %v302
  %v367 = vpack.c.bf16 %v305, %v304
  %v368 = vpack.c.bf16 %v307, %v306
  %v369 = vpack.c.bf16 %v309, %v308
  %v370 = vpack.c.bf16 %v311, %v310
  %v371 = vpack.c.bf16 %v313, %v312
  %v372 = vpack.c.bf16 %v315, %v314
  %v373 = vpack.c.bf16 %v317, %v316
  %v374 = vpack.c.bf16 %v319, %v318
  %v375 = vpack.c.bf16 %v321, %v320
  %v376 = vpack.c.bf16 %v323, %v322
  %v377 = vpack.c.bf16 %v325, %v324
  %v378 = vpack.c.bf16 %v327, %v326
  %v379 = vpack.c.bf16 %v329, %v328
  %v380 = vpack.c.bf16 %v331, %v330
  %v381 = vpack.c.bf16 %v333, %v332
  %v382 = vpack.c.bf16 %v335, %v334
  %v383 = vpack.c.bf16 %v337, %v336
  %v384 = vpack.c.bf16 %v339, %v338
  %v385 = vpack.c.bf16 %v341, %v340
  %v386 = vpack.c.bf16 %v343, %v342
  %v387 = vpack.c.bf16 %v345, %v344
  %v388 = vpack.c.bf16 %v347, %v346
  %v389 = vpack.c.bf16 %v349, %v348
  %v390 = vpack.c.bf16 %v351, %v350
  %v391 = vpack.c.bf16 %v353, %v352
  %v392 = vpack.c.bf16 %v355, %v354
  %v393 = vpack.c.bf16 %v357, %v356
  %v394 = vpack.c.bf16 %v359, %v358
  %v395 = vpack.c.bf16 %v361, %v360
  %v396 = vpack.c.bf16 %v363, %v362
  %v397 = vpack.c.bf16 %v365, %v364
  %v398 = vld [vmem:[%s10] sm:$0xf]
  %v399 = vld [vmem:[%s10 + $0x4] sm:$0xf]
  %v400 = vld [vmem:[%s10 + $0x8] sm:$0xf]
  %v401 = vld [vmem:[%s10 + $0xc] sm:$0xf]
  %v402 = vld [vmem:[%s10 + $0x10] sm:$0xf]
  %v403 = vld [vmem:[%s10 + $0x14] sm:$0xf]
  %v404 = vld [vmem:[%s10 + $0x18] sm:$0xf]
  %v405 = vld [vmem:[%s10 + $0x1c] sm:$0xf]
  %v406 = vld [vmem:[%s10 + $0x20] sm:$0xf]
  %v407 = vld [vmem:[%s10 + $0x24] sm:$0xf]
  %v408 = vld [vmem:[%s10 + $0x28] sm:$0xf]
  %v409 = vld [vmem:[%s10 + $0x2c] sm:$0xf]
  %v410 = vld [vmem:[%s10 + $0x30] sm:$0xf]
  %v411 = vld [vmem:[%s10 + $0x34] sm:$0xf]
  %v412 = vld [vmem:[%s10 + $0x38] sm:$0xf]
  %v413 = vld [vmem:[%s10 + $0x3c] sm:$0xf]
  %v414 = vld [vmem:[%s1] sm:$0xf]
  %v415 = vld [vmem:[%s1 + $0x4] sm:$0xf]
  %v416 = vld [vmem:[%s1 + $0x8] sm:$0xf]
  %v417 = vld [vmem:[%s1 + $0xc] sm:$0xf]
  %v418 = vld [vmem:[%s1 + $0x10] sm:$0xf]
  %v419 = vld [vmem:[%s1 + $0x14] sm:$0xf]
  %v420 = vld [vmem:[%s1 + $0x18] sm:$0xf]
  %v421 = vld [vmem:[%s1 + $0x1c] sm:$0xf]
  %v422 = vld [vmem:[%s1 + $0x20] sm:$0xf]
  %v423 = vld [vmem:[%s1 + $0x24] sm:$0xf]
  %v424 = vld [vmem:[%s1 + $0x28] sm:$0xf]
  %v425 = vld [vmem:[%s1 + $0x2c] sm:$0xf]
  %v426 = vld [vmem:[%s1 + $0x30] sm:$0xf]
  %v427 = vld [vmem:[%s1 + $0x34] sm:$0xf]
  %v428 = vld [vmem:[%s1 + $0x38] sm:$0xf]
  %v429 = vld [vmem:[%s1 + $0x3c] sm:$0xf]
  %v430 = vld [vmem:[%s1 + $0x40] sm:$0xf]
  %v431 = vld [vmem:[%s1 + $0x44] sm:$0xf]
  %v432 = vld [vmem:[%s1 + $0x48] sm:$0xf]
  %v433 = vld [vmem:[%s1 + $0x4c] sm:$0xf]
  %v434 = vld [vmem:[%s1 + $0x50] sm:$0xf]
  %v435 = vld [vmem:[%s1 + $0x54] sm:$0xf]
  %v436 = vld [vmem:[%s1 + $0x58] sm:$0xf]
  %v437 = vld [vmem:[%s1 + $0x5c] sm:$0xf]
  %v438 = vld [vmem:[%s1 + $0x60] sm:$0xf]
  %v439 = vld [vmem:[%s1 + $0x64] sm:$0xf]
  %v440 = vld [vmem:[%s1 + $0x68] sm:$0xf]
  %v441 = vld [vmem:[%s1 + $0x6c] sm:$0xf]
  %v442 = vld [vmem:[%s1 + $0x70] sm:$0xf]
  %v443 = vld [vmem:[%s1 + $0x74] sm:$0xf]
  %v444 = vld [vmem:[%s1 + $0x78] sm:$0xf]
  %v445 = vld [vmem:[%s1 + $0x7c] sm:$0xf]
  %v446 = vld [vmem:[%s1 + $0x80] sm:$0xf]
  %v447 = vld [vmem:[%s1 + $0x84] sm:$0xf]
  %v448 = vld [vmem:[%s1 + $0x88] sm:$0xf]
  %v449 = vld [vmem:[%s1 + $0x8c] sm:$0xf]
  %v450 = vld [vmem:[%s1 + $0x90] sm:$0xf]
  %v451 = vld [vmem:[%s1 + $0x94] sm:$0xf]
  %v452 = vld [vmem:[%s1 + $0x98] sm:$0xf]
  %v453 = vld [vmem:[%s1 + $0x9c] sm:$0xf]
  %v454 = vld [vmem:[%s1 + $0xa0] sm:$0xf]
  %v455 = vld [vmem:[%s1 + $0xa4] sm:$0xf]
  %v456 = vld [vmem:[%s1 + $0xa8] sm:$0xf]
  %v457 = vld [vmem:[%s1 + $0xac] sm:$0xf]
  %v458 = vld [vmem:[%s1 + $0xb0] sm:$0xf]
  %v459 = vld [vmem:[%s1 + $0xb4] sm:$0xf]
  %v460 = vld [vmem:[%s1 + $0xb8] sm:$0xf]
  %v461 = vld [vmem:[%s1 + $0xbc] sm:$0xf]
  %v462 = vld [vmem:[%s1 + $0xc0] sm:$0xf]
  %v463 = vld [vmem:[%s1 + $0xc4] sm:$0xf]
  %v464 = vld [vmem:[%s1 + $0xc8] sm:$0xf]
  %v465 = vld [vmem:[%s1 + $0xcc] sm:$0xf]
  %v466 = vld [vmem:[%s1 + $0xd0] sm:$0xf]
  %v467 = vld [vmem:[%s1 + $0xd4] sm:$0xf]
  %v468 = vld [vmem:[%s1 + $0xd8] sm:$0xf]
  %v469 = vld [vmem:[%s1 + $0xdc] sm:$0xf]
  %v470 = vld [vmem:[%s1 + $0xe0] sm:$0xf]
  %v471 = vld [vmem:[%s1 + $0xe4] sm:$0xf]
  %v472 = vld [vmem:[%s1 + $0xe8] sm:$0xf]
  %v473 = vld [vmem:[%s1 + $0xec] sm:$0xf]
  %v474 = vld [vmem:[%s1 + $0xf0] sm:$0xf]
  %v475 = vld [vmem:[%s1 + $0xf4] sm:$0xf]
  %v476 = vld [vmem:[%s1 + $0xf8] sm:$0xf]
  %v477 = vld [vmem:[%s1 + $0xfc] sm:$0xf]
  %v478 = vunpack.c.l.bf16 %v414
  %v479 = vunpack.c.l.bf16 %v415
  %v480 = vunpack.c.l.bf16 %v416
  %v481 = vunpack.c.l.bf16 %v417
  %v482 = vunpack.c.l.bf16 %v418
  %v483 = vunpack.c.l.bf16 %v419
  %v484 = vunpack.c.l.bf16 %v420
  %v485 = vunpack.c.l.bf16 %v421
  %v486 = vunpack.c.l.bf16 %v422
  %v487 = vunpack.c.l.bf16 %v423
  %v488 = vunpack.c.l.bf16 %v424
  %v489 = vunpack.c.l.bf16 %v425
  %v490 = vunpack.c.l.bf16 %v426
  %v491 = vunpack.c.l.bf16 %v427
  %v492 = vunpack.c.l.bf16 %v428
  %v493 = vunpack.c.l.bf16 %v429
  %v494 = vunpack.c.l.bf16 %v430
  %v495 = vunpack.c.l.bf16 %v431
  %v496 = vunpack.c.l.bf16 %v432
  %v497 = vunpack.c.l.bf16 %v433
  %v498 = vunpack.c.l.bf16 %v434
  %v499 = vunpack.c.l.bf16 %v435
  %v500 = vunpack.c.l.bf16 %v436
  %v501 = vunpack.c.l.bf16 %v437
  %v502 = vunpack.c.l.bf16 %v438
  %v503 = vunpack.c.l.bf16 %v439
  %v504 = vunpack.c.l.bf16 %v440
  %v505 = vunpack.c.l.bf16 %v441
  %v506 = vunpack.c.l.bf16 %v442
  %v507 = vunpack.c.l.bf16 %v443
  %v508 = vunpack.c.l.bf16 %v444
  %v509 = vunpack.c.l.bf16 %v445
  %v510 = vunpack.c.l.bf16 %v446
  %v511 = vunpack.c.l.bf16 %v447
  %v512 = vunpack.c.l.bf16 %v448
  %v513 = vunpack.c.l.bf16 %v449
  %v514 = vunpack.c.l.bf16 %v450
  %v515 = vunpack.c.l.bf16 %v451
  %v516 = vunpack.c.l.bf16 %v452
  %v517 = vunpack.c.l.bf16 %v453
  %v518 = vunpack.c.l.bf16 %v454
  %v519 = vunpack.c.l.bf16 %v455
  %v520 = vunpack.c.l.bf16 %v456
  %v521 = vunpack.c.l.bf16 %v457
  %v522 = vunpack.c.l.bf16 %v458
  %v523 = vunpack.c.l.bf16 %v459
  %v524 = vunpack.c.l.bf16 %v460
  %v525 = vunpack.c.l.bf16 %v461
  %v526 = vunpack.c.l.bf16 %v462
  %v527 = vunpack.c.l.bf16 %v463
  %v528 = vunpack.c.l.bf16 %v464
  %v529 = vunpack.c.l.bf16 %v465
  %v530 = vunpack.c.l.bf16 %v466
  %v531 = vunpack.c.l.bf16 %v467
  %v532 = vunpack.c.l.bf16 %v468
  %v533 = vunpack.c.l.bf16 %v469
  %v534 = vunpack.c.l.bf16 %v470
  %v535 = vunpack.c.l.bf16 %v471
  %v536 = vunpack.c.l.bf16 %v472
  %v537 = vunpack.c.l.bf16 %v473
  %v538 = vunpack.c.l.bf16 %v474
  %v539 = vunpack.c.l.bf16 %v475
  %v540 = vunpack.c.l.bf16 %v476
  %v541 = vunpack.c.l.bf16 %v477
  %v542 = vld [vmem:[%s6 + $0x1] sm:$0x1]
  %v543 = vperm.slane %v542, 0
  %v544 = vmul.f32 %v478, %v543
  %v545 = vmul.f32 %v479, %v543
  %v546 = vmul.f32 %v480, %v543
  %v547 = vmul.f32 %v481, %v543
  %v548 = vmul.f32 %v482, %v543
  %v549 = vmul.f32 %v483, %v543
  %v550 = vmul.f32 %v484, %v543
  %v551 = vmul.f32 %v485, %v543
  %v552 = vmul.f32 %v486, %v543
  %v553 = vmul.f32 %v487, %v543
  %v554 = vmul.f32 %v488, %v543
  %v555 = vmul.f32 %v489, %v543
  %v556 = vmul.f32 %v490, %v543
  %v557 = vmul.f32 %v491, %v543
  %v558 = vmul.f32 %v492, %v543
  %v559 = vmul.f32 %v493, %v543
  %v560 = vmul.f32 %v494, %v543
  %v561 = vmul.f32 %v495, %v543
  %v562 = vmul.f32 %v496, %v543
  %v563 = vmul.f32 %v497, %v543
  %v564 = vmul.f32 %v498, %v543
  %v565 = vmul.f32 %v499, %v543
  %v566 = vmul.f32 %v500, %v543
  %v567 = vmul.f32 %v501, %v543
  %v568 = vmul.f32 %v502, %v543
  %v569 = vmul.f32 %v503, %v543
  %v570 = vmul.f32 %v504, %v543
  %v571 = vmul.f32 %v505, %v543
  %v572 = vmul.f32 %v506, %v543
  %v573 = vmul.f32 %v507, %v543
  %v574 = vmul.f32 %v508, %v543
  %v575 = vmul.f32 %v509, %v543
  %v576 = vmul.f32 %v510, %v543
  %v577 = vmul.f32 %v511, %v543
  %v578 = vmul.f32 %v512, %v543
  %v579 = vmul.f32 %v513, %v543
  %v580 = vmul.f32 %v514, %v543
  %v581 = vmul.f32 %v515, %v543
  %v582 = vmul.f32 %v516, %v543
  %v583 = vmul.f32 %v517, %v543
  %v584 = vmul.f32 %v518, %v543
  %v585 = vmul.f32 %v519, %v543
  %v586 = vmul.f32 %v520, %v543
  %v587 = vmul.f32 %v521, %v543
  %v588 = vmul.f32 %v522, %v543
  %v589 = vmul.f32 %v523, %v543
  %v590 = vmul.f32 %v524, %v543
  %v591 = vmul.f32 %v525, %v543
  %v592 = vmul.f32 %v526, %v543
  %v593 = vmul.f32 %v527, %v543
  %v594 = vmul.f32 %v528, %v543
  %v595 = vmul.f32 %v529, %v543
  %v596 = vmul.f32 %v530, %v543
  %v597 = vmul.f32 %v531, %v543
  %v598 = vmul.f32 %v532, %v543
  %v599 = vmul.f32 %v533, %v543
  %v600 = vmul.f32 %v534, %v543
  %v601 = vmul.f32 %v535, %v543
  %v602 = vmul.f32 %v536, %v543
  %v603 = vmul.f32 %v537, %v543
  %v604 = vmul.f32 %v538, %v543
  %v605 = vmul.f32 %v539, %v543
  %v606 = vmul.f32 %v540, %v543
  %v607 = vmul.f32 %v541, %v543
  %v608 = vld [vmem:[%s7 + $0x1] sm:$0x1]
  %v609 = vperm.slane %v608, 0
  %v610 = vadd.f32 %v544, %v609
  %v611 = vadd.f32 %v545, %v609
  %v612 = vadd.f32 %v546, %v609
  %v613 = vadd.f32 %v547, %v609
  %v614 = vadd.f32 %v548, %v609
  %v615 = vadd.f32 %v549, %v609
  %v616 = vadd.f32 %v550, %v609
  %v617 = vadd.f32 %v551, %v609
  %v618 = vadd.f32 %v552, %v609
  %v619 = vadd.f32 %v553, %v609
  %v620 = vadd.f32 %v554, %v609
  %v621 = vadd.f32 %v555, %v609
  %v622 = vadd.f32 %v556, %v609
  %v623 = vadd.f32 %v557, %v609
  %v624 = vadd.f32 %v558, %v609
  %v625 = vadd.f32 %v559, %v609
  %v626 = vadd.f32 %v560, %v609
  %v627 = vadd.f32 %v561, %v609
  %v628 = vadd.f32 %v562, %v609
  %v629 = vadd.f32 %v563, %v609
  %v630 = vadd.f32 %v564, %v609
  %v631 = vadd.f32 %v565, %v609
  %v632 = vadd.f32 %v566, %v609
  %v633 = vadd.f32 %v567, %v609
  %v634 = vadd.f32 %v568, %v609
  %v635 = vadd.f32 %v569, %v609
  %v636 = vadd.f32 %v570, %v609
  %v637 = vadd.f32 %v571, %v609
  %v638 = vadd.f32 %v572, %v609
  %v639 = vadd.f32 %v573, %v609
  %v640 = vadd.f32 %v574, %v609
  %v641 = vadd.f32 %v575, %v609
  %v642 = vadd.f32 %v576, %v609
  %v643 = vadd.f32 %v577, %v609
  %v644 = vadd.f32 %v578, %v609
  %v645 = vadd.f32 %v579, %v609
  %v646 = vadd.f32 %v580, %v609
  %v647 = vadd.f32 %v581, %v609
  %v648 = vadd.f32 %v582, %v609
  %v649 = vadd.f32 %v583, %v609
  %v650 = vadd.f32 %v584, %v609
  %v651 = vadd.f32 %v585, %v609
  %v652 = vadd.f32 %v586, %v609
  %v653 = vadd.f32 %v587, %v609
  %v654 = vadd.f32 %v588, %v609
  %v655 = vadd.f32 %v589, %v609
  %v656 = vadd.f32 %v590, %v609
  %v657 = vadd.f32 %v591, %v609
  %v658 = vadd.f32 %v592, %v609
  %v659 = vadd.f32 %v593, %v609
  %v660 = vadd.f32 %v594, %v609
  %v661 = vadd.f32 %v595, %v609
  %v662 = vadd.f32 %v596, %v609
  %v663 = vadd.f32 %v597, %v609
  %v664 = vadd.f32 %v598, %v609
  %v665 = vadd.f32 %v599, %v609
  %v666 = vadd.f32 %v600, %v609
  %v667 = vadd.f32 %v601, %v609
  %v668 = vadd.f32 %v602, %v609
  %v669 = vadd.f32 %v603, %v609
  %v670 = vadd.f32 %v604, %v609
  %v671 = vadd.f32 %v605, %v609
  %v672 = vadd.f32 %v606, %v609
  %v673 = vadd.f32 %v607, %v609
  %v674 = vmax.f32 %v610, 0.0
  %v675 = vmax.f32 %v611, 0.0
  %v676 = vmax.f32 %v612, 0.0
  %v677 = vmax.f32 %v613, 0.0
  %v678 = vmax.f32 %v614, 0.0
  %v679 = vmax.f32 %v615, 0.0
  %v680 = vmax.f32 %v616, 0.0
  %v681 = vmax.f32 %v617, 0.0
  %v682 = vmax.f32 %v618, 0.0
  %v683 = vmax.f32 %v619, 0.0
  %v684 = vmax.f32 %v620, 0.0
  %v685 = vmax.f32 %v621, 0.0
  %v686 = vmax.f32 %v622, 0.0
  %v687 = vmax.f32 %v623, 0.0
  %v688 = vmax.f32 %v624, 0.0
  %v689 = vmax.f32 %v625, 0.0
  %v690 = vmax.f32 %v626, 0.0
  %v691 = vmax.f32 %v627, 0.0
  %v692 = vmax.f32 %v628, 0.0
  %v693 = vmax.f32 %v629, 0.0
  %v694 = vmax.f32 %v630, 0.0
  %v695 = vmax.f32 %v631, 0.0
  %v696 = vmax.f32 %v632, 0.0
  %v697 = vmax.f32 %v633, 0.0
  %v698 = vmax.f32 %v634, 0.0
  %v699 = vmax.f32 %v635, 0.0
  %v700 = vmax.f32 %v636, 0.0
  %v701 = vmax.f32 %v637, 0.0
  %v702 = vmax.f32 %v638, 0.0
  %v703 = vmax.f32 %v639, 0.0
  %v704 = vmax.f32 %v640, 0.0
  %v705 = vmax.f32 %v641, 0.0
  %v706 = vmax.f32 %v642, 0.0
  %v707 = vmax.f32 %v643, 0.0
  %v708 = vmax.f32 %v644, 0.0
  %v709 = vmax.f32 %v645, 0.0
  %v710 = vmax.f32 %v646, 0.0
  %v711 = vmax.f32 %v647, 0.0
  %v712 = vmax.f32 %v648, 0.0
  %v713 = vmax.f32 %v649, 0.0
  %v714 = vmax.f32 %v650, 0.0
  %v715 = vmax.f32 %v651, 0.0
  %v716 = vmax.f32 %v652, 0.0
  %v717 = vmax.f32 %v653, 0.0
  %v718 = vmax.f32 %v654, 0.0
  %v719 = vmax.f32 %v655, 0.0
  %v720 = vmax.f32 %v656, 0.0
  %v721 = vmax.f32 %v657, 0.0
  %v722 = vmax.f32 %v658, 0.0
  %v723 = vmax.f32 %v659, 0.0
  %v724 = vmax.f32 %v660, 0.0
  %v725 = vmax.f32 %v661, 0.0
  %v726 = vmax.f32 %v662, 0.0
  %v727 = vmax.f32 %v663, 0.0
  %v728 = vmax.f32 %v664, 0.0
  %v729 = vmax.f32 %v665, 0.0
  %v730 = vmax.f32 %v666, 0.0
  %v731 = vmax.f32 %v667, 0.0
  %v732 = vmax.f32 %v668, 0.0
  %v733 = vmax.f32 %v669, 0.0
  %v734 = vmax.f32 %v670, 0.0
  %v735 = vmax.f32 %v671, 0.0
  %v736 = vmax.f32 %v672, 0.0
  %v737 = vmax.f32 %v673, 0.0
  %v738 = vpack.c.bf16 %v675, %v674
  %v739 = vpack.c.bf16 %v677, %v676
  %v740 = vpack.c.bf16 %v679, %v678
  %v741 = vpack.c.bf16 %v681, %v680
  %v742 = vpack.c.bf16 %v683, %v682
  %v743 = vpack.c.bf16 %v685, %v684
  %v744 = vpack.c.bf16 %v687, %v686
  %v745 = vpack.c.bf16 %v689, %v688
  %v746 = vpack.c.bf16 %v691, %v690
  %v747 = vpack.c.bf16 %v693, %v692
  %v748 = vpack.c.bf16 %v695, %v694
  %v749 = vpack.c.bf16 %v697, %v696
  %v750 = vpack.c.bf16 %v699, %v698
  %v751 = vpack.c.bf16 %v701, %v700
  %v752 = vpack.c.bf16 %v703, %v702
  %v753 = vpack.c.bf16 %v705, %v704
  %v754 = vpack.c.bf16 %v707, %v706
  %v755 = vpack.c.bf16 %v709, %v708
  %v756 = vpack.c.bf16 %v711, %v710
  %v757 = vpack.c.bf16 %v713, %v712
  %v758 = vpack.c.bf16 %v715, %v714
  %v759 = vpack.c.bf16 %v717, %v716
  %v760 = vpack.c.bf16 %v719, %v718
  %v761 = vpack.c.bf16 %v721, %v720
  %v762 = vpack.c.bf16 %v723, %v722
  %v763 = vpack.c.bf16 %v725, %v724
  %v764 = vpack.c.bf16 %v727, %v726
  %v765 = vpack.c.bf16 %v729, %v728
  %v766 = vpack.c.bf16 %v731, %v730
  %v767 = vpack.c.bf16 %v733, %v732
  %v768 = vpack.c.bf16 %v735, %v734
  %v769 = vpack.c.bf16 %v737, %v736
  %s770 = scalar_lea.vmem %s10, 64
  %v771 = vld [vmem:[%s770] sm:$0xf]
  %v772 = vld [vmem:[%s770 + $0x4] sm:$0xf]
  %v773 = vld [vmem:[%s770 + $0x8] sm:$0xf]
  %v774 = vld [vmem:[%s770 + $0xc] sm:$0xf]
  %v775 = vld [vmem:[%s770 + $0x10] sm:$0xf]
  %v776 = vld [vmem:[%s770 + $0x14] sm:$0xf]
  %v777 = vld [vmem:[%s770 + $0x18] sm:$0xf]
  %v778 = vld [vmem:[%s770 + $0x1c] sm:$0xf]
  %v779 = vld [vmem:[%s770 + $0x20] sm:$0xf]
  %v780 = vld [vmem:[%s770 + $0x24] sm:$0xf]
  %v781 = vld [vmem:[%s770 + $0x28] sm:$0xf]
  %v782 = vld [vmem:[%s770 + $0x2c] sm:$0xf]
  %v783 = vld [vmem:[%s770 + $0x30] sm:$0xf]
  %v784 = vld [vmem:[%s770 + $0x34] sm:$0xf]
  %v785 = vld [vmem:[%s770 + $0x38] sm:$0xf]
  %v786 = vld [vmem:[%s770 + $0x3c] sm:$0xf]
  %v803 = vunpack.c.l.b16 %v771
  %v804 = vunpack.c.l.b16 %v772
  %v805 = vunpack.c.l.b16 %v773
  %v806 = vunpack.c.l.b16 %v774
  %v807 = vunpack.c.l.b16 %v775
  %v808 = vunpack.c.l.b16 %v776
  %v809 = vunpack.c.l.b16 %v777
  %v810 = vunpack.c.l.b16 %v778
  %v811 = vunpack.c.l.b16 %v779
  %v812 = vunpack.c.l.b16 %v780
  %v813 = vunpack.c.l.b16 %v781
  %v814 = vunpack.c.l.b16 %v782
  %v815 = vunpack.c.l.b16 %v783
  %v816 = vunpack.c.l.b16 %v784
  %v817 = vunpack.c.l.b16 %v785
  %v818 = vunpack.c.l.b16 %v786
  %v819 = vpack.c.b16 %v804, %v803
  %v820 = vpack.c.b16 %v806, %v805
  %v821 = vpack.c.b16 %v808, %v807
  %v822 = vpack.c.b16 %v810, %v809
  %v823 = vpack.c.b16 %v812, %v811
  %v824 = vpack.c.b16 %v814, %v813
  %v825 = vpack.c.b16 %v816, %v815
  %v826 = vpack.c.b16 %v818, %v817
  %835 = vmatpush.bf16.msra.mxu0 %v826
  %836 = vmatpush.bf16.msra.mxu0 %v825
  %837 = vmatpush.bf16.msra.mxu0 %v824
  %838 = vmatpush.bf16.msra.mxu0 %v823
  %839 = vmatpush.bf16.msra.mxu0 %v822
  %840 = vmatpush.bf16.msra.mxu0 %v821
  %841 = vmatpush.bf16.msra.mxu0 %v820
  %842 = vmatpush.bf16.msra.mxu0 %v819
  %843 = vmatmul.bf16.gmra.mxu0 %v738
  %v844 = vpop.f32.mrf.mxu0
  %v845 = vadd.f32 0.0, %v844
  %v846 = vpop.f32.mrf.mxu0
  %v847 = vadd.f32 0.0, %v846
  %848 = vmatmul.bf16.gmra.mxu0 %v739
  %v849 = vpop.f32.mrf.mxu0
  %v850 = vadd.f32 0.0, %v849
  %v851 = vpop.f32.mrf.mxu0
  %v852 = vadd.f32 0.0, %v851
  %853 = vmatmul.bf16.gmra.mxu0 %v740
  %v854 = vpop.f32.mrf.mxu0
  %v855 = vadd.f32 0.0, %v854
  %v856 = vpop.f32.mrf.mxu0
  %v857 = vadd.f32 0.0, %v856
  %858 = vmatmul.bf16.gmra.mxu0 %v741
  %v859 = vpop.f32.mrf.mxu0
  %v860 = vadd.f32 0.0, %v859
  %v861 = vpop.f32.mrf.mxu0
  %v862 = vadd.f32 0.0, %v861
  %863 = vmatmul.bf16.gmra.mxu0 %v742
  %v864 = vpop.f32.mrf.mxu0
  %v865 = vadd.f32 0.0, %v864
  %v866 = vpop.f32.mrf.mxu0
  %v867 = vadd.f32 0.0, %v866
  %868 = vmatmul.bf16.gmra.mxu0 %v743
  %v869 = vpop.f32.mrf.mxu0
  %v870 = vadd.f32 0.0, %v869
  %v871 = vpop.f32.mrf.mxu0
  %v872 = vadd.f32 0.0, %v871
  %873 = vmatmul.bf16.gmra.mxu0 %v744
  %v874 = vpop.f32.mrf.mxu0
  %v875 = vadd.f32 0.0, %v874
  %v876 = vpop.f32.mrf.mxu0
  %v877 = vadd.f32 0.0, %v876
  %878 = vmatmul.bf16.gmra.mxu0 %v745
  %v879 = vpop.f32.mrf.mxu0
  %v880 = vadd.f32 0.0, %v879
  %v881 = vpop.f32.mrf.mxu0
  %v882 = vadd.f32 0.0, %v881
  %883 = vmatmul.bf16.gmra.mxu0 %v746
  %v884 = vpop.f32.mrf.mxu0
  %v885 = vadd.f32 0.0, %v884
  %v886 = vpop.f32.mrf.mxu0
  %v887 = vadd.f32 0.0, %v886
  %888 = vmatmul.bf16.gmra.mxu0 %v747
  %v889 = vpop.f32.mrf.mxu0
  %v890 = vadd.f32 0.0, %v889
  %v891 = vpop.f32.mrf.mxu0
  %v892 = vadd.f32 0.0, %v891
  %893 = vmatmul.bf16.gmra.mxu0 %v748
  %v894 = vpop.f32.mrf.mxu0
  %v895 = vadd.f32 0.0, %v894
  %v896 = vpop.f32.mrf.mxu0
  %v897 = vadd.f32 0.0, %v896
  %898 = vmatmul.bf16.gmra.mxu0 %v749
  %v899 = vpop.f32.mrf.mxu0
  %v900 = vadd.f32 0.0, %v899
  %v901 = vpop.f32.mrf.mxu0
  %v902 = vadd.f32 0.0, %v901
  %903 = vmatmul.bf16.gmra.mxu0 %v750
  %v904 = vpop.f32.mrf.mxu0
  %v905 = vadd.f32 0.0, %v904
  %v906 = vpop.f32.mrf.mxu0
  %v907 = vadd.f32 0.0, %v906
  %908 = vmatmul.bf16.gmra.mxu0 %v751
  %v909 = vpop.f32.mrf.mxu0
  %v910 = vadd.f32 0.0, %v909
  %v911 = vpop.f32.mrf.mxu0
  %v912 = vadd.f32 0.0, %v911
  %913 = vmatmul.bf16.gmra.mxu0 %v752
  %v914 = vpop.f32.mrf.mxu0
  %v915 = vadd.f32 0.0, %v914
  %v916 = vpop.f32.mrf.mxu0
  %v917 = vadd.f32 0.0, %v916
  %918 = vmatmul.bf16.gmra.mxu0 %v753
  %v919 = vpop.f32.mrf.mxu0
  %v920 = vadd.f32 0.0, %v919
  %v921 = vpop.f32.mrf.mxu0
  %v922 = vadd.f32 0.0, %v921
  %923 = vmatmul.bf16.gmra.mxu0 %v754
  %v924 = vpop.f32.mrf.mxu0
  %v925 = vadd.f32 0.0, %v924
  %v926 = vpop.f32.mrf.mxu0
  %v927 = vadd.f32 0.0, %v926
  %928 = vmatmul.bf16.gmra.mxu0 %v755
  %v929 = vpop.f32.mrf.mxu0
  %v930 = vadd.f32 0.0, %v929
  %v931 = vpop.f32.mrf.mxu0
  %v932 = vadd.f32 0.0, %v931
  %933 = vmatmul.bf16.gmra.mxu0 %v756
  %v934 = vpop.f32.mrf.mxu0
  %v935 = vadd.f32 0.0, %v934
  %v936 = vpop.f32.mrf.mxu0
  %v937 = vadd.f32 0.0, %v936
  %938 = vmatmul.bf16.gmra.mxu0 %v757
  %v939 = vpop.f32.mrf.mxu0
  %v940 = vadd.f32 0.0, %v939
  %v941 = vpop.f32.mrf.mxu0
  %v942 = vadd.f32 0.0, %v941
  %943 = vmatmul.bf16.gmra.mxu0 %v758
  %v944 = vpop.f32.mrf.mxu0
  %v945 = vadd.f32 0.0, %v944
  %v946 = vpop.f32.mrf.mxu0
  %v947 = vadd.f32 0.0, %v946
  %948 = vmatmul.bf16.gmra.mxu0 %v759
  %v949 = vpop.f32.mrf.mxu0
  %v950 = vadd.f32 0.0, %v949
  %v951 = vpop.f32.mrf.mxu0
  %v952 = vadd.f32 0.0, %v951
  %953 = vmatmul.bf16.gmra.mxu0 %v760
  %v954 = vpop.f32.mrf.mxu0
  %v955 = vadd.f32 0.0, %v954
  %v956 = vpop.f32.mrf.mxu0
  %v957 = vadd.f32 0.0, %v956
  %958 = vmatmul.bf16.gmra.mxu0 %v761
  %v959 = vpop.f32.mrf.mxu0
  %v960 = vadd.f32 0.0, %v959
  %v961 = vpop.f32.mrf.mxu0
  %v962 = vadd.f32 0.0, %v961
  %963 = vmatmul.bf16.gmra.mxu0 %v762
  %v964 = vpop.f32.mrf.mxu0
  %v965 = vadd.f32 0.0, %v964
  %v966 = vpop.f32.mrf.mxu0
  %v967 = vadd.f32 0.0, %v966
  %968 = vmatmul.bf16.gmra.mxu0 %v763
  %v969 = vpop.f32.mrf.mxu0
  %v970 = vadd.f32 0.0, %v969
  %v971 = vpop.f32.mrf.mxu0
  %v972 = vadd.f32 0.0, %v971
  %973 = vmatmul.bf16.gmra.mxu0 %v764
  %v974 = vpop.f32.mrf.mxu0
  %v975 = vadd.f32 0.0, %v974
  %v976 = vpop.f32.mrf.mxu0
  %v977 = vadd.f32 0.0, %v976
  %978 = vmatmul.bf16.gmra.mxu0 %v765
  %v979 = vpop.f32.mrf.mxu0
  %v980 = vadd.f32 0.0, %v979
  %v981 = vpop.f32.mrf.mxu0
  %v982 = vadd.f32 0.0, %v981
  %983 = vmatmul.bf16.gmra.mxu0 %v766
  %v984 = vpop.f32.mrf.mxu0
  %v985 = vadd.f32 0.0, %v984
  %v986 = vpop.f32.mrf.mxu0
  %v987 = vadd.f32 0.0, %v986
  %988 = vmatmul.bf16.gmra.mxu0 %v767
  %v989 = vpop.f32.mrf.mxu0
  %v990 = vadd.f32 0.0, %v989
  %v991 = vpop.f32.mrf.mxu0
  %v992 = vadd.f32 0.0, %v991
  %993 = vmatmul.bf16.gmra.mxu0 %v768
  %v994 = vpop.f32.mrf.mxu0
  %v995 = vadd.f32 0.0, %v994
  %v996 = vpop.f32.mrf.mxu0
  %v997 = vadd.f32 0.0, %v996
  %998 = vmatmul.bf16.gmra.mxu0 %v769
  %v999 = vpop.f32.mrf.mxu0
  %v1000 = vadd.f32 0.0, %v999
  %v1001 = vpop.f32.mrf.mxu0
  %v1002 = vadd.f32 0.0, %v1001
  %1003 = vdwg.mxu0
  %v1020 = vunpack.c.l.b16 %v398
  %v1021 = vunpack.c.l.b16 %v399
  %v1022 = vunpack.c.l.b16 %v400
  %v1023 = vunpack.c.l.b16 %v401
  %v1024 = vunpack.c.l.b16 %v402
  %v1025 = vunpack.c.l.b16 %v403
  %v1026 = vunpack.c.l.b16 %v404
  %v1027 = vunpack.c.l.b16 %v405
  %v1028 = vunpack.c.l.b16 %v406
  %v1029 = vunpack.c.l.b16 %v407
  %v1030 = vunpack.c.l.b16 %v408
  %v1031 = vunpack.c.l.b16 %v409
  %v1032 = vunpack.c.l.b16 %v410
  %v1033 = vunpack.c.l.b16 %v411
  %v1034 = vunpack.c.l.b16 %v412
  %v1035 = vunpack.c.l.b16 %v413
  %v1036 = vpack.c.b16 %v1021, %v1020
  %v1037 = vpack.c.b16 %v1023, %v1022
  %v1038 = vpack.c.b16 %v1025, %v1024
  %v1039 = vpack.c.b16 %v1027, %v1026
  %v1040 = vpack.c.b16 %v1029, %v1028
  %v1041 = vpack.c.b16 %v1031, %v1030
  %v1042 = vpack.c.b16 %v1033, %v1032
  %v1043 = vpack.c.b16 %v1035, %v1034
  %1052 = vmatpush.bf16.msra.mxu0 %v1043
  %1053 = vmatpush.bf16.msra.mxu0 %v1042
  %1054 = vmatpush.bf16.msra.mxu0 %v1041
  %1055 = vmatpush.bf16.msra.mxu0 %v1040
  %1056 = vmatpush.bf16.msra.mxu0 %v1039
  %1057 = vmatpush.bf16.msra.mxu0 %v1038
  %1058 = vmatpush.bf16.msra.mxu0 %v1037
  %1059 = vmatpush.bf16.msra.mxu0 %v1036
  %1060 = vmatmul.bf16.gmra.mxu0 %v366
  %v1061 = vpop.f32.mrf.mxu0
  %v1062 = vadd.f32 %v845, %v1061
  %v1063 = vpop.f32.mrf.mxu0
  %v1064 = vadd.f32 %v847, %v1063
  %1065 = vmatmul.bf16.gmra.mxu0 %v367
  %v1066 = vpop.f32.mrf.mxu0
  %v1067 = vadd.f32 %v850, %v1066
  %v1068 = vpop.f32.mrf.mxu0
  %v1069 = vadd.f32 %v852, %v1068
  %1070 = vmatmul.bf16.gmra.mxu0 %v368
  %v1071 = vpop.f32.mrf.mxu0
  %v1072 = vadd.f32 %v855, %v1071
  %v1073 = vpop.f32.mrf.mxu0
  %v1074 = vadd.f32 %v857, %v1073
  %1075 = vmatmul.bf16.gmra.mxu0 %v369
  %v1076 = vpop.f32.mrf.mxu0
  %v1077 = vadd.f32 %v860, %v1076
  %v1078 = vpop.f32.mrf.mxu0
  %v1079 = vadd.f32 %v862, %v1078
  %1080 = vmatmul.bf16.gmra.mxu0 %v370
  %v1081 = vpop.f32.mrf.mxu0
  %v1082 = vadd.f32 %v865, %v1081
  %v1083 = vpop.f32.mrf.mxu0
  %v1084 = vadd.f32 %v867, %v1083
  %1085 = vmatmul.bf16.gmra.mxu0 %v371
  %v1086 = vpop.f32.mrf.mxu0
  %v1087 = vadd.f32 %v870, %v1086
  %v1088 = vpop.f32.mrf.mxu0
  %v1089 = vadd.f32 %v872, %v1088
  %1090 = vmatmul.bf16.gmra.mxu0 %v372
  %v1091 = vpop.f32.mrf.mxu0
  %v1092 = vadd.f32 %v875, %v1091
  %v1093 = vpop.f32.mrf.mxu0
  %v1094 = vadd.f32 %v877, %v1093
  %1095 = vmatmul.bf16.gmra.mxu0 %v373
  %v1096 = vpop.f32.mrf.mxu0
  %v1097 = vadd.f32 %v880, %v1096
  %v1098 = vpop.f32.mrf.mxu0
  %v1099 = vadd.f32 %v882, %v1098
  %1100 = vmatmul.bf16.gmra.mxu0 %v374
  %v1101 = vpop.f32.mrf.mxu0
  %v1102 = vadd.f32 %v885, %v1101
  %v1103 = vpop.f32.mrf.mxu0
  %v1104 = vadd.f32 %v887, %v1103
  %1105 = vmatmul.bf16.gmra.mxu0 %v375
  %v1106 = vpop.f32.mrf.mxu0
  %v1107 = vadd.f32 %v890, %v1106
  %v1108 = vpop.f32.mrf.mxu0
  %v1109 = vadd.f32 %v892, %v1108
  %1110 = vmatmul.bf16.gmra.mxu0 %v376
  %v1111 = vpop.f32.mrf.mxu0
  %v1112 = vadd.f32 %v895, %v1111
  %v1113 = vpop.f32.mrf.mxu0
  %v1114 = vadd.f32 %v897, %v1113
  %1115 = vmatmul.bf16.gmra.mxu0 %v377
  %v1116 = vpop.f32.mrf.mxu0
  %v1117 = vadd.f32 %v900, %v1116
  %v1118 = vpop.f32.mrf.mxu0
  %v1119 = vadd.f32 %v902, %v1118
  %1120 = vmatmul.bf16.gmra.mxu0 %v378
  %v1121 = vpop.f32.mrf.mxu0
  %v1122 = vadd.f32 %v905, %v1121
  %v1123 = vpop.f32.mrf.mxu0
  %v1124 = vadd.f32 %v907, %v1123
  %1125 = vmatmul.bf16.gmra.mxu0 %v379
  %v1126 = vpop.f32.mrf.mxu0
  %v1127 = vadd.f32 %v910, %v1126
  %v1128 = vpop.f32.mrf.mxu0
  %v1129 = vadd.f32 %v912, %v1128
  %1130 = vmatmul.bf16.gmra.mxu0 %v380
  %v1131 = vpop.f32.mrf.mxu0
  %v1132 = vadd.f32 %v915, %v1131
  %v1133 = vpop.f32.mrf.mxu0
  %v1134 = vadd.f32 %v917, %v1133
  %1135 = vmatmul.bf16.gmra.mxu0 %v381
  %v1136 = vpop.f32.mrf.mxu0
  %v1137 = vadd.f32 %v920, %v1136
  %v1138 = vpop.f32.mrf.mxu0
  %v1139 = vadd.f32 %v922, %v1138
  %1140 = vmatmul.bf16.gmra.mxu0 %v382
  %v1141 = vpop.f32.mrf.mxu0
  %v1142 = vadd.f32 %v925, %v1141
  %v1143 = vpop.f32.mrf.mxu0
  %v1144 = vadd.f32 %v927, %v1143
  %1145 = vmatmul.bf16.gmra.mxu0 %v383
  %v1146 = vpop.f32.mrf.mxu0
  %v1147 = vadd.f32 %v930, %v1146
  %v1148 = vpop.f32.mrf.mxu0
  %v1149 = vadd.f32 %v932, %v1148
  %1150 = vmatmul.bf16.gmra.mxu0 %v384
  %v1151 = vpop.f32.mrf.mxu0
  %v1152 = vadd.f32 %v935, %v1151
  %v1153 = vpop.f32.mrf.mxu0
  %v1154 = vadd.f32 %v937, %v1153
  %1155 = vmatmul.bf16.gmra.mxu0 %v385
  %v1156 = vpop.f32.mrf.mxu0
  %v1157 = vadd.f32 %v940, %v1156
  %v1158 = vpop.f32.mrf.mxu0
  %v1159 = vadd.f32 %v942, %v1158
  %1160 = vmatmul.bf16.gmra.mxu0 %v386
  %v1161 = vpop.f32.mrf.mxu0
  %v1162 = vadd.f32 %v945, %v1161
  %v1163 = vpop.f32.mrf.mxu0
  %v1164 = vadd.f32 %v947, %v1163
  %1165 = vmatmul.bf16.gmra.mxu0 %v387
  %v1166 = vpop.f32.mrf.mxu0
  %v1167 = vadd.f32 %v950, %v1166
  %v1168 = vpop.f32.mrf.mxu0
  %v1169 = vadd.f32 %v952, %v1168
  %1170 = vmatmul.bf16.gmra.mxu0 %v388
  %v1171 = vpop.f32.mrf.mxu0
  %v1172 = vadd.f32 %v955, %v1171
  %v1173 = vpop.f32.mrf.mxu0
  %v1174 = vadd.f32 %v957, %v1173
  %1175 = vmatmul.bf16.gmra.mxu0 %v389
  %v1176 = vpop.f32.mrf.mxu0
  %v1177 = vadd.f32 %v960, %v1176
  %v1178 = vpop.f32.mrf.mxu0
  %v1179 = vadd.f32 %v962, %v1178
  %1180 = vmatmul.bf16.gmra.mxu0 %v390
  %v1181 = vpop.f32.mrf.mxu0
  %v1182 = vadd.f32 %v965, %v1181
  %v1183 = vpop.f32.mrf.mxu0
  %v1184 = vadd.f32 %v967, %v1183
  %1185 = vmatmul.bf16.gmra.mxu0 %v391
  %v1186 = vpop.f32.mrf.mxu0
  %v1187 = vadd.f32 %v970, %v1186
  %v1188 = vpop.f32.mrf.mxu0
  %v1189 = vadd.f32 %v972, %v1188
  %1190 = vmatmul.bf16.gmra.mxu0 %v392
  %v1191 = vpop.f32.mrf.mxu0
  %v1192 = vadd.f32 %v975, %v1191
  %v1193 = vpop.f32.mrf.mxu0
  %v1194 = vadd.f32 %v977, %v1193
  %1195 = vmatmul.bf16.gmra.mxu0 %v393
  %v1196 = vpop.f32.mrf.mxu0
  %v1197 = vadd.f32 %v980, %v1196
  %v1198 = vpop.f32.mrf.mxu0
  %v1199 = vadd.f32 %v982, %v1198
  %1200 = vmatmul.bf16.gmra.mxu0 %v394
  %v1201 = vpop.f32.mrf.mxu0
  %v1202 = vadd.f32 %v985, %v1201
  %v1203 = vpop.f32.mrf.mxu0
  %v1204 = vadd.f32 %v987, %v1203
  %1205 = vmatmul.bf16.gmra.mxu0 %v395
  %v1206 = vpop.f32.mrf.mxu0
  %v1207 = vadd.f32 %v990, %v1206
  %v1208 = vpop.f32.mrf.mxu0
  %v1209 = vadd.f32 %v992, %v1208
  %1210 = vmatmul.bf16.gmra.mxu0 %v396
  %v1211 = vpop.f32.mrf.mxu0
  %v1212 = vadd.f32 %v995, %v1211
  %v1213 = vpop.f32.mrf.mxu0
  %v1214 = vadd.f32 %v997, %v1213
  %1215 = vmatmul.bf16.gmra.mxu0 %v397
  %v1216 = vpop.f32.mrf.mxu0
  %v1217 = vadd.f32 %v1000, %v1216
  %v1218 = vpop.f32.mrf.mxu0
  %v1219 = vadd.f32 %v1002, %v1218
  %1220 = vdwg.mxu0
  %v1221 = vld [vmem:[%s2] sm:$0xf]
  %v1222 = vld [vmem:[%s2 + $0x4] sm:$0xf]
  %v1223 = vld [vmem:[%s2 + $0x8] sm:$0xf]
  %v1224 = vld [vmem:[%s2 + $0xc] sm:$0xf]
  %v1225 = vld [vmem:[%s2 + $0x10] sm:$0xf]
  %v1226 = vld [vmem:[%s2 + $0x14] sm:$0xf]
  %v1227 = vld [vmem:[%s2 + $0x18] sm:$0xf]
  %v1228 = vld [vmem:[%s2 + $0x1c] sm:$0xf]
  %v1229 = vld [vmem:[%s2 + $0x20] sm:$0xf]
  %v1230 = vld [vmem:[%s2 + $0x24] sm:$0xf]
  %v1231 = vld [vmem:[%s2 + $0x28] sm:$0xf]
  %v1232 = vld [vmem:[%s2 + $0x2c] sm:$0xf]
  %v1233 = vld [vmem:[%s2 + $0x30] sm:$0xf]
  %v1234 = vld [vmem:[%s2 + $0x34] sm:$0xf]
  %v1235 = vld [vmem:[%s2 + $0x38] sm:$0xf]
  %v1236 = vld [vmem:[%s2 + $0x3c] sm:$0xf]
  %v1237 = vld [vmem:[%s2 + $0x40] sm:$0xf]
  %v1238 = vld [vmem:[%s2 + $0x44] sm:$0xf]
  %v1239 = vld [vmem:[%s2 + $0x48] sm:$0xf]
  %v1240 = vld [vmem:[%s2 + $0x4c] sm:$0xf]
  %v1241 = vld [vmem:[%s2 + $0x50] sm:$0xf]
  %v1242 = vld [vmem:[%s2 + $0x54] sm:$0xf]
  %v1243 = vld [vmem:[%s2 + $0x58] sm:$0xf]
  %v1244 = vld [vmem:[%s2 + $0x5c] sm:$0xf]
  %v1245 = vld [vmem:[%s2 + $0x60] sm:$0xf]
  %v1246 = vld [vmem:[%s2 + $0x64] sm:$0xf]
  %v1247 = vld [vmem:[%s2 + $0x68] sm:$0xf]
  %v1248 = vld [vmem:[%s2 + $0x6c] sm:$0xf]
  %v1249 = vld [vmem:[%s2 + $0x70] sm:$0xf]
  %v1250 = vld [vmem:[%s2 + $0x74] sm:$0xf]
  %v1251 = vld [vmem:[%s2 + $0x78] sm:$0xf]
  %v1252 = vld [vmem:[%s2 + $0x7c] sm:$0xf]
  %v1253 = vld [vmem:[%s2 + $0x80] sm:$0xf]
  %v1254 = vld [vmem:[%s2 + $0x84] sm:$0xf]
  %v1255 = vld [vmem:[%s2 + $0x88] sm:$0xf]
  %v1256 = vld [vmem:[%s2 + $0x8c] sm:$0xf]
  %v1257 = vld [vmem:[%s2 + $0x90] sm:$0xf]
  %v1258 = vld [vmem:[%s2 + $0x94] sm:$0xf]
  %v1259 = vld [vmem:[%s2 + $0x98] sm:$0xf]
  %v1260 = vld [vmem:[%s2 + $0x9c] sm:$0xf]
  %v1261 = vld [vmem:[%s2 + $0xa0] sm:$0xf]
  %v1262 = vld [vmem:[%s2 + $0xa4] sm:$0xf]
  %v1263 = vld [vmem:[%s2 + $0xa8] sm:$0xf]
  %v1264 = vld [vmem:[%s2 + $0xac] sm:$0xf]
  %v1265 = vld [vmem:[%s2 + $0xb0] sm:$0xf]
  %v1266 = vld [vmem:[%s2 + $0xb4] sm:$0xf]
  %v1267 = vld [vmem:[%s2 + $0xb8] sm:$0xf]
  %v1268 = vld [vmem:[%s2 + $0xbc] sm:$0xf]
  %v1269 = vld [vmem:[%s2 + $0xc0] sm:$0xf]
  %v1270 = vld [vmem:[%s2 + $0xc4] sm:$0xf]
  %v1271 = vld [vmem:[%s2 + $0xc8] sm:$0xf]
  %v1272 = vld [vmem:[%s2 + $0xcc] sm:$0xf]
  %v1273 = vld [vmem:[%s2 + $0xd0] sm:$0xf]
  %v1274 = vld [vmem:[%s2 + $0xd4] sm:$0xf]
  %v1275 = vld [vmem:[%s2 + $0xd8] sm:$0xf]
  %v1276 = vld [vmem:[%s2 + $0xdc] sm:$0xf]
  %v1277 = vld [vmem:[%s2 + $0xe0] sm:$0xf]
  %v1278 = vld [vmem:[%s2 + $0xe4] sm:$0xf]
  %v1279 = vld [vmem:[%s2 + $0xe8] sm:$0xf]
  %v1280 = vld [vmem:[%s2 + $0xec] sm:$0xf]
  %v1281 = vld [vmem:[%s2 + $0xf0] sm:$0xf]
  %v1282 = vld [vmem:[%s2 + $0xf4] sm:$0xf]
  %v1283 = vld [vmem:[%s2 + $0xf8] sm:$0xf]
  %v1284 = vld [vmem:[%s2 + $0xfc] sm:$0xf]
  %v1285 = vunpack.c.l.bf16 %v1221
  %v1286 = vunpack.c.l.bf16 %v1222
  %v1287 = vunpack.c.l.bf16 %v1223
  %v1288 = vunpack.c.l.bf16 %v1224
  %v1289 = vunpack.c.l.bf16 %v1225
  %v1290 = vunpack.c.l.bf16 %v1226
  %v1291 = vunpack.c.l.bf16 %v1227
  %v1292 = vunpack.c.l.bf16 %v1228
  %v1293 = vunpack.c.l.bf16 %v1229
  %v1294 = vunpack.c.l.bf16 %v1230
  %v1295 = vunpack.c.l.bf16 %v1231
  %v1296 = vunpack.c.l.bf16 %v1232
  %v1297 = vunpack.c.l.bf16 %v1233
  %v1298 = vunpack.c.l.bf16 %v1234
  %v1299 = vunpack.c.l.bf16 %v1235
  %v1300 = vunpack.c.l.bf16 %v1236
  %v1301 = vunpack.c.l.bf16 %v1237
  %v1302 = vunpack.c.l.bf16 %v1238
  %v1303 = vunpack.c.l.bf16 %v1239
  %v1304 = vunpack.c.l.bf16 %v1240
  %v1305 = vunpack.c.l.bf16 %v1241
  %v1306 = vunpack.c.l.bf16 %v1242
  %v1307 = vunpack.c.l.bf16 %v1243
  %v1308 = vunpack.c.l.bf16 %v1244
  %v1309 = vunpack.c.l.bf16 %v1245
  %v1310 = vunpack.c.l.bf16 %v1246
  %v1311 = vunpack.c.l.bf16 %v1247
  %v1312 = vunpack.c.l.bf16 %v1248
  %v1313 = vunpack.c.l.bf16 %v1249
  %v1314 = vunpack.c.l.bf16 %v1250
  %v1315 = vunpack.c.l.bf16 %v1251
  %v1316 = vunpack.c.l.bf16 %v1252
  %v1317 = vunpack.c.l.bf16 %v1253
  %v1318 = vunpack.c.l.bf16 %v1254
  %v1319 = vunpack.c.l.bf16 %v1255
  %v1320 = vunpack.c.l.bf16 %v1256
  %v1321 = vunpack.c.l.bf16 %v1257
  %v1322 = vunpack.c.l.bf16 %v1258
  %v1323 = vunpack.c.l.bf16 %v1259
  %v1324 = vunpack.c.l.bf16 %v1260
  %v1325 = vunpack.c.l.bf16 %v1261
  %v1326 = vunpack.c.l.bf16 %v1262
  %v1327 = vunpack.c.l.bf16 %v1263
  %v1328 = vunpack.c.l.bf16 %v1264
  %v1329 = vunpack.c.l.bf16 %v1265
  %v1330 = vunpack.c.l.bf16 %v1266
  %v1331 = vunpack.c.l.bf16 %v1267
  %v1332 = vunpack.c.l.bf16 %v1268
  %v1333 = vunpack.c.l.bf16 %v1269
  %v1334 = vunpack.c.l.bf16 %v1270
  %v1335 = vunpack.c.l.bf16 %v1271
  %v1336 = vunpack.c.l.bf16 %v1272
  %v1337 = vunpack.c.l.bf16 %v1273
  %v1338 = vunpack.c.l.bf16 %v1274
  %v1339 = vunpack.c.l.bf16 %v1275
  %v1340 = vunpack.c.l.bf16 %v1276
  %v1341 = vunpack.c.l.bf16 %v1277
  %v1342 = vunpack.c.l.bf16 %v1278
  %v1343 = vunpack.c.l.bf16 %v1279
  %v1344 = vunpack.c.l.bf16 %v1280
  %v1345 = vunpack.c.l.bf16 %v1281
  %v1346 = vunpack.c.l.bf16 %v1282
  %v1347 = vunpack.c.l.bf16 %v1283
  %v1348 = vunpack.c.l.bf16 %v1284
  %v1349 = vld [vmem:[%s6 + $0x2] sm:$0x1]
  %v1350 = vperm.slane %v1349, 0
  %v1351 = vmul.f32 %v1285, %v1350
  %v1352 = vmul.f32 %v1286, %v1350
  %v1353 = vmul.f32 %v1287, %v1350
  %v1354 = vmul.f32 %v1288, %v1350
  %v1355 = vmul.f32 %v1289, %v1350
  %v1356 = vmul.f32 %v1290, %v1350
  %v1357 = vmul.f32 %v1291, %v1350
  %v1358 = vmul.f32 %v1292, %v1350
  %v1359 = vmul.f32 %v1293, %v1350
  %v1360 = vmul.f32 %v1294, %v1350
  %v1361 = vmul.f32 %v1295, %v1350
  %v1362 = vmul.f32 %v1296, %v1350
  %v1363 = vmul.f32 %v1297, %v1350
  %v1364 = vmul.f32 %v1298, %v1350
  %v1365 = vmul.f32 %v1299, %v1350
  %v1366 = vmul.f32 %v1300, %v1350
  %v1367 = vmul.f32 %v1301, %v1350
  %v1368 = vmul.f32 %v1302, %v1350
  %v1369 = vmul.f32 %v1303, %v1350
  %v1370 = vmul.f32 %v1304, %v1350
  %v1371 = vmul.f32 %v1305, %v1350
  %v1372 = vmul.f32 %v1306, %v1350
  %v1373 = vmul.f32 %v1307, %v1350
  %v1374 = vmul.f32 %v1308, %v1350
  %v1375 = vmul.f32 %v1309, %v1350
  %v1376 = vmul.f32 %v1310, %v1350
  %v1377 = vmul.f32 %v1311, %v1350
  %v1378 = vmul.f32 %v1312, %v1350
  %v1379 = vmul.f32 %v1313, %v1350
  %v1380 = vmul.f32 %v1314, %v1350
  %v1381 = vmul.f32 %v1315, %v1350
  %v1382 = vmul.f32 %v1316, %v1350
  %v1383 = vmul.f32 %v1317, %v1350
  %v1384 = vmul.f32 %v1318, %v1350
  %v1385 = vmul.f32 %v1319, %v1350
  %v1386 = vmul.f32 %v1320, %v1350
  %v1387 = vmul.f32 %v1321, %v1350
  %v1388 = vmul.f32 %v1322, %v1350
  %v1389 = vmul.f32 %v1323, %v1350
  %v1390 = vmul.f32 %v1324, %v1350
  %v1391 = vmul.f32 %v1325, %v1350
  %v1392 = vmul.f32 %v1326, %v1350
  %v1393 = vmul.f32 %v1327, %v1350
  %v1394 = vmul.f32 %v1328, %v1350
  %v1395 = vmul.f32 %v1329, %v1350
  %v1396 = vmul.f32 %v1330, %v1350
  %v1397 = vmul.f32 %v1331, %v1350
  %v1398 = vmul.f32 %v1332, %v1350
  %v1399 = vmul.f32 %v1333, %v1350
  %v1400 = vmul.f32 %v1334, %v1350
  %v1401 = vmul.f32 %v1335, %v1350
  %v1402 = vmul.f32 %v1336, %v1350
  %v1403 = vmul.f32 %v1337, %v1350
  %v1404 = vmul.f32 %v1338, %v1350
  %v1405 = vmul.f32 %v1339, %v1350
  %v1406 = vmul.f32 %v1340, %v1350
  %v1407 = vmul.f32 %v1341, %v1350
  %v1408 = vmul.f32 %v1342, %v1350
  %v1409 = vmul.f32 %v1343, %v1350
  %v1410 = vmul.f32 %v1344, %v1350
  %v1411 = vmul.f32 %v1345, %v1350
  %v1412 = vmul.f32 %v1346, %v1350
  %v1413 = vmul.f32 %v1347, %v1350
  %v1414 = vmul.f32 %v1348, %v1350
  %v1415 = vld [vmem:[%s7 + $0x2] sm:$0x1]
  %v1416 = vperm.slane %v1415, 0
  %v1417 = vadd.f32 %v1351, %v1416
  %v1418 = vadd.f32 %v1352, %v1416
  %v1419 = vadd.f32 %v1353, %v1416
  %v1420 = vadd.f32 %v1354, %v1416
  %v1421 = vadd.f32 %v1355, %v1416
  %v1422 = vadd.f32 %v1356, %v1416
  %v1423 = vadd.f32 %v1357, %v1416
  %v1424 = vadd.f32 %v1358, %v1416
  %v1425 = vadd.f32 %v1359, %v1416
  %v1426 = vadd.f32 %v1360, %v1416
  %v1427 = vadd.f32 %v1361, %v1416
  %v1428 = vadd.f32 %v1362, %v1416
  %v1429 = vadd.f32 %v1363, %v1416
  %v1430 = vadd.f32 %v1364, %v1416
  %v1431 = vadd.f32 %v1365, %v1416
  %v1432 = vadd.f32 %v1366, %v1416
  %v1433 = vadd.f32 %v1367, %v1416
  %v1434 = vadd.f32 %v1368, %v1416
  %v1435 = vadd.f32 %v1369, %v1416
  %v1436 = vadd.f32 %v1370, %v1416
  %v1437 = vadd.f32 %v1371, %v1416
  %v1438 = vadd.f32 %v1372, %v1416
  %v1439 = vadd.f32 %v1373, %v1416
  %v1440 = vadd.f32 %v1374, %v1416
  %v1441 = vadd.f32 %v1375, %v1416
  %v1442 = vadd.f32 %v1376, %v1416
  %v1443 = vadd.f32 %v1377, %v1416
  %v1444 = vadd.f32 %v1378, %v1416
  %v1445 = vadd.f32 %v1379, %v1416
  %v1446 = vadd.f32 %v1380, %v1416
  %v1447 = vadd.f32 %v1381, %v1416
  %v1448 = vadd.f32 %v1382, %v1416
  %v1449 = vadd.f32 %v1383, %v1416
  %v1450 = vadd.f32 %v1384, %v1416
  %v1451 = vadd.f32 %v1385, %v1416
  %v1452 = vadd.f32 %v1386, %v1416
  %v1453 = vadd.f32 %v1387, %v1416
  %v1454 = vadd.f32 %v1388, %v1416
  %v1455 = vadd.f32 %v1389, %v1416
  %v1456 = vadd.f32 %v1390, %v1416
  %v1457 = vadd.f32 %v1391, %v1416
  %v1458 = vadd.f32 %v1392, %v1416
  %v1459 = vadd.f32 %v1393, %v1416
  %v1460 = vadd.f32 %v1394, %v1416
  %v1461 = vadd.f32 %v1395, %v1416
  %v1462 = vadd.f32 %v1396, %v1416
  %v1463 = vadd.f32 %v1397, %v1416
  %v1464 = vadd.f32 %v1398, %v1416
  %v1465 = vadd.f32 %v1399, %v1416
  %v1466 = vadd.f32 %v1400, %v1416
  %v1467 = vadd.f32 %v1401, %v1416
  %v1468 = vadd.f32 %v1402, %v1416
  %v1469 = vadd.f32 %v1403, %v1416
  %v1470 = vadd.f32 %v1404, %v1416
  %v1471 = vadd.f32 %v1405, %v1416
  %v1472 = vadd.f32 %v1406, %v1416
  %v1473 = vadd.f32 %v1407, %v1416
  %v1474 = vadd.f32 %v1408, %v1416
  %v1475 = vadd.f32 %v1409, %v1416
  %v1476 = vadd.f32 %v1410, %v1416
  %v1477 = vadd.f32 %v1411, %v1416
  %v1478 = vadd.f32 %v1412, %v1416
  %v1479 = vadd.f32 %v1413, %v1416
  %v1480 = vadd.f32 %v1414, %v1416
  %v1481 = vmax.f32 %v1417, 0.0
  %v1482 = vmax.f32 %v1418, 0.0
  %v1483 = vmax.f32 %v1419, 0.0
  %v1484 = vmax.f32 %v1420, 0.0
  %v1485 = vmax.f32 %v1421, 0.0
  %v1486 = vmax.f32 %v1422, 0.0
  %v1487 = vmax.f32 %v1423, 0.0
  %v1488 = vmax.f32 %v1424, 0.0
  %v1489 = vmax.f32 %v1425, 0.0
  %v1490 = vmax.f32 %v1426, 0.0
  %v1491 = vmax.f32 %v1427, 0.0
  %v1492 = vmax.f32 %v1428, 0.0
  %v1493 = vmax.f32 %v1429, 0.0
  %v1494 = vmax.f32 %v1430, 0.0
  %v1495 = vmax.f32 %v1431, 0.0
  %v1496 = vmax.f32 %v1432, 0.0
  %v1497 = vmax.f32 %v1433, 0.0
  %v1498 = vmax.f32 %v1434, 0.0
  %v1499 = vmax.f32 %v1435, 0.0
  %v1500 = vmax.f32 %v1436, 0.0
  %v1501 = vmax.f32 %v1437, 0.0
  %v1502 = vmax.f32 %v1438, 0.0
  %v1503 = vmax.f32 %v1439, 0.0
  %v1504 = vmax.f32 %v1440, 0.0
  %v1505 = vmax.f32 %v1441, 0.0
  %v1506 = vmax.f32 %v1442, 0.0
  %v1507 = vmax.f32 %v1443, 0.0
  %v1508 = vmax.f32 %v1444, 0.0
  %v1509 = vmax.f32 %v1445, 0.0
  %v1510 = vmax.f32 %v1446, 0.0
  %v1511 = vmax.f32 %v1447, 0.0
  %v1512 = vmax.f32 %v1448, 0.0
  %v1513 = vmax.f32 %v1449, 0.0
  %v1514 = vmax.f32 %v1450, 0.0
  %v1515 = vmax.f32 %v1451, 0.0
  %v1516 = vmax.f32 %v1452, 0.0
  %v1517 = vmax.f32 %v1453, 0.0
  %v1518 = vmax.f32 %v1454, 0.0
  %v1519 = vmax.f32 %v1455, 0.0
  %v1520 = vmax.f32 %v1456, 0.0
  %v1521 = vmax.f32 %v1457, 0.0
  %v1522 = vmax.f32 %v1458, 0.0
  %v1523 = vmax.f32 %v1459, 0.0
  %v1524 = vmax.f32 %v1460, 0.0
  %v1525 = vmax.f32 %v1461, 0.0
  %v1526 = vmax.f32 %v1462, 0.0
  %v1527 = vmax.f32 %v1463, 0.0
  %v1528 = vmax.f32 %v1464, 0.0
  %v1529 = vmax.f32 %v1465, 0.0
  %v1530 = vmax.f32 %v1466, 0.0
  %v1531 = vmax.f32 %v1467, 0.0
  %v1532 = vmax.f32 %v1468, 0.0
  %v1533 = vmax.f32 %v1469, 0.0
  %v1534 = vmax.f32 %v1470, 0.0
  %v1535 = vmax.f32 %v1471, 0.0
  %v1536 = vmax.f32 %v1472, 0.0
  %v1537 = vmax.f32 %v1473, 0.0
  %v1538 = vmax.f32 %v1474, 0.0
  %v1539 = vmax.f32 %v1475, 0.0
  %v1540 = vmax.f32 %v1476, 0.0
  %v1541 = vmax.f32 %v1477, 0.0
  %v1542 = vmax.f32 %v1478, 0.0
  %v1543 = vmax.f32 %v1479, 0.0
  %v1544 = vmax.f32 %v1480, 0.0
  %v1545 = vpack.c.bf16 %v1482, %v1481
  %v1546 = vpack.c.bf16 %v1484, %v1483
  %v1547 = vpack.c.bf16 %v1486, %v1485
  %v1548 = vpack.c.bf16 %v1488, %v1487
  %v1549 = vpack.c.bf16 %v1490, %v1489
  %v1550 = vpack.c.bf16 %v1492, %v1491
  %v1551 = vpack.c.bf16 %v1494, %v1493
  %v1552 = vpack.c.bf16 %v1496, %v1495
  %v1553 = vpack.c.bf16 %v1498, %v1497
  %v1554 = vpack.c.bf16 %v1500, %v1499
  %v1555 = vpack.c.bf16 %v1502, %v1501
  %v1556 = vpack.c.bf16 %v1504, %v1503
  %v1557 = vpack.c.bf16 %v1506, %v1505
  %v1558 = vpack.c.bf16 %v1508, %v1507
  %v1559 = vpack.c.bf16 %v1510, %v1509
  %v1560 = vpack.c.bf16 %v1512, %v1511
  %v1561 = vpack.c.bf16 %v1514, %v1513
  %v1562 = vpack.c.bf16 %v1516, %v1515
  %v1563 = vpack.c.bf16 %v1518, %v1517
  %v1564 = vpack.c.bf16 %v1520, %v1519
  %v1565 = vpack.c.bf16 %v1522, %v1521
  %v1566 = vpack.c.bf16 %v1524, %v1523
  %v1567 = vpack.c.bf16 %v1526, %v1525
  %v1568 = vpack.c.bf16 %v1528, %v1527
  %v1569 = vpack.c.bf16 %v1530, %v1529
  %v1570 = vpack.c.bf16 %v1532, %v1531
  %v1571 = vpack.c.bf16 %v1534, %v1533
  %v1572 = vpack.c.bf16 %v1536, %v1535
  %v1573 = vpack.c.bf16 %v1538, %v1537
  %v1574 = vpack.c.bf16 %v1540, %v1539
  %v1575 = vpack.c.bf16 %v1542, %v1541
  %v1576 = vpack.c.bf16 %v1544, %v1543
  %s1577 = scalar_lea.vmem %s10, 128
  %v1578 = vld [vmem:[%s1577] sm:$0xf]
  %v1579 = vld [vmem:[%s1577 + $0x4] sm:$0xf]
  %v1580 = vld [vmem:[%s1577 + $0x8] sm:$0xf]
  %v1581 = vld [vmem:[%s1577 + $0xc] sm:$0xf]
  %v1582 = vld [vmem:[%s1577 + $0x10] sm:$0xf]
  %v1583 = vld [vmem:[%s1577 + $0x14] sm:$0xf]
  %v1584 = vld [vmem:[%s1577 + $0x18] sm:$0xf]
  %v1585 = vld [vmem:[%s1577 + $0x1c] sm:$0xf]
  %v1586 = vld [vmem:[%s1577 + $0x20] sm:$0xf]
  %v1587 = vld [vmem:[%s1577 + $0x24] sm:$0xf]
  %v1588 = vld [vmem:[%s1577 + $0x28] sm:$0xf]
  %v1589 = vld [vmem:[%s1577 + $0x2c] sm:$0xf]
  %v1590 = vld [vmem:[%s1577 + $0x30] sm:$0xf]
  %v1591 = vld [vmem:[%s1577 + $0x34] sm:$0xf]
  %v1592 = vld [vmem:[%s1577 + $0x38] sm:$0xf]
  %v1593 = vld [vmem:[%s1577 + $0x3c] sm:$0xf]
  %v1610 = vunpack.c.l.b16 %v1578
  %v1611 = vunpack.c.l.b16 %v1579
  %v1612 = vunpack.c.l.b16 %v1580
  %v1613 = vunpack.c.l.b16 %v1581
  %v1614 = vunpack.c.l.b16 %v1582
  %v1615 = vunpack.c.l.b16 %v1583
  %v1616 = vunpack.c.l.b16 %v1584
  %v1617 = vunpack.c.l.b16 %v1585
  %v1618 = vunpack.c.l.b16 %v1586
  %v1619 = vunpack.c.l.b16 %v1587
  %v1620 = vunpack.c.l.b16 %v1588
  %v1621 = vunpack.c.l.b16 %v1589
  %v1622 = vunpack.c.l.b16 %v1590
  %v1623 = vunpack.c.l.b16 %v1591
  %v1624 = vunpack.c.l.b16 %v1592
  %v1625 = vunpack.c.l.b16 %v1593
  %v1626 = vpack.c.b16 %v1611, %v1610
  %v1627 = vpack.c.b16 %v1613, %v1612
  %v1628 = vpack.c.b16 %v1615, %v1614
  %v1629 = vpack.c.b16 %v1617, %v1616
  %v1630 = vpack.c.b16 %v1619, %v1618
  %v1631 = vpack.c.b16 %v1621, %v1620
  %v1632 = vpack.c.b16 %v1623, %v1622
  %v1633 = vpack.c.b16 %v1625, %v1624
  %1642 = vmatpush.bf16.msra.mxu0 %v1633
  %1643 = vmatpush.bf16.msra.mxu0 %v1632
  %1644 = vmatpush.bf16.msra.mxu0 %v1631
  %1645 = vmatpush.bf16.msra.mxu0 %v1630
  %1646 = vmatpush.bf16.msra.mxu0 %v1629
  %1647 = vmatpush.bf16.msra.mxu0 %v1628
  %1648 = vmatpush.bf16.msra.mxu0 %v1627
  %1649 = vmatpush.bf16.msra.mxu0 %v1626
  %1650 = vmatmul.bf16.gmra.mxu0 %v1545
  %v1651 = vpop.f32.mrf.mxu0
  %v1652 = vadd.f32 0.0, %v1651
  %v1653 = vpop.f32.mrf.mxu0
  %v1654 = vadd.f32 0.0, %v1653
  %1655 = vmatmul.bf16.gmra.mxu0 %v1546
  %v1656 = vpop.f32.mrf.mxu0
  %v1657 = vadd.f32 0.0, %v1656
  %v1658 = vpop.f32.mrf.mxu0
  %v1659 = vadd.f32 0.0, %v1658
  %1660 = vmatmul.bf16.gmra.mxu0 %v1547
  %v1661 = vpop.f32.mrf.mxu0
  %v1662 = vadd.f32 0.0, %v1661
  %v1663 = vpop.f32.mrf.mxu0
  %v1664 = vadd.f32 0.0, %v1663
  %1665 = vmatmul.bf16.gmra.mxu0 %v1548
  %v1666 = vpop.f32.mrf.mxu0
  %v1667 = vadd.f32 0.0, %v1666
  %v1668 = vpop.f32.mrf.mxu0
  %v1669 = vadd.f32 0.0, %v1668
  %1670 = vmatmul.bf16.gmra.mxu0 %v1549
  %v1671 = vpop.f32.mrf.mxu0
  %v1672 = vadd.f32 0.0, %v1671
  %v1673 = vpop.f32.mrf.mxu0
  %v1674 = vadd.f32 0.0, %v1673
  %1675 = vmatmul.bf16.gmra.mxu0 %v1550
  %v1676 = vpop.f32.mrf.mxu0
  %v1677 = vadd.f32 0.0, %v1676
  %v1678 = vpop.f32.mrf.mxu0
  %v1679 = vadd.f32 0.0, %v1678
  %1680 = vmatmul.bf16.gmra.mxu0 %v1551
  %v1681 = vpop.f32.mrf.mxu0
  %v1682 = vadd.f32 0.0, %v1681
  %v1683 = vpop.f32.mrf.mxu0
  %v1684 = vadd.f32 0.0, %v1683
  %1685 = vmatmul.bf16.gmra.mxu0 %v1552
  %v1686 = vpop.f32.mrf.mxu0
  %v1687 = vadd.f32 0.0, %v1686
  %v1688 = vpop.f32.mrf.mxu0
  %v1689 = vadd.f32 0.0, %v1688
  %1690 = vmatmul.bf16.gmra.mxu0 %v1553
  %v1691 = vpop.f32.mrf.mxu0
  %v1692 = vadd.f32 0.0, %v1691
  %v1693 = vpop.f32.mrf.mxu0
  %v1694 = vadd.f32 0.0, %v1693
  %1695 = vmatmul.bf16.gmra.mxu0 %v1554
  %v1696 = vpop.f32.mrf.mxu0
  %v1697 = vadd.f32 0.0, %v1696
  %v1698 = vpop.f32.mrf.mxu0
  %v1699 = vadd.f32 0.0, %v1698
  %1700 = vmatmul.bf16.gmra.mxu0 %v1555
  %v1701 = vpop.f32.mrf.mxu0
  %v1702 = vadd.f32 0.0, %v1701
  %v1703 = vpop.f32.mrf.mxu0
  %v1704 = vadd.f32 0.0, %v1703
  %1705 = vmatmul.bf16.gmra.mxu0 %v1556
  %v1706 = vpop.f32.mrf.mxu0
  %v1707 = vadd.f32 0.0, %v1706
  %v1708 = vpop.f32.mrf.mxu0
  %v1709 = vadd.f32 0.0, %v1708
  %1710 = vmatmul.bf16.gmra.mxu0 %v1557
  %v1711 = vpop.f32.mrf.mxu0
  %v1712 = vadd.f32 0.0, %v1711
  %v1713 = vpop.f32.mrf.mxu0
  %v1714 = vadd.f32 0.0, %v1713
  %1715 = vmatmul.bf16.gmra.mxu0 %v1558
  %v1716 = vpop.f32.mrf.mxu0
  %v1717 = vadd.f32 0.0, %v1716
  %v1718 = vpop.f32.mrf.mxu0
  %v1719 = vadd.f32 0.0, %v1718
  %1720 = vmatmul.bf16.gmra.mxu0 %v1559
  %v1721 = vpop.f32.mrf.mxu0
  %v1722 = vadd.f32 0.0, %v1721
  %v1723 = vpop.f32.mrf.mxu0
  %v1724 = vadd.f32 0.0, %v1723
  %1725 = vmatmul.bf16.gmra.mxu0 %v1560
  %v1726 = vpop.f32.mrf.mxu0
  %v1727 = vadd.f32 0.0, %v1726
  %v1728 = vpop.f32.mrf.mxu0
  %v1729 = vadd.f32 0.0, %v1728
  %1730 = vmatmul.bf16.gmra.mxu0 %v1561
  %v1731 = vpop.f32.mrf.mxu0
  %v1732 = vadd.f32 0.0, %v1731
  %v1733 = vpop.f32.mrf.mxu0
  %v1734 = vadd.f32 0.0, %v1733
  %1735 = vmatmul.bf16.gmra.mxu0 %v1562
  %v1736 = vpop.f32.mrf.mxu0
  %v1737 = vadd.f32 0.0, %v1736
  %v1738 = vpop.f32.mrf.mxu0
  %v1739 = vadd.f32 0.0, %v1738
  %1740 = vmatmul.bf16.gmra.mxu0 %v1563
  %v1741 = vpop.f32.mrf.mxu0
  %v1742 = vadd.f32 0.0, %v1741
  %v1743 = vpop.f32.mrf.mxu0
  %v1744 = vadd.f32 0.0, %v1743
  %1745 = vmatmul.bf16.gmra.mxu0 %v1564
  %v1746 = vpop.f32.mrf.mxu0
  %v1747 = vadd.f32 0.0, %v1746
  %v1748 = vpop.f32.mrf.mxu0
  %v1749 = vadd.f32 0.0, %v1748
  %1750 = vmatmul.bf16.gmra.mxu0 %v1565
  %v1751 = vpop.f32.mrf.mxu0
  %v1752 = vadd.f32 0.0, %v1751
  %v1753 = vpop.f32.mrf.mxu0
  %v1754 = vadd.f32 0.0, %v1753
  %1755 = vmatmul.bf16.gmra.mxu0 %v1566
  %v1756 = vpop.f32.mrf.mxu0
  %v1757 = vadd.f32 0.0, %v1756
  %v1758 = vpop.f32.mrf.mxu0
  %v1759 = vadd.f32 0.0, %v1758
  %1760 = vmatmul.bf16.gmra.mxu0 %v1567
  %v1761 = vpop.f32.mrf.mxu0
  %v1762 = vadd.f32 0.0, %v1761
  %v1763 = vpop.f32.mrf.mxu0
  %v1764 = vadd.f32 0.0, %v1763
  %1765 = vmatmul.bf16.gmra.mxu0 %v1568
  %v1766 = vpop.f32.mrf.mxu0
  %v1767 = vadd.f32 0.0, %v1766
  %v1768 = vpop.f32.mrf.mxu0
  %v1769 = vadd.f32 0.0, %v1768
  %1770 = vmatmul.bf16.gmra.mxu0 %v1569
  %v1771 = vpop.f32.mrf.mxu0
  %v1772 = vadd.f32 0.0, %v1771
  %v1773 = vpop.f32.mrf.mxu0
  %v1774 = vadd.f32 0.0, %v1773
  %1775 = vmatmul.bf16.gmra.mxu0 %v1570
  %v1776 = vpop.f32.mrf.mxu0
  %v1777 = vadd.f32 0.0, %v1776
  %v1778 = vpop.f32.mrf.mxu0
  %v1779 = vadd.f32 0.0, %v1778
  %1780 = vmatmul.bf16.gmra.mxu0 %v1571
  %v1781 = vpop.f32.mrf.mxu0
  %v1782 = vadd.f32 0.0, %v1781
  %v1783 = vpop.f32.mrf.mxu0
  %v1784 = vadd.f32 0.0, %v1783
  %1785 = vmatmul.bf16.gmra.mxu0 %v1572
  %v1786 = vpop.f32.mrf.mxu0
  %v1787 = vadd.f32 0.0, %v1786
  %v1788 = vpop.f32.mrf.mxu0
  %v1789 = vadd.f32 0.0, %v1788
  %1790 = vmatmul.bf16.gmra.mxu0 %v1573
  %v1791 = vpop.f32.mrf.mxu0
  %v1792 = vadd.f32 0.0, %v1791
  %v1793 = vpop.f32.mrf.mxu0
  %v1794 = vadd.f32 0.0, %v1793
  %1795 = vmatmul.bf16.gmra.mxu0 %v1574
  %v1796 = vpop.f32.mrf.mxu0
  %v1797 = vadd.f32 0.0, %v1796
  %v1798 = vpop.f32.mrf.mxu0
  %v1799 = vadd.f32 0.0, %v1798
  %1800 = vmatmul.bf16.gmra.mxu0 %v1575
  %v1801 = vpop.f32.mrf.mxu0
  %v1802 = vadd.f32 0.0, %v1801
  %v1803 = vpop.f32.mrf.mxu0
  %v1804 = vadd.f32 0.0, %v1803
  %1805 = vmatmul.bf16.gmra.mxu0 %v1576
  %v1806 = vpop.f32.mrf.mxu0
  %v1807 = vadd.f32 0.0, %v1806
  %v1808 = vpop.f32.mrf.mxu0
  %v1809 = vadd.f32 0.0, %v1808
  %1810 = vdwg.mxu0
  %v1811 = vadd.f32 %v1062, %v1652
  %v1812 = vadd.f32 %v1064, %v1654
  %v1813 = vadd.f32 %v1067, %v1657
  %v1814 = vadd.f32 %v1069, %v1659
  %v1815 = vadd.f32 %v1072, %v1662
  %v1816 = vadd.f32 %v1074, %v1664
  %v1817 = vadd.f32 %v1077, %v1667
  %v1818 = vadd.f32 %v1079, %v1669
  %v1819 = vadd.f32 %v1082, %v1672
  %v1820 = vadd.f32 %v1084, %v1674
  %v1821 = vadd.f32 %v1087, %v1677
  %v1822 = vadd.f32 %v1089, %v1679
  %v1823 = vadd.f32 %v1092, %v1682
  %v1824 = vadd.f32 %v1094, %v1684
  %v1825 = vadd.f32 %v1097, %v1687
  %v1826 = vadd.f32 %v1099, %v1689
  %v1827 = vadd.f32 %v1102, %v1692
  %v1828 = vadd.f32 %v1104, %v1694
  %v1829 = vadd.f32 %v1107, %v1697
  %v1830 = vadd.f32 %v1109, %v1699
  %v1831 = vadd.f32 %v1112, %v1702
  %v1832 = vadd.f32 %v1114, %v1704
  %v1833 = vadd.f32 %v1117, %v1707
  %v1834 = vadd.f32 %v1119, %v1709
  %v1835 = vadd.f32 %v1122, %v1712
  %v1836 = vadd.f32 %v1124, %v1714
  %v1837 = vadd.f32 %v1127, %v1717
  %v1838 = vadd.f32 %v1129, %v1719
  %v1839 = vadd.f32 %v1132, %v1722
  %v1840 = vadd.f32 %v1134, %v1724
  %v1841 = vadd.f32 %v1137, %v1727
  %v1842 = vadd.f32 %v1139, %v1729
  %v1843 = vadd.f32 %v1142, %v1732
  %v1844 = vadd.f32 %v1144, %v1734
  %v1845 = vadd.f32 %v1147, %v1737
  %v1846 = vadd.f32 %v1149, %v1739
  %v1847 = vadd.f32 %v1152, %v1742
  %v1848 = vadd.f32 %v1154, %v1744
  %v1849 = vadd.f32 %v1157, %v1747
  %v1850 = vadd.f32 %v1159, %v1749
  %v1851 = vadd.f32 %v1162, %v1752
  %v1852 = vadd.f32 %v1164, %v1754
  %v1853 = vadd.f32 %v1167, %v1757
  %v1854 = vadd.f32 %v1169, %v1759
  %v1855 = vadd.f32 %v1172, %v1762
  %v1856 = vadd.f32 %v1174, %v1764
  %v1857 = vadd.f32 %v1177, %v1767
  %v1858 = vadd.f32 %v1179, %v1769
  %v1859 = vadd.f32 %v1182, %v1772
  %v1860 = vadd.f32 %v1184, %v1774
  %v1861 = vadd.f32 %v1187, %v1777
  %v1862 = vadd.f32 %v1189, %v1779
  %v1863 = vadd.f32 %v1192, %v1782
  %v1864 = vadd.f32 %v1194, %v1784
  %v1865 = vadd.f32 %v1197, %v1787
  %v1866 = vadd.f32 %v1199, %v1789
  %v1867 = vadd.f32 %v1202, %v1792
  %v1868 = vadd.f32 %v1204, %v1794
  %v1869 = vadd.f32 %v1207, %v1797
  %v1870 = vadd.f32 %v1209, %v1799
  %v1871 = vadd.f32 %v1212, %v1802
  %v1872 = vadd.f32 %v1214, %v1804
  %v1873 = vadd.f32 %v1217, %v1807
  %v1874 = vadd.f32 %v1219, %v1809
  %v1875 = vld [vmem:[%s3] sm:$0xf]
  %v1876 = vld [vmem:[%s3 + $0x4] sm:$0xf]
  %v1877 = vld [vmem:[%s3 + $0x8] sm:$0xf]
  %v1878 = vld [vmem:[%s3 + $0xc] sm:$0xf]
  %v1879 = vld [vmem:[%s3 + $0x10] sm:$0xf]
  %v1880 = vld [vmem:[%s3 + $0x14] sm:$0xf]
  %v1881 = vld [vmem:[%s3 + $0x18] sm:$0xf]
  %v1882 = vld [vmem:[%s3 + $0x1c] sm:$0xf]
  %v1883 = vld [vmem:[%s3 + $0x20] sm:$0xf]
  %v1884 = vld [vmem:[%s3 + $0x24] sm:$0xf]
  %v1885 = vld [vmem:[%s3 + $0x28] sm:$0xf]
  %v1886 = vld [vmem:[%s3 + $0x2c] sm:$0xf]
  %v1887 = vld [vmem:[%s3 + $0x30] sm:$0xf]
  %v1888 = vld [vmem:[%s3 + $0x34] sm:$0xf]
  %v1889 = vld [vmem:[%s3 + $0x38] sm:$0xf]
  %v1890 = vld [vmem:[%s3 + $0x3c] sm:$0xf]
  %v1891 = vld [vmem:[%s3 + $0x40] sm:$0xf]
  %v1892 = vld [vmem:[%s3 + $0x44] sm:$0xf]
  %v1893 = vld [vmem:[%s3 + $0x48] sm:$0xf]
  %v1894 = vld [vmem:[%s3 + $0x4c] sm:$0xf]
  %v1895 = vld [vmem:[%s3 + $0x50] sm:$0xf]
  %v1896 = vld [vmem:[%s3 + $0x54] sm:$0xf]
  %v1897 = vld [vmem:[%s3 + $0x58] sm:$0xf]
  %v1898 = vld [vmem:[%s3 + $0x5c] sm:$0xf]
  %v1899 = vld [vmem:[%s3 + $0x60] sm:$0xf]
  %v1900 = vld [vmem:[%s3 + $0x64] sm:$0xf]
  %v1901 = vld [vmem:[%s3 + $0x68] sm:$0xf]
  %v1902 = vld [vmem:[%s3 + $0x6c] sm:$0xf]
  %v1903 = vld [vmem:[%s3 + $0x70] sm:$0xf]
  %v1904 = vld [vmem:[%s3 + $0x74] sm:$0xf]
  %v1905 = vld [vmem:[%s3 + $0x78] sm:$0xf]
  %v1906 = vld [vmem:[%s3 + $0x7c] sm:$0xf]
  %v1907 = vld [vmem:[%s3 + $0x80] sm:$0xf]
  %v1908 = vld [vmem:[%s3 + $0x84] sm:$0xf]
  %v1909 = vld [vmem:[%s3 + $0x88] sm:$0xf]
  %v1910 = vld [vmem:[%s3 + $0x8c] sm:$0xf]
  %v1911 = vld [vmem:[%s3 + $0x90] sm:$0xf]
  %v1912 = vld [vmem:[%s3 + $0x94] sm:$0xf]
  %v1913 = vld [vmem:[%s3 + $0x98] sm:$0xf]
  %v1914 = vld [vmem:[%s3 + $0x9c] sm:$0xf]
  %v1915 = vld [vmem:[%s3 + $0xa0] sm:$0xf]
  %v1916 = vld [vmem:[%s3 + $0xa4] sm:$0xf]
  %v1917 = vld [vmem:[%s3 + $0xa8] sm:$0xf]
  %v1918 = vld [vmem:[%s3 + $0xac] sm:$0xf]
  %v1919 = vld [vmem:[%s3 + $0xb0] sm:$0xf]
  %v1920 = vld [vmem:[%s3 + $0xb4] sm:$0xf]
  %v1921 = vld [vmem:[%s3 + $0xb8] sm:$0xf]
  %v1922 = vld [vmem:[%s3 + $0xbc] sm:$0xf]
  %v1923 = vld [vmem:[%s3 + $0xc0] sm:$0xf]
  %v1924 = vld [vmem:[%s3 + $0xc4] sm:$0xf]
  %v1925 = vld [vmem:[%s3 + $0xc8] sm:$0xf]
  %v1926 = vld [vmem:[%s3 + $0xcc] sm:$0xf]
  %v1927 = vld [vmem:[%s3 + $0xd0] sm:$0xf]
  %v1928 = vld [vmem:[%s3 + $0xd4] sm:$0xf]
  %v1929 = vld [vmem:[%s3 + $0xd8] sm:$0xf]
  %v1930 = vld [vmem:[%s3 + $0xdc] sm:$0xf]
  %v1931 = vld [vmem:[%s3 + $0xe0] sm:$0xf]
  %v1932 = vld [vmem:[%s3 + $0xe4] sm:$0xf]
  %v1933 = vld [vmem:[%s3 + $0xe8] sm:$0xf]
  %v1934 = vld [vmem:[%s3 + $0xec] sm:$0xf]
  %v1935 = vld [vmem:[%s3 + $0xf0] sm:$0xf]
  %v1936 = vld [vmem:[%s3 + $0xf4] sm:$0xf]
  %v1937 = vld [vmem:[%s3 + $0xf8] sm:$0xf]
  %v1938 = vld [vmem:[%s3 + $0xfc] sm:$0xf]
  %v1939 = vunpack.c.l.bf16 %v1875
  %v1940 = vunpack.c.l.bf16 %v1876
  %v1941 = vunpack.c.l.bf16 %v1877
  %v1942 = vunpack.c.l.bf16 %v1878
  %v1943 = vunpack.c.l.bf16 %v1879
  %v1944 = vunpack.c.l.bf16 %v1880
  %v1945 = vunpack.c.l.bf16 %v1881
  %v1946 = vunpack.c.l.bf16 %v1882
  %v1947 = vunpack.c.l.bf16 %v1883
  %v1948 = vunpack.c.l.bf16 %v1884
  %v1949 = vunpack.c.l.bf16 %v1885
  %v1950 = vunpack.c.l.bf16 %v1886
  %v1951 = vunpack.c.l.bf16 %v1887
  %v1952 = vunpack.c.l.bf16 %v1888
  %v1953 = vunpack.c.l.bf16 %v1889
  %v1954 = vunpack.c.l.bf16 %v1890
  %v1955 = vunpack.c.l.bf16 %v1891
  %v1956 = vunpack.c.l.bf16 %v1892
  %v1957 = vunpack.c.l.bf16 %v1893
  %v1958 = vunpack.c.l.bf16 %v1894
  %v1959 = vunpack.c.l.bf16 %v1895
  %v1960 = vunpack.c.l.bf16 %v1896
  %v1961 = vunpack.c.l.bf16 %v1897
  %v1962 = vunpack.c.l.bf16 %v1898
  %v1963 = vunpack.c.l.bf16 %v1899
  %v1964 = vunpack.c.l.bf16 %v1900
  %v1965 = vunpack.c.l.bf16 %v1901
  %v1966 = vunpack.c.l.bf16 %v1902
  %v1967 = vunpack.c.l.bf16 %v1903
  %v1968 = vunpack.c.l.bf16 %v1904
  %v1969 = vunpack.c.l.bf16 %v1905
  %v1970 = vunpack.c.l.bf16 %v1906
  %v1971 = vunpack.c.l.bf16 %v1907
  %v1972 = vunpack.c.l.bf16 %v1908
  %v1973 = vunpack.c.l.bf16 %v1909
  %v1974 = vunpack.c.l.bf16 %v1910
  %v1975 = vunpack.c.l.bf16 %v1911
  %v1976 = vunpack.c.l.bf16 %v1912
  %v1977 = vunpack.c.l.bf16 %v1913
  %v1978 = vunpack.c.l.bf16 %v1914
  %v1979 = vunpack.c.l.bf16 %v1915
  %v1980 = vunpack.c.l.bf16 %v1916
  %v1981 = vunpack.c.l.bf16 %v1917
  %v1982 = vunpack.c.l.bf16 %v1918
  %v1983 = vunpack.c.l.bf16 %v1919
  %v1984 = vunpack.c.l.bf16 %v1920
  %v1985 = vunpack.c.l.bf16 %v1921
  %v1986 = vunpack.c.l.bf16 %v1922
  %v1987 = vunpack.c.l.bf16 %v1923
  %v1988 = vunpack.c.l.bf16 %v1924
  %v1989 = vunpack.c.l.bf16 %v1925
  %v1990 = vunpack.c.l.bf16 %v1926
  %v1991 = vunpack.c.l.bf16 %v1927
  %v1992 = vunpack.c.l.bf16 %v1928
  %v1993 = vunpack.c.l.bf16 %v1929
  %v1994 = vunpack.c.l.bf16 %v1930
  %v1995 = vunpack.c.l.bf16 %v1931
  %v1996 = vunpack.c.l.bf16 %v1932
  %v1997 = vunpack.c.l.bf16 %v1933
  %v1998 = vunpack.c.l.bf16 %v1934
  %v1999 = vunpack.c.l.bf16 %v1935
  %v2000 = vunpack.c.l.bf16 %v1936
  %v2001 = vunpack.c.l.bf16 %v1937
  %v2002 = vunpack.c.l.bf16 %v1938
  %v2003 = vld [vmem:[%s6 + $0x3] sm:$0x1]
  %v2004 = vperm.slane %v2003, 0
  %v2005 = vmul.f32 %v1939, %v2004
  %v2006 = vmul.f32 %v1940, %v2004
  %v2007 = vmul.f32 %v1941, %v2004
  %v2008 = vmul.f32 %v1942, %v2004
  %v2009 = vmul.f32 %v1943, %v2004
  %v2010 = vmul.f32 %v1944, %v2004
  %v2011 = vmul.f32 %v1945, %v2004
  %v2012 = vmul.f32 %v1946, %v2004
  %v2013 = vmul.f32 %v1947, %v2004
  %v2014 = vmul.f32 %v1948, %v2004
  %v2015 = vmul.f32 %v1949, %v2004
  %v2016 = vmul.f32 %v1950, %v2004
  %v2017 = vmul.f32 %v1951, %v2004
  %v2018 = vmul.f32 %v1952, %v2004
  %v2019 = vmul.f32 %v1953, %v2004
  %v2020 = vmul.f32 %v1954, %v2004
  %v2021 = vmul.f32 %v1955, %v2004
  %v2022 = vmul.f32 %v1956, %v2004
  %v2023 = vmul.f32 %v1957, %v2004
  %v2024 = vmul.f32 %v1958, %v2004
  %v2025 = vmul.f32 %v1959, %v2004
  %v2026 = vmul.f32 %v1960, %v2004
  %v2027 = vmul.f32 %v1961, %v2004
  %v2028 = vmul.f32 %v1962, %v2004
  %v2029 = vmul.f32 %v1963, %v2004
  %v2030 = vmul.f32 %v1964, %v2004
  %v2031 = vmul.f32 %v1965, %v2004
  %v2032 = vmul.f32 %v1966, %v2004
  %v2033 = vmul.f32 %v1967, %v2004
  %v2034 = vmul.f32 %v1968, %v2004
  %v2035 = vmul.f32 %v1969, %v2004
  %v2036 = vmul.f32 %v1970, %v2004
  %v2037 = vmul.f32 %v1971, %v2004
  %v2038 = vmul.f32 %v1972, %v2004
  %v2039 = vmul.f32 %v1973, %v2004
  %v2040 = vmul.f32 %v1974, %v2004
  %v2041 = vmul.f32 %v1975, %v2004
  %v2042 = vmul.f32 %v1976, %v2004
  %v2043 = vmul.f32 %v1977, %v2004
  %v2044 = vmul.f32 %v1978, %v2004
  %v2045 = vmul.f32 %v1979, %v2004
  %v2046 = vmul.f32 %v1980, %v2004
  %v2047 = vmul.f32 %v1981, %v2004
  %v2048 = vmul.f32 %v1982, %v2004
  %v2049 = vmul.f32 %v1983, %v2004
  %v2050 = vmul.f32 %v1984, %v2004
  %v2051 = vmul.f32 %v1985, %v2004
  %v2052 = vmul.f32 %v1986, %v2004
  %v2053 = vmul.f32 %v1987, %v2004
  %v2054 = vmul.f32 %v1988, %v2004
  %v2055 = vmul.f32 %v1989, %v2004
  %v2056 = vmul.f32 %v1990, %v2004
  %v2057 = vmul.f32 %v1991, %v2004
  %v2058 = vmul.f32 %v1992, %v2004
  %v2059 = vmul.f32 %v1993, %v2004
  %v2060 = vmul.f32 %v1994, %v2004
  %v2061 = vmul.f32 %v1995, %v2004
  %v2062 = vmul.f32 %v1996, %v2004
  %v2063 = vmul.f32 %v1997, %v2004
  %v2064 = vmul.f32 %v1998, %v2004
  %v2065 = vmul.f32 %v1999, %v2004
  %v2066 = vmul.f32 %v2000, %v2004
  %v2067 = vmul.f32 %v2001, %v2004
  %v2068 = vmul.f32 %v2002, %v2004
  %v2069 = vld [vmem:[%s7 + $0x3] sm:$0x1]
  %v2070 = vperm.slane %v2069, 0
  %v2071 = vadd.f32 %v2005, %v2070
  %v2072 = vadd.f32 %v2006, %v2070
  %v2073 = vadd.f32 %v2007, %v2070
  %v2074 = vadd.f32 %v2008, %v2070
  %v2075 = vadd.f32 %v2009, %v2070
  %v2076 = vadd.f32 %v2010, %v2070
  %v2077 = vadd.f32 %v2011, %v2070
  %v2078 = vadd.f32 %v2012, %v2070
  %v2079 = vadd.f32 %v2013, %v2070
  %v2080 = vadd.f32 %v2014, %v2070
  %v2081 = vadd.f32 %v2015, %v2070
  %v2082 = vadd.f32 %v2016, %v2070
  %v2083 = vadd.f32 %v2017, %v2070
  %v2084 = vadd.f32 %v2018, %v2070
  %v2085 = vadd.f32 %v2019, %v2070
  %v2086 = vadd.f32 %v2020, %v2070
  %v2087 = vadd.f32 %v2021, %v2070
  %v2088 = vadd.f32 %v2022, %v2070
  %v2089 = vadd.f32 %v2023, %v2070
  %v2090 = vadd.f32 %v2024, %v2070
  %v2091 = vadd.f32 %v2025, %v2070
  %v2092 = vadd.f32 %v2026, %v2070
  %v2093 = vadd.f32 %v2027, %v2070
  %v2094 = vadd.f32 %v2028, %v2070
  %v2095 = vadd.f32 %v2029, %v2070
  %v2096 = vadd.f32 %v2030, %v2070
  %v2097 = vadd.f32 %v2031, %v2070
  %v2098 = vadd.f32 %v2032, %v2070
  %v2099 = vadd.f32 %v2033, %v2070
  %v2100 = vadd.f32 %v2034, %v2070
  %v2101 = vadd.f32 %v2035, %v2070
  %v2102 = vadd.f32 %v2036, %v2070
  %v2103 = vadd.f32 %v2037, %v2070
  %v2104 = vadd.f32 %v2038, %v2070
  %v2105 = vadd.f32 %v2039, %v2070
  %v2106 = vadd.f32 %v2040, %v2070
  %v2107 = vadd.f32 %v2041, %v2070
  %v2108 = vadd.f32 %v2042, %v2070
  %v2109 = vadd.f32 %v2043, %v2070
  %v2110 = vadd.f32 %v2044, %v2070
  %v2111 = vadd.f32 %v2045, %v2070
  %v2112 = vadd.f32 %v2046, %v2070
  %v2113 = vadd.f32 %v2047, %v2070
  %v2114 = vadd.f32 %v2048, %v2070
  %v2115 = vadd.f32 %v2049, %v2070
  %v2116 = vadd.f32 %v2050, %v2070
  %v2117 = vadd.f32 %v2051, %v2070
  %v2118 = vadd.f32 %v2052, %v2070
  %v2119 = vadd.f32 %v2053, %v2070
  %v2120 = vadd.f32 %v2054, %v2070
  %v2121 = vadd.f32 %v2055, %v2070
  %v2122 = vadd.f32 %v2056, %v2070
  %v2123 = vadd.f32 %v2057, %v2070
  %v2124 = vadd.f32 %v2058, %v2070
  %v2125 = vadd.f32 %v2059, %v2070
  %v2126 = vadd.f32 %v2060, %v2070
  %v2127 = vadd.f32 %v2061, %v2070
  %v2128 = vadd.f32 %v2062, %v2070
  %v2129 = vadd.f32 %v2063, %v2070
  %v2130 = vadd.f32 %v2064, %v2070
  %v2131 = vadd.f32 %v2065, %v2070
  %v2132 = vadd.f32 %v2066, %v2070
  %v2133 = vadd.f32 %v2067, %v2070
  %v2134 = vadd.f32 %v2068, %v2070
  %v2135 = vmax.f32 %v2071, 0.0
  %v2136 = vmax.f32 %v2072, 0.0
  %v2137 = vmax.f32 %v2073, 0.0
  %v2138 = vmax.f32 %v2074, 0.0
  %v2139 = vmax.f32 %v2075, 0.0
  %v2140 = vmax.f32 %v2076, 0.0
  %v2141 = vmax.f32 %v2077, 0.0
  %v2142 = vmax.f32 %v2078, 0.0
  %v2143 = vmax.f32 %v2079, 0.0
  %v2144 = vmax.f32 %v2080, 0.0
  %v2145 = vmax.f32 %v2081, 0.0
  %v2146 = vmax.f32 %v2082, 0.0
  %v2147 = vmax.f32 %v2083, 0.0
  %v2148 = vmax.f32 %v2084, 0.0
  %v2149 = vmax.f32 %v2085, 0.0
  %v2150 = vmax.f32 %v2086, 0.0
  %v2151 = vmax.f32 %v2087, 0.0
  %v2152 = vmax.f32 %v2088, 0.0
  %v2153 = vmax.f32 %v2089, 0.0
  %v2154 = vmax.f32 %v2090, 0.0
  %v2155 = vmax.f32 %v2091, 0.0
  %v2156 = vmax.f32 %v2092, 0.0
  %v2157 = vmax.f32 %v2093, 0.0
  %v2158 = vmax.f32 %v2094, 0.0
  %v2159 = vmax.f32 %v2095, 0.0
  %v2160 = vmax.f32 %v2096, 0.0
  %v2161 = vmax.f32 %v2097, 0.0
  %v2162 = vmax.f32 %v2098, 0.0
  %v2163 = vmax.f32 %v2099, 0.0
  %v2164 = vmax.f32 %v2100, 0.0
  %v2165 = vmax.f32 %v2101, 0.0
  %v2166 = vmax.f32 %v2102, 0.0
  %v2167 = vmax.f32 %v2103, 0.0
  %v2168 = vmax.f32 %v2104, 0.0
  %v2169 = vmax.f32 %v2105, 0.0
  %v2170 = vmax.f32 %v2106, 0.0
  %v2171 = vmax.f32 %v2107, 0.0
  %v2172 = vmax.f32 %v2108, 0.0
  %v2173 = vmax.f32 %v2109, 0.0
  %v2174 = vmax.f32 %v2110, 0.0
  %v2175 = vmax.f32 %v2111, 0.0
  %v2176 = vmax.f32 %v2112, 0.0
  %v2177 = vmax.f32 %v2113, 0.0
  %v2178 = vmax.f32 %v2114, 0.0
  %v2179 = vmax.f32 %v2115, 0.0
  %v2180 = vmax.f32 %v2116, 0.0
  %v2181 = vmax.f32 %v2117, 0.0
  %v2182 = vmax.f32 %v2118, 0.0
  %v2183 = vmax.f32 %v2119, 0.0
  %v2184 = vmax.f32 %v2120, 0.0
  %v2185 = vmax.f32 %v2121, 0.0
  %v2186 = vmax.f32 %v2122, 0.0
  %v2187 = vmax.f32 %v2123, 0.0
  %v2188 = vmax.f32 %v2124, 0.0
  %v2189 = vmax.f32 %v2125, 0.0
  %v2190 = vmax.f32 %v2126, 0.0
  %v2191 = vmax.f32 %v2127, 0.0
  %v2192 = vmax.f32 %v2128, 0.0
  %v2193 = vmax.f32 %v2129, 0.0
  %v2194 = vmax.f32 %v2130, 0.0
  %v2195 = vmax.f32 %v2131, 0.0
  %v2196 = vmax.f32 %v2132, 0.0
  %v2197 = vmax.f32 %v2133, 0.0
  %v2198 = vmax.f32 %v2134, 0.0
  %v2199 = vpack.c.bf16 %v2136, %v2135
  %v2200 = vpack.c.bf16 %v2138, %v2137
  %v2201 = vpack.c.bf16 %v2140, %v2139
  %v2202 = vpack.c.bf16 %v2142, %v2141
  %v2203 = vpack.c.bf16 %v2144, %v2143
  %v2204 = vpack.c.bf16 %v2146, %v2145
  %v2205 = vpack.c.bf16 %v2148, %v2147
  %v2206 = vpack.c.bf16 %v2150, %v2149
  %v2207 = vpack.c.bf16 %v2152, %v2151
  %v2208 = vpack.c.bf16 %v2154, %v2153
  %v2209 = vpack.c.bf16 %v2156, %v2155
  %v2210 = vpack.c.bf16 %v2158, %v2157
  %v2211 = vpack.c.bf16 %v2160, %v2159
  %v2212 = vpack.c.bf16 %v2162, %v2161
  %v2213 = vpack.c.bf16 %v2164, %v2163
  %v2214 = vpack.c.bf16 %v2166, %v2165
  %v2215 = vpack.c.bf16 %v2168, %v2167
  %v2216 = vpack.c.bf16 %v2170, %v2169
  %v2217 = vpack.c.bf16 %v2172, %v2171
  %v2218 = vpack.c.bf16 %v2174, %v2173
  %v2219 = vpack.c.bf16 %v2176, %v2175
  %v2220 = vpack.c.bf16 %v2178, %v2177
  %v2221 = vpack.c.bf16 %v2180, %v2179
  %v2222 = vpack.c.bf16 %v2182, %v2181
  %v2223 = vpack.c.bf16 %v2184, %v2183
  %v2224 = vpack.c.bf16 %v2186, %v2185
  %v2225 = vpack.c.bf16 %v2188, %v2187
  %v2226 = vpack.c.bf16 %v2190, %v2189
  %v2227 = vpack.c.bf16 %v2192, %v2191
  %v2228 = vpack.c.bf16 %v2194, %v2193
  %v2229 = vpack.c.bf16 %v2196, %v2195
  %v2230 = vpack.c.bf16 %v2198, %v2197
  %s2231 = scalar_lea.vmem %s10, 192
  %v2232 = vld [vmem:[%s2231] sm:$0xf]
  %v2233 = vld [vmem:[%s2231 + $0x4] sm:$0xf]
  %v2234 = vld [vmem:[%s2231 + $0x8] sm:$0xf]
  %v2235 = vld [vmem:[%s2231 + $0xc] sm:$0xf]
  %v2236 = vld [vmem:[%s2231 + $0x10] sm:$0xf]
  %v2237 = vld [vmem:[%s2231 + $0x14] sm:$0xf]
  %v2238 = vld [vmem:[%s2231 + $0x18] sm:$0xf]
  %v2239 = vld [vmem:[%s2231 + $0x1c] sm:$0xf]
  %v2240 = vld [vmem:[%s2231 + $0x20] sm:$0xf]
  %v2241 = vld [vmem:[%s2231 + $0x24] sm:$0xf]
  %v2242 = vld [vmem:[%s2231 + $0x28] sm:$0xf]
  %v2243 = vld [vmem:[%s2231 + $0x2c] sm:$0xf]
  %v2244 = vld [vmem:[%s2231 + $0x30] sm:$0xf]
  %v2245 = vld [vmem:[%s2231 + $0x34] sm:$0xf]
  %v2246 = vld [vmem:[%s2231 + $0x38] sm:$0xf]
  %v2247 = vld [vmem:[%s2231 + $0x3c] sm:$0xf]
  %v2264 = vunpack.c.l.b16 %v2232
  %v2265 = vunpack.c.l.b16 %v2233
  %v2266 = vunpack.c.l.b16 %v2234
  %v2267 = vunpack.c.l.b16 %v2235
  %v2268 = vunpack.c.l.b16 %v2236
  %v2269 = vunpack.c.l.b16 %v2237
  %v2270 = vunpack.c.l.b16 %v2238
  %v2271 = vunpack.c.l.b16 %v2239
  %v2272 = vunpack.c.l.b16 %v2240
  %v2273 = vunpack.c.l.b16 %v2241
  %v2274 = vunpack.c.l.b16 %v2242
  %v2275 = vunpack.c.l.b16 %v2243
  %v2276 = vunpack.c.l.b16 %v2244
  %v2277 = vunpack.c.l.b16 %v2245
  %v2278 = vunpack.c.l.b16 %v2246
  %v2279 = vunpack.c.l.b16 %v2247
  %v2280 = vpack.c.b16 %v2265, %v2264
  %v2281 = vpack.c.b16 %v2267, %v2266
  %v2282 = vpack.c.b16 %v2269, %v2268
  %v2283 = vpack.c.b16 %v2271, %v2270
  %v2284 = vpack.c.b16 %v2273, %v2272
  %v2285 = vpack.c.b16 %v2275, %v2274
  %v2286 = vpack.c.b16 %v2277, %v2276
  %v2287 = vpack.c.b16 %v2279, %v2278
  %2296 = vmatpush.bf16.msra.mxu0 %v2287
  %2297 = vmatpush.bf16.msra.mxu0 %v2286
  %2298 = vmatpush.bf16.msra.mxu0 %v2285
  %2299 = vmatpush.bf16.msra.mxu0 %v2284
  %2300 = vmatpush.bf16.msra.mxu0 %v2283
  %2301 = vmatpush.bf16.msra.mxu0 %v2282
  %2302 = vmatpush.bf16.msra.mxu0 %v2281
  %2303 = vmatpush.bf16.msra.mxu0 %v2280
  %2304 = vmatmul.bf16.gmra.mxu0 %v2199
  %v2305 = vpop.f32.mrf.mxu0
  %v2306 = vadd.f32 0.0, %v2305
  %v2307 = vpop.f32.mrf.mxu0
  %v2308 = vadd.f32 0.0, %v2307
  %2309 = vmatmul.bf16.gmra.mxu0 %v2200
  %v2310 = vpop.f32.mrf.mxu0
  %v2311 = vadd.f32 0.0, %v2310
  %v2312 = vpop.f32.mrf.mxu0
  %v2313 = vadd.f32 0.0, %v2312
  %2314 = vmatmul.bf16.gmra.mxu0 %v2201
  %v2315 = vpop.f32.mrf.mxu0
  %v2316 = vadd.f32 0.0, %v2315
  %v2317 = vpop.f32.mrf.mxu0
  %v2318 = vadd.f32 0.0, %v2317
  %2319 = vmatmul.bf16.gmra.mxu0 %v2202
  %v2320 = vpop.f32.mrf.mxu0
  %v2321 = vadd.f32 0.0, %v2320
  %v2322 = vpop.f32.mrf.mxu0
  %v2323 = vadd.f32 0.0, %v2322
  %2324 = vmatmul.bf16.gmra.mxu0 %v2203
  %v2325 = vpop.f32.mrf.mxu0
  %v2326 = vadd.f32 0.0, %v2325
  %v2327 = vpop.f32.mrf.mxu0
  %v2328 = vadd.f32 0.0, %v2327
  %2329 = vmatmul.bf16.gmra.mxu0 %v2204
  %v2330 = vpop.f32.mrf.mxu0
  %v2331 = vadd.f32 0.0, %v2330
  %v2332 = vpop.f32.mrf.mxu0
  %v2333 = vadd.f32 0.0, %v2332
  %2334 = vmatmul.bf16.gmra.mxu0 %v2205
  %v2335 = vpop.f32.mrf.mxu0
  %v2336 = vadd.f32 0.0, %v2335
  %v2337 = vpop.f32.mrf.mxu0
  %v2338 = vadd.f32 0.0, %v2337
  %2339 = vmatmul.bf16.gmra.mxu0 %v2206
  %v2340 = vpop.f32.mrf.mxu0
  %v2341 = vadd.f32 0.0, %v2340
  %v2342 = vpop.f32.mrf.mxu0
  %v2343 = vadd.f32 0.0, %v2342
  %2344 = vmatmul.bf16.gmra.mxu0 %v2207
  %v2345 = vpop.f32.mrf.mxu0
  %v2346 = vadd.f32 0.0, %v2345
  %v2347 = vpop.f32.mrf.mxu0
  %v2348 = vadd.f32 0.0, %v2347
  %2349 = vmatmul.bf16.gmra.mxu0 %v2208
  %v2350 = vpop.f32.mrf.mxu0
  %v2351 = vadd.f32 0.0, %v2350
  %v2352 = vpop.f32.mrf.mxu0
  %v2353 = vadd.f32 0.0, %v2352
  %2354 = vmatmul.bf16.gmra.mxu0 %v2209
  %v2355 = vpop.f32.mrf.mxu0
  %v2356 = vadd.f32 0.0, %v2355
  %v2357 = vpop.f32.mrf.mxu0
  %v2358 = vadd.f32 0.0, %v2357
  %2359 = vmatmul.bf16.gmra.mxu0 %v2210
  %v2360 = vpop.f32.mrf.mxu0
  %v2361 = vadd.f32 0.0, %v2360
  %v2362 = vpop.f32.mrf.mxu0
  %v2363 = vadd.f32 0.0, %v2362
  %2364 = vmatmul.bf16.gmra.mxu0 %v2211
  %v2365 = vpop.f32.mrf.mxu0
  %v2366 = vadd.f32 0.0, %v2365
  %v2367 = vpop.f32.mrf.mxu0
  %v2368 = vadd.f32 0.0, %v2367
  %2369 = vmatmul.bf16.gmra.mxu0 %v2212
  %v2370 = vpop.f32.mrf.mxu0
  %v2371 = vadd.f32 0.0, %v2370
  %v2372 = vpop.f32.mrf.mxu0
  %v2373 = vadd.f32 0.0, %v2372
  %2374 = vmatmul.bf16.gmra.mxu0 %v2213
  %v2375 = vpop.f32.mrf.mxu0
  %v2376 = vadd.f32 0.0, %v2375
  %v2377 = vpop.f32.mrf.mxu0
  %v2378 = vadd.f32 0.0, %v2377
  %2379 = vmatmul.bf16.gmra.mxu0 %v2214
  %v2380 = vpop.f32.mrf.mxu0
  %v2381 = vadd.f32 0.0, %v2380
  %v2382 = vpop.f32.mrf.mxu0
  %v2383 = vadd.f32 0.0, %v2382
  %2384 = vmatmul.bf16.gmra.mxu0 %v2215
  %v2385 = vpop.f32.mrf.mxu0
  %v2386 = vadd.f32 0.0, %v2385
  %v2387 = vpop.f32.mrf.mxu0
  %v2388 = vadd.f32 0.0, %v2387
  %2389 = vmatmul.bf16.gmra.mxu0 %v2216
  %v2390 = vpop.f32.mrf.mxu0
  %v2391 = vadd.f32 0.0, %v2390
  %v2392 = vpop.f32.mrf.mxu0
  %v2393 = vadd.f32 0.0, %v2392
  %2394 = vmatmul.bf16.gmra.mxu0 %v2217
  %v2395 = vpop.f32.mrf.mxu0
  %v2396 = vadd.f32 0.0, %v2395
  %v2397 = vpop.f32.mrf.mxu0
  %v2398 = vadd.f32 0.0, %v2397
  %2399 = vmatmul.bf16.gmra.mxu0 %v2218
  %v2400 = vpop.f32.mrf.mxu0
  %v2401 = vadd.f32 0.0, %v2400
  %v2402 = vpop.f32.mrf.mxu0
  %v2403 = vadd.f32 0.0, %v2402
  %2404 = vmatmul.bf16.gmra.mxu0 %v2219
  %v2405 = vpop.f32.mrf.mxu0
  %v2406 = vadd.f32 0.0, %v2405
  %v2407 = vpop.f32.mrf.mxu0
  %v2408 = vadd.f32 0.0, %v2407
  %2409 = vmatmul.bf16.gmra.mxu0 %v2220
  %v2410 = vpop.f32.mrf.mxu0
  %v2411 = vadd.f32 0.0, %v2410
  %v2412 = vpop.f32.mrf.mxu0
  %v2413 = vadd.f32 0.0, %v2412
  %2414 = vmatmul.bf16.gmra.mxu0 %v2221
  %v2415 = vpop.f32.mrf.mxu0
  %v2416 = vadd.f32 0.0, %v2415
  %v2417 = vpop.f32.mrf.mxu0
  %v2418 = vadd.f32 0.0, %v2417
  %2419 = vmatmul.bf16.gmra.mxu0 %v2222
  %v2420 = vpop.f32.mrf.mxu0
  %v2421 = vadd.f32 0.0, %v2420
  %v2422 = vpop.f32.mrf.mxu0
  %v2423 = vadd.f32 0.0, %v2422
  %2424 = vmatmul.bf16.gmra.mxu0 %v2223
  %v2425 = vpop.f32.mrf.mxu0
  %v2426 = vadd.f32 0.0, %v2425
  %v2427 = vpop.f32.mrf.mxu0
  %v2428 = vadd.f32 0.0, %v2427
  %2429 = vmatmul.bf16.gmra.mxu0 %v2224
  %v2430 = vpop.f32.mrf.mxu0
  %v2431 = vadd.f32 0.0, %v2430
  %v2432 = vpop.f32.mrf.mxu0
  %v2433 = vadd.f32 0.0, %v2432
  %2434 = vmatmul.bf16.gmra.mxu0 %v2225
  %v2435 = vpop.f32.mrf.mxu0
  %v2436 = vadd.f32 0.0, %v2435
  %v2437 = vpop.f32.mrf.mxu0
  %v2438 = vadd.f32 0.0, %v2437
  %2439 = vmatmul.bf16.gmra.mxu0 %v2226
  %v2440 = vpop.f32.mrf.mxu0
  %v2441 = vadd.f32 0.0, %v2440
  %v2442 = vpop.f32.mrf.mxu0
  %v2443 = vadd.f32 0.0, %v2442
  %2444 = vmatmul.bf16.gmra.mxu0 %v2227
  %v2445 = vpop.f32.mrf.mxu0
  %v2446 = vadd.f32 0.0, %v2445
  %v2447 = vpop.f32.mrf.mxu0
  %v2448 = vadd.f32 0.0, %v2447
  %2449 = vmatmul.bf16.gmra.mxu0 %v2228
  %v2450 = vpop.f32.mrf.mxu0
  %v2451 = vadd.f32 0.0, %v2450
  %v2452 = vpop.f32.mrf.mxu0
  %v2453 = vadd.f32 0.0, %v2452
  %2454 = vmatmul.bf16.gmra.mxu0 %v2229
  %v2455 = vpop.f32.mrf.mxu0
  %v2456 = vadd.f32 0.0, %v2455
  %v2457 = vpop.f32.mrf.mxu0
  %v2458 = vadd.f32 0.0, %v2457
  %2459 = vmatmul.bf16.gmra.mxu0 %v2230
  %v2460 = vpop.f32.mrf.mxu0
  %v2461 = vadd.f32 0.0, %v2460
  %v2462 = vpop.f32.mrf.mxu0
  %v2463 = vadd.f32 0.0, %v2462
  %2464 = vdwg.mxu0
  %v2465 = vadd.f32 %v1811, %v2306
  %v2466 = vadd.f32 %v1812, %v2308
  %v2467 = vadd.f32 %v1813, %v2311
  %v2468 = vadd.f32 %v1814, %v2313
  %v2469 = vadd.f32 %v1815, %v2316
  %v2470 = vadd.f32 %v1816, %v2318
  %v2471 = vadd.f32 %v1817, %v2321
  %v2472 = vadd.f32 %v1818, %v2323
  %v2473 = vadd.f32 %v1819, %v2326
  %v2474 = vadd.f32 %v1820, %v2328
  %v2475 = vadd.f32 %v1821, %v2331
  %v2476 = vadd.f32 %v1822, %v2333
  %v2477 = vadd.f32 %v1823, %v2336
  %v2478 = vadd.f32 %v1824, %v2338
  %v2479 = vadd.f32 %v1825, %v2341
  %v2480 = vadd.f32 %v1826, %v2343
  %v2481 = vadd.f32 %v1827, %v2346
  %v2482 = vadd.f32 %v1828, %v2348
  %v2483 = vadd.f32 %v1829, %v2351
  %v2484 = vadd.f32 %v1830, %v2353
  %v2485 = vadd.f32 %v1831, %v2356
  %v2486 = vadd.f32 %v1832, %v2358
  %v2487 = vadd.f32 %v1833, %v2361
  %v2488 = vadd.f32 %v1834, %v2363
  %v2489 = vadd.f32 %v1835, %v2366
  %v2490 = vadd.f32 %v1836, %v2368
  %v2491 = vadd.f32 %v1837, %v2371
  %v2492 = vadd.f32 %v1838, %v2373
  %v2493 = vadd.f32 %v1839, %v2376
  %v2494 = vadd.f32 %v1840, %v2378
  %v2495 = vadd.f32 %v1841, %v2381
  %v2496 = vadd.f32 %v1842, %v2383
  %v2497 = vadd.f32 %v1843, %v2386
  %v2498 = vadd.f32 %v1844, %v2388
  %v2499 = vadd.f32 %v1845, %v2391
  %v2500 = vadd.f32 %v1846, %v2393
  %v2501 = vadd.f32 %v1847, %v2396
  %v2502 = vadd.f32 %v1848, %v2398
  %v2503 = vadd.f32 %v1849, %v2401
  %v2504 = vadd.f32 %v1850, %v2403
  %v2505 = vadd.f32 %v1851, %v2406
  %v2506 = vadd.f32 %v1852, %v2408
  %v2507 = vadd.f32 %v1853, %v2411
  %v2508 = vadd.f32 %v1854, %v2413
  %v2509 = vadd.f32 %v1855, %v2416
  %v2510 = vadd.f32 %v1856, %v2418
  %v2511 = vadd.f32 %v1857, %v2421
  %v2512 = vadd.f32 %v1858, %v2423
  %v2513 = vadd.f32 %v1859, %v2426
  %v2514 = vadd.f32 %v1860, %v2428
  %v2515 = vadd.f32 %v1861, %v2431
  %v2516 = vadd.f32 %v1862, %v2433
  %v2517 = vadd.f32 %v1863, %v2436
  %v2518 = vadd.f32 %v1864, %v2438
  %v2519 = vadd.f32 %v1865, %v2441
  %v2520 = vadd.f32 %v1866, %v2443
  %v2521 = vadd.f32 %v1867, %v2446
  %v2522 = vadd.f32 %v1868, %v2448
  %v2523 = vadd.f32 %v1869, %v2451
  %v2524 = vadd.f32 %v1870, %v2453
  %v2525 = vadd.f32 %v1871, %v2456
  %v2526 = vadd.f32 %v1872, %v2458
  %v2527 = vadd.f32 %v1873, %v2461
  %v2528 = vadd.f32 %v1874, %v2463
  %v2529 = vld [vmem:[%s4] sm:$0xf]
  %v2530 = vld [vmem:[%s4 + $0x4] sm:$0xf]
  %v2531 = vld [vmem:[%s4 + $0x8] sm:$0xf]
  %v2532 = vld [vmem:[%s4 + $0xc] sm:$0xf]
  %v2533 = vld [vmem:[%s4 + $0x10] sm:$0xf]
  %v2534 = vld [vmem:[%s4 + $0x14] sm:$0xf]
  %v2535 = vld [vmem:[%s4 + $0x18] sm:$0xf]
  %v2536 = vld [vmem:[%s4 + $0x1c] sm:$0xf]
  %v2537 = vld [vmem:[%s4 + $0x20] sm:$0xf]
  %v2538 = vld [vmem:[%s4 + $0x24] sm:$0xf]
  %v2539 = vld [vmem:[%s4 + $0x28] sm:$0xf]
  %v2540 = vld [vmem:[%s4 + $0x2c] sm:$0xf]
  %v2541 = vld [vmem:[%s4 + $0x30] sm:$0xf]
  %v2542 = vld [vmem:[%s4 + $0x34] sm:$0xf]
  %v2543 = vld [vmem:[%s4 + $0x38] sm:$0xf]
  %v2544 = vld [vmem:[%s4 + $0x3c] sm:$0xf]
  %v2545 = vld [vmem:[%s4 + $0x40] sm:$0xf]
  %v2546 = vld [vmem:[%s4 + $0x44] sm:$0xf]
  %v2547 = vld [vmem:[%s4 + $0x48] sm:$0xf]
  %v2548 = vld [vmem:[%s4 + $0x4c] sm:$0xf]
  %v2549 = vld [vmem:[%s4 + $0x50] sm:$0xf]
  %v2550 = vld [vmem:[%s4 + $0x54] sm:$0xf]
  %v2551 = vld [vmem:[%s4 + $0x58] sm:$0xf]
  %v2552 = vld [vmem:[%s4 + $0x5c] sm:$0xf]
  %v2553 = vld [vmem:[%s4 + $0x60] sm:$0xf]
  %v2554 = vld [vmem:[%s4 + $0x64] sm:$0xf]
  %v2555 = vld [vmem:[%s4 + $0x68] sm:$0xf]
  %v2556 = vld [vmem:[%s4 + $0x6c] sm:$0xf]
  %v2557 = vld [vmem:[%s4 + $0x70] sm:$0xf]
  %v2558 = vld [vmem:[%s4 + $0x74] sm:$0xf]
  %v2559 = vld [vmem:[%s4 + $0x78] sm:$0xf]
  %v2560 = vld [vmem:[%s4 + $0x7c] sm:$0xf]
  %v2561 = vld [vmem:[%s4 + $0x80] sm:$0xf]
  %v2562 = vld [vmem:[%s4 + $0x84] sm:$0xf]
  %v2563 = vld [vmem:[%s4 + $0x88] sm:$0xf]
  %v2564 = vld [vmem:[%s4 + $0x8c] sm:$0xf]
  %v2565 = vld [vmem:[%s4 + $0x90] sm:$0xf]
  %v2566 = vld [vmem:[%s4 + $0x94] sm:$0xf]
  %v2567 = vld [vmem:[%s4 + $0x98] sm:$0xf]
  %v2568 = vld [vmem:[%s4 + $0x9c] sm:$0xf]
  %v2569 = vld [vmem:[%s4 + $0xa0] sm:$0xf]
  %v2570 = vld [vmem:[%s4 + $0xa4] sm:$0xf]
  %v2571 = vld [vmem:[%s4 + $0xa8] sm:$0xf]
  %v2572 = vld [vmem:[%s4 + $0xac] sm:$0xf]
  %v2573 = vld [vmem:[%s4 + $0xb0] sm:$0xf]
  %v2574 = vld [vmem:[%s4 + $0xb4] sm:$0xf]
  %v2575 = vld [vmem:[%s4 + $0xb8] sm:$0xf]
  %v2576 = vld [vmem:[%s4 + $0xbc] sm:$0xf]
  %v2577 = vld [vmem:[%s4 + $0xc0] sm:$0xf]
  %v2578 = vld [vmem:[%s4 + $0xc4] sm:$0xf]
  %v2579 = vld [vmem:[%s4 + $0xc8] sm:$0xf]
  %v2580 = vld [vmem:[%s4 + $0xcc] sm:$0xf]
  %v2581 = vld [vmem:[%s4 + $0xd0] sm:$0xf]
  %v2582 = vld [vmem:[%s4 + $0xd4] sm:$0xf]
  %v2583 = vld [vmem:[%s4 + $0xd8] sm:$0xf]
  %v2584 = vld [vmem:[%s4 + $0xdc] sm:$0xf]
  %v2585 = vld [vmem:[%s4 + $0xe0] sm:$0xf]
  %v2586 = vld [vmem:[%s4 + $0xe4] sm:$0xf]
  %v2587 = vld [vmem:[%s4 + $0xe8] sm:$0xf]
  %v2588 = vld [vmem:[%s4 + $0xec] sm:$0xf]
  %v2589 = vld [vmem:[%s4 + $0xf0] sm:$0xf]
  %v2590 = vld [vmem:[%s4 + $0xf4] sm:$0xf]
  %v2591 = vld [vmem:[%s4 + $0xf8] sm:$0xf]
  %v2592 = vld [vmem:[%s4 + $0xfc] sm:$0xf]
  %v2593 = vunpack.c.l.bf16 %v2529
  %v2594 = vunpack.c.l.bf16 %v2530
  %v2595 = vunpack.c.l.bf16 %v2531
  %v2596 = vunpack.c.l.bf16 %v2532
  %v2597 = vunpack.c.l.bf16 %v2533
  %v2598 = vunpack.c.l.bf16 %v2534
  %v2599 = vunpack.c.l.bf16 %v2535
  %v2600 = vunpack.c.l.bf16 %v2536
  %v2601 = vunpack.c.l.bf16 %v2537
  %v2602 = vunpack.c.l.bf16 %v2538
  %v2603 = vunpack.c.l.bf16 %v2539
  %v2604 = vunpack.c.l.bf16 %v2540
  %v2605 = vunpack.c.l.bf16 %v2541
  %v2606 = vunpack.c.l.bf16 %v2542
  %v2607 = vunpack.c.l.bf16 %v2543
  %v2608 = vunpack.c.l.bf16 %v2544
  %v2609 = vunpack.c.l.bf16 %v2545
  %v2610 = vunpack.c.l.bf16 %v2546
  %v2611 = vunpack.c.l.bf16 %v2547
  %v2612 = vunpack.c.l.bf16 %v2548
  %v2613 = vunpack.c.l.bf16 %v2549
  %v2614 = vunpack.c.l.bf16 %v2550
  %v2615 = vunpack.c.l.bf16 %v2551
  %v2616 = vunpack.c.l.bf16 %v2552
  %v2617 = vunpack.c.l.bf16 %v2553
  %v2618 = vunpack.c.l.bf16 %v2554
  %v2619 = vunpack.c.l.bf16 %v2555
  %v2620 = vunpack.c.l.bf16 %v2556
  %v2621 = vunpack.c.l.bf16 %v2557
  %v2622 = vunpack.c.l.bf16 %v2558
  %v2623 = vunpack.c.l.bf16 %v2559
  %v2624 = vunpack.c.l.bf16 %v2560
  %v2625 = vunpack.c.l.bf16 %v2561
  %v2626 = vunpack.c.l.bf16 %v2562
  %v2627 = vunpack.c.l.bf16 %v2563
  %v2628 = vunpack.c.l.bf16 %v2564
  %v2629 = vunpack.c.l.bf16 %v2565
  %v2630 = vunpack.c.l.bf16 %v2566
  %v2631 = vunpack.c.l.bf16 %v2567
  %v2632 = vunpack.c.l.bf16 %v2568
  %v2633 = vunpack.c.l.bf16 %v2569
  %v2634 = vunpack.c.l.bf16 %v2570
  %v2635 = vunpack.c.l.bf16 %v2571
  %v2636 = vunpack.c.l.bf16 %v2572
  %v2637 = vunpack.c.l.bf16 %v2573
  %v2638 = vunpack.c.l.bf16 %v2574
  %v2639 = vunpack.c.l.bf16 %v2575
  %v2640 = vunpack.c.l.bf16 %v2576
  %v2641 = vunpack.c.l.bf16 %v2577
  %v2642 = vunpack.c.l.bf16 %v2578
  %v2643 = vunpack.c.l.bf16 %v2579
  %v2644 = vunpack.c.l.bf16 %v2580
  %v2645 = vunpack.c.l.bf16 %v2581
  %v2646 = vunpack.c.l.bf16 %v2582
  %v2647 = vunpack.c.l.bf16 %v2583
  %v2648 = vunpack.c.l.bf16 %v2584
  %v2649 = vunpack.c.l.bf16 %v2585
  %v2650 = vunpack.c.l.bf16 %v2586
  %v2651 = vunpack.c.l.bf16 %v2587
  %v2652 = vunpack.c.l.bf16 %v2588
  %v2653 = vunpack.c.l.bf16 %v2589
  %v2654 = vunpack.c.l.bf16 %v2590
  %v2655 = vunpack.c.l.bf16 %v2591
  %v2656 = vunpack.c.l.bf16 %v2592
  %v2657 = vld [vmem:[%s6 + $0x4] sm:$0x1]
  %v2658 = vperm.slane %v2657, 0
  %v2659 = vmul.f32 %v2593, %v2658
  %v2660 = vmul.f32 %v2594, %v2658
  %v2661 = vmul.f32 %v2595, %v2658
  %v2662 = vmul.f32 %v2596, %v2658
  %v2663 = vmul.f32 %v2597, %v2658
  %v2664 = vmul.f32 %v2598, %v2658
  %v2665 = vmul.f32 %v2599, %v2658
  %v2666 = vmul.f32 %v2600, %v2658
  %v2667 = vmul.f32 %v2601, %v2658
  %v2668 = vmul.f32 %v2602, %v2658
  %v2669 = vmul.f32 %v2603, %v2658
  %v2670 = vmul.f32 %v2604, %v2658
  %v2671 = vmul.f32 %v2605, %v2658
  %v2672 = vmul.f32 %v2606, %v2658
  %v2673 = vmul.f32 %v2607, %v2658
  %v2674 = vmul.f32 %v2608, %v2658
  %v2675 = vmul.f32 %v2609, %v2658
  %v2676 = vmul.f32 %v2610, %v2658
  %v2677 = vmul.f32 %v2611, %v2658
  %v2678 = vmul.f32 %v2612, %v2658
  %v2679 = vmul.f32 %v2613, %v2658
  %v2680 = vmul.f32 %v2614, %v2658
  %v2681 = vmul.f32 %v2615, %v2658
  %v2682 = vmul.f32 %v2616, %v2658
  %v2683 = vmul.f32 %v2617, %v2658
  %v2684 = vmul.f32 %v2618, %v2658
  %v2685 = vmul.f32 %v2619, %v2658
  %v2686 = vmul.f32 %v2620, %v2658
  %v2687 = vmul.f32 %v2621, %v2658
  %v2688 = vmul.f32 %v2622, %v2658
  %v2689 = vmul.f32 %v2623, %v2658
  %v2690 = vmul.f32 %v2624, %v2658
  %v2691 = vmul.f32 %v2625, %v2658
  %v2692 = vmul.f32 %v2626, %v2658
  %v2693 = vmul.f32 %v2627, %v2658
  %v2694 = vmul.f32 %v2628, %v2658
  %v2695 = vmul.f32 %v2629, %v2658
  %v2696 = vmul.f32 %v2630, %v2658
  %v2697 = vmul.f32 %v2631, %v2658
  %v2698 = vmul.f32 %v2632, %v2658
  %v2699 = vmul.f32 %v2633, %v2658
  %v2700 = vmul.f32 %v2634, %v2658
  %v2701 = vmul.f32 %v2635, %v2658
  %v2702 = vmul.f32 %v2636, %v2658
  %v2703 = vmul.f32 %v2637, %v2658
  %v2704 = vmul.f32 %v2638, %v2658
  %v2705 = vmul.f32 %v2639, %v2658
  %v2706 = vmul.f32 %v2640, %v2658
  %v2707 = vmul.f32 %v2641, %v2658
  %v2708 = vmul.f32 %v2642, %v2658
  %v2709 = vmul.f32 %v2643, %v2658
  %v2710 = vmul.f32 %v2644, %v2658
  %v2711 = vmul.f32 %v2645, %v2658
  %v2712 = vmul.f32 %v2646, %v2658
  %v2713 = vmul.f32 %v2647, %v2658
  %v2714 = vmul.f32 %v2648, %v2658
  %v2715 = vmul.f32 %v2649, %v2658
  %v2716 = vmul.f32 %v2650, %v2658
  %v2717 = vmul.f32 %v2651, %v2658
  %v2718 = vmul.f32 %v2652, %v2658
  %v2719 = vmul.f32 %v2653, %v2658
  %v2720 = vmul.f32 %v2654, %v2658
  %v2721 = vmul.f32 %v2655, %v2658
  %v2722 = vmul.f32 %v2656, %v2658
  %v2723 = vld [vmem:[%s7 + $0x4] sm:$0x1]
  %v2724 = vperm.slane %v2723, 0
  %v2725 = vadd.f32 %v2659, %v2724
  %v2726 = vadd.f32 %v2660, %v2724
  %v2727 = vadd.f32 %v2661, %v2724
  %v2728 = vadd.f32 %v2662, %v2724
  %v2729 = vadd.f32 %v2663, %v2724
  %v2730 = vadd.f32 %v2664, %v2724
  %v2731 = vadd.f32 %v2665, %v2724
  %v2732 = vadd.f32 %v2666, %v2724
  %v2733 = vadd.f32 %v2667, %v2724
  %v2734 = vadd.f32 %v2668, %v2724
  %v2735 = vadd.f32 %v2669, %v2724
  %v2736 = vadd.f32 %v2670, %v2724
  %v2737 = vadd.f32 %v2671, %v2724
  %v2738 = vadd.f32 %v2672, %v2724
  %v2739 = vadd.f32 %v2673, %v2724
  %v2740 = vadd.f32 %v2674, %v2724
  %v2741 = vadd.f32 %v2675, %v2724
  %v2742 = vadd.f32 %v2676, %v2724
  %v2743 = vadd.f32 %v2677, %v2724
  %v2744 = vadd.f32 %v2678, %v2724
  %v2745 = vadd.f32 %v2679, %v2724
  %v2746 = vadd.f32 %v2680, %v2724
  %v2747 = vadd.f32 %v2681, %v2724
  %v2748 = vadd.f32 %v2682, %v2724
  %v2749 = vadd.f32 %v2683, %v2724
  %v2750 = vadd.f32 %v2684, %v2724
  %v2751 = vadd.f32 %v2685, %v2724
  %v2752 = vadd.f32 %v2686, %v2724
  %v2753 = vadd.f32 %v2687, %v2724
  %v2754 = vadd.f32 %v2688, %v2724
  %v2755 = vadd.f32 %v2689, %v2724
  %v2756 = vadd.f32 %v2690, %v2724
  %v2757 = vadd.f32 %v2691, %v2724
  %v2758 = vadd.f32 %v2692, %v2724
  %v2759 = vadd.f32 %v2693, %v2724
  %v2760 = vadd.f32 %v2694, %v2724
  %v2761 = vadd.f32 %v2695, %v2724
  %v2762 = vadd.f32 %v2696, %v2724
  %v2763 = vadd.f32 %v2697, %v2724
  %v2764 = vadd.f32 %v2698, %v2724
  %v2765 = vadd.f32 %v2699, %v2724
  %v2766 = vadd.f32 %v2700, %v2724
  %v2767 = vadd.f32 %v2701, %v2724
  %v2768 = vadd.f32 %v2702, %v2724
  %v2769 = vadd.f32 %v2703, %v2724
  %v2770 = vadd.f32 %v2704, %v2724
  %v2771 = vadd.f32 %v2705, %v2724
  %v2772 = vadd.f32 %v2706, %v2724
  %v2773 = vadd.f32 %v2707, %v2724
  %v2774 = vadd.f32 %v2708, %v2724
  %v2775 = vadd.f32 %v2709, %v2724
  %v2776 = vadd.f32 %v2710, %v2724
  %v2777 = vadd.f32 %v2711, %v2724
  %v2778 = vadd.f32 %v2712, %v2724
  %v2779 = vadd.f32 %v2713, %v2724
  %v2780 = vadd.f32 %v2714, %v2724
  %v2781 = vadd.f32 %v2715, %v2724
  %v2782 = vadd.f32 %v2716, %v2724
  %v2783 = vadd.f32 %v2717, %v2724
  %v2784 = vadd.f32 %v2718, %v2724
  %v2785 = vadd.f32 %v2719, %v2724
  %v2786 = vadd.f32 %v2720, %v2724
  %v2787 = vadd.f32 %v2721, %v2724
  %v2788 = vadd.f32 %v2722, %v2724
  %v2789 = vmax.f32 %v2725, 0.0
  %v2790 = vmax.f32 %v2726, 0.0
  %v2791 = vmax.f32 %v2727, 0.0
  %v2792 = vmax.f32 %v2728, 0.0
  %v2793 = vmax.f32 %v2729, 0.0
  %v2794 = vmax.f32 %v2730, 0.0
  %v2795 = vmax.f32 %v2731, 0.0
  %v2796 = vmax.f32 %v2732, 0.0
  %v2797 = vmax.f32 %v2733, 0.0
  %v2798 = vmax.f32 %v2734, 0.0
  %v2799 = vmax.f32 %v2735, 0.0
  %v2800 = vmax.f32 %v2736, 0.0
  %v2801 = vmax.f32 %v2737, 0.0
  %v2802 = vmax.f32 %v2738, 0.0
  %v2803 = vmax.f32 %v2739, 0.0
  %v2804 = vmax.f32 %v2740, 0.0
  %v2805 = vmax.f32 %v2741, 0.0
  %v2806 = vmax.f32 %v2742, 0.0
  %v2807 = vmax.f32 %v2743, 0.0
  %v2808 = vmax.f32 %v2744, 0.0
  %v2809 = vmax.f32 %v2745, 0.0
  %v2810 = vmax.f32 %v2746, 0.0
  %v2811 = vmax.f32 %v2747, 0.0
  %v2812 = vmax.f32 %v2748, 0.0
  %v2813 = vmax.f32 %v2749, 0.0
  %v2814 = vmax.f32 %v2750, 0.0
  %v2815 = vmax.f32 %v2751, 0.0
  %v2816 = vmax.f32 %v2752, 0.0
  %v2817 = vmax.f32 %v2753, 0.0
  %v2818 = vmax.f32 %v2754, 0.0
  %v2819 = vmax.f32 %v2755, 0.0
  %v2820 = vmax.f32 %v2756, 0.0
  %v2821 = vmax.f32 %v2757, 0.0
  %v2822 = vmax.f32 %v2758, 0.0
  %v2823 = vmax.f32 %v2759, 0.0
  %v2824 = vmax.f32 %v2760, 0.0
  %v2825 = vmax.f32 %v2761, 0.0
  %v2826 = vmax.f32 %v2762, 0.0
  %v2827 = vmax.f32 %v2763, 0.0
  %v2828 = vmax.f32 %v2764, 0.0
  %v2829 = vmax.f32 %v2765, 0.0
  %v2830 = vmax.f32 %v2766, 0.0
  %v2831 = vmax.f32 %v2767, 0.0
  %v2832 = vmax.f32 %v2768, 0.0
  %v2833 = vmax.f32 %v2769, 0.0
  %v2834 = vmax.f32 %v2770, 0.0
  %v2835 = vmax.f32 %v2771, 0.0
  %v2836 = vmax.f32 %v2772, 0.0
  %v2837 = vmax.f32 %v2773, 0.0
  %v2838 = vmax.f32 %v2774, 0.0
  %v2839 = vmax.f32 %v2775, 0.0
  %v2840 = vmax.f32 %v2776, 0.0
  %v2841 = vmax.f32 %v2777, 0.0
  %v2842 = vmax.f32 %v2778, 0.0
  %v2843 = vmax.f32 %v2779, 0.0
  %v2844 = vmax.f32 %v2780, 0.0
  %v2845 = vmax.f32 %v2781, 0.0
  %v2846 = vmax.f32 %v2782, 0.0
  %v2847 = vmax.f32 %v2783, 0.0
  %v2848 = vmax.f32 %v2784, 0.0
  %v2849 = vmax.f32 %v2785, 0.0
  %v2850 = vmax.f32 %v2786, 0.0
  %v2851 = vmax.f32 %v2787, 0.0
  %v2852 = vmax.f32 %v2788, 0.0
  %v2853 = vpack.c.bf16 %v2790, %v2789
  %v2854 = vpack.c.bf16 %v2792, %v2791
  %v2855 = vpack.c.bf16 %v2794, %v2793
  %v2856 = vpack.c.bf16 %v2796, %v2795
  %v2857 = vpack.c.bf16 %v2798, %v2797
  %v2858 = vpack.c.bf16 %v2800, %v2799
  %v2859 = vpack.c.bf16 %v2802, %v2801
  %v2860 = vpack.c.bf16 %v2804, %v2803
  %v2861 = vpack.c.bf16 %v2806, %v2805
  %v2862 = vpack.c.bf16 %v2808, %v2807
  %v2863 = vpack.c.bf16 %v2810, %v2809
  %v2864 = vpack.c.bf16 %v2812, %v2811
  %v2865 = vpack.c.bf16 %v2814, %v2813
  %v2866 = vpack.c.bf16 %v2816, %v2815
  %v2867 = vpack.c.bf16 %v2818, %v2817
  %v2868 = vpack.c.bf16 %v2820, %v2819
  %v2869 = vpack.c.bf16 %v2822, %v2821
  %v2870 = vpack.c.bf16 %v2824, %v2823
  %v2871 = vpack.c.bf16 %v2826, %v2825
  %v2872 = vpack.c.bf16 %v2828, %v2827
  %v2873 = vpack.c.bf16 %v2830, %v2829
  %v2874 = vpack.c.bf16 %v2832, %v2831
  %v2875 = vpack.c.bf16 %v2834, %v2833
  %v2876 = vpack.c.bf16 %v2836, %v2835
  %v2877 = vpack.c.bf16 %v2838, %v2837
  %v2878 = vpack.c.bf16 %v2840, %v2839
  %v2879 = vpack.c.bf16 %v2842, %v2841
  %v2880 = vpack.c.bf16 %v2844, %v2843
  %v2881 = vpack.c.bf16 %v2846, %v2845
  %v2882 = vpack.c.bf16 %v2848, %v2847
  %v2883 = vpack.c.bf16 %v2850, %v2849
  %v2884 = vpack.c.bf16 %v2852, %v2851
  %s2885 = scalar_lea.vmem %s10, 256
  %v2886 = vld [vmem:[%s2885] sm:$0xf]
  %v2887 = vld [vmem:[%s2885 + $0x4] sm:$0xf]
  %v2888 = vld [vmem:[%s2885 + $0x8] sm:$0xf]
  %v2889 = vld [vmem:[%s2885 + $0xc] sm:$0xf]
  %v2890 = vld [vmem:[%s2885 + $0x10] sm:$0xf]
  %v2891 = vld [vmem:[%s2885 + $0x14] sm:$0xf]
  %v2892 = vld [vmem:[%s2885 + $0x18] sm:$0xf]
  %v2893 = vld [vmem:[%s2885 + $0x1c] sm:$0xf]
  %v2894 = vld [vmem:[%s2885 + $0x20] sm:$0xf]
  %v2895 = vld [vmem:[%s2885 + $0x24] sm:$0xf]
  %v2896 = vld [vmem:[%s2885 + $0x28] sm:$0xf]
  %v2897 = vld [vmem:[%s2885 + $0x2c] sm:$0xf]
  %v2898 = vld [vmem:[%s2885 + $0x30] sm:$0xf]
  %v2899 = vld [vmem:[%s2885 + $0x34] sm:$0xf]
  %v2900 = vld [vmem:[%s2885 + $0x38] sm:$0xf]
  %v2901 = vld [vmem:[%s2885 + $0x3c] sm:$0xf]
  %v2918 = vunpack.c.l.b16 %v2886
  %v2919 = vunpack.c.l.b16 %v2887
  %v2920 = vunpack.c.l.b16 %v2888
  %v2921 = vunpack.c.l.b16 %v2889
  %v2922 = vunpack.c.l.b16 %v2890
  %v2923 = vunpack.c.l.b16 %v2891
  %v2924 = vunpack.c.l.b16 %v2892
  %v2925 = vunpack.c.l.b16 %v2893
  %v2926 = vunpack.c.l.b16 %v2894
  %v2927 = vunpack.c.l.b16 %v2895
  %v2928 = vunpack.c.l.b16 %v2896
  %v2929 = vunpack.c.l.b16 %v2897
  %v2930 = vunpack.c.l.b16 %v2898
  %v2931 = vunpack.c.l.b16 %v2899
  %v2932 = vunpack.c.l.b16 %v2900
  %v2933 = vunpack.c.l.b16 %v2901
  %v2934 = vpack.c.b16 %v2919, %v2918
  %v2935 = vpack.c.b16 %v2921, %v2920
  %v2936 = vpack.c.b16 %v2923, %v2922
  %v2937 = vpack.c.b16 %v2925, %v2924
  %v2938 = vpack.c.b16 %v2927, %v2926
  %v2939 = vpack.c.b16 %v2929, %v2928
  %v2940 = vpack.c.b16 %v2931, %v2930
  %v2941 = vpack.c.b16 %v2933, %v2932
  %2950 = vmatpush.bf16.msra.mxu0 %v2941
  %2951 = vmatpush.bf16.msra.mxu0 %v2940
  %2952 = vmatpush.bf16.msra.mxu0 %v2939
  %2953 = vmatpush.bf16.msra.mxu0 %v2938
  %2954 = vmatpush.bf16.msra.mxu0 %v2937
  %2955 = vmatpush.bf16.msra.mxu0 %v2936
  %2956 = vmatpush.bf16.msra.mxu0 %v2935
  %2957 = vmatpush.bf16.msra.mxu0 %v2934
  %2958 = vmatmul.bf16.gmra.mxu0 %v2853
  %v2959 = vpop.f32.mrf.mxu0
  %v2960 = vadd.f32 0.0, %v2959
  %v2961 = vpop.f32.mrf.mxu0
  %v2962 = vadd.f32 0.0, %v2961
  %2963 = vmatmul.bf16.gmra.mxu0 %v2854
  %v2964 = vpop.f32.mrf.mxu0
  %v2965 = vadd.f32 0.0, %v2964
  %v2966 = vpop.f32.mrf.mxu0
  %v2967 = vadd.f32 0.0, %v2966
  %2968 = vmatmul.bf16.gmra.mxu0 %v2855
  %v2969 = vpop.f32.mrf.mxu0
  %v2970 = vadd.f32 0.0, %v2969
  %v2971 = vpop.f32.mrf.mxu0
  %v2972 = vadd.f32 0.0, %v2971
  %2973 = vmatmul.bf16.gmra.mxu0 %v2856
  %v2974 = vpop.f32.mrf.mxu0
  %v2975 = vadd.f32 0.0, %v2974
  %v2976 = vpop.f32.mrf.mxu0
  %v2977 = vadd.f32 0.0, %v2976
  %2978 = vmatmul.bf16.gmra.mxu0 %v2857
  %v2979 = vpop.f32.mrf.mxu0
  %v2980 = vadd.f32 0.0, %v2979
  %v2981 = vpop.f32.mrf.mxu0
  %v2982 = vadd.f32 0.0, %v2981
  %2983 = vmatmul.bf16.gmra.mxu0 %v2858
  %v2984 = vpop.f32.mrf.mxu0
  %v2985 = vadd.f32 0.0, %v2984
  %v2986 = vpop.f32.mrf.mxu0
  %v2987 = vadd.f32 0.0, %v2986
  %2988 = vmatmul.bf16.gmra.mxu0 %v2859
  %v2989 = vpop.f32.mrf.mxu0
  %v2990 = vadd.f32 0.0, %v2989
  %v2991 = vpop.f32.mrf.mxu0
  %v2992 = vadd.f32 0.0, %v2991
  %2993 = vmatmul.bf16.gmra.mxu0 %v2860
  %v2994 = vpop.f32.mrf.mxu0
  %v2995 = vadd.f32 0.0, %v2994
  %v2996 = vpop.f32.mrf.mxu0
  %v2997 = vadd.f32 0.0, %v2996
  %2998 = vmatmul.bf16.gmra.mxu0 %v2861
  %v2999 = vpop.f32.mrf.mxu0
  %v3000 = vadd.f32 0.0, %v2999
  %v3001 = vpop.f32.mrf.mxu0
  %v3002 = vadd.f32 0.0, %v3001
  %3003 = vmatmul.bf16.gmra.mxu0 %v2862
  %v3004 = vpop.f32.mrf.mxu0
  %v3005 = vadd.f32 0.0, %v3004
  %v3006 = vpop.f32.mrf.mxu0
  %v3007 = vadd.f32 0.0, %v3006
  %3008 = vmatmul.bf16.gmra.mxu0 %v2863
  %v3009 = vpop.f32.mrf.mxu0
  %v3010 = vadd.f32 0.0, %v3009
  %v3011 = vpop.f32.mrf.mxu0
  %v3012 = vadd.f32 0.0, %v3011
  %3013 = vmatmul.bf16.gmra.mxu0 %v2864
  %v3014 = vpop.f32.mrf.mxu0
  %v3015 = vadd.f32 0.0, %v3014
  %v3016 = vpop.f32.mrf.mxu0
  %v3017 = vadd.f32 0.0, %v3016
  %3018 = vmatmul.bf16.gmra.mxu0 %v2865
  %v3019 = vpop.f32.mrf.mxu0
  %v3020 = vadd.f32 0.0, %v3019
  %v3021 = vpop.f32.mrf.mxu0
  %v3022 = vadd.f32 0.0, %v3021
  %3023 = vmatmul.bf16.gmra.mxu0 %v2866
  %v3024 = vpop.f32.mrf.mxu0
  %v3025 = vadd.f32 0.0, %v3024
  %v3026 = vpop.f32.mrf.mxu0
  %v3027 = vadd.f32 0.0, %v3026
  %3028 = vmatmul.bf16.gmra.mxu0 %v2867
  %v3029 = vpop.f32.mrf.mxu0
  %v3030 = vadd.f32 0.0, %v3029
  %v3031 = vpop.f32.mrf.mxu0
  %v3032 = vadd.f32 0.0, %v3031
  %3033 = vmatmul.bf16.gmra.mxu0 %v2868
  %v3034 = vpop.f32.mrf.mxu0
  %v3035 = vadd.f32 0.0, %v3034
  %v3036 = vpop.f32.mrf.mxu0
  %v3037 = vadd.f32 0.0, %v3036
  %3038 = vmatmul.bf16.gmra.mxu0 %v2869
  %v3039 = vpop.f32.mrf.mxu0
  %v3040 = vadd.f32 0.0, %v3039
  %v3041 = vpop.f32.mrf.mxu0
  %v3042 = vadd.f32 0.0, %v3041
  %3043 = vmatmul.bf16.gmra.mxu0 %v2870
  %v3044 = vpop.f32.mrf.mxu0
  %v3045 = vadd.f32 0.0, %v3044
  %v3046 = vpop.f32.mrf.mxu0
  %v3047 = vadd.f32 0.0, %v3046
  %3048 = vmatmul.bf16.gmra.mxu0 %v2871
  %v3049 = vpop.f32.mrf.mxu0
  %v3050 = vadd.f32 0.0, %v3049
  %v3051 = vpop.f32.mrf.mxu0
  %v3052 = vadd.f32 0.0, %v3051
  %3053 = vmatmul.bf16.gmra.mxu0 %v2872
  %v3054 = vpop.f32.mrf.mxu0
  %v3055 = vadd.f32 0.0, %v3054
  %v3056 = vpop.f32.mrf.mxu0
  %v3057 = vadd.f32 0.0, %v3056
  %3058 = vmatmul.bf16.gmra.mxu0 %v2873
  %v3059 = vpop.f32.mrf.mxu0
  %v3060 = vadd.f32 0.0, %v3059
  %v3061 = vpop.f32.mrf.mxu0
  %v3062 = vadd.f32 0.0, %v3061
  %3063 = vmatmul.bf16.gmra.mxu0 %v2874
  %v3064 = vpop.f32.mrf.mxu0
  %v3065 = vadd.f32 0.0, %v3064
  %v3066 = vpop.f32.mrf.mxu0
  %v3067 = vadd.f32 0.0, %v3066
  %3068 = vmatmul.bf16.gmra.mxu0 %v2875
  %v3069 = vpop.f32.mrf.mxu0
  %v3070 = vadd.f32 0.0, %v3069
  %v3071 = vpop.f32.mrf.mxu0
  %v3072 = vadd.f32 0.0, %v3071
  %3073 = vmatmul.bf16.gmra.mxu0 %v2876
  %v3074 = vpop.f32.mrf.mxu0
  %v3075 = vadd.f32 0.0, %v3074
  %v3076 = vpop.f32.mrf.mxu0
  %v3077 = vadd.f32 0.0, %v3076
  %3078 = vmatmul.bf16.gmra.mxu0 %v2877
  %v3079 = vpop.f32.mrf.mxu0
  %v3080 = vadd.f32 0.0, %v3079
  %v3081 = vpop.f32.mrf.mxu0
  %v3082 = vadd.f32 0.0, %v3081
  %3083 = vmatmul.bf16.gmra.mxu0 %v2878
  %v3084 = vpop.f32.mrf.mxu0
  %v3085 = vadd.f32 0.0, %v3084
  %v3086 = vpop.f32.mrf.mxu0
  %v3087 = vadd.f32 0.0, %v3086
  %3088 = vmatmul.bf16.gmra.mxu0 %v2879
  %v3089 = vpop.f32.mrf.mxu0
  %v3090 = vadd.f32 0.0, %v3089
  %v3091 = vpop.f32.mrf.mxu0
  %v3092 = vadd.f32 0.0, %v3091
  %3093 = vmatmul.bf16.gmra.mxu0 %v2880
  %v3094 = vpop.f32.mrf.mxu0
  %v3095 = vadd.f32 0.0, %v3094
  %v3096 = vpop.f32.mrf.mxu0
  %v3097 = vadd.f32 0.0, %v3096
  %3098 = vmatmul.bf16.gmra.mxu0 %v2881
  %v3099 = vpop.f32.mrf.mxu0
  %v3100 = vadd.f32 0.0, %v3099
  %v3101 = vpop.f32.mrf.mxu0
  %v3102 = vadd.f32 0.0, %v3101
  %3103 = vmatmul.bf16.gmra.mxu0 %v2882
  %v3104 = vpop.f32.mrf.mxu0
  %v3105 = vadd.f32 0.0, %v3104
  %v3106 = vpop.f32.mrf.mxu0
  %v3107 = vadd.f32 0.0, %v3106
  %3108 = vmatmul.bf16.gmra.mxu0 %v2883
  %v3109 = vpop.f32.mrf.mxu0
  %v3110 = vadd.f32 0.0, %v3109
  %v3111 = vpop.f32.mrf.mxu0
  %v3112 = vadd.f32 0.0, %v3111
  %3113 = vmatmul.bf16.gmra.mxu0 %v2884
  %v3114 = vpop.f32.mrf.mxu0
  %v3115 = vadd.f32 0.0, %v3114
  %v3116 = vpop.f32.mrf.mxu0
  %v3117 = vadd.f32 0.0, %v3116
  %3118 = vdwg.mxu0
  %v3119 = vadd.f32 %v2465, %v2960
  %v3120 = vadd.f32 %v2466, %v2962
  %v3121 = vadd.f32 %v2467, %v2965
  %v3122 = vadd.f32 %v2468, %v2967
  %v3123 = vadd.f32 %v2469, %v2970
  %v3124 = vadd.f32 %v2470, %v2972
  %v3125 = vadd.f32 %v2471, %v2975
  %v3126 = vadd.f32 %v2472, %v2977
  %v3127 = vadd.f32 %v2473, %v2980
  %v3128 = vadd.f32 %v2474, %v2982
  %v3129 = vadd.f32 %v2475, %v2985
  %v3130 = vadd.f32 %v2476, %v2987
  %v3131 = vadd.f32 %v2477, %v2990
  %v3132 = vadd.f32 %v2478, %v2992
  %v3133 = vadd.f32 %v2479, %v2995
  %v3134 = vadd.f32 %v2480, %v2997
  %v3135 = vadd.f32 %v2481, %v3000
  %v3136 = vadd.f32 %v2482, %v3002
  %v3137 = vadd.f32 %v2483, %v3005
  %v3138 = vadd.f32 %v2484, %v3007
  %v3139 = vadd.f32 %v2485, %v3010
  %v3140 = vadd.f32 %v2486, %v3012
  %v3141 = vadd.f32 %v2487, %v3015
  %v3142 = vadd.f32 %v2488, %v3017
  %v3143 = vadd.f32 %v2489, %v3020
  %v3144 = vadd.f32 %v2490, %v3022
  %v3145 = vadd.f32 %v2491, %v3025
  %v3146 = vadd.f32 %v2492, %v3027
  %v3147 = vadd.f32 %v2493, %v3030
  %v3148 = vadd.f32 %v2494, %v3032
  %v3149 = vadd.f32 %v2495, %v3035
  %v3150 = vadd.f32 %v2496, %v3037
  %v3151 = vadd.f32 %v2497, %v3040
  %v3152 = vadd.f32 %v2498, %v3042
  %v3153 = vadd.f32 %v2499, %v3045
  %v3154 = vadd.f32 %v2500, %v3047
  %v3155 = vadd.f32 %v2501, %v3050
  %v3156 = vadd.f32 %v2502, %v3052
  %v3157 = vadd.f32 %v2503, %v3055
  %v3158 = vadd.f32 %v2504, %v3057
  %v3159 = vadd.f32 %v2505, %v3060
  %v3160 = vadd.f32 %v2506, %v3062
  %v3161 = vadd.f32 %v2507, %v3065
  %v3162 = vadd.f32 %v2508, %v3067
  %v3163 = vadd.f32 %v2509, %v3070
  %v3164 = vadd.f32 %v2510, %v3072
  %v3165 = vadd.f32 %v2511, %v3075
  %v3166 = vadd.f32 %v2512, %v3077
  %v3167 = vadd.f32 %v2513, %v3080
  %v3168 = vadd.f32 %v2514, %v3082
  %v3169 = vadd.f32 %v2515, %v3085
  %v3170 = vadd.f32 %v2516, %v3087
  %v3171 = vadd.f32 %v2517, %v3090
  %v3172 = vadd.f32 %v2518, %v3092
  %v3173 = vadd.f32 %v2519, %v3095
  %v3174 = vadd.f32 %v2520, %v3097
  %v3175 = vadd.f32 %v2521, %v3100
  %v3176 = vadd.f32 %v2522, %v3102
  %v3177 = vadd.f32 %v2523, %v3105
  %v3178 = vadd.f32 %v2524, %v3107
  %v3179 = vadd.f32 %v2525, %v3110
  %v3180 = vadd.f32 %v2526, %v3112
  %v3181 = vadd.f32 %v2527, %v3115
  %v3182 = vadd.f32 %v2528, %v3117
  %v3183 = vld [vmem:[%s5] sm:$0xff]
  %v3184 = vld [vmem:[%s5 + $0x8] sm:$0xff]
  %v3185 = vld [vmem:[%s5 + $0x10] sm:$0xff]
  %v3186 = vld [vmem:[%s5 + $0x18] sm:$0xff]
  %v3187 = vld [vmem:[%s5 + $0x20] sm:$0xff]
  %v3188 = vld [vmem:[%s5 + $0x28] sm:$0xff]
  %v3189 = vld [vmem:[%s5 + $0x30] sm:$0xff]
  %v3190 = vld [vmem:[%s5 + $0x38] sm:$0xff]
  %v3191 = vld [vmem:[%s5 + $0x40] sm:$0xff]
  %v3192 = vld [vmem:[%s5 + $0x48] sm:$0xff]
  %v3193 = vld [vmem:[%s5 + $0x50] sm:$0xff]
  %v3194 = vld [vmem:[%s5 + $0x58] sm:$0xff]
  %v3195 = vld [vmem:[%s5 + $0x60] sm:$0xff]
  %v3196 = vld [vmem:[%s5 + $0x68] sm:$0xff]
  %v3197 = vld [vmem:[%s5 + $0x70] sm:$0xff]
  %v3198 = vld [vmem:[%s5 + $0x78] sm:$0xff]
  %v3199 = vld [vmem:[%s5 + $0x80] sm:$0xff]
  %v3200 = vld [vmem:[%s5 + $0x88] sm:$0xff]
  %v3201 = vld [vmem:[%s5 + $0x90] sm:$0xff]
  %v3202 = vld [vmem:[%s5 + $0x98] sm:$0xff]
  %v3203 = vld [vmem:[%s5 + $0xa0] sm:$0xff]
  %v3204 = vld [vmem:[%s5 + $0xa8] sm:$0xff]
  %v3205 = vld [vmem:[%s5 + $0xb0] sm:$0xff]
  %v3206 = vld [vmem:[%s5 + $0xb8] sm:$0xff]
  %v3207 = vld [vmem:[%s5 + $0xc0] sm:$0xff]
  %v3208 = vld [vmem:[%s5 + $0xc8] sm:$0xff]
  %v3209 = vld [vmem:[%s5 + $0xd0] sm:$0xff]
  %v3210 = vld [vmem:[%s5 + $0xd8] sm:$0xff]
  %v3211 = vld [vmem:[%s5 + $0xe0] sm:$0xff]
  %v3212 = vld [vmem:[%s5 + $0xe8] sm:$0xff]
  %v3213 = vld [vmem:[%s5 + $0xf0] sm:$0xff]
  %v3214 = vld [vmem:[%s5 + $0xf8] sm:$0xff]
  %v3215 = vld [vmem:[%s5 + $0x100] sm:$0xff]
  %v3216 = vld [vmem:[%s5 + $0x108] sm:$0xff]
  %v3217 = vld [vmem:[%s5 + $0x110] sm:$0xff]
  %v3218 = vld [vmem:[%s5 + $0x118] sm:$0xff]
  %v3219 = vld [vmem:[%s5 + $0x120] sm:$0xff]
  %v3220 = vld [vmem:[%s5 + $0x128] sm:$0xff]
  %v3221 = vld [vmem:[%s5 + $0x130] sm:$0xff]
  %v3222 = vld [vmem:[%s5 + $0x138] sm:$0xff]
  %v3223 = vld [vmem:[%s5 + $0x140] sm:$0xff]
  %v3224 = vld [vmem:[%s5 + $0x148] sm:$0xff]
  %v3225 = vld [vmem:[%s5 + $0x150] sm:$0xff]
  %v3226 = vld [vmem:[%s5 + $0x158] sm:$0xff]
  %v3227 = vld [vmem:[%s5 + $0x160] sm:$0xff]
  %v3228 = vld [vmem:[%s5 + $0x168] sm:$0xff]
  %v3229 = vld [vmem:[%s5 + $0x170] sm:$0xff]
  %v3230 = vld [vmem:[%s5 + $0x178] sm:$0xff]
  %v3231 = vld [vmem:[%s5 + $0x180] sm:$0xff]
  %v3232 = vld [vmem:[%s5 + $0x188] sm:$0xff]
  %v3233 = vld [vmem:[%s5 + $0x190] sm:$0xff]
  %v3234 = vld [vmem:[%s5 + $0x198] sm:$0xff]
  %v3235 = vld [vmem:[%s5 + $0x1a0] sm:$0xff]
  %v3236 = vld [vmem:[%s5 + $0x1a8] sm:$0xff]
  %v3237 = vld [vmem:[%s5 + $0x1b0] sm:$0xff]
  %v3238 = vld [vmem:[%s5 + $0x1b8] sm:$0xff]
  %v3239 = vld [vmem:[%s5 + $0x1c0] sm:$0xff]
  %v3240 = vld [vmem:[%s5 + $0x1c8] sm:$0xff]
  %v3241 = vld [vmem:[%s5 + $0x1d0] sm:$0xff]
  %v3242 = vld [vmem:[%s5 + $0x1d8] sm:$0xff]
  %v3243 = vld [vmem:[%s5 + $0x1e0] sm:$0xff]
  %v3244 = vld [vmem:[%s5 + $0x1e8] sm:$0xff]
  %v3245 = vld [vmem:[%s5 + $0x1f0] sm:$0xff]
  %v3246 = vld [vmem:[%s5 + $0x1f8] sm:$0xff]
  %v3247 = vld [vmem:[%s8] sm:$0x1]
  %v3249 = vperm.slane %v3247, 0
  %v3251 = vmul.f32 %v3183, %v3249
  %v3252 = vmul.f32 %v3184, %v3249
  %v3253 = vmul.f32 %v3185, %v3249
  %v3254 = vmul.f32 %v3186, %v3249
  %v3255 = vmul.f32 %v3187, %v3249
  %v3256 = vmul.f32 %v3188, %v3249
  %v3257 = vmul.f32 %v3189, %v3249
  %v3258 = vmul.f32 %v3190, %v3249
  %v3259 = vmul.f32 %v3191, %v3249
  %v3260 = vmul.f32 %v3192, %v3249
  %v3261 = vmul.f32 %v3193, %v3249
  %v3262 = vmul.f32 %v3194, %v3249
  %v3263 = vmul.f32 %v3195, %v3249
  %v3264 = vmul.f32 %v3196, %v3249
  %v3265 = vmul.f32 %v3197, %v3249
  %v3266 = vmul.f32 %v3198, %v3249
  %v3267 = vmul.f32 %v3199, %v3249
  %v3268 = vmul.f32 %v3200, %v3249
  %v3269 = vmul.f32 %v3201, %v3249
  %v3270 = vmul.f32 %v3202, %v3249
  %v3271 = vmul.f32 %v3203, %v3249
  %v3272 = vmul.f32 %v3204, %v3249
  %v3273 = vmul.f32 %v3205, %v3249
  %v3274 = vmul.f32 %v3206, %v3249
  %v3275 = vmul.f32 %v3207, %v3249
  %v3276 = vmul.f32 %v3208, %v3249
  %v3277 = vmul.f32 %v3209, %v3249
  %v3278 = vmul.f32 %v3210, %v3249
  %v3279 = vmul.f32 %v3211, %v3249
  %v3280 = vmul.f32 %v3212, %v3249
  %v3281 = vmul.f32 %v3213, %v3249
  %v3282 = vmul.f32 %v3214, %v3249
  %v3283 = vmul.f32 %v3215, %v3249
  %v3284 = vmul.f32 %v3216, %v3249
  %v3285 = vmul.f32 %v3217, %v3249
  %v3286 = vmul.f32 %v3218, %v3249
  %v3287 = vmul.f32 %v3219, %v3249
  %v3288 = vmul.f32 %v3220, %v3249
  %v3289 = vmul.f32 %v3221, %v3249
  %v3290 = vmul.f32 %v3222, %v3249
  %v3291 = vmul.f32 %v3223, %v3249
  %v3292 = vmul.f32 %v3224, %v3249
  %v3293 = vmul.f32 %v3225, %v3249
  %v3294 = vmul.f32 %v3226, %v3249
  %v3295 = vmul.f32 %v3227, %v3249
  %v3296 = vmul.f32 %v3228, %v3249
  %v3297 = vmul.f32 %v3229, %v3249
  %v3298 = vmul.f32 %v3230, %v3249
  %v3299 = vmul.f32 %v3231, %v3249
  %v3300 = vmul.f32 %v3232, %v3249
  %v3301 = vmul.f32 %v3233, %v3249
  %v3302 = vmul.f32 %v3234, %v3249
  %v3303 = vmul.f32 %v3235, %v3249
  %v3304 = vmul.f32 %v3236, %v3249
  %v3305 = vmul.f32 %v3237, %v3249
  %v3306 = vmul.f32 %v3238, %v3249
  %v3307 = vmul.f32 %v3239, %v3249
  %v3308 = vmul.f32 %v3240, %v3249
  %v3309 = vmul.f32 %v3241, %v3249
  %v3310 = vmul.f32 %v3242, %v3249
  %v3311 = vmul.f32 %v3243, %v3249
  %v3312 = vmul.f32 %v3244, %v3249
  %v3313 = vmul.f32 %v3245, %v3249
  %v3314 = vmul.f32 %v3246, %v3249
  %v3315 = vld [vmem:[%s9] sm:$0x1]
  %v3317 = vperm.slane %v3315, 0
  %v3319 = vadd.f32 %v3251, %v3317
  %v3320 = vadd.f32 %v3252, %v3317
  %v3321 = vadd.f32 %v3253, %v3317
  %v3322 = vadd.f32 %v3254, %v3317
  %v3323 = vadd.f32 %v3255, %v3317
  %v3324 = vadd.f32 %v3256, %v3317
  %v3325 = vadd.f32 %v3257, %v3317
  %v3326 = vadd.f32 %v3258, %v3317
  %v3327 = vadd.f32 %v3259, %v3317
  %v3328 = vadd.f32 %v3260, %v3317
  %v3329 = vadd.f32 %v3261, %v3317
  %v3330 = vadd.f32 %v3262, %v3317
  %v3331 = vadd.f32 %v3263, %v3317
  %v3332 = vadd.f32 %v3264, %v3317
  %v3333 = vadd.f32 %v3265, %v3317
  %v3334 = vadd.f32 %v3266, %v3317
  %v3335 = vadd.f32 %v3267, %v3317
  %v3336 = vadd.f32 %v3268, %v3317
  %v3337 = vadd.f32 %v3269, %v3317
  %v3338 = vadd.f32 %v3270, %v3317
  %v3339 = vadd.f32 %v3271, %v3317
  %v3340 = vadd.f32 %v3272, %v3317
  %v3341 = vadd.f32 %v3273, %v3317
  %v3342 = vadd.f32 %v3274, %v3317
  %v3343 = vadd.f32 %v3275, %v3317
  %v3344 = vadd.f32 %v3276, %v3317
  %v3345 = vadd.f32 %v3277, %v3317
  %v3346 = vadd.f32 %v3278, %v3317
  %v3347 = vadd.f32 %v3279, %v3317
  %v3348 = vadd.f32 %v3280, %v3317
  %v3349 = vadd.f32 %v3281, %v3317
  %v3350 = vadd.f32 %v3282, %v3317
  %v3351 = vadd.f32 %v3283, %v3317
  %v3352 = vadd.f32 %v3284, %v3317
  %v3353 = vadd.f32 %v3285, %v3317
  %v3354 = vadd.f32 %v3286, %v3317
  %v3355 = vadd.f32 %v3287, %v3317
  %v3356 = vadd.f32 %v3288, %v3317
  %v3357 = vadd.f32 %v3289, %v3317
  %v3358 = vadd.f32 %v3290, %v3317
  %v3359 = vadd.f32 %v3291, %v3317
  %v3360 = vadd.f32 %v3292, %v3317
  %v3361 = vadd.f32 %v3293, %v3317
  %v3362 = vadd.f32 %v3294, %v3317
  %v3363 = vadd.f32 %v3295, %v3317
  %v3364 = vadd.f32 %v3296, %v3317
  %v3365 = vadd.f32 %v3297, %v3317
  %v3366 = vadd.f32 %v3298, %v3317
  %v3367 = vadd.f32 %v3299, %v3317
  %v3368 = vadd.f32 %v3300, %v3317
  %v3369 = vadd.f32 %v3301, %v3317
  %v3370 = vadd.f32 %v3302, %v3317
  %v3371 = vadd.f32 %v3303, %v3317
  %v3372 = vadd.f32 %v3304, %v3317
  %v3373 = vadd.f32 %v3305, %v3317
  %v3374 = vadd.f32 %v3306, %v3317
  %v3375 = vadd.f32 %v3307, %v3317
  %v3376 = vadd.f32 %v3308, %v3317
  %v3377 = vadd.f32 %v3309, %v3317
  %v3378 = vadd.f32 %v3310, %v3317
  %v3379 = vadd.f32 %v3311, %v3317
  %v3380 = vadd.f32 %v3312, %v3317
  %v3381 = vadd.f32 %v3313, %v3317
  %v3382 = vadd.f32 %v3314, %v3317
  %v3383 = vmax.f32 %v3319, 0.0
  %v3384 = vmax.f32 %v3320, 0.0
  %v3385 = vmax.f32 %v3321, 0.0
  %v3386 = vmax.f32 %v3322, 0.0
  %v3387 = vmax.f32 %v3323, 0.0
  %v3388 = vmax.f32 %v3324, 0.0
  %v3389 = vmax.f32 %v3325, 0.0
  %v3390 = vmax.f32 %v3326, 0.0
  %v3391 = vmax.f32 %v3327, 0.0
  %v3392 = vmax.f32 %v3328, 0.0
  %v3393 = vmax.f32 %v3329, 0.0
  %v3394 = vmax.f32 %v3330, 0.0
  %v3395 = vmax.f32 %v3331, 0.0
  %v3396 = vmax.f32 %v3332, 0.0
  %v3397 = vmax.f32 %v3333, 0.0
  %v3398 = vmax.f32 %v3334, 0.0
  %v3399 = vmax.f32 %v3335, 0.0
  %v3400 = vmax.f32 %v3336, 0.0
  %v3401 = vmax.f32 %v3337, 0.0
  %v3402 = vmax.f32 %v3338, 0.0
  %v3403 = vmax.f32 %v3339, 0.0
  %v3404 = vmax.f32 %v3340, 0.0
  %v3405 = vmax.f32 %v3341, 0.0
  %v3406 = vmax.f32 %v3342, 0.0
  %v3407 = vmax.f32 %v3343, 0.0
  %v3408 = vmax.f32 %v3344, 0.0
  %v3409 = vmax.f32 %v3345, 0.0
  %v3410 = vmax.f32 %v3346, 0.0
  %v3411 = vmax.f32 %v3347, 0.0
  %v3412 = vmax.f32 %v3348, 0.0
  %v3413 = vmax.f32 %v3349, 0.0
  %v3414 = vmax.f32 %v3350, 0.0
  %v3415 = vmax.f32 %v3351, 0.0
  %v3416 = vmax.f32 %v3352, 0.0
  %v3417 = vmax.f32 %v3353, 0.0
  %v3418 = vmax.f32 %v3354, 0.0
  %v3419 = vmax.f32 %v3355, 0.0
  %v3420 = vmax.f32 %v3356, 0.0
  %v3421 = vmax.f32 %v3357, 0.0
  %v3422 = vmax.f32 %v3358, 0.0
  %v3423 = vmax.f32 %v3359, 0.0
  %v3424 = vmax.f32 %v3360, 0.0
  %v3425 = vmax.f32 %v3361, 0.0
  %v3426 = vmax.f32 %v3362, 0.0
  %v3427 = vmax.f32 %v3363, 0.0
  %v3428 = vmax.f32 %v3364, 0.0
  %v3429 = vmax.f32 %v3365, 0.0
  %v3430 = vmax.f32 %v3366, 0.0
  %v3431 = vmax.f32 %v3367, 0.0
  %v3432 = vmax.f32 %v3368, 0.0
  %v3433 = vmax.f32 %v3369, 0.0
  %v3434 = vmax.f32 %v3370, 0.0
  %v3435 = vmax.f32 %v3371, 0.0
  %v3436 = vmax.f32 %v3372, 0.0
  %v3437 = vmax.f32 %v3373, 0.0
  %v3438 = vmax.f32 %v3374, 0.0
  %v3439 = vmax.f32 %v3375, 0.0
  %v3440 = vmax.f32 %v3376, 0.0
  %v3441 = vmax.f32 %v3377, 0.0
  %v3442 = vmax.f32 %v3378, 0.0
  %v3443 = vmax.f32 %v3379, 0.0
  %v3444 = vmax.f32 %v3380, 0.0
  %v3445 = vmax.f32 %v3381, 0.0
  %v3446 = vmax.f32 %v3382, 0.0
  %v3447 = vpack.c.bf16 %v3384, %v3383
  %v3448 = vpack.c.bf16 %v3386, %v3385
  %v3449 = vpack.c.bf16 %v3388, %v3387
  %v3450 = vpack.c.bf16 %v3390, %v3389
  %v3451 = vpack.c.bf16 %v3392, %v3391
  %v3452 = vpack.c.bf16 %v3394, %v3393
  %v3453 = vpack.c.bf16 %v3396, %v3395
  %v3454 = vpack.c.bf16 %v3398, %v3397
  %v3455 = vpack.c.bf16 %v3400, %v3399
  %v3456 = vpack.c.bf16 %v3402, %v3401
  %v3457 = vpack.c.bf16 %v3404, %v3403
  %v3458 = vpack.c.bf16 %v3406, %v3405
  %v3459 = vpack.c.bf16 %v3408, %v3407
  %v3460 = vpack.c.bf16 %v3410, %v3409
  %v3461 = vpack.c.bf16 %v3412, %v3411
  %v3462 = vpack.c.bf16 %v3414, %v3413
  %v3463 = vpack.c.bf16 %v3416, %v3415
  %v3464 = vpack.c.bf16 %v3418, %v3417
  %v3465 = vpack.c.bf16 %v3420, %v3419
  %v3466 = vpack.c.bf16 %v3422, %v3421
  %v3467 = vpack.c.bf16 %v3424, %v3423
  %v3468 = vpack.c.bf16 %v3426, %v3425
  %v3469 = vpack.c.bf16 %v3428, %v3427
  %v3470 = vpack.c.bf16 %v3430, %v3429
  %v3471 = vpack.c.bf16 %v3432, %v3431
  %v3472 = vpack.c.bf16 %v3434, %v3433
  %v3473 = vpack.c.bf16 %v3436, %v3435
  %v3474 = vpack.c.bf16 %v3438, %v3437
  %v3475 = vpack.c.bf16 %v3440, %v3439
  %v3476 = vpack.c.bf16 %v3442, %v3441
  %v3477 = vpack.c.bf16 %v3444, %v3443
  %v3478 = vpack.c.bf16 %v3446, %v3445
  %v3479 = vld [vmem:[%s11] sm:$0xf]
  %vm3480 = vcmask 64512
  %v3482 = vsel %vm3480, %v3447, 0
  %v3485 = vsel %vm3480, %v3448, 0
  %v3488 = vsel %vm3480, %v3449, 0
  %v3491 = vsel %vm3480, %v3450, 0
  %v3494 = vsel %vm3480, %v3451, 0
  %v3497 = vsel %vm3480, %v3452, 0
  %v3500 = vsel %vm3480, %v3453, 0
  %v3503 = vsel %vm3480, %v3454, 0
  %v3506 = vsel %vm3480, %v3455, 0
  %v3509 = vsel %vm3480, %v3456, 0
  %v3512 = vsel %vm3480, %v3457, 0
  %v3515 = vsel %vm3480, %v3458, 0
  %v3518 = vsel %vm3480, %v3459, 0
  %v3521 = vsel %vm3480, %v3460, 0
  %v3524 = vsel %vm3480, %v3461, 0
  %v3527 = vsel %vm3480, %v3462, 0
  %v3530 = vsel %vm3480, %v3463, 0
  %v3533 = vsel %vm3480, %v3464, 0
  %v3536 = vsel %vm3480, %v3465, 0
  %v3539 = vsel %vm3480, %v3466, 0
  %v3542 = vsel %vm3480, %v3467, 0
  %v3545 = vsel %vm3480, %v3468, 0
  %v3548 = vsel %vm3480, %v3469, 0
  %v3551 = vsel %vm3480, %v3470, 0
  %v3554 = vsel %vm3480, %v3471, 0
  %v3557 = vsel %vm3480, %v3472, 0
  %v3560 = vsel %vm3480, %v3473, 0
  %v3563 = vsel %vm3480, %v3474, 0
  %v3566 = vsel %vm3480, %v3475, 0
  %v3569 = vsel %vm3480, %v3476, 0
  %v3572 = vsel %vm3480, %v3477, 0
  %v3575 = vsel %vm3480, %v3478, 0
  %vm3577 = vcmask 1043456
  %v3579 = vsel %vm3577, %v3479, 0
  %3581 = vmatpush.bf16.msra.mxu0 0
  %3582 = vmatpush.bf16.msra.mxu0 0
  %3583 = vmatpush.bf16.msra.mxu0 0
  %3584 = vmatpush.bf16.msra.mxu0 0
  %3585 = vmatpush.bf16.msra.mxu0 0
  %3586 = vmatpush.bf16.msra.mxu0 0
  %3587 = vmatpush.bf16.msra.mxu0 0
  %3588 = vmatpush.bf16.msra.mxu0 %v3579
  %3589 = vmatmul.bf16.gmra.mxu0 %v3482
  %v3590 = vpop.f32.mrf.mxu0
  %v3591 = vadd.f32 0.0, %v3590
  %v3592 = vpop.f32.mrf.mxu0
  %v3593 = vadd.f32 0.0, %v3592
  %3594 = vmatmul.bf16.gmra.mxu0 %v3485
  %v3595 = vpop.f32.mrf.mxu0
  %v3596 = vadd.f32 0.0, %v3595
  %v3597 = vpop.f32.mrf.mxu0
  %v3598 = vadd.f32 0.0, %v3597
  %3599 = vmatmul.bf16.gmra.mxu0 %v3488
  %v3600 = vpop.f32.mrf.mxu0
  %v3601 = vadd.f32 0.0, %v3600
  %v3602 = vpop.f32.mrf.mxu0
  %v3603 = vadd.f32 0.0, %v3602
  %3604 = vmatmul.bf16.gmra.mxu0 %v3491
  %v3605 = vpop.f32.mrf.mxu0
  %v3606 = vadd.f32 0.0, %v3605
  %v3607 = vpop.f32.mrf.mxu0
  %v3608 = vadd.f32 0.0, %v3607
  %3609 = vmatmul.bf16.gmra.mxu0 %v3494
  %v3610 = vpop.f32.mrf.mxu0
  %v3611 = vadd.f32 0.0, %v3610
  %v3612 = vpop.f32.mrf.mxu0
  %v3613 = vadd.f32 0.0, %v3612
  %3614 = vmatmul.bf16.gmra.mxu0 %v3497
  %v3615 = vpop.f32.mrf.mxu0
  %v3616 = vadd.f32 0.0, %v3615
  %v3617 = vpop.f32.mrf.mxu0
  %v3618 = vadd.f32 0.0, %v3617
  %3619 = vmatmul.bf16.gmra.mxu0 %v3500
  %v3620 = vpop.f32.mrf.mxu0
  %v3621 = vadd.f32 0.0, %v3620
  %v3622 = vpop.f32.mrf.mxu0
  %v3623 = vadd.f32 0.0, %v3622
  %3624 = vmatmul.bf16.gmra.mxu0 %v3503
  %v3625 = vpop.f32.mrf.mxu0
  %v3626 = vadd.f32 0.0, %v3625
  %v3627 = vpop.f32.mrf.mxu0
  %v3628 = vadd.f32 0.0, %v3627
  %3629 = vmatmul.bf16.gmra.mxu0 %v3506
  %v3630 = vpop.f32.mrf.mxu0
  %v3631 = vadd.f32 0.0, %v3630
  %v3632 = vpop.f32.mrf.mxu0
  %v3633 = vadd.f32 0.0, %v3632
  %3634 = vmatmul.bf16.gmra.mxu0 %v3509
  %v3635 = vpop.f32.mrf.mxu0
  %v3636 = vadd.f32 0.0, %v3635
  %v3637 = vpop.f32.mrf.mxu0
  %v3638 = vadd.f32 0.0, %v3637
  %3639 = vmatmul.bf16.gmra.mxu0 %v3512
  %v3640 = vpop.f32.mrf.mxu0
  %v3641 = vadd.f32 0.0, %v3640
  %v3642 = vpop.f32.mrf.mxu0
  %v3643 = vadd.f32 0.0, %v3642
  %3644 = vmatmul.bf16.gmra.mxu0 %v3515
  %v3645 = vpop.f32.mrf.mxu0
  %v3646 = vadd.f32 0.0, %v3645
  %v3647 = vpop.f32.mrf.mxu0
  %v3648 = vadd.f32 0.0, %v3647
  %3649 = vmatmul.bf16.gmra.mxu0 %v3518
  %v3650 = vpop.f32.mrf.mxu0
  %v3651 = vadd.f32 0.0, %v3650
  %v3652 = vpop.f32.mrf.mxu0
  %v3653 = vadd.f32 0.0, %v3652
  %3654 = vmatmul.bf16.gmra.mxu0 %v3521
  %v3655 = vpop.f32.mrf.mxu0
  %v3656 = vadd.f32 0.0, %v3655
  %v3657 = vpop.f32.mrf.mxu0
  %v3658 = vadd.f32 0.0, %v3657
  %3659 = vmatmul.bf16.gmra.mxu0 %v3524
  %v3660 = vpop.f32.mrf.mxu0
  %v3661 = vadd.f32 0.0, %v3660
  %v3662 = vpop.f32.mrf.mxu0
  %v3663 = vadd.f32 0.0, %v3662
  %3664 = vmatmul.bf16.gmra.mxu0 %v3527
  %v3665 = vpop.f32.mrf.mxu0
  %v3666 = vadd.f32 0.0, %v3665
  %v3667 = vpop.f32.mrf.mxu0
  %v3668 = vadd.f32 0.0, %v3667
  %3669 = vmatmul.bf16.gmra.mxu0 %v3530
  %v3670 = vpop.f32.mrf.mxu0
  %v3671 = vadd.f32 0.0, %v3670
  %v3672 = vpop.f32.mrf.mxu0
  %v3673 = vadd.f32 0.0, %v3672
  %3674 = vmatmul.bf16.gmra.mxu0 %v3533
  %v3675 = vpop.f32.mrf.mxu0
  %v3676 = vadd.f32 0.0, %v3675
  %v3677 = vpop.f32.mrf.mxu0
  %v3678 = vadd.f32 0.0, %v3677
  %3679 = vmatmul.bf16.gmra.mxu0 %v3536
  %v3680 = vpop.f32.mrf.mxu0
  %v3681 = vadd.f32 0.0, %v3680
  %v3682 = vpop.f32.mrf.mxu0
  %v3683 = vadd.f32 0.0, %v3682
  %3684 = vmatmul.bf16.gmra.mxu0 %v3539
  %v3685 = vpop.f32.mrf.mxu0
  %v3686 = vadd.f32 0.0, %v3685
  %v3687 = vpop.f32.mrf.mxu0
  %v3688 = vadd.f32 0.0, %v3687
  %3689 = vmatmul.bf16.gmra.mxu0 %v3542
  %v3690 = vpop.f32.mrf.mxu0
  %v3691 = vadd.f32 0.0, %v3690
  %v3692 = vpop.f32.mrf.mxu0
  %v3693 = vadd.f32 0.0, %v3692
  %3694 = vmatmul.bf16.gmra.mxu0 %v3545
  %v3695 = vpop.f32.mrf.mxu0
  %v3696 = vadd.f32 0.0, %v3695
  %v3697 = vpop.f32.mrf.mxu0
  %v3698 = vadd.f32 0.0, %v3697
  %3699 = vmatmul.bf16.gmra.mxu0 %v3548
  %v3700 = vpop.f32.mrf.mxu0
  %v3701 = vadd.f32 0.0, %v3700
  %v3702 = vpop.f32.mrf.mxu0
  %v3703 = vadd.f32 0.0, %v3702
  %3704 = vmatmul.bf16.gmra.mxu0 %v3551
  %v3705 = vpop.f32.mrf.mxu0
  %v3706 = vadd.f32 0.0, %v3705
  %v3707 = vpop.f32.mrf.mxu0
  %v3708 = vadd.f32 0.0, %v3707
  %3709 = vmatmul.bf16.gmra.mxu0 %v3554
  %v3710 = vpop.f32.mrf.mxu0
  %v3711 = vadd.f32 0.0, %v3710
  %v3712 = vpop.f32.mrf.mxu0
  %v3713 = vadd.f32 0.0, %v3712
  %3714 = vmatmul.bf16.gmra.mxu0 %v3557
  %v3715 = vpop.f32.mrf.mxu0
  %v3716 = vadd.f32 0.0, %v3715
  %v3717 = vpop.f32.mrf.mxu0
  %v3718 = vadd.f32 0.0, %v3717
  %3719 = vmatmul.bf16.gmra.mxu0 %v3560
  %v3720 = vpop.f32.mrf.mxu0
  %v3721 = vadd.f32 0.0, %v3720
  %v3722 = vpop.f32.mrf.mxu0
  %v3723 = vadd.f32 0.0, %v3722
  %3724 = vmatmul.bf16.gmra.mxu0 %v3563
  %v3725 = vpop.f32.mrf.mxu0
  %v3726 = vadd.f32 0.0, %v3725
  %v3727 = vpop.f32.mrf.mxu0
  %v3728 = vadd.f32 0.0, %v3727
  %3729 = vmatmul.bf16.gmra.mxu0 %v3566
  %v3730 = vpop.f32.mrf.mxu0
  %v3731 = vadd.f32 0.0, %v3730
  %v3732 = vpop.f32.mrf.mxu0
  %v3733 = vadd.f32 0.0, %v3732
  %3734 = vmatmul.bf16.gmra.mxu0 %v3569
  %v3735 = vpop.f32.mrf.mxu0
  %v3736 = vadd.f32 0.0, %v3735
  %v3737 = vpop.f32.mrf.mxu0
  %v3738 = vadd.f32 0.0, %v3737
  %3739 = vmatmul.bf16.gmra.mxu0 %v3572
  %v3740 = vpop.f32.mrf.mxu0
  %v3741 = vadd.f32 0.0, %v3740
  %v3742 = vpop.f32.mrf.mxu0
  %v3743 = vadd.f32 0.0, %v3742
  %3744 = vmatmul.bf16.gmra.mxu0 %v3575
  %v3745 = vpop.f32.mrf.mxu0
  %v3746 = vadd.f32 0.0, %v3745
  %v3747 = vpop.f32.mrf.mxu0
  %v3748 = vadd.f32 0.0, %v3747
  %3749 = vdwg.mxu0
  %v3750 = vadd.f32 %v3119, %v3591
  %v3751 = vadd.f32 %v3120, %v3593
  %v3752 = vadd.f32 %v3121, %v3596
  %v3753 = vadd.f32 %v3122, %v3598
  %v3754 = vadd.f32 %v3123, %v3601
  %v3755 = vadd.f32 %v3124, %v3603
  %v3756 = vadd.f32 %v3125, %v3606
  %v3757 = vadd.f32 %v3126, %v3608
  %v3758 = vadd.f32 %v3127, %v3611
  %v3759 = vadd.f32 %v3128, %v3613
  %v3760 = vadd.f32 %v3129, %v3616
  %v3761 = vadd.f32 %v3130, %v3618
  %v3762 = vadd.f32 %v3131, %v3621
  %v3763 = vadd.f32 %v3132, %v3623
  %v3764 = vadd.f32 %v3133, %v3626
  %v3765 = vadd.f32 %v3134, %v3628
  %v3766 = vadd.f32 %v3135, %v3631
  %v3767 = vadd.f32 %v3136, %v3633
  %v3768 = vadd.f32 %v3137, %v3636
  %v3769 = vadd.f32 %v3138, %v3638
  %v3770 = vadd.f32 %v3139, %v3641
  %v3771 = vadd.f32 %v3140, %v3643
  %v3772 = vadd.f32 %v3141, %v3646
  %v3773 = vadd.f32 %v3142, %v3648
  %v3774 = vadd.f32 %v3143, %v3651
  %v3775 = vadd.f32 %v3144, %v3653
  %v3776 = vadd.f32 %v3145, %v3656
  %v3777 = vadd.f32 %v3146, %v3658
  %v3778 = vadd.f32 %v3147, %v3661
  %v3779 = vadd.f32 %v3148, %v3663
  %v3780 = vadd.f32 %v3149, %v3666
  %v3781 = vadd.f32 %v3150, %v3668
  %v3782 = vadd.f32 %v3151, %v3671
  %v3783 = vadd.f32 %v3152, %v3673
  %v3784 = vadd.f32 %v3153, %v3676
  %v3785 = vadd.f32 %v3154, %v3678
  %v3786 = vadd.f32 %v3155, %v3681
  %v3787 = vadd.f32 %v3156, %v3683
  %v3788 = vadd.f32 %v3157, %v3686
  %v3789 = vadd.f32 %v3158, %v3688
  %v3790 = vadd.f32 %v3159, %v3691
  %v3791 = vadd.f32 %v3160, %v3693
  %v3792 = vadd.f32 %v3161, %v3696
  %v3793 = vadd.f32 %v3162, %v3698
  %v3794 = vadd.f32 %v3163, %v3701
  %v3795 = vadd.f32 %v3164, %v3703
  %v3796 = vadd.f32 %v3165, %v3706
  %v3797 = vadd.f32 %v3166, %v3708
  %v3798 = vadd.f32 %v3167, %v3711
  %v3799 = vadd.f32 %v3168, %v3713
  %v3800 = vadd.f32 %v3169, %v3716
  %v3801 = vadd.f32 %v3170, %v3718
  %v3802 = vadd.f32 %v3171, %v3721
  %v3803 = vadd.f32 %v3172, %v3723
  %v3804 = vadd.f32 %v3173, %v3726
  %v3805 = vadd.f32 %v3174, %v3728
  %v3806 = vadd.f32 %v3175, %v3731
  %v3807 = vadd.f32 %v3176, %v3733
  %v3808 = vadd.f32 %v3177, %v3736
  %v3809 = vadd.f32 %v3178, %v3738
  %v3810 = vadd.f32 %v3179, %v3741
  %v3811 = vadd.f32 %v3180, %v3743
  %v3812 = vadd.f32 %v3181, %v3746
  %v3813 = vadd.f32 %v3182, %v3748
  %3814 = vst [vmem:[%s12] sm:$0xff] %v3750
  %3815 = vst [vmem:[%s12 + $0x8] sm:$0xff] %v3751
  %3816 = vst [vmem:[%s12 + $0x10] sm:$0xff] %v3752
  %3817 = vst [vmem:[%s12 + $0x18] sm:$0xff] %v3753
  %3818 = vst [vmem:[%s12 + $0x20] sm:$0xff] %v3754
  %3819 = vst [vmem:[%s12 + $0x28] sm:$0xff] %v3755
  %3820 = vst [vmem:[%s12 + $0x30] sm:$0xff] %v3756
  %3821 = vst [vmem:[%s12 + $0x38] sm:$0xff] %v3757
  %3822 = vst [vmem:[%s12 + $0x40] sm:$0xff] %v3758
  %3823 = vst [vmem:[%s12 + $0x48] sm:$0xff] %v3759
  %3824 = vst [vmem:[%s12 + $0x50] sm:$0xff] %v3760
  %3825 = vst [vmem:[%s12 + $0x58] sm:$0xff] %v3761
  %3826 = vst [vmem:[%s12 + $0x60] sm:$0xff] %v3762
  %3827 = vst [vmem:[%s12 + $0x68] sm:$0xff] %v3763
  %3828 = vst [vmem:[%s12 + $0x70] sm:$0xff] %v3764
  %3829 = vst [vmem:[%s12 + $0x78] sm:$0xff] %v3765
  %3830 = vst [vmem:[%s12 + $0x80] sm:$0xff] %v3766
  %3831 = vst [vmem:[%s12 + $0x88] sm:$0xff] %v3767
  %3832 = vst [vmem:[%s12 + $0x90] sm:$0xff] %v3768
  %3833 = vst [vmem:[%s12 + $0x98] sm:$0xff] %v3769
  %3834 = vst [vmem:[%s12 + $0xa0] sm:$0xff] %v3770
  %3835 = vst [vmem:[%s12 + $0xa8] sm:$0xff] %v3771
  %3836 = vst [vmem:[%s12 + $0xb0] sm:$0xff] %v3772
  %3837 = vst [vmem:[%s12 + $0xb8] sm:$0xff] %v3773
  %3838 = vst [vmem:[%s12 + $0xc0] sm:$0xff] %v3774
  %3839 = vst [vmem:[%s12 + $0xc8] sm:$0xff] %v3775
  %3840 = vst [vmem:[%s12 + $0xd0] sm:$0xff] %v3776
  %3841 = vst [vmem:[%s12 + $0xd8] sm:$0xff] %v3777
  %3842 = vst [vmem:[%s12 + $0xe0] sm:$0xff] %v3778
  %3843 = vst [vmem:[%s12 + $0xe8] sm:$0xff] %v3779
  %3844 = vst [vmem:[%s12 + $0xf0] sm:$0xff] %v3780
  %3845 = vst [vmem:[%s12 + $0xf8] sm:$0xff] %v3781
  %3846 = vst [vmem:[%s12 + $0x100] sm:$0xff] %v3782
  %3847 = vst [vmem:[%s12 + $0x108] sm:$0xff] %v3783
  %3848 = vst [vmem:[%s12 + $0x110] sm:$0xff] %v3784
  %3849 = vst [vmem:[%s12 + $0x118] sm:$0xff] %v3785
  %3850 = vst [vmem:[%s12 + $0x120] sm:$0xff] %v3786
  %3851 = vst [vmem:[%s12 + $0x128] sm:$0xff] %v3787
  %3852 = vst [vmem:[%s12 + $0x130] sm:$0xff] %v3788
  %3853 = vst [vmem:[%s12 + $0x138] sm:$0xff] %v3789
  %3854 = vst [vmem:[%s12 + $0x140] sm:$0xff] %v3790
  %3855 = vst [vmem:[%s12 + $0x148] sm:$0xff] %v3791
  %3856 = vst [vmem:[%s12 + $0x150] sm:$0xff] %v3792
  %3857 = vst [vmem:[%s12 + $0x158] sm:$0xff] %v3793
  %3858 = vst [vmem:[%s12 + $0x160] sm:$0xff] %v3794
  %3859 = vst [vmem:[%s12 + $0x168] sm:$0xff] %v3795
  %3860 = vst [vmem:[%s12 + $0x170] sm:$0xff] %v3796
  %3861 = vst [vmem:[%s12 + $0x178] sm:$0xff] %v3797
  %3862 = vst [vmem:[%s12 + $0x180] sm:$0xff] %v3798
  %3863 = vst [vmem:[%s12 + $0x188] sm:$0xff] %v3799
  %3864 = vst [vmem:[%s12 + $0x190] sm:$0xff] %v3800
  %3865 = vst [vmem:[%s12 + $0x198] sm:$0xff] %v3801
  %3866 = vst [vmem:[%s12 + $0x1a0] sm:$0xff] %v3802
  %3867 = vst [vmem:[%s12 + $0x1a8] sm:$0xff] %v3803
  %3868 = vst [vmem:[%s12 + $0x1b0] sm:$0xff] %v3804
  %3869 = vst [vmem:[%s12 + $0x1b8] sm:$0xff] %v3805
  %3870 = vst [vmem:[%s12 + $0x1c0] sm:$0xff] %v3806
  %3871 = vst [vmem:[%s12 + $0x1c8] sm:$0xff] %v3807
  %3872 = vst [vmem:[%s12 + $0x1d0] sm:$0xff] %v3808
  %3873 = vst [vmem:[%s12 + $0x1d8] sm:$0xff] %v3809
  %3874 = vst [vmem:[%s12 + $0x1e0] sm:$0xff] %v3810
  %3875 = vst [vmem:[%s12 + $0x1e8] sm:$0xff] %v3811
  %3876 = vst [vmem:[%s12 + $0x1f0] sm:$0xff] %v3812
  %3877 = vst [vmem:[%s12 + $0x1f8] sm:$0xff] %v3813
  // Predicated region
  $region50: #{dappm_forward.11} parent=0 // pred_check
    _
  $region51: #{dappm_forward.11} parent=0 // pred_check_branch
    %3879 = sbr.rel (0) target = $region53
  $region52: #{dappm_forward.11} parent=0 // pred_region
    _
  $region53: #{dappm_forward.11} parent=0 // pred_fallthru
    _
  // Predicated region
  $region54: #{dappm_forward.11} parent=0 // pred_check
    _
  $region55: #{dappm_forward.11} parent=0 // pred_check_branch
    %3881 = sbr.rel (0) target = $region57
  $region56: #{dappm_forward.11} parent=0 // pred_region
    _
  $region57: #{dappm_forward.11} parent=0 // pred_fallthru
    _

// kernel: dappm_forward.7
$region0: #{dappm_forward.7}
  #allocation0 [shape = 'u32[]', space=smem, size = 0x4, offset = 0x4, fixed_abs, tag = 'smem constant byte address 0x4 - core index']
  #allocation1 [shape = 'u32[72,128]{1,0:T(1,128)}', space=vmem, size = 0x9000, scoped, tag = 'internal scratch']
  #allocation2 [shape = 'bf16[304,128]{1,0:T(8,128)(2,1)}', space=vmem, size = 0x13000, scoped, tag = 'scratch operand']
  #allocation3 [shape = 'bf16[288,128]{1,0:T(8,128)(2,1)}', space=vmem, size = 0x12000, scoped, tag = 'scratch operand']
  #allocation4 [shape = 'bf16[288,128]{1,0:T(8,128)(2,1)}', space=vmem, size = 0x12000, scoped, tag = 'scratch operand']
  %s0 = inlined_call_operand.vmem [shape: bf16[512,128], index: 0, kind: input, shape index: {}]
  %s1 = inlined_call_operand.vmem [shape: bf16[512,128], index: 1, kind: input, shape index: {}]
  %s2 = inlined_call_operand.vmem [shape: f32[1,128], index: 2, kind: input, shape index: {}]
  %s3 = inlined_call_operand.vmem [shape: f32[1,128], index: 3, kind: input, shape index: {}]
  %s4 = inlined_call_operand.vmem [shape: bf16[1152,128], index: 4, kind: input, shape index: {}]
  %s5 = inlined_call_operand.vmem [shape: f32[288,1], index: 5, kind: input, shape index: {}]
  %s6 = inlined_call_operand.vmem [shape: f32[288,1], index: 6, kind: input, shape index: {}]
  %s7 = inlined_call_operand.vmem [shape: bf16[512,128], index: 7, kind: output, shape index: {}]
  %s8 = sld [smem:[#allocation0]]
  $region61: #{dappm_forward.7} parent=0
    _
  %s10 = ssub.s32 1, %s8
  %s11 = scalar_select 0, %s10, %s8
  loop: start=0, step=1, limit=4
  $region2: #{dappm_forward.7} parent=0 // loop_pre_header
    _
  $region3: #{dappm_forward.7} parent=0 // loop_header
    %s13 = sphi 0, %s17
    %p14 = scmp.ge.s32.totalorder %s13, 4
    %s23 = sphi 0, %s25
    %s26 = sphi 0, %s23
    %s27 = sphi 0, %s26
    %s43 = sphi 0, %s27
    %s49 = sphi 0, %s51
    %s52 = sphi 0, %s49
    %s53 = sphi 0, %s52
    %s69 = sphi 0, %s53
    %s73 = sphi 0, %s73
    %s75 = sphi 0, %s73
    %s76 = sphi 0, %s75
    %s90 = sphi 0, %s76
    %s94 = sphi 0, %s94
    %s96 = sphi 0, %s94
    %s97 = sphi 0, %s96
    %s111 = sphi 0, %s97
    %s115 = sphi 0, %s115
    %s117 = sphi 0, %s115
    %s118 = sphi 0, %s117
    %s132 = sphi 0, %s118
    %s136 = sphi 0, %s136
    %s138 = sphi 0, %s136
    %s139 = sphi 0, %s138
    %s153 = sphi 0, %s139
    %s157 = sphi 0, %s157
    %s159 = sphi 0, %s157
    %s160 = sphi 0, %s159
    %s174 = sphi 0, %s160
    %s180 = sphi 0, %s182
    %s183 = sphi 0, %s180
    %s184 = sphi 0, %s183
    %s200 = sphi 0, %s184
  $region4: #{dappm_forward.7} parent=0 // loop_header_branch
    %16 = sbr.rel (%p14) target = $region8
  $region5: #{dappm_forward.7} parent=0 // loop_body
    %s18 = ssub.s32 %s13, 1
    %s19 = ssub.s32 %s13, 2
    %s20 = sadd.s32 %s13, 1
    %s21 = ssub.s32 %s13, %s20
    %p22 = scmp.eq.s32.totalorder %s21, 0
    %s24 = sadd.s32 %s23, 1
    %s25 = scalar_select %p22, %s23, %s24
    %p28 = pneg %p22
    %p29 = scmp.eq.s32.totalorder %s13, 1
    %p30 = por %p28, %p29
    %p31 = scmp.ne.s32.totalorder %s23, %s26
    %p32 = scmp.eq.s32.totalorder %s13, 0
    %p33 = por %p31, %p32
    %p34 = scmp.ne.s32.totalorder %s23, %s26
    %p35 = scmp.eq.s32.totalorder %s18, 1
    %p36 = por %p34, %p35
    %p37 = scmp.ne.s32.totalorder %s26, %s27
    %p38 = scmp.eq.s32.totalorder %s18, 0
    %p39 = por %p37, %p38
    %p40 = scmp.ne.s32.totalorder %s26, %s27
    %p41 = scmp.eq.s32.totalorder %s19, 1
    %p42 = por %p40, %p41
    %p44 = scmp.ne.s32.totalorder %s27, %s43
    %p45 = scmp.eq.s32.totalorder %s19, 0
    %p46 = por %p44, %p45
    %s47 = ssub.s32 %s13, %s20
    %p48 = scmp.eq.s32.totalorder %s47, 0
    %s50 = sadd.s32 %s49, 1
    %s51 = scalar_select %p48, %s49, %s50
    %p54 = pneg %p48
    %p55 = scmp.eq.s32.totalorder %s13, 1
    %p56 = por %p54, %p55
    %p57 = scmp.ne.s32.totalorder %s49, %s52
    %p58 = scmp.eq.s32.totalorder %s13, 0
    %p59 = por %p57, %p58
    %p60 = scmp.ne.s32.totalorder %s49, %s52
    %p61 = scmp.eq.s32.totalorder %s18, 1
    %p62 = por %p60, %p61
    %p63 = scmp.ne.s32.totalorder %s52, %s53
    %p64 = scmp.eq.s32.totalorder %s18, 0
    %p65 = por %p63, %p64
    %p66 = scmp.ne.s32.totalorder %s52, %s53
    %p67 = scmp.eq.s32.totalorder %s19, 1
    %p68 = por %p66, %p67
    %p70 = scmp.ne.s32.totalorder %s53, %s69
    %p71 = scmp.eq.s32.totalorder %s19, 0
    %p72 = por %p70, %p71
    %s74 = sadd.s32 %s73, 1
    %p77 = scmp.eq.s32.totalorder %s13, 1
    %p78 = scmp.ne.s32.totalorder %s73, %s75
    %p79 = scmp.eq.s32.totalorder %s13, 0
    %p80 = por %p78, %p79
    %p81 = scmp.ne.s32.totalorder %s73, %s75
    %p82 = scmp.eq.s32.totalorder %s18, 1
    %p83 = por %p81, %p82
    %p84 = scmp.ne.s32.totalorder %s75, %s76
    %p85 = scmp.eq.s32.totalorder %s18, 0
    %p86 = por %p84, %p85
    %p87 = scmp.ne.s32.totalorder %s75, %s76
    %p88 = scmp.eq.s32.totalorder %s19, 1
    %p89 = por %p87, %p88
    %p91 = scmp.ne.s32.totalorder %s76, %s90
    %p92 = scmp.eq.s32.totalorder %s19, 0
    %p93 = por %p91, %p92
    %s95 = sadd.s32 %s94, 1
    %p98 = scmp.eq.s32.totalorder %s13, 1
    %p99 = scmp.ne.s32.totalorder %s94, %s96
    %p100 = scmp.eq.s32.totalorder %s13, 0
    %p101 = por %p99, %p100
    %p102 = scmp.ne.s32.totalorder %s94, %s96
    %p103 = scmp.eq.s32.totalorder %s18, 1
    %p104 = por %p102, %p103
    %p105 = scmp.ne.s32.totalorder %s96, %s97
    %p106 = scmp.eq.s32.totalorder %s18, 0
    %p107 = por %p105, %p106
    %p108 = scmp.ne.s32.totalorder %s96, %s97
    %p109 = scmp.eq.s32.totalorder %s19, 1
    %p110 = por %p108, %p109
    %p112 = scmp.ne.s32.totalorder %s97, %s111
    %p113 = scmp.eq.s32.totalorder %s19, 0
    %p114 = por %p112, %p113
    %s116 = sadd.s32 %s115, 1
    %p119 = scmp.eq.s32.totalorder %s13, 1
    %p120 = scmp.ne.s32.totalorder %s115, %s117
    %p121 = scmp.eq.s32.totalorder %s13, 0
    %p122 = por %p120, %p121
    %p123 = scmp.ne.s32.totalorder %s115, %s117
    %p124 = scmp.eq.s32.totalorder %s18, 1
    %p125 = por %p123, %p124
    %p126 = scmp.ne.s32.totalorder %s117, %s118
    %p127 = scmp.eq.s32.totalorder %s18, 0
    %p128 = por %p126, %p127
    %p129 = scmp.ne.s32.totalorder %s117, %s118
    %p130 = scmp.eq.s32.totalorder %s19, 1
    %p131 = por %p129, %p130
    %p133 = scmp.ne.s32.totalorder %s118, %s132
    %p134 = scmp.eq.s32.totalorder %s19, 0
    %p135 = por %p133, %p134
    %s137 = sadd.s32 %s136, 1
    %p140 = scmp.eq.s32.totalorder %s13, 1
    %p141 = scmp.ne.s32.totalorder %s136, %s138
    %p142 = scmp.eq.s32.totalorder %s13, 0
    %p143 = por %p141, %p142
    %p144 = scmp.ne.s32.totalorder %s136, %s138
    %p145 = scmp.eq.s32.totalorder %s18, 1
    %p146 = por %p144, %p145
    %p147 = scmp.ne.s32.totalorder %s138, %s139
    %p148 = scmp.eq.s32.totalorder %s18, 0
    %p149 = por %p147, %p148
    %p150 = scmp.ne.s32.totalorder %s138, %s139
    %p151 = scmp.eq.s32.totalorder %s19, 1
    %p152 = por %p150, %p151
    %p154 = scmp.ne.s32.totalorder %s139, %s153
    %p155 = scmp.eq.s32.totalorder %s19, 0
    %p156 = por %p154, %p155
    %s158 = sadd.s32 %s157, 1
    %p161 = scmp.eq.s32.totalorder %s13, 1
    %p162 = scmp.ne.s32.totalorder %s157, %s159
    %p163 = scmp.eq.s32.totalorder %s13, 0
    %p164 = por %p162, %p163
    %p165 = scmp.ne.s32.totalorder %s157, %s159
    %p166 = scmp.eq.s32.totalorder %s18, 1
    %p167 = por %p165, %p166
    %p168 = scmp.ne.s32.totalorder %s159, %s160
    %p169 = scmp.eq.s32.totalorder %s18, 0
    %p170 = por %p168, %p169
    %p171 = scmp.ne.s32.totalorder %s159, %s160
    %p172 = scmp.eq.s32.totalorder %s19, 1
    %p173 = por %p171, %p172
    %p175 = scmp.ne.s32.totalorder %s160, %s174
    %p176 = scmp.eq.s32.totalorder %s19, 0
    %p177 = por %p175, %p176
    %s178 = ssub.s32 %s13, %s20
    %p179 = scmp.eq.s32.totalorder %s178, 0
    %s181 = sadd.s32 %s180, 1
    %s182 = scalar_select %p179, %s180, %s181
    %p185 = pneg %p179
    %p186 = scmp.eq.s32.totalorder %s13, 1
    %p187 = por %p185, %p186
    %p188 = scmp.ne.s32.totalorder %s180, %s183
    %p189 = scmp.eq.s32.totalorder %s13, 0
    %p190 = por %p188, %p189
    %p191 = scmp.ne.s32.totalorder %s180, %s183
    %p192 = scmp.eq.s32.totalorder %s18, 1
    %p193 = por %p191, %p192
    %p194 = scmp.ne.s32.totalorder %s183, %s184
    %p195 = scmp.eq.s32.totalorder %s18, 0
    %p196 = por %p194, %p195
    %p197 = scmp.ne.s32.totalorder %s183, %s184
    %p198 = scmp.eq.s32.totalorder %s19, 1
    %p199 = por %p197, %p198
    %p201 = scmp.ne.s32.totalorder %s184, %s200
    %p202 = scmp.eq.s32.totalorder %s19, 0
    %p203 = por %p201, %p202
    %p204 = scmp.le.s32.totalorder 1, %s13
    %p205 = scmp.lt.s32.totalorder %s13, 3
    %p206 = pnand %p204, %p205
    %p207 = pneg %p206
    // Predicated region
    $region9: #{dappm_forward.7} parent=5 // pred_check
      _
    $region10: #{dappm_forward.7} parent=5 // pred_check_branch
      %209 = sbr.rel (%p206) target = $region12
    $region11: #{dappm_forward.7} parent=5 // pred_region
      %s210 = ssub.s32 %s13, 1
      // Predicated region
      $region13: #{dappm_forward.7} parent=11 // pred_check
        %p211 = pneg %p86
      $region14: #{dappm_forward.7} parent=11 // pred_check_branch
        %213 = sbr.rel (%p211) target = $region16
      $region15: #{dappm_forward.7} parent=11 // pred_region
        _
      $region16: #{dappm_forward.7} parent=11 // pred_fallthru
        _
      // Predicated region
      $region17: #{dappm_forward.7} parent=11 // pred_check
        %p214 = pneg %p107
      $region18: #{dappm_forward.7} parent=11 // pred_check_branch
        %216 = sbr.rel (%p214) target = $region20
      $region19: #{dappm_forward.7} parent=11 // pred_region
        _
      $region20: #{dappm_forward.7} parent=11 // pred_fallthru
        _
      // Predicated region
      $region21: #{dappm_forward.7} parent=11 // pred_check
        %p217 = pneg %p128
      $region22: #{dappm_forward.7} parent=11 // pred_check_branch
        %219 = sbr.rel (%p217) target = $region24
      $region23: #{dappm_forward.7} parent=11 // pred_region
        _
      $region24: #{dappm_forward.7} parent=11 // pred_fallthru
        _
      // Predicated region
      $region25: #{dappm_forward.7} parent=11 // pred_check
        %p220 = pneg %p149
      $region26: #{dappm_forward.7} parent=11 // pred_check_branch
        %222 = sbr.rel (%p220) target = $region28
      $region27: #{dappm_forward.7} parent=11 // pred_region
        _
      $region28: #{dappm_forward.7} parent=11 // pred_fallthru
        _
      // Predicated region
      $region29: #{dappm_forward.7} parent=11 // pred_check
        %p223 = pneg %p170
      $region30: #{dappm_forward.7} parent=11 // pred_check_branch
        %225 = sbr.rel (%p223) target = $region32
      $region31: #{dappm_forward.7} parent=11 // pred_region
        _
      $region32: #{dappm_forward.7} parent=11 // pred_fallthru
        _
    $region12: #{dappm_forward.7} parent=5 // pred_fallthru
      _
    %p226 = scmp.lt.s32.totalorder %s13, 2
    // Predicated region
    $region33: #{dappm_forward.7} parent=5 // pred_check
      %p227 = pneg %p226
    $region34: #{dappm_forward.7} parent=5 // pred_check_branch
      %229 = sbr.rel (%p227) target = $region36
    $region35: #{dappm_forward.7} parent=5 // pred_region
      // Predicated region
      $region37: #{dappm_forward.7} parent=35 // pred_check
        %p230 = pneg %p33
      $region38: #{dappm_forward.7} parent=35 // pred_check_branch
        %232 = sbr.rel (%p230) target = $region40
      $region39: #{dappm_forward.7} parent=35 // pred_region
        %s233 = smul.u32 32, %s13
        %p234 = scmp.lt.s32.totalorder %s233, 63
        %s235 = scalar_select %p234, %s233, 63
        %s236 = smul.addr %s235, 4
        %s237 = scalar_lea.vmem %s0, %s236
        %s238 = smul.u32 32, %s13
      $region40: #{dappm_forward.7} parent=35 // pred_fallthru
        _
      // Predicated region
      $region41: #{dappm_forward.7} parent=35 // pred_check
        %p239 = pneg %p59
      $region42: #{dappm_forward.7} parent=35 // pred_check_branch
        %241 = sbr.rel (%p239) target = $region44
      $region43: #{dappm_forward.7} parent=35 // pred_region
        %s242 = smul.u32 32, %s13
        %p243 = scmp.lt.s32.totalorder %s242, 63
        %s244 = scalar_select %p243, %s242, 63
        %s245 = smul.addr %s244, 4
        %s246 = scalar_lea.vmem %s1, %s245
        %s247 = smul.u32 32, %s13
      $region44: #{dappm_forward.7} parent=35 // pred_fallthru
        _
    $region36: #{dappm_forward.7} parent=5 // pred_fallthru
      _
    %p248 = scmp.le.s32.totalorder 1, %s13
    %p249 = scmp.lt.s32.totalorder %s13, 3
    %p250 = pnand %p248, %p249
    %p251 = pneg %p250
    // Predicated region
    $region45: #{dappm_forward.7} parent=5 // pred_check
      _
    $region46: #{dappm_forward.7} parent=5 // pred_check_branch
      %253 = sbr.rel (%p250) target = $region48
    $region47: #{dappm_forward.7} parent=5 // pred_region
      %s254 = ssub.s32 %s13, 1
      %s255 = smul.u32 32, %s18
      %p256 = scmp.lt.s32.totalorder %s255, 63
      %s257 = scalar_select %p256, %s255, 63
      %s258 = smul.addr %s257, 4
      %s259 = scalar_lea.vmem %s0, %s258
      %p260 = pneg %p39
      %p261 = pneg %p36
      %s262 = smul.u32 32, %s18
      %p263 = scmp.lt.s32.totalorder %s262, 63
      %s264 = scalar_select %p263, %s262, 63
      %s265 = smul.addr %s264, 4
      %s266 = scalar_lea.vmem %s1, %s265
      %p267 = pneg %p65
      %p268 = pneg %p62
      %p269 = pneg %p86
      %p270 = pneg %p83
      %p271 = pneg %p107
      %p272 = pneg %p104
      %p273 = pneg %p128
      %p274 = pneg %p125
      %p275 = pneg %p149
      %p276 = pneg %p146
      %p277 = pneg %p170
      %p278 = pneg %p167
      %p279 = pneg %p196
      %p280 = pneg %p193
      %s281 = smul.u32 32, %s18
      %p282 = scmp.lt.s32.totalorder %s281, 63
      %s283 = scalar_select %p282, %s281, 63
      %s284 = smul.addr %s283, 4
      %s285 = scalar_lea.vmem %s7, %s284
      %s286 = smul.u32 32, %s18
      %p287 = scmp.lt.s32.totalorder %s286, 63
      %s288 = scalar_select %p287, %s286, 63
      %s289 = smul.addr %s288, 4
      %s290 = scalar_lea.vmem %s0, %s289
      %s291 = smul.u32 32, %s18
      %s292 = smul.u32 32, %s18
      %p293 = scmp.lt.s32.totalorder %s292, 63
      %s294 = scalar_select %p293, %s292, 63
      %s295 = smul.addr %s294, 4
      %s296 = scalar_lea.vmem %s1, %s295
      %s297 = smul.u32 32, %s18
      %s298 = smul.u32 32, %s18
      %p299 = scmp.lt.s32.totalorder %s298, 63
      %s300 = scalar_select %p299, %s298, 63
      %s301 = smul.addr %s300, 4
      %s302 = scalar_lea.vmem %s7, %s301
      %s303 = smul.u32 32, %s18
      %v305 = vld [vmem:[%s290] sm:$0xf]
      %v306 = vld [vmem:[%s290 + $0x4] sm:$0xf]
      %v307 = vld [vmem:[%s290 + $0x8] sm:$0xf]
      %v308 = vld [vmem:[%s290 + $0xc] sm:$0xf]
      %v309 = vld [vmem:[%s290 + $0x10] sm:$0xf]
      %v310 = vld [vmem:[%s290 + $0x14] sm:$0xf]
      %v311 = vld [vmem:[%s290 + $0x18] sm:$0xf]
      %v312 = vld [vmem:[%s290 + $0x1c] sm:$0xf]
      %v313 = vld [vmem:[%s290 + $0x20] sm:$0xf]
      %v314 = vld [vmem:[%s290 + $0x24] sm:$0xf]
      %v315 = vld [vmem:[%s290 + $0x28] sm:$0xf]
      %v316 = vld [vmem:[%s290 + $0x2c] sm:$0xf]
      %v317 = vld [vmem:[%s290 + $0x30] sm:$0xf]
      %v318 = vld [vmem:[%s290 + $0x34] sm:$0xf]
      %v319 = vld [vmem:[%s290 + $0x38] sm:$0xf]
      %v320 = vld [vmem:[%s290 + $0x3c] sm:$0xf]
      %v321 = vld [vmem:[%s290 + $0x40] sm:$0xf]
      %v322 = vld [vmem:[%s290 + $0x44] sm:$0xf]
      %v323 = vld [vmem:[%s290 + $0x48] sm:$0xf]
      %v324 = vld [vmem:[%s290 + $0x4c] sm:$0xf]
      %v325 = vld [vmem:[%s290 + $0x50] sm:$0xf]
      %v326 = vld [vmem:[%s290 + $0x54] sm:$0xf]
      %v327 = vld [vmem:[%s290 + $0x58] sm:$0xf]
      %v328 = vld [vmem:[%s290 + $0x5c] sm:$0xf]
      %v329 = vld [vmem:[%s290 + $0x60] sm:$0xf]
      %v330 = vld [vmem:[%s290 + $0x64] sm:$0xf]
      %v331 = vld [vmem:[%s290 + $0x68] sm:$0xf]
      %v332 = vld [vmem:[%s290 + $0x6c] sm:$0xf]
      %v333 = vld [vmem:[%s290 + $0x70] sm:$0xf]
      %v334 = vld [vmem:[%s290 + $0x74] sm:$0xf]
      %v335 = vld [vmem:[%s290 + $0x78] sm:$0xf]
      %v336 = vld [vmem:[%s290 + $0x7c] sm:$0xf]
      %v337 = vunpack.c.l.bf16 %v305
      %v338 = vunpack.c.l.bf16 %v306
      %v339 = vunpack.c.l.bf16 %v307
      %v340 = vunpack.c.l.bf16 %v308
      %v341 = vunpack.c.l.bf16 %v309
      %v342 = vunpack.c.l.bf16 %v310
      %v343 = vunpack.c.l.bf16 %v311
      %v344 = vunpack.c.l.bf16 %v312
      %v345 = vunpack.c.l.bf16 %v313
      %v346 = vunpack.c.l.bf16 %v314
      %v347 = vunpack.c.l.bf16 %v315
      %v348 = vunpack.c.l.bf16 %v316
      %v349 = vunpack.c.l.bf16 %v317
      %v350 = vunpack.c.l.bf16 %v318
      %v351 = vunpack.c.l.bf16 %v319
      %v352 = vunpack.c.l.bf16 %v320
      %v353 = vunpack.c.l.bf16 %v321
      %v354 = vunpack.c.l.bf16 %v322
      %v355 = vunpack.c.l.bf16 %v323
      %v356 = vunpack.c.l.bf16 %v324
      %v357 = vunpack.c.l.bf16 %v325
      %v358 = vunpack.c.l.bf16 %v326
      %v359 = vunpack.c.l.bf16 %v327
      %v360 = vunpack.c.l.bf16 %v328
      %v361 = vunpack.c.l.bf16 %v329
      %v362 = vunpack.c.l.bf16 %v330
      %v363 = vunpack.c.l.bf16 %v331
      %v364 = vunpack.c.l.bf16 %v332
      %v365 = vunpack.c.l.bf16 %v333
      %v366 = vunpack.c.l.bf16 %v334
      %v367 = vunpack.c.l.bf16 %v335
      %v368 = vunpack.c.l.bf16 %v336
      %v369 = vld [vmem:[%s296] sm:$0xf]
      %v370 = vld [vmem:[%s296 + $0x4] sm:$0xf]
      %v371 = vld [vmem:[%s296 + $0x8] sm:$0xf]
      %v372 = vld [vmem:[%s296 + $0xc] sm:$0xf]
      %v373 = vld [vmem:[%s296 + $0x10] sm:$0xf]
      %v374 = vld [vmem:[%s296 + $0x14] sm:$0xf]
      %v375 = vld [vmem:[%s296 + $0x18] sm:$0xf]
      %v376 = vld [vmem:[%s296 + $0x1c] sm:$0xf]
      %v377 = vld [vmem:[%s296 + $0x20] sm:$0xf]
      %v378 = vld [vmem:[%s296 + $0x24] sm:$0xf]
      %v379 = vld [vmem:[%s296 + $0x28] sm:$0xf]
      %v380 = vld [vmem:[%s296 + $0x2c] sm:$0xf]
      %v381 = vld [vmem:[%s296 + $0x30] sm:$0xf]
      %v382 = vld [vmem:[%s296 + $0x34] sm:$0xf]
      %v383 = vld [vmem:[%s296 + $0x38] sm:$0xf]
      %v384 = vld [vmem:[%s296 + $0x3c] sm:$0xf]
      %v385 = vld [vmem:[%s296 + $0x40] sm:$0xf]
      %v386 = vld [vmem:[%s296 + $0x44] sm:$0xf]
      %v387 = vld [vmem:[%s296 + $0x48] sm:$0xf]
      %v388 = vld [vmem:[%s296 + $0x4c] sm:$0xf]
      %v389 = vld [vmem:[%s296 + $0x50] sm:$0xf]
      %v390 = vld [vmem:[%s296 + $0x54] sm:$0xf]
      %v391 = vld [vmem:[%s296 + $0x58] sm:$0xf]
      %v392 = vld [vmem:[%s296 + $0x5c] sm:$0xf]
      %v393 = vld [vmem:[%s296 + $0x60] sm:$0xf]
      %v394 = vld [vmem:[%s296 + $0x64] sm:$0xf]
      %v395 = vld [vmem:[%s296 + $0x68] sm:$0xf]
      %v396 = vld [vmem:[%s296 + $0x6c] sm:$0xf]
      %v397 = vld [vmem:[%s296 + $0x70] sm:$0xf]
      %v398 = vld [vmem:[%s296 + $0x74] sm:$0xf]
      %v399 = vld [vmem:[%s296 + $0x78] sm:$0xf]
      %v400 = vld [vmem:[%s296 + $0x7c] sm:$0xf]
      %v401 = vunpack.c.l.bf16 %v369
      %v402 = vunpack.c.l.bf16 %v370
      %v403 = vunpack.c.l.bf16 %v371
      %v404 = vunpack.c.l.bf16 %v372
      %v405 = vunpack.c.l.bf16 %v373
      %v406 = vunpack.c.l.bf16 %v374
      %v407 = vunpack.c.l.bf16 %v375
      %v408 = vunpack.c.l.bf16 %v376
      %v409 = vunpack.c.l.bf16 %v377
      %v410 = vunpack.c.l.bf16 %v378
      %v411 = vunpack.c.l.bf16 %v379
      %v412 = vunpack.c.l.bf16 %v380
      %v413 = vunpack.c.l.bf16 %v381
      %v414 = vunpack.c.l.bf16 %v382
      %v415 = vunpack.c.l.bf16 %v383
      %v416 = vunpack.c.l.bf16 %v384
      %v417 = vunpack.c.l.bf16 %v385
      %v418 = vunpack.c.l.bf16 %v386
      %v419 = vunpack.c.l.bf16 %v387
      %v420 = vunpack.c.l.bf16 %v388
      %v421 = vunpack.c.l.bf16 %v389
      %v422 = vunpack.c.l.bf16 %v390
      %v423 = vunpack.c.l.bf16 %v391
      %v424 = vunpack.c.l.bf16 %v392
      %v425 = vunpack.c.l.bf16 %v393
      %v426 = vunpack.c.l.bf16 %v394
      %v427 = vunpack.c.l.bf16 %v395
      %v428 = vunpack.c.l.bf16 %v396
      %v429 = vunpack.c.l.bf16 %v397
      %v430 = vunpack.c.l.bf16 %v398
      %v431 = vunpack.c.l.bf16 %v399
      %v432 = vunpack.c.l.bf16 %v400
      %v433 = vadd.f32 %v337, %v401
      %v434 = vadd.f32 %v338, %v402
      %v435 = vadd.f32 %v339, %v403
      %v436 = vadd.f32 %v340, %v404
      %v437 = vadd.f32 %v341, %v405
      %v438 = vadd.f32 %v342, %v406
      %v439 = vadd.f32 %v343, %v407
      %v440 = vadd.f32 %v344, %v408
      %v441 = vadd.f32 %v345, %v409
      %v442 = vadd.f32 %v346, %v410
      %v443 = vadd.f32 %v347, %v411
      %v444 = vadd.f32 %v348, %v412
      %v445 = vadd.f32 %v349, %v413
      %v446 = vadd.f32 %v350, %v414
      %v447 = vadd.f32 %v351, %v415
      %v448 = vadd.f32 %v352, %v416
      %v449 = vadd.f32 %v353, %v417
      %v450 = vadd.f32 %v354, %v418
      %v451 = vadd.f32 %v355, %v419
      %v452 = vadd.f32 %v356, %v420
      %v453 = vadd.f32 %v357, %v421
      %v454 = vadd.f32 %v358, %v422
      %v455 = vadd.f32 %v359, %v423
      %v456 = vadd.f32 %v360, %v424
      %v457 = vadd.f32 %v361, %v425
      %v458 = vadd.f32 %v362, %v426
      %v459 = vadd.f32 %v363, %v427
      %v460 = vadd.f32 %v364, %v428
      %v461 = vadd.f32 %v365, %v429
      %v462 = vadd.f32 %v366, %v430
      %v463 = vadd.f32 %v367, %v431
      %v464 = vadd.f32 %v368, %v432
      %v465 = vld [vmem:[%s2] sm:$0x1]
      %v467 = vperm.slane %v465, 0
      %v469 = vmul.f32 %v433, %v467
      %v470 = vmul.f32 %v434, %v467
      %v471 = vmul.f32 %v435, %v467
      %v472 = vmul.f32 %v436, %v467
      %v473 = vmul.f32 %v437, %v467
      %v474 = vmul.f32 %v438, %v467
      %v475 = vmul.f32 %v439, %v467
      %v476 = vmul.f32 %v440, %v467
      %v477 = vmul.f32 %v441, %v467
      %v478 = vmul.f32 %v442, %v467
      %v479 = vmul.f32 %v443, %v467
      %v480 = vmul.f32 %v444, %v467
      %v481 = vmul.f32 %v445, %v467
      %v482 = vmul.f32 %v446, %v467
      %v483 = vmul.f32 %v447, %v467
      %v484 = vmul.f32 %v448, %v467
      %v485 = vmul.f32 %v449, %v467
      %v486 = vmul.f32 %v450, %v467
      %v487 = vmul.f32 %v451, %v467
      %v488 = vmul.f32 %v452, %v467
      %v489 = vmul.f32 %v453, %v467
      %v490 = vmul.f32 %v454, %v467
      %v491 = vmul.f32 %v455, %v467
      %v492 = vmul.f32 %v456, %v467
      %v493 = vmul.f32 %v457, %v467
      %v494 = vmul.f32 %v458, %v467
      %v495 = vmul.f32 %v459, %v467
      %v496 = vmul.f32 %v460, %v467
      %v497 = vmul.f32 %v461, %v467
      %v498 = vmul.f32 %v462, %v467
      %v499 = vmul.f32 %v463, %v467
      %v500 = vmul.f32 %v464, %v467
      %v501 = vld [vmem:[%s3] sm:$0x1]
      %v503 = vperm.slane %v501, 0
      %v505 = vadd.f32 %v469, %v503
      %v506 = vadd.f32 %v470, %v503
      %v507 = vadd.f32 %v471, %v503
      %v508 = vadd.f32 %v472, %v503
      %v509 = vadd.f32 %v473, %v503
      %v510 = vadd.f32 %v474, %v503
      %v511 = vadd.f32 %v475, %v503
      %v512 = vadd.f32 %v476, %v503
      %v513 = vadd.f32 %v477, %v503
      %v514 = vadd.f32 %v478, %v503
      %v515 = vadd.f32 %v479, %v503
      %v516 = vadd.f32 %v480, %v503
      %v517 = vadd.f32 %v481, %v503
      %v518 = vadd.f32 %v482, %v503
      %v519 = vadd.f32 %v483, %v503
      %v520 = vadd.f32 %v484, %v503
      %v521 = vadd.f32 %v485, %v503
      %v522 = vadd.f32 %v486, %v503
      %v523 = vadd.f32 %v487, %v503
      %v524 = vadd.f32 %v488, %v503
      %v525 = vadd.f32 %v489, %v503
      %v526 = vadd.f32 %v490, %v503
      %v527 = vadd.f32 %v491, %v503
      %v528 = vadd.f32 %v492, %v503
      %v529 = vadd.f32 %v493, %v503
      %v530 = vadd.f32 %v494, %v503
      %v531 = vadd.f32 %v495, %v503
      %v532 = vadd.f32 %v496, %v503
      %v533 = vadd.f32 %v497, %v503
      %v534 = vadd.f32 %v498, %v503
      %v535 = vadd.f32 %v499, %v503
      %v536 = vadd.f32 %v500, %v503
      %v537 = vmax.f32 %v505, 0.0
      %v538 = vmax.f32 %v506, 0.0
      %v539 = vmax.f32 %v507, 0.0
      %v540 = vmax.f32 %v508, 0.0
      %v541 = vmax.f32 %v509, 0.0
      %v542 = vmax.f32 %v510, 0.0
      %v543 = vmax.f32 %v511, 0.0
      %v544 = vmax.f32 %v512, 0.0
      %v545 = vmax.f32 %v513, 0.0
      %v546 = vmax.f32 %v514, 0.0
      %v547 = vmax.f32 %v515, 0.0
      %v548 = vmax.f32 %v516, 0.0
      %v549 = vmax.f32 %v517, 0.0
      %v550 = vmax.f32 %v518, 0.0
      %v551 = vmax.f32 %v519, 0.0
      %v552 = vmax.f32 %v520, 0.0
      %v553 = vmax.f32 %v521, 0.0
      %v554 = vmax.f32 %v522, 0.0
      %v555 = vmax.f32 %v523, 0.0
      %v556 = vmax.f32 %v524, 0.0
      %v557 = vmax.f32 %v525, 0.0
      %v558 = vmax.f32 %v526, 0.0
      %v559 = vmax.f32 %v527, 0.0
      %v560 = vmax.f32 %v528, 0.0
      %v561 = vmax.f32 %v529, 0.0
      %v562 = vmax.f32 %v530, 0.0
      %v563 = vmax.f32 %v531, 0.0
      %v564 = vmax.f32 %v532, 0.0
      %v565 = vmax.f32 %v533, 0.0
      %v566 = vmax.f32 %v534, 0.0
      %v567 = vmax.f32 %v535, 0.0
      %v568 = vmax.f32 %v536, 0.0
      %569 = vst [vmem:[#allocation2] sm:$0xf] 0
      %570 = vst [vmem:[#allocation2 + $0x4] sm:$0xf] 0
      %571 = vst [vmem:[#allocation2 + $0x8] sm:$0xf] 0
      %v572 = vpack.c.bf16 %v537, %v537
      %v573 = vpack.c.bf16 %v538, %v538
      %v574 = vpack.c.bf16 %v539, %v539
      %v575 = vpack.c.bf16 %v540, %v540
      %v576 = vpack.c.bf16 %v541, %v541
      %v577 = vpack.c.bf16 %v542, %v542
      %v578 = vpack.c.bf16 %v543, %v543
      %v579 = vpack.c.bf16 %v544, %v544
      %v580 = vpack.c.bf16 %v545, %v545
      %v581 = vpack.c.bf16 %v546, %v546
      %v582 = vpack.c.bf16 %v547, %v547
      %v583 = vpack.c.bf16 %v548, %v548
      %v584 = vpack.c.bf16 %v549, %v549
      %v585 = vpack.c.bf16 %v550, %v550
      %v586 = vpack.c.bf16 %v551, %v551
      %v587 = vpack.c.bf16 %v552, %v552
      %v588 = vpack.c.bf16 %v553, %v553
      %v589 = vpack.c.bf16 %v554, %v554
      %v590 = vpack.c.bf16 %v555, %v555
      %v591 = vpack.c.bf16 %v556, %v556
      %v592 = vpack.c.bf16 %v557, %v557
      %v593 = vpack.c.bf16 %v558, %v558
      %v594 = vpack.c.bf16 %v559, %v559
      %v595 = vpack.c.bf16 %v560, %v560
      %v596 = vpack.c.bf16 %v561, %v561
      %v597 = vpack.c.bf16 %v562, %v562
      %v598 = vpack.c.bf16 %v563, %v563
      %v599 = vpack.c.bf16 %v564, %v564
      %v600 = vpack.c.bf16 %v565, %v565
      %v601 = vpack.c.bf16 %v566, %v566
      %v602 = vpack.c.bf16 %v567, %v567
      %v603 = vpack.c.bf16 %v568, %v568
      %604 = vst [vmem:[#allocation2 + $0xc] sm:$0xf] %v572
      %605 = vst [vmem:[#allocation2 + $0x10] sm:$0xf] %v573
      %606 = vst [vmem:[#allocation2 + $0x14] sm:$0xf] %v574
      %607 = vst [vmem:[#allocation2 + $0x18] sm:$0xf] %v575
      %608 = vst [vmem:[#allocation2 + $0x1c] sm:$0xf] %v576
      %609 = vst [vmem:[#allocation2 + $0x20] sm:$0xf] %v577
      %610 = vst [vmem:[#allocation2 + $0x24] sm:$0xf] %v578
      %611 = vst [vmem:[#allocation2 + $0x28] sm:$0xf] %v579
      %612 = vst [vmem:[#allocation2 + $0x2c] sm:$0xf] %v580
      %613 = vst [vmem:[#allocation2 + $0x30] sm:$0xf] %v581
      %614 = vst [vmem:[#allocation2 + $0x34] sm:$0xf] %v582
      %615 = vst [vmem:[#allocation2 + $0x38] sm:$0xf] %v583
      %616 = vst [vmem:[#allocation2 + $0x3c] sm:$0xf] %v584
      %617 = vst [vmem:[#allocation2 + $0x40] sm:$0xf] %v585
      %618 = vst [vmem:[#allocation2 + $0x44] sm:$0xf] %v586
      %619 = vst [vmem:[#allocation2 + $0x48] sm:$0xf] %v587
      %620 = vst [vmem:[#allocation2 + $0x4c] sm:$0xf] %v588
      %621 = vst [vmem:[#allocation2 + $0x50] sm:$0xf] %v589
      %622 = vst [vmem:[#allocation2 + $0x54] sm:$0xf] %v590
      %623 = vst [vmem:[#allocation2 + $0x58] sm:$0xf] %v591
      %624 = vst [vmem:[#allocation2 + $0x5c] sm:$0xf] %v592
      %625 = vst [vmem:[#allocation2 + $0x60] sm:$0xf] %v593
      %626 = vst [vmem:[#allocation2 + $0x64] sm:$0xf] %v594
      %627 = vst [vmem:[#allocation2 + $0x68] sm:$0xf] %v595
      %628 = vst [vmem:[#allocation2 + $0x6c] sm:$0xf] %v596
      %629 = vst [vmem:[#allocation2 + $0x70] sm:$0xf] %v597
      %630 = vst [vmem:[#allocation2 + $0x74] sm:$0xf] %v598
      %631 = vst [vmem:[#allocation2 + $0x78] sm:$0xf] %v599
      %632 = vst [vmem:[#allocation2 + $0x7c] sm:$0xf] %v600
      %633 = vst [vmem:[#allocation2 + $0x80] sm:$0xf] %v601
      %634 = vst [vmem:[#allocation2 + $0x84] sm:$0xf] %v602
      %635 = vst [vmem:[#allocation2 + $0x88] sm:$0xf] %v603
      %636 = vst [vmem:[#allocation2 + $0x8c] sm:$0xf] 0
      %637 = vst [vmem:[#allocation2 + $0x90] sm:$0xf] 0
      %638 = vst [vmem:[#allocation2 + $0x94] sm:$0xf] 0
      %v639 = vld [vmem:[%s5] sm:$0xff]
      %v640 = vld [vmem:[%s5 + $0x8] sm:$0xff]
      %v641 = vld [vmem:[%s5 + $0x10] sm:$0xff]
      %v642 = vld [vmem:[%s5 + $0x18] sm:$0xff]
      %v643 = vld [vmem:[%s5 + $0x20] sm:$0xff]
      %v644 = vld [vmem:[%s5 + $0x28] sm:$0xff]
      %v645 = vld [vmem:[%s5 + $0x30] sm:$0xff]
      %v646 = vld [vmem:[%s5 + $0x38] sm:$0xff]
      %v647 = vld [vmem:[%s5 + $0x40] sm:$0xff]
      %v648 = vld [vmem:[%s5 + $0x48] sm:$0xff]
      %v649 = vld [vmem:[%s5 + $0x50] sm:$0xff]
      %v650 = vld [vmem:[%s5 + $0x58] sm:$0xff]
      %v651 = vld [vmem:[%s5 + $0x60] sm:$0xff]
      %v652 = vld [vmem:[%s5 + $0x68] sm:$0xff]
      %v653 = vld [vmem:[%s5 + $0x70] sm:$0xff]
      %v654 = vld [vmem:[%s5 + $0x78] sm:$0xff]
      %v655 = vld [vmem:[%s5 + $0x80] sm:$0xff]
      %v656 = vld [vmem:[%s5 + $0x88] sm:$0xff]
      %v657 = vld [vmem:[%s5 + $0x90] sm:$0xff]
      %v658 = vld [vmem:[%s5 + $0x98] sm:$0xff]
      %v659 = vld [vmem:[%s5 + $0xa0] sm:$0xff]
      %v660 = vld [vmem:[%s5 + $0xa8] sm:$0xff]
      %v661 = vld [vmem:[%s5 + $0xb0] sm:$0xff]
      %v662 = vld [vmem:[%s5 + $0xb8] sm:$0xff]
      %v663 = vld [vmem:[%s5 + $0xc0] sm:$0xff]
      %v664 = vld [vmem:[%s5 + $0xc8] sm:$0xff]
      %v665 = vld [vmem:[%s5 + $0xd0] sm:$0xff]
      %v666 = vld [vmem:[%s5 + $0xd8] sm:$0xff]
      %v667 = vld [vmem:[%s5 + $0xe0] sm:$0xff]
      %v668 = vld [vmem:[%s5 + $0xe8] sm:$0xff]
      %v669 = vld [vmem:[%s5 + $0xf0] sm:$0xff]
      %v670 = vld [vmem:[%s5 + $0xf8] sm:$0xff]
      %v671 = vld [vmem:[%s5 + $0x100] sm:$0xff]
      %v672 = vld [vmem:[%s5 + $0x108] sm:$0xff]
      %v673 = vld [vmem:[%s5 + $0x110] sm:$0xff]
      %v674 = vld [vmem:[%s5 + $0x118] sm:$0xff]
      %v675 = vpack.c.bf16 %v639, %v639
      %v676 = vpack.c.bf16 %v640, %v640
      %v677 = vpack.c.bf16 %v641, %v641
      %v678 = vpack.c.bf16 %v642, %v642
      %v679 = vpack.c.bf16 %v643, %v643
      %v680 = vpack.c.bf16 %v644, %v644
      %v681 = vpack.c.bf16 %v645, %v645
      %v682 = vpack.c.bf16 %v646, %v646
      %v683 = vpack.c.bf16 %v647, %v647
      %v684 = vpack.c.bf16 %v648, %v648
      %v685 = vpack.c.bf16 %v649, %v649
      %v686 = vpack.c.bf16 %v650, %v650
      %v687 = vpack.c.bf16 %v651, %v651
      %v688 = vpack.c.bf16 %v652, %v652
      %v689 = vpack.c.bf16 %v653, %v653
      %v690 = vpack.c.bf16 %v654, %v654
      %v691 = vpack.c.bf16 %v655, %v655
      %v692 = vpack.c.bf16 %v656, %v656
      %v693 = vpack.c.bf16 %v657, %v657
      %v694 = vpack.c.bf16 %v658, %v658
      %v695 = vpack.c.bf16 %v659, %v659
      %v696 = vpack.c.bf16 %v660, %v660
      %v697 = vpack.c.bf16 %v661, %v661
      %v698 = vpack.c.bf16 %v662, %v662
      %v699 = vpack.c.bf16 %v663, %v663
      %v700 = vpack.c.bf16 %v664, %v664
      %v701 = vpack.c.bf16 %v665, %v665
      %v702 = vpack.c.bf16 %v666, %v666
      %v703 = vpack.c.bf16 %v667, %v667
      %v704 = vpack.c.bf16 %v668, %v668
      %v705 = vpack.c.bf16 %v669, %v669
      %v706 = vpack.c.bf16 %v670, %v670
      %v707 = vpack.c.bf16 %v671, %v671
      %v708 = vpack.c.bf16 %v672, %v672
      %v709 = vpack.c.bf16 %v673, %v673
      %v710 = vpack.c.bf16 %v674, %v674
      %v711 = vld [vmem:[%s6] sm:$0xff]
      %v712 = vld [vmem:[%s6 + $0x8] sm:$0xff]
      %v713 = vld [vmem:[%s6 + $0x10] sm:$0xff]
      %v714 = vld [vmem:[%s6 + $0x18] sm:$0xff]
      %v715 = vld [vmem:[%s6 + $0x20] sm:$0xff]
      %v716 = vld [vmem:[%s6 + $0x28] sm:$0xff]
      %v717 = vld [vmem:[%s6 + $0x30] sm:$0xff]
      %v718 = vld [vmem:[%s6 + $0x38] sm:$0xff]
      %v719 = vld [vmem:[%s6 + $0x40] sm:$0xff]
      %v720 = vld [vmem:[%s6 + $0x48] sm:$0xff]
      %v721 = vld [vmem:[%s6 + $0x50] sm:$0xff]
      %v722 = vld [vmem:[%s6 + $0x58] sm:$0xff]
      %v723 = vld [vmem:[%s6 + $0x60] sm:$0xff]
      %v724 = vld [vmem:[%s6 + $0x68] sm:$0xff]
      %v725 = vld [vmem:[%s6 + $0x70] sm:$0xff]
      %v726 = vld [vmem:[%s6 + $0x78] sm:$0xff]
      %v727 = vld [vmem:[%s6 + $0x80] sm:$0xff]
      %v728 = vld [vmem:[%s6 + $0x88] sm:$0xff]
      %v729 = vld [vmem:[%s6 + $0x90] sm:$0xff]
      %v730 = vld [vmem:[%s6 + $0x98] sm:$0xff]
      %v731 = vld [vmem:[%s6 + $0xa0] sm:$0xff]
      %v732 = vld [vmem:[%s6 + $0xa8] sm:$0xff]
      %v733 = vld [vmem:[%s6 + $0xb0] sm:$0xff]
      %v734 = vld [vmem:[%s6 + $0xb8] sm:$0xff]
      %v735 = vld [vmem:[%s6 + $0xc0] sm:$0xff]
      %v736 = vld [vmem:[%s6 + $0xc8] sm:$0xff]
      %v737 = vld [vmem:[%s6 + $0xd0] sm:$0xff]
      %v738 = vld [vmem:[%s6 + $0xd8] sm:$0xff]
      %v739 = vld [vmem:[%s6 + $0xe0] sm:$0xff]
      %v740 = vld [vmem:[%s6 + $0xe8] sm:$0xff]
      %v741 = vld [vmem:[%s6 + $0xf0] sm:$0xff]
      %v742 = vld [vmem:[%s6 + $0xf8] sm:$0xff]
      %v743 = vld [vmem:[%s6 + $0x100] sm:$0xff]
      %v744 = vld [vmem:[%s6 + $0x108] sm:$0xff]
      %v745 = vld [vmem:[%s6 + $0x110] sm:$0xff]
      %v746 = vld [vmem:[%s6 + $0x118] sm:$0xff]
      %v747 = vpack.c.bf16 %v711, %v711
      %v748 = vpack.c.bf16 %v712, %v712
      %v749 = vpack.c.bf16 %v713, %v713
      %v750 = vpack.c.bf16 %v714, %v714
      %v751 = vpack.c.bf16 %v715, %v715
      %v752 = vpack.c.bf16 %v716, %v716
      %v753 = vpack.c.bf16 %v717, %v717
      %v754 = vpack.c.bf16 %v718, %v718
      %v755 = vpack.c.bf16 %v719, %v719
      %v756 = vpack.c.bf16 %v720, %v720
      %v757 = vpack.c.bf16 %v721, %v721
      %v758 = vpack.c.bf16 %v722, %v722
      %v759 = vpack.c.bf16 %v723, %v723
      %v760 = vpack.c.bf16 %v724, %v724
      %v761 = vpack.c.bf16 %v725, %v725
      %v762 = vpack.c.bf16 %v726, %v726
      %v763 = vpack.c.bf16 %v727, %v727
      %v764 = vpack.c.bf16 %v728, %v728
      %v765 = vpack.c.bf16 %v729, %v729
      %v766 = vpack.c.bf16 %v730, %v730
      %v767 = vpack.c.bf16 %v731, %v731
      %v768 = vpack.c.bf16 %v732, %v732
      %v769 = vpack.c.bf16 %v733, %v733
      %v770 = vpack.c.bf16 %v734, %v734
      %v771 = vpack.c.bf16 %v735, %v735
      %v772 = vpack.c.bf16 %v736, %v736
      %v773 = vpack.c.bf16 %v737, %v737
      %v774 = vpack.c.bf16 %v738, %v738
      %v775 = vpack.c.bf16 %v739, %v739
      %v776 = vpack.c.bf16 %v740, %v740
      %v777 = vpack.c.bf16 %v741, %v741
      %v778 = vpack.c.bf16 %v742, %v742
      %v779 = vpack.c.bf16 %v743, %v743
      %v780 = vpack.c.bf16 %v744, %v744
      %v781 = vpack.c.bf16 %v745, %v745
      %v782 = vpack.c.bf16 %v746, %v746
      %v783 = vld [vmem:[#allocation2] sm:$0x8]
      %v784 = vld [vmem:[#allocation2 + $0x4] sm:$0xf]
      %v785 = vld [vmem:[#allocation2 + $0x8] sm:$0xf]
      %v786 = vld [vmem:[#allocation2 + $0xc] sm:$0xf]
      %v787 = vld [vmem:[#allocation2 + $0x10] sm:$0xf]
      %v788 = vld [vmem:[#allocation2 + $0x14] sm:$0xf]
      %v789 = vld [vmem:[#allocation2 + $0x18] sm:$0xf]
      %v790 = vld [vmem:[#allocation2 + $0x1c] sm:$0xf]
      %v791 = vld [vmem:[#allocation2 + $0x20] sm:$0xf]
      %v792 = vld [vmem:[#allocation2 + $0x24] sm:$0xf]
      %v793 = vld [vmem:[#allocation2 + $0x28] sm:$0xf]
      %v794 = vld [vmem:[#allocation2 + $0x2c] sm:$0xf]
      %v795 = vld [vmem:[#allocation2 + $0x30] sm:$0xf]
      %v796 = vld [vmem:[#allocation2 + $0x34] sm:$0xf]
      %v797 = vld [vmem:[#allocation2 + $0x38] sm:$0xf]
      %v798 = vld [vmem:[#allocation2 + $0x3c] sm:$0xf]
      %v799 = vld [vmem:[#allocation2 + $0x40] sm:$0xf]
      %v800 = vld [vmem:[#allocation2 + $0x44] sm:$0xf]
      %v801 = vld [vmem:[#allocation2 + $0x48] sm:$0xf]
      %v802 = vld [vmem:[#allocation2 + $0x4c] sm:$0xf]
      %v803 = vld [vmem:[#allocation2 + $0x50] sm:$0xf]
      %v804 = vld [vmem:[#allocation2 + $0x54] sm:$0xf]
      %v805 = vld [vmem:[#allocation2 + $0x58] sm:$0xf]
      %v806 = vld [vmem:[#allocation2 + $0x5c] sm:$0xf]
      %v807 = vld [vmem:[#allocation2 + $0x60] sm:$0xf]
      %v808 = vld [vmem:[#allocation2 + $0x64] sm:$0xf]
      %v809 = vld [vmem:[#allocation2 + $0x68] sm:$0xf]
      %v810 = vld [vmem:[#allocation2 + $0x6c] sm:$0xf]
      %v811 = vld [vmem:[#allocation2 + $0x70] sm:$0xf]
      %v812 = vld [vmem:[#allocation2 + $0x74] sm:$0xf]
      %v813 = vld [vmem:[#allocation2 + $0x78] sm:$0xf]
      %v814 = vld [vmem:[#allocation2 + $0x7c] sm:$0xf]
      %v815 = vld [vmem:[#allocation2 + $0x80] sm:$0xf]
      %v816 = vld [vmem:[#allocation2 + $0x84] sm:$0xf]
      %v817 = vld [vmem:[#allocation2 + $0x88] sm:$0xf]
      %v818 = vld [vmem:[#allocation2 + $0x8c] sm:$0xf]
      %v819 = vld [vmem:[#allocation2 + $0x90] sm:$0xf]
      %821 = vset.pattern.permute.xlu0 0
      %822 = vperm.xlu0 %821, %v675
      %v823 = vpop.permute.xlu0 %822
      %v826 = vunpack.c.l.s4 839922192
      %v827 = vunpack.c.0.s8 %v826
      %v828 = vperm.slane %v823, %v827
      %830 = vset.pattern.permute.xlu0 0
      %831 = vperm.xlu0 %830, %v676
      %v832 = vpop.permute.xlu0 %831
      %v835 = vunpack.c.l.s4 839922192
      %v836 = vunpack.c.0.s8 %v835
      %v837 = vperm.slane %v832, %v836
      %839 = vset.pattern.permute.xlu0 0
      %840 = vperm.xlu0 %839, %v677
      %v841 = vpop.permute.xlu0 %840
      %v844 = vunpack.c.l.s4 839922192
      %v845 = vunpack.c.0.s8 %v844
      %v846 = vperm.slane %v841, %v845
      %848 = vset.pattern.permute.xlu0 0
      %849 = vperm.xlu0 %848, %v678
      %v850 = vpop.permute.xlu0 %849
      %v853 = vunpack.c.l.s4 839922192
      %v854 = vunpack.c.0.s8 %v853
      %v855 = vperm.slane %v850, %v854
      %857 = vset.pattern.permute.xlu0 0
      %858 = vperm.xlu0 %857, %v679
      %v859 = vpop.permute.xlu0 %858
      %v862 = vunpack.c.l.s4 839922192
      %v863 = vunpack.c.0.s8 %v862
      %v864 = vperm.slane %v859, %v863
      %866 = vset.pattern.permute.xlu0 0
      %867 = vperm.xlu0 %866, %v680
      %v868 = vpop.permute.xlu0 %867
      %v871 = vunpack.c.l.s4 839922192
      %v872 = vunpack.c.0.s8 %v871
      %v873 = vperm.slane %v868, %v872
      %875 = vset.pattern.permute.xlu0 0
      %876 = vperm.xlu0 %875, %v681
      %v877 = vpop.permute.xlu0 %876
      %v880 = vunpack.c.l.s4 839922192
      %v881 = vunpack.c.0.s8 %v880
      %v882 = vperm.slane %v877, %v881
      %884 = vset.pattern.permute.xlu0 0
      %885 = vperm.xlu0 %884, %v682
      %v886 = vpop.permute.xlu0 %885
      %v889 = vunpack.c.l.s4 839922192
      %v890 = vunpack.c.0.s8 %v889
      %v891 = vperm.slane %v886, %v890
      %893 = vset.pattern.permute.xlu0 0
      %894 = vperm.xlu0 %893, %v683
      %v895 = vpop.permute.xlu0 %894
      %v898 = vunpack.c.l.s4 839922192
      %v899 = vunpack.c.0.s8 %v898
      %v900 = vperm.slane %v895, %v899
      %902 = vset.pattern.permute.xlu0 0
      %903 = vperm.xlu0 %902, %v684
      %v904 = vpop.permute.xlu0 %903
      %v907 = vunpack.c.l.s4 839922192
      %v908 = vunpack.c.0.s8 %v907
      %v909 = vperm.slane %v904, %v908
      %911 = vset.pattern.permute.xlu0 0
      %912 = vperm.xlu0 %911, %v685
      %v913 = vpop.permute.xlu0 %912
      %v916 = vunpack.c.l.s4 839922192
      %v917 = vunpack.c.0.s8 %v916
      %v918 = vperm.slane %v913, %v917
      %920 = vset.pattern.permute.xlu0 0
      %921 = vperm.xlu0 %920, %v686
      %v922 = vpop.permute.xlu0 %921
      %v925 = vunpack.c.l.s4 839922192
      %v926 = vunpack.c.0.s8 %v925
      %v927 = vperm.slane %v922, %v926
      %929 = vset.pattern.permute.xlu0 0
      %930 = vperm.xlu0 %929, %v687
      %v931 = vpop.permute.xlu0 %930
      %v934 = vunpack.c.l.s4 839922192
      %v935 = vunpack.c.0.s8 %v934
      %v936 = vperm.slane %v931, %v935
      %938 = vset.pattern.permute.xlu0 0
      %939 = vperm.xlu0 %938, %v688
      %v940 = vpop.permute.xlu0 %939
      %v943 = vunpack.c.l.s4 839922192
      %v944 = vunpack.c.0.s8 %v943
      %v945 = vperm.slane %v940, %v944
      %947 = vset.pattern.permute.xlu0 0
      %948 = vperm.xlu0 %947, %v689
      %v949 = vpop.permute.xlu0 %948
      %v952 = vunpack.c.l.s4 839922192
      %v953 = vunpack.c.0.s8 %v952
      %v954 = vperm.slane %v949, %v953
      %956 = vset.pattern.permute.xlu0 0
      %957 = vperm.xlu0 %956, %v690
      %v958 = vpop.permute.xlu0 %957
      %v961 = vunpack.c.l.s4 839922192
      %v962 = vunpack.c.0.s8 %v961
      %v963 = vperm.slane %v958, %v962
      %965 = vset.pattern.permute.xlu0 0
      %966 = vperm.xlu0 %965, %v691
      %v967 = vpop.permute.xlu0 %966
      %v970 = vunpack.c.l.s4 839922192
      %v971 = vunpack.c.0.s8 %v970
      %v972 = vperm.slane %v967, %v971
      %974 = vset.pattern.permute.xlu0 0
      %975 = vperm.xlu0 %974, %v692
      %v976 = vpop.permute.xlu0 %975
      %v979 = vunpack.c.l.s4 839922192
      %v980 = vunpack.c.0.s8 %v979
      %v981 = vperm.slane %v976, %v980
      %983 = vset.pattern.permute.xlu0 0
      %984 = vperm.xlu0 %983, %v693
      %v985 = vpop.permute.xlu0 %984
      %v988 = vunpack.c.l.s4 839922192
      %v989 = vunpack.c.0.s8 %v988
      %v990 = vperm.slane %v985, %v989
      %992 = vset.pattern.permute.xlu0 0
      %993 = vperm.xlu0 %992, %v694
      %v994 = vpop.permute.xlu0 %993
      %v997 = vunpack.c.l.s4 839922192
      %v998 = vunpack.c.0.s8 %v997
      %v999 = vperm.slane %v994, %v998
      %1001 = vset.pattern.permute.xlu0 0
      %1002 = vperm.xlu0 %1001, %v695
      %v1003 = vpop.permute.xlu0 %1002
      %v1006 = vunpack.c.l.s4 839922192
      %v1007 = vunpack.c.0.s8 %v1006
      %v1008 = vperm.slane %v1003, %v1007
      %1010 = vset.pattern.permute.xlu0 0
      %1011 = vperm.xlu0 %1010, %v696
      %v1012 = vpop.permute.xlu0 %1011
      %v1015 = vunpack.c.l.s4 839922192
      %v1016 = vunpack.c.0.s8 %v1015
      %v1017 = vperm.slane %v1012, %v1016
      %1019 = vset.pattern.permute.xlu0 0
      %1020 = vperm.xlu0 %1019, %v697
      %v1021 = vpop.permute.xlu0 %1020
      %v1024 = vunpack.c.l.s4 839922192
      %v1025 = vunpack.c.0.s8 %v1024
      %v1026 = vperm.slane %v1021, %v1025
      %1028 = vset.pattern.permute.xlu0 0
      %1029 = vperm.xlu0 %1028, %v698
      %v1030 = vpop.permute.xlu0 %1029
      %v1033 = vunpack.c.l.s4 839922192
      %v1034 = vunpack.c.0.s8 %v1033
      %v1035 = vperm.slane %v1030, %v1034
      %1037 = vset.pattern.permute.xlu0 0
      %1038 = vperm.xlu0 %1037, %v699
      %v1039 = vpop.permute.xlu0 %1038
      %v1042 = vunpack.c.l.s4 839922192
      %v1043 = vunpack.c.0.s8 %v1042
      %v1044 = vperm.slane %v1039, %v1043
      %1046 = vset.pattern.permute.xlu0 0
      %1047 = vperm.xlu0 %1046, %v700
      %v1048 = vpop.permute.xlu0 %1047
      %v1051 = vunpack.c.l.s4 839922192
      %v1052 = vunpack.c.0.s8 %v1051
      %v1053 = vperm.slane %v1048, %v1052
      %1055 = vset.pattern.permute.xlu0 0
      %1056 = vperm.xlu0 %1055, %v701
      %v1057 = vpop.permute.xlu0 %1056
      %v1060 = vunpack.c.l.s4 839922192
      %v1061 = vunpack.c.0.s8 %v1060
      %v1062 = vperm.slane %v1057, %v1061
      %1064 = vset.pattern.permute.xlu0 0
      %1065 = vperm.xlu0 %1064, %v702
      %v1066 = vpop.permute.xlu0 %1065
      %v1069 = vunpack.c.l.s4 839922192
      %v1070 = vunpack.c.0.s8 %v1069
      %v1071 = vperm.slane %v1066, %v1070
      %1073 = vset.pattern.permute.xlu0 0
      %1074 = vperm.xlu0 %1073, %v703
      %v1075 = vpop.permute.xlu0 %1074
      %v1078 = vunpack.c.l.s4 839922192
      %v1079 = vunpack.c.0.s8 %v1078
      %v1080 = vperm.slane %v1075, %v1079
      %1082 = vset.pattern.permute.xlu0 0
      %1083 = vperm.xlu0 %1082, %v704
      %v1084 = vpop.permute.xlu0 %1083
      %v1087 = vunpack.c.l.s4 839922192
      %v1088 = vunpack.c.0.s8 %v1087
      %v1089 = vperm.slane %v1084, %v1088
      %1091 = vset.pattern.permute.xlu0 0
      %1092 = vperm.xlu0 %1091, %v705
      %v1093 = vpop.permute.xlu0 %1092
      %v1096 = vunpack.c.l.s4 839922192
      %v1097 = vunpack.c.0.s8 %v1096
      %v1098 = vperm.slane %v1093, %v1097
      %1100 = vset.pattern.permute.xlu0 0
      %1101 = vperm.xlu0 %1100, %v706
      %v1102 = vpop.permute.xlu0 %1101
      %v1105 = vunpack.c.l.s4 839922192
      %v1106 = vunpack.c.0.s8 %v1105
      %v1107 = vperm.slane %v1102, %v1106
      %1109 = vset.pattern.permute.xlu0 0
      %1110 = vperm.xlu0 %1109, %v707
      %v1111 = vpop.permute.xlu0 %1110
      %v1114 = vunpack.c.l.s4 839922192
      %v1115 = vunpack.c.0.s8 %v1114
      %v1116 = vperm.slane %v1111, %v1115
      %1118 = vset.pattern.permute.xlu0 0
      %1119 = vperm.xlu0 %1118, %v708
      %v1120 = vpop.permute.xlu0 %1119
      %v1123 = vunpack.c.l.s4 839922192
      %v1124 = vunpack.c.0.s8 %v1123
      %v1125 = vperm.slane %v1120, %v1124
      %1127 = vset.pattern.permute.xlu0 0
      %1128 = vperm.xlu0 %1127, %v709
      %v1129 = vpop.permute.xlu0 %1128
      %v1132 = vunpack.c.l.s4 839922192
      %v1133 = vunpack.c.0.s8 %v1132
      %v1134 = vperm.slane %v1129, %v1133
      %1136 = vset.pattern.permute.xlu0 0
      %1137 = vperm.xlu0 %1136, %v710
      %v1138 = vpop.permute.xlu0 %1137
      %v1141 = vunpack.c.l.s4 839922192
      %v1142 = vunpack.c.0.s8 %v1141
      %v1143 = vperm.slane %v1138, %v1142
      %v1144 = vunpack.c.l.bf16 %v783
      %v1145 = vunpack.c.l.bf16 %v784
      %v1146 = vunpack.c.l.bf16 %v785
      %v1147 = vunpack.c.l.bf16 %v786
      %v1148 = vunpack.c.l.bf16 %v787
      %v1149 = vunpack.c.l.bf16 %v788
      %v1150 = vunpack.c.l.bf16 %v789
      %v1151 = vunpack.c.l.bf16 %v790
      %v1152 = vunpack.c.l.bf16 %v791
      %v1153 = vunpack.c.l.bf16 %v792
      %v1154 = vunpack.c.l.bf16 %v793
      %v1155 = vunpack.c.l.bf16 %v794
      %v1156 = vunpack.c.l.bf16 %v795
      %v1157 = vunpack.c.l.bf16 %v796
      %v1158 = vunpack.c.l.bf16 %v797
      %v1159 = vunpack.c.l.bf16 %v798
      %v1160 = vunpack.c.l.bf16 %v799
      %v1161 = vunpack.c.l.bf16 %v800
      %v1162 = vunpack.c.l.bf16 %v801
      %v1163 = vunpack.c.l.bf16 %v802
      %v1164 = vunpack.c.l.bf16 %v803
      %v1165 = vunpack.c.l.bf16 %v804
      %v1166 = vunpack.c.l.bf16 %v805
      %v1167 = vunpack.c.l.bf16 %v806
      %v1168 = vunpack.c.l.bf16 %v807
      %v1169 = vunpack.c.l.bf16 %v808
      %v1170 = vunpack.c.l.bf16 %v809
      %v1171 = vunpack.c.l.bf16 %v810
      %v1172 = vunpack.c.l.bf16 %v811
      %v1173 = vunpack.c.l.bf16 %v812
      %v1174 = vunpack.c.l.bf16 %v813
      %v1175 = vunpack.c.l.bf16 %v814
      %v1176 = vunpack.c.l.bf16 %v815
      %v1177 = vunpack.c.l.bf16 %v816
      %v1178 = vunpack.c.l.bf16 %v817
      %v1179 = vunpack.c.l.bf16 %v818
      %v1180 = vunpack.c.l.bf16 %v819
      %v1181 = vunpack.c.l.bf16 %v828
      %v1182 = vunpack.c.l.bf16 %v837
      %v1183 = vunpack.c.l.bf16 %v846
      %v1184 = vunpack.c.l.bf16 %v855
      %v1185 = vunpack.c.l.bf16 %v864
      %v1186 = vunpack.c.l.bf16 %v873
      %v1187 = vunpack.c.l.bf16 %v882
      %v1188 = vunpack.c.l.bf16 %v891
      %v1189 = vunpack.c.l.bf16 %v900
      %v1190 = vunpack.c.l.bf16 %v909
      %v1191 = vunpack.c.l.bf16 %v918
      %v1192 = vunpack.c.l.bf16 %v927
      %v1193 = vunpack.c.l.bf16 %v936
      %v1194 = vunpack.c.l.bf16 %v945
      %v1195 = vunpack.c.l.bf16 %v954
      %v1196 = vunpack.c.l.bf16 %v963
      %v1197 = vunpack.c.l.bf16 %v972
      %v1198 = vunpack.c.l.bf16 %v981
      %v1199 = vunpack.c.l.bf16 %v990
      %v1200 = vunpack.c.l.bf16 %v999
      %v1201 = vunpack.c.l.bf16 %v1008
      %v1202 = vunpack.c.l.bf16 %v1017
      %v1203 = vunpack.c.l.bf16 %v1026
      %v1204 = vunpack.c.l.bf16 %v1035
      %v1205 = vunpack.c.l.bf16 %v1044
      %v1206 = vunpack.c.l.bf16 %v1053
      %v1207 = vunpack.c.l.bf16 %v1062
      %v1208 = vunpack.c.l.bf16 %v1071
      %v1209 = vunpack.c.l.bf16 %v1080
      %v1210 = vunpack.c.l.bf16 %v1089
      %v1211 = vunpack.c.l.bf16 %v1098
      %v1212 = vunpack.c.l.bf16 %v1107
      %v1213 = vunpack.c.l.bf16 %v1116
      %v1214 = vunpack.c.l.bf16 %v1125
      %v1215 = vunpack.c.l.bf16 %v1134
      %v1216 = vunpack.c.l.bf16 %v1143
      %vm1253 = vcmask 1046528
      %v1254 = vrot.slane %v1181, 1
      %v1255 = vrot.slane %v1182, 1
      %v1256 = vsel %vm1253, %v1254, %v1255
      %v1257 = vrot.slane %v1183, 1
      %v1258 = vsel %vm1253, %v1255, %v1257
      %v1259 = vrot.slane %v1184, 1
      %v1260 = vsel %vm1253, %v1257, %v1259
      %v1261 = vrot.slane %v1185, 1
      %v1262 = vsel %vm1253, %v1259, %v1261
      %v1263 = vrot.slane %v1186, 1
      %v1264 = vsel %vm1253, %v1261, %v1263
      %v1265 = vrot.slane %v1187, 1
      %v1266 = vsel %vm1253, %v1263, %v1265
      %v1267 = vrot.slane %v1188, 1
      %v1268 = vsel %vm1253, %v1265, %v1267
      %v1269 = vrot.slane %v1189, 1
      %v1270 = vsel %vm1253, %v1267, %v1269
      %v1271 = vrot.slane %v1190, 1
      %v1272 = vsel %vm1253, %v1269, %v1271
      %v1273 = vrot.slane %v1191, 1
      %v1274 = vsel %vm1253, %v1271, %v1273
      %v1275 = vrot.slane %v1192, 1
      %v1276 = vsel %vm1253, %v1273, %v1275
      %v1277 = vrot.slane %v1193, 1
      %v1278 = vsel %vm1253, %v1275, %v1277
      %v1279 = vrot.slane %v1194, 1
      %v1280 = vsel %vm1253, %v1277, %v1279
      %v1281 = vrot.slane %v1195, 1
      %v1282 = vsel %vm1253, %v1279, %v1281
      %v1283 = vrot.slane %v1196, 1
      %v1284 = vsel %vm1253, %v1281, %v1283
      %v1285 = vrot.slane %v1197, 1
      %v1286 = vsel %vm1253, %v1283, %v1285
      %v1287 = vrot.slane %v1198, 1
      %v1288 = vsel %vm1253, %v1285, %v1287
      %v1289 = vrot.slane %v1199, 1
      %v1290 = vsel %vm1253, %v1287, %v1289
      %v1291 = vrot.slane %v1200, 1
      %v1292 = vsel %vm1253, %v1289, %v1291
      %v1293 = vrot.slane %v1201, 1
      %v1294 = vsel %vm1253, %v1291, %v1293
      %v1295 = vrot.slane %v1202, 1
      %v1296 = vsel %vm1253, %v1293, %v1295
      %v1297 = vrot.slane %v1203, 1
      %v1298 = vsel %vm1253, %v1295, %v1297
      %v1299 = vrot.slane %v1204, 1
      %v1300 = vsel %vm1253, %v1297, %v1299
      %v1301 = vrot.slane %v1205, 1
      %v1302 = vsel %vm1253, %v1299, %v1301
      %v1303 = vrot.slane %v1206, 1
      %v1304 = vsel %vm1253, %v1301, %v1303
      %v1305 = vrot.slane %v1207, 1
      %v1306 = vsel %vm1253, %v1303, %v1305
      %v1307 = vrot.slane %v1208, 1
      %v1308 = vsel %vm1253, %v1305, %v1307
      %v1309 = vrot.slane %v1209, 1
      %v1310 = vsel %vm1253, %v1307, %v1309
      %v1311 = vrot.slane %v1210, 1
      %v1312 = vsel %vm1253, %v1309, %v1311
      %v1313 = vrot.slane %v1211, 1
      %v1314 = vsel %vm1253, %v1311, %v1313
      %v1315 = vrot.slane %v1212, 1
      %v1316 = vsel %vm1253, %v1313, %v1315
      %v1317 = vrot.slane %v1213, 1
      %v1318 = vsel %vm1253, %v1315, %v1317
      %v1319 = vrot.slane %v1214, 1
      %v1320 = vsel %vm1253, %v1317, %v1319
      %v1321 = vrot.slane %v1215, 1
      %v1322 = vsel %vm1253, %v1319, %v1321
      %v1323 = vrot.slane %v1216, 1
      %v1324 = vsel %vm1253, %v1321, %v1323
      %v1362 = vmul.f32 %v1144, %v1254
      %v1363 = vmul.f32 %v1145, %v1256
      %v1364 = vmul.f32 %v1146, %v1258
      %v1365 = vmul.f32 %v1147, %v1260
      %v1366 = vmul.f32 %v1148, %v1262
      %v1367 = vmul.f32 %v1149, %v1264
      %v1368 = vmul.f32 %v1150, %v1266
      %v1369 = vmul.f32 %v1151, %v1268
      %v1370 = vmul.f32 %v1152, %v1270
      %v1371 = vmul.f32 %v1153, %v1272
      %v1372 = vmul.f32 %v1154, %v1274
      %v1373 = vmul.f32 %v1155, %v1276
      %v1374 = vmul.f32 %v1156, %v1278
      %v1375 = vmul.f32 %v1157, %v1280
      %v1376 = vmul.f32 %v1158, %v1282
      %v1377 = vmul.f32 %v1159, %v1284
      %v1378 = vmul.f32 %v1160, %v1286
      %v1379 = vmul.f32 %v1161, %v1288
      %v1380 = vmul.f32 %v1162, %v1290
      %v1381 = vmul.f32 %v1163, %v1292
      %v1382 = vmul.f32 %v1164, %v1294
      %v1383 = vmul.f32 %v1165, %v1296
      %v1384 = vmul.f32 %v1166, %v1298
      %v1385 = vmul.f32 %v1167, %v1300
      %v1386 = vmul.f32 %v1168, %v1302
      %v1387 = vmul.f32 %v1169, %v1304
      %v1388 = vmul.f32 %v1170, %v1306
      %v1389 = vmul.f32 %v1171, %v1308
      %v1390 = vmul.f32 %v1172, %v1310
      %v1391 = vmul.f32 %v1173, %v1312
      %v1392 = vmul.f32 %v1174, %v1314
      %v1393 = vmul.f32 %v1175, %v1316
      %v1394 = vmul.f32 %v1176, %v1318
      %v1395 = vmul.f32 %v1177, %v1320
      %v1396 = vmul.f32 %v1178, %v1322
      %v1397 = vmul.f32 %v1179, %v1324
      %v1398 = vmul.f32 %v1180, %v1323
      %v1399 = vpack.c.bf16 %v1362, %v1362
      %v1400 = vpack.c.bf16 %v1363, %v1363
      %v1401 = vpack.c.bf16 %v1364, %v1364
      %v1402 = vpack.c.bf16 %v1365, %v1365
      %v1403 = vpack.c.bf16 %v1366, %v1366
      %v1404 = vpack.c.bf16 %v1367, %v1367
      %v1405 = vpack.c.bf16 %v1368, %v1368
      %v1406 = vpack.c.bf16 %v1369, %v1369
      %v1407 = vpack.c.bf16 %v1370, %v1370
      %v1408 = vpack.c.bf16 %v1371, %v1371
      %v1409 = vpack.c.bf16 %v1372, %v1372
      %v1410 = vpack.c.bf16 %v1373, %v1373
      %v1411 = vpack.c.bf16 %v1374, %v1374
      %v1412 = vpack.c.bf16 %v1375, %v1375
      %v1413 = vpack.c.bf16 %v1376, %v1376
      %v1414 = vpack.c.bf16 %v1377, %v1377
      %v1415 = vpack.c.bf16 %v1378, %v1378
      %v1416 = vpack.c.bf16 %v1379, %v1379
      %v1417 = vpack.c.bf16 %v1380, %v1380
      %v1418 = vpack.c.bf16 %v1381, %v1381
      %v1419 = vpack.c.bf16 %v1382, %v1382
      %v1420 = vpack.c.bf16 %v1383, %v1383
      %v1421 = vpack.c.bf16 %v1384, %v1384
      %v1422 = vpack.c.bf16 %v1385, %v1385
      %v1423 = vpack.c.bf16 %v1386, %v1386
      %v1424 = vpack.c.bf16 %v1387, %v1387
      %v1425 = vpack.c.bf16 %v1388, %v1388
      %v1426 = vpack.c.bf16 %v1389, %v1389
      %v1427 = vpack.c.bf16 %v1390, %v1390
      %v1428 = vpack.c.bf16 %v1391, %v1391
      %v1429 = vpack.c.bf16 %v1392, %v1392
      %v1430 = vpack.c.bf16 %v1393, %v1393
      %v1431 = vpack.c.bf16 %v1394, %v1394
      %v1432 = vpack.c.bf16 %v1395, %v1395
      %v1433 = vpack.c.bf16 %v1396, %v1396
      %v1434 = vpack.c.bf16 %v1397, %v1397
      %v1435 = vpack.c.bf16 %v1398, %v1398
      %vm1436 = vsmask.f32 256
      %vm1437 = vsmask.f32 4368
      %vm1438 = vmor %vm1436, %vm1437
      %v1440 = vshrl.u32 %v1399, 16
      %v1442 = vrot.slane %v1440, 7
      %v1443 = vrot.slane %v1442, 4
      %v1445 = vshrl.u32 %v1400, 16
      %v1447 = vrot.slane %v1445, 7
      %v1448 = vshll.u32 %v1400, 16
      %v1450 = vor.u32 %v1447, %v1448
      %v1451 = vsel %vm1438, %v1443, %v1450
      %v1452 = vrot.slane %v1447, 4
      %v1454 = vshrl.u32 %v1401, 16
      %v1456 = vrot.slane %v1454, 7
      %v1457 = vshll.u32 %v1401, 16
      %v1459 = vor.u32 %v1456, %v1457
      %v1460 = vsel %vm1438, %v1452, %v1459
      %v1461 = vrot.slane %v1456, 4
      %v1463 = vshrl.u32 %v1402, 16
      %v1465 = vrot.slane %v1463, 7
      %v1466 = vshll.u32 %v1402, 16
      %v1468 = vor.u32 %v1465, %v1466
      %v1469 = vsel %vm1438, %v1461, %v1468
      %v1470 = vrot.slane %v1465, 4
      %v1472 = vshrl.u32 %v1403, 16
      %v1474 = vrot.slane %v1472, 7
      %v1475 = vshll.u32 %v1403, 16
      %v1477 = vor.u32 %v1474, %v1475
      %v1478 = vsel %vm1438, %v1470, %v1477
      %v1479 = vrot.slane %v1474, 4
      %v1481 = vshrl.u32 %v1404, 16
      %v1483 = vrot.slane %v1481, 7
      %v1484 = vshll.u32 %v1404, 16
      %v1486 = vor.u32 %v1483, %v1484
      %v1487 = vsel %vm1438, %v1479, %v1486
      %v1488 = vrot.slane %v1483, 4
      %v1490 = vshrl.u32 %v1405, 16
      %v1492 = vrot.slane %v1490, 7
      %v1493 = vshll.u32 %v1405, 16
      %v1495 = vor.u32 %v1492, %v1493
      %v1496 = vsel %vm1438, %v1488, %v1495
      %v1497 = vrot.slane %v1492, 4
      %v1499 = vshrl.u32 %v1406, 16
      %v1501 = vrot.slane %v1499, 7
      %v1502 = vshll.u32 %v1406, 16
      %v1504 = vor.u32 %v1501, %v1502
      %v1505 = vsel %vm1438, %v1497, %v1504
      %v1506 = vrot.slane %v1501, 4
      %v1508 = vshrl.u32 %v1407, 16
      %v1510 = vrot.slane %v1508, 7
      %v1511 = vshll.u32 %v1407, 16
      %v1513 = vor.u32 %v1510, %v1511
      %v1514 = vsel %vm1438, %v1506, %v1513
      %v1515 = vrot.slane %v1510, 4
      %v1517 = vshrl.u32 %v1408, 16
      %v1519 = vrot.slane %v1517, 7
      %v1520 = vshll.u32 %v1408, 16
      %v1522 = vor.u32 %v1519, %v1520
      %v1523 = vsel %vm1438, %v1515, %v1522
      %v1524 = vrot.slane %v1519, 4
      %v1526 = vshrl.u32 %v1409, 16
      %v1528 = vrot.slane %v1526, 7
      %v1529 = vshll.u32 %v1409, 16
      %v1531 = vor.u32 %v1528, %v1529
      %v1532 = vsel %vm1438, %v1524, %v1531
      %v1533 = vrot.slane %v1528, 4
      %v1535 = vshrl.u32 %v1410, 16
      %v1537 = vrot.slane %v1535, 7
      %v1538 = vshll.u32 %v1410, 16
      %v1540 = vor.u32 %v1537, %v1538
      %v1541 = vsel %vm1438, %v1533, %v1540
      %v1542 = vrot.slane %v1537, 4
      %v1544 = vshrl.u32 %v1411, 16
      %v1546 = vrot.slane %v1544, 7
      %v1547 = vshll.u32 %v1411, 16
      %v1549 = vor.u32 %v1546, %v1547
      %v1550 = vsel %vm1438, %v1542, %v1549
      %v1551 = vrot.slane %v1546, 4
      %v1553 = vshrl.u32 %v1412, 16
      %v1555 = vrot.slane %v1553, 7
      %v1556 = vshll.u32 %v1412, 16
      %v1558 = vor.u32 %v1555, %v1556
      %v1559 = vsel %vm1438, %v1551, %v1558
      %v1560 = vrot.slane %v1555, 4
      %v1562 = vshrl.u32 %v1413, 16
      %v1564 = vrot.slane %v1562, 7
      %v1565 = vshll.u32 %v1413, 16
      %v1567 = vor.u32 %v1564, %v1565
      %v1568 = vsel %vm1438, %v1560, %v1567
      %v1569 = vrot.slane %v1564, 4
      %v1571 = vshrl.u32 %v1414, 16
      %v1573 = vrot.slane %v1571, 7
      %v1574 = vshll.u32 %v1414, 16
      %v1576 = vor.u32 %v1573, %v1574
      %v1577 = vsel %vm1438, %v1569, %v1576
      %v1578 = vrot.slane %v1573, 4
      %v1580 = vshrl.u32 %v1415, 16
      %v1582 = vrot.slane %v1580, 7
      %v1583 = vshll.u32 %v1415, 16
      %v1585 = vor.u32 %v1582, %v1583
      %v1586 = vsel %vm1438, %v1578, %v1585
      %v1587 = vrot.slane %v1582, 4
      %v1589 = vshrl.u32 %v1416, 16
      %v1591 = vrot.slane %v1589, 7
      %v1592 = vshll.u32 %v1416, 16
      %v1594 = vor.u32 %v1591, %v1592
      %v1595 = vsel %vm1438, %v1587, %v1594
      %v1596 = vrot.slane %v1591, 4
      %v1598 = vshrl.u32 %v1417, 16
      %v1600 = vrot.slane %v1598, 7
      %v1601 = vshll.u32 %v1417, 16
      %v1603 = vor.u32 %v1600, %v1601
      %v1604 = vsel %vm1438, %v1596, %v1603
      %v1605 = vrot.slane %v1600, 4
      %v1607 = vshrl.u32 %v1418, 16
      %v1609 = vrot.slane %v1607, 7
      %v1610 = vshll.u32 %v1418, 16
      %v1612 = vor.u32 %v1609, %v1610
      %v1613 = vsel %vm1438, %v1605, %v1612
      %v1614 = vrot.slane %v1609, 4
      %v1616 = vshrl.u32 %v1419, 16
      %v1618 = vrot.slane %v1616, 7
      %v1619 = vshll.u32 %v1419, 16
      %v1621 = vor.u32 %v1618, %v1619
      %v1622 = vsel %vm1438, %v1614, %v1621
      %v1623 = vrot.slane %v1618, 4
      %v1625 = vshrl.u32 %v1420, 16
      %v1627 = vrot.slane %v1625, 7
      %v1628 = vshll.u32 %v1420, 16
      %v1630 = vor.u32 %v1627, %v1628
      %v1631 = vsel %vm1438, %v1623, %v1630
      %v1632 = vrot.slane %v1627, 4
      %v1634 = vshrl.u32 %v1421, 16
      %v1636 = vrot.slane %v1634, 7
      %v1637 = vshll.u32 %v1421, 16
      %v1639 = vor.u32 %v1636, %v1637
      %v1640 = vsel %vm1438, %v1632, %v1639
      %v1641 = vrot.slane %v1636, 4
      %v1643 = vshrl.u32 %v1422, 16
      %v1645 = vrot.slane %v1643, 7
      %v1646 = vshll.u32 %v1422, 16
      %v1648 = vor.u32 %v1645, %v1646
      %v1649 = vsel %vm1438, %v1641, %v1648
      %v1650 = vrot.slane %v1645, 4
      %v1652 = vshrl.u32 %v1423, 16
      %v1654 = vrot.slane %v1652, 7
      %v1655 = vshll.u32 %v1423, 16
      %v1657 = vor.u32 %v1654, %v1655
      %v1658 = vsel %vm1438, %v1650, %v1657
      %v1659 = vrot.slane %v1654, 4
      %v1661 = vshrl.u32 %v1424, 16
      %v1663 = vrot.slane %v1661, 7
      %v1664 = vshll.u32 %v1424, 16
      %v1666 = vor.u32 %v1663, %v1664
      %v1667 = vsel %vm1438, %v1659, %v1666
      %v1668 = vrot.slane %v1663, 4
      %v1670 = vshrl.u32 %v1425, 16
      %v1672 = vrot.slane %v1670, 7
      %v1673 = vshll.u32 %v1425, 16
      %v1675 = vor.u32 %v1672, %v1673
      %v1676 = vsel %vm1438, %v1668, %v1675
      %v1677 = vrot.slane %v1672, 4
      %v1679 = vshrl.u32 %v1426, 16
      %v1681 = vrot.slane %v1679, 7
      %v1682 = vshll.u32 %v1426, 16
      %v1684 = vor.u32 %v1681, %v1682
      %v1685 = vsel %vm1438, %v1677, %v1684
      %v1686 = vrot.slane %v1681, 4
      %v1688 = vshrl.u32 %v1427, 16
      %v1690 = vrot.slane %v1688, 7
      %v1691 = vshll.u32 %v1427, 16
      %v1693 = vor.u32 %v1690, %v1691
      %v1694 = vsel %vm1438, %v1686, %v1693
      %v1695 = vrot.slane %v1690, 4
      %v1697 = vshrl.u32 %v1428, 16
      %v1699 = vrot.slane %v1697, 7
      %v1700 = vshll.u32 %v1428, 16
      %v1702 = vor.u32 %v1699, %v1700
      %v1703 = vsel %vm1438, %v1695, %v1702
      %v1704 = vrot.slane %v1699, 4
      %v1706 = vshrl.u32 %v1429, 16
      %v1708 = vrot.slane %v1706, 7
      %v1709 = vshll.u32 %v1429, 16
      %v1711 = vor.u32 %v1708, %v1709
      %v1712 = vsel %vm1438, %v1704, %v1711
      %v1713 = vrot.slane %v1708, 4
      %v1715 = vshrl.u32 %v1430, 16
      %v1717 = vrot.slane %v1715, 7
      %v1718 = vshll.u32 %v1430, 16
      %v1720 = vor.u32 %v1717, %v1718
      %v1721 = vsel %vm1438, %v1713, %v1720
      %v1722 = vrot.slane %v1717, 4
      %v1724 = vshrl.u32 %v1431, 16
      %v1726 = vrot.slane %v1724, 7
      %v1727 = vshll.u32 %v1431, 16
      %v1729 = vor.u32 %v1726, %v1727
      %v1730 = vsel %vm1438, %v1722, %v1729
      %v1731 = vrot.slane %v1726, 4
      %v1733 = vshrl.u32 %v1432, 16
      %v1735 = vrot.slane %v1733, 7
      %v1736 = vshll.u32 %v1432, 16
      %v1738 = vor.u32 %v1735, %v1736
      %v1739 = vsel %vm1438, %v1731, %v1738
      %v1740 = vrot.slane %v1735, 4
      %v1742 = vshrl.u32 %v1433, 16
      %v1744 = vrot.slane %v1742, 7
      %v1745 = vshll.u32 %v1433, 16
      %v1747 = vor.u32 %v1744, %v1745
      %v1748 = vsel %vm1438, %v1740, %v1747
      %v1749 = vrot.slane %v1744, 4
      %v1751 = vshrl.u32 %v1434, 16
      %v1753 = vrot.slane %v1751, 7
      %v1754 = vshll.u32 %v1434, 16
      %v1756 = vor.u32 %v1753, %v1754
      %v1757 = vsel %vm1438, %v1749, %v1756
      %v1758 = vrot.slane %v1753, 4
      %v1760 = vshrl.u32 %v1435, 16
      %v1762 = vrot.slane %v1760, 7
      %v1763 = vshll.u32 %v1435, 16
      %v1765 = vor.u32 %v1762, %v1763
      %v1766 = vsel %vm1438, %v1758, %v1765
      %1803 = vst [vmem:[#allocation3] sm:$0xf] %v1451
      %1804 = vst [vmem:[#allocation3 + $0x4] sm:$0xf] %v1460
      %1805 = vst [vmem:[#allocation3 + $0x8] sm:$0xf] %v1469
      %1806 = vst [vmem:[#allocation3 + $0xc] sm:$0xf] %v1478
      %1807 = vst [vmem:[#allocation3 + $0x10] sm:$0xf] %v1487
      %1808 = vst [vmem:[#allocation3 + $0x14] sm:$0xf] %v1496
      %1809 = vst [vmem:[#allocation3 + $0x18] sm:$0xf] %v1505
      %1810 = vst [vmem:[#allocation3 + $0x1c] sm:$0xf] %v1514
      %1811 = vst [vmem:[#allocation3 + $0x20] sm:$0xf] %v1523
      %1812 = vst [vmem:[#allocation3 + $0x24] sm:$0xf] %v1532
      %1813 = vst [vmem:[#allocation3 + $0x28] sm:$0xf] %v1541
      %1814 = vst [vmem:[#allocation3 + $0x2c] sm:$0xf] %v1550
      %1815 = vst [vmem:[#allocation3 + $0x30] sm:$0xf] %v1559
      %1816 = vst [vmem:[#allocation3 + $0x34] sm:$0xf] %v1568
      %1817 = vst [vmem:[#allocation3 + $0x38] sm:$0xf] %v1577
      %1818 = vst [vmem:[#allocation3 + $0x3c] sm:$0xf] %v1586
      %1819 = vst [vmem:[#allocation3 + $0x40] sm:$0xf] %v1595
      %1820 = vst [vmem:[#allocation3 + $0x44] sm:$0xf] %v1604
      %1821 = vst [vmem:[#allocation3 + $0x48] sm:$0xf] %v1613
      %1822 = vst [vmem:[#allocation3 + $0x4c] sm:$0xf] %v1622
      %1823 = vst [vmem:[#allocation3 + $0x50] sm:$0xf] %v1631
      %1824 = vst [vmem:[#allocation3 + $0x54] sm:$0xf] %v1640
      %1825 = vst [vmem:[#allocation3 + $0x58] sm:$0xf] %v1649
      %1826 = vst [vmem:[#allocation3 + $0x5c] sm:$0xf] %v1658
      %1827 = vst [vmem:[#allocation3 + $0x60] sm:$0xf] %v1667
      %1828 = vst [vmem:[#allocation3 + $0x64] sm:$0xf] %v1676
      %1829 = vst [vmem:[#allocation3 + $0x68] sm:$0xf] %v1685
      %1830 = vst [vmem:[#allocation3 + $0x6c] sm:$0xf] %v1694
      %1831 = vst [vmem:[#allocation3 + $0x70] sm:$0xf] %v1703
      %1832 = vst [vmem:[#allocation3 + $0x74] sm:$0xf] %v1712
      %1833 = vst [vmem:[#allocation3 + $0x78] sm:$0xf] %v1721
      %1834 = vst [vmem:[#allocation3 + $0x7c] sm:$0xf] %v1730
      %1835 = vst [vmem:[#allocation3 + $0x80] sm:$0xf] %v1739
      %1836 = vst [vmem:[#allocation3 + $0x84] sm:$0xf] %v1748
      %1837 = vst [vmem:[#allocation3 + $0x88] sm:$0xf] %v1757
      %1838 = vst [vmem:[#allocation3 + $0x8c] sm:$0xf] %v1766
      %v1839 = vld [vmem:[#allocation2 + $0x4] sm:$0xf]
      %v1840 = vld [vmem:[#allocation2 + $0x8] sm:$0xf]
      %v1841 = vld [vmem:[#allocation2 + $0xc] sm:$0xf]
      %v1842 = vld [vmem:[#allocation2 + $0x10] sm:$0xf]
      %v1843 = vld [vmem:[#allocation2 + $0x14] sm:$0xf]
      %v1844 = vld [vmem:[#allocation2 + $0x18] sm:$0xf]
      %v1845 = vld [vmem:[#allocation2 + $0x1c] sm:$0xf]
      %v1846 = vld [vmem:[#allocation2 + $0x20] sm:$0xf]
      %v1847 = vld [vmem:[#allocation2 + $0x24] sm:$0xf]
      %v1848 = vld [vmem:[#allocation2 + $0x28] sm:$0xf]
      %v1849 = vld [vmem:[#allocation2 + $0x2c] sm:$0xf]
      %v1850 = vld [vmem:[#allocation2 + $0x30] sm:$0xf]
      %v1851 = vld [vmem:[#allocation2 + $0x34] sm:$0xf]
      %v1852 = vld [vmem:[#allocation2 + $0x38] sm:$0xf]
      %v1853 = vld [vmem:[#allocation2 + $0x3c] sm:$0xf]
      %v1854 = vld [vmem:[#allocation2 + $0x40] sm:$0xf]
      %v1855 = vld [vmem:[#allocation2 + $0x44] sm:$0xf]
      %v1856 = vld [vmem:[#allocation2 + $0x48] sm:$0xf]
      %v1857 = vld [vmem:[#allocation2 + $0x4c] sm:$0xf]
      %v1858 = vld [vmem:[#allocation2 + $0x50] sm:$0xf]
      %v1859 = vld [vmem:[#allocation2 + $0x54] sm:$0xf]
      %v1860 = vld [vmem:[#allocation2 + $0x58] sm:$0xf]
      %v1861 = vld [vmem:[#allocation2 + $0x5c] sm:$0xf]
      %v1862 = vld [vmem:[#allocation2 + $0x60] sm:$0xf]
      %v1863 = vld [vmem:[#allocation2 + $0x64] sm:$0xf]
      %v1864 = vld [vmem:[#allocation2 + $0x68] sm:$0xf]
      %v1865 = vld [vmem:[#allocation2 + $0x6c] sm:$0xf]
      %v1866 = vld [vmem:[#allocation2 + $0x70] sm:$0xf]
      %v1867 = vld [vmem:[#allocation2 + $0x74] sm:$0xf]
      %v1868 = vld [vmem:[#allocation2 + $0x78] sm:$0xf]
      %v1869 = vld [vmem:[#allocation2 + $0x7c] sm:$0xf]
      %v1870 = vld [vmem:[#allocation2 + $0x80] sm:$0xf]
      %v1871 = vld [vmem:[#allocation2 + $0x84] sm:$0xf]
      %v1872 = vld [vmem:[#allocation2 + $0x88] sm:$0xf]
      %v1873 = vld [vmem:[#allocation2 + $0x8c] sm:$0xf]
      %v1874 = vld [vmem:[#allocation2 + $0x90] sm:$0xf]
      %v1875 = vld [vmem:[#allocation2 + $0x94] sm:$0x1]
      %1877 = vset.pattern.permute.xlu0 0
      %1878 = vperm.xlu0 %1877, %v747
      %v1879 = vpop.permute.xlu0 %1878
      %v1882 = vunpack.c.l.s4 839922192
      %v1883 = vunpack.c.0.s8 %v1882
      %v1884 = vperm.slane %v1879, %v1883
      %1886 = vset.pattern.permute.xlu0 0
      %1887 = vperm.xlu0 %1886, %v748
      %v1888 = vpop.permute.xlu0 %1887
      %v1891 = vunpack.c.l.s4 839922192
      %v1892 = vunpack.c.0.s8 %v1891
      %v1893 = vperm.slane %v1888, %v1892
      %1895 = vset.pattern.permute.xlu0 0
      %1896 = vperm.xlu0 %1895, %v749
      %v1897 = vpop.permute.xlu0 %1896
      %v1900 = vunpack.c.l.s4 839922192
      %v1901 = vunpack.c.0.s8 %v1900
      %v1902 = vperm.slane %v1897, %v1901
      %1904 = vset.pattern.permute.xlu0 0
      %1905 = vperm.xlu0 %1904, %v750
      %v1906 = vpop.permute.xlu0 %1905
      %v1909 = vunpack.c.l.s4 839922192
      %v1910 = vunpack.c.0.s8 %v1909
      %v1911 = vperm.slane %v1906, %v1910
      %1913 = vset.pattern.permute.xlu0 0
      %1914 = vperm.xlu0 %1913, %v751
      %v1915 = vpop.permute.xlu0 %1914
      %v1918 = vunpack.c.l.s4 839922192
      %v1919 = vunpack.c.0.s8 %v1918
      %v1920 = vperm.slane %v1915, %v1919
      %1922 = vset.pattern.permute.xlu0 0
      %1923 = vperm.xlu0 %1922, %v752
      %v1924 = vpop.permute.xlu0 %1923
      %v1927 = vunpack.c.l.s4 839922192
      %v1928 = vunpack.c.0.s8 %v1927
      %v1929 = vperm.slane %v1924, %v1928
      %1931 = vset.pattern.permute.xlu0 0
      %1932 = vperm.xlu0 %1931, %v753
      %v1933 = vpop.permute.xlu0 %1932
      %v1936 = vunpack.c.l.s4 839922192
      %v1937 = vunpack.c.0.s8 %v1936
      %v1938 = vperm.slane %v1933, %v1937
      %1940 = vset.pattern.permute.xlu0 0
      %1941 = vperm.xlu0 %1940, %v754
      %v1942 = vpop.permute.xlu0 %1941
      %v1945 = vunpack.c.l.s4 839922192
      %v1946 = vunpack.c.0.s8 %v1945
      %v1947 = vperm.slane %v1942, %v1946
      %1949 = vset.pattern.permute.xlu0 0
      %1950 = vperm.xlu0 %1949, %v755
      %v1951 = vpop.permute.xlu0 %1950
      %v1954 = vunpack.c.l.s4 839922192
      %v1955 = vunpack.c.0.s8 %v1954
      %v1956 = vperm.slane %v1951, %v1955
      %1958 = vset.pattern.permute.xlu0 0
      %1959 = vperm.xlu0 %1958, %v756
      %v1960 = vpop.permute.xlu0 %1959
      %v1963 = vunpack.c.l.s4 839922192
      %v1964 = vunpack.c.0.s8 %v1963
      %v1965 = vperm.slane %v1960, %v1964
      %1967 = vset.pattern.permute.xlu0 0
      %1968 = vperm.xlu0 %1967, %v757
      %v1969 = vpop.permute.xlu0 %1968
      %v1972 = vunpack.c.l.s4 839922192
      %v1973 = vunpack.c.0.s8 %v1972
      %v1974 = vperm.slane %v1969, %v1973
      %1976 = vset.pattern.permute.xlu0 0
      %1977 = vperm.xlu0 %1976, %v758
      %v1978 = vpop.permute.xlu0 %1977
      %v1981 = vunpack.c.l.s4 839922192
      %v1982 = vunpack.c.0.s8 %v1981
      %v1983 = vperm.slane %v1978, %v1982
      %1985 = vset.pattern.permute.xlu0 0
      %1986 = vperm.xlu0 %1985, %v759
      %v1987 = vpop.permute.xlu0 %1986
      %v1990 = vunpack.c.l.s4 839922192
      %v1991 = vunpack.c.0.s8 %v1990
      %v1992 = vperm.slane %v1987, %v1991
      %1994 = vset.pattern.permute.xlu0 0
      %1995 = vperm.xlu0 %1994, %v760
      %v1996 = vpop.permute.xlu0 %1995
      %v1999 = vunpack.c.l.s4 839922192
      %v2000 = vunpack.c.0.s8 %v1999
      %v2001 = vperm.slane %v1996, %v2000
      %2003 = vset.pattern.permute.xlu0 0
      %2004 = vperm.xlu0 %2003, %v761
      %v2005 = vpop.permute.xlu0 %2004
      %v2008 = vunpack.c.l.s4 839922192
      %v2009 = vunpack.c.0.s8 %v2008
      %v2010 = vperm.slane %v2005, %v2009
      %2012 = vset.pattern.permute.xlu0 0
      %2013 = vperm.xlu0 %2012, %v762
      %v2014 = vpop.permute.xlu0 %2013
      %v2017 = vunpack.c.l.s4 839922192
      %v2018 = vunpack.c.0.s8 %v2017
      %v2019 = vperm.slane %v2014, %v2018
      %2021 = vset.pattern.permute.xlu0 0
      %2022 = vperm.xlu0 %2021, %v763
      %v2023 = vpop.permute.xlu0 %2022
      %v2026 = vunpack.c.l.s4 839922192
      %v2027 = vunpack.c.0.s8 %v2026
      %v2028 = vperm.slane %v2023, %v2027
      %2030 = vset.pattern.permute.xlu0 0
      %2031 = vperm.xlu0 %2030, %v764
      %v2032 = vpop.permute.xlu0 %2031
      %v2035 = vunpack.c.l.s4 839922192
      %v2036 = vunpack.c.0.s8 %v2035
      %v2037 = vperm.slane %v2032, %v2036
      %2039 = vset.pattern.permute.xlu0 0
      %2040 = vperm.xlu0 %2039, %v765
      %v2041 = vpop.permute.xlu0 %2040
      %v2044 = vunpack.c.l.s4 839922192
      %v2045 = vunpack.c.0.s8 %v2044
      %v2046 = vperm.slane %v2041, %v2045
      %2048 = vset.pattern.permute.xlu0 0
      %2049 = vperm.xlu0 %2048, %v766
      %v2050 = vpop.permute.xlu0 %2049
      %v2053 = vunpack.c.l.s4 839922192
      %v2054 = vunpack.c.0.s8 %v2053
      %v2055 = vperm.slane %v2050, %v2054
      %2057 = vset.pattern.permute.xlu0 0
      %2058 = vperm.xlu0 %2057, %v767
      %v2059 = vpop.permute.xlu0 %2058
      %v2062 = vunpack.c.l.s4 839922192
      %v2063 = vunpack.c.0.s8 %v2062
      %v2064 = vperm.slane %v2059, %v2063
      %2066 = vset.pattern.permute.xlu0 0
      %2067 = vperm.xlu0 %2066, %v768
      %v2068 = vpop.permute.xlu0 %2067
      %v2071 = vunpack.c.l.s4 839922192
      %v2072 = vunpack.c.0.s8 %v2071
      %v2073 = vperm.slane %v2068, %v2072
      %2075 = vset.pattern.permute.xlu0 0
      %2076 = vperm.xlu0 %2075, %v769
      %v2077 = vpop.permute.xlu0 %2076
      %v2080 = vunpack.c.l.s4 839922192
      %v2081 = vunpack.c.0.s8 %v2080
      %v2082 = vperm.slane %v2077, %v2081
      %2084 = vset.pattern.permute.xlu0 0
      %2085 = vperm.xlu0 %2084, %v770
      %v2086 = vpop.permute.xlu0 %2085
      %v2089 = vunpack.c.l.s4 839922192
      %v2090 = vunpack.c.0.s8 %v2089
      %v2091 = vperm.slane %v2086, %v2090
      %2093 = vset.pattern.permute.xlu0 0
      %2094 = vperm.xlu0 %2093, %v771
      %v2095 = vpop.permute.xlu0 %2094
      %v2098 = vunpack.c.l.s4 839922192
      %v2099 = vunpack.c.0.s8 %v2098
      %v2100 = vperm.slane %v2095, %v2099
      %2102 = vset.pattern.permute.xlu0 0
      %2103 = vperm.xlu0 %2102, %v772
      %v2104 = vpop.permute.xlu0 %2103
      %v2107 = vunpack.c.l.s4 839922192
      %v2108 = vunpack.c.0.s8 %v2107
      %v2109 = vperm.slane %v2104, %v2108
      %2111 = vset.pattern.permute.xlu0 0
      %2112 = vperm.xlu0 %2111, %v773
      %v2113 = vpop.permute.xlu0 %2112
      %v2116 = vunpack.c.l.s4 839922192
      %v2117 = vunpack.c.0.s8 %v2116
      %v2118 = vperm.slane %v2113, %v2117
      %2120 = vset.pattern.permute.xlu0 0
      %2121 = vperm.xlu0 %2120, %v774
      %v2122 = vpop.permute.xlu0 %2121
      %v2125 = vunpack.c.l.s4 839922192
      %v2126 = vunpack.c.0.s8 %v2125
      %v2127 = vperm.slane %v2122, %v2126
      %2129 = vset.pattern.permute.xlu0 0
      %2130 = vperm.xlu0 %2129, %v775
      %v2131 = vpop.permute.xlu0 %2130
      %v2134 = vunpack.c.l.s4 839922192
      %v2135 = vunpack.c.0.s8 %v2134
      %v2136 = vperm.slane %v2131, %v2135
      %2138 = vset.pattern.permute.xlu0 0
      %2139 = vperm.xlu0 %2138, %v776
      %v2140 = vpop.permute.xlu0 %2139
      %v2143 = vunpack.c.l.s4 839922192
      %v2144 = vunpack.c.0.s8 %v2143
      %v2145 = vperm.slane %v2140, %v2144
      %2147 = vset.pattern.permute.xlu0 0
      %2148 = vperm.xlu0 %2147, %v777
      %v2149 = vpop.permute.xlu0 %2148
      %v2152 = vunpack.c.l.s4 839922192
      %v2153 = vunpack.c.0.s8 %v2152
      %v2154 = vperm.slane %v2149, %v2153
      %2156 = vset.pattern.permute.xlu0 0
      %2157 = vperm.xlu0 %2156, %v778
      %v2158 = vpop.permute.xlu0 %2157
      %v2161 = vunpack.c.l.s4 839922192
      %v2162 = vunpack.c.0.s8 %v2161
      %v2163 = vperm.slane %v2158, %v2162
      %2165 = vset.pattern.permute.xlu0 0
      %2166 = vperm.xlu0 %2165, %v779
      %v2167 = vpop.permute.xlu0 %2166
      %v2170 = vunpack.c.l.s4 839922192
      %v2171 = vunpack.c.0.s8 %v2170
      %v2172 = vperm.slane %v2167, %v2171
      %2174 = vset.pattern.permute.xlu0 0
      %2175 = vperm.xlu0 %2174, %v780
      %v2176 = vpop.permute.xlu0 %2175
      %v2179 = vunpack.c.l.s4 839922192
      %v2180 = vunpack.c.0.s8 %v2179
      %v2181 = vperm.slane %v2176, %v2180
      %2183 = vset.pattern.permute.xlu0 0
      %2184 = vperm.xlu0 %2183, %v781
      %v2185 = vpop.permute.xlu0 %2184
      %v2188 = vunpack.c.l.s4 839922192
      %v2189 = vunpack.c.0.s8 %v2188
      %v2190 = vperm.slane %v2185, %v2189
      %2192 = vset.pattern.permute.xlu0 0
      %2193 = vperm.xlu0 %2192, %v782
      %v2194 = vpop.permute.xlu0 %2193
      %v2197 = vunpack.c.l.s4 839922192
      %v2198 = vunpack.c.0.s8 %v2197
      %v2199 = vperm.slane %v2194, %v2198
      %v2200 = vunpack.c.l.bf16 %v1839
      %v2201 = vunpack.c.l.bf16 %v1840
      %v2202 = vunpack.c.l.bf16 %v1841
      %v2203 = vunpack.c.l.bf16 %v1842
      %v2204 = vunpack.c.l.bf16 %v1843
      %v2205 = vunpack.c.l.bf16 %v1844
      %v2206 = vunpack.c.l.bf16 %v1845
      %v2207 = vunpack.c.l.bf16 %v1846
      %v2208 = vunpack.c.l.bf16 %v1847
      %v2209 = vunpack.c.l.bf16 %v1848
      %v2210 = vunpack.c.l.bf16 %v1849
      %v2211 = vunpack.c.l.bf16 %v1850
      %v2212 = vunpack.c.l.bf16 %v1851
      %v2213 = vunpack.c.l.bf16 %v1852
      %v2214 = vunpack.c.l.bf16 %v1853
      %v2215 = vunpack.c.l.bf16 %v1854
      %v2216 = vunpack.c.l.bf16 %v1855
      %v2217 = vunpack.c.l.bf16 %v1856
      %v2218 = vunpack.c.l.bf16 %v1857
      %v2219 = vunpack.c.l.bf16 %v1858
      %v2220 = vunpack.c.l.bf16 %v1859
      %v2221 = vunpack.c.l.bf16 %v1860
      %v2222 = vunpack.c.l.bf16 %v1861
      %v2223 = vunpack.c.l.bf16 %v1862
      %v2224 = vunpack.c.l.bf16 %v1863
      %v2225 = vunpack.c.l.bf16 %v1864
      %v2226 = vunpack.c.l.bf16 %v1865
      %v2227 = vunpack.c.l.bf16 %v1866
      %v2228 = vunpack.c.l.bf16 %v1867
      %v2229 = vunpack.c.l.bf16 %v1868
      %v2230 = vunpack.c.l.bf16 %v1869
      %v2231 = vunpack.c.l.bf16 %v1870
      %v2232 = vunpack.c.l.bf16 %v1871
      %v2233 = vunpack.c.l.bf16 %v1872
      %v2234 = vunpack.c.l.bf16 %v1873
      %v2235 = vunpack.c.l.bf16 %v1874
      %v2236 = vunpack.c.l.bf16 %v1875
      %v2237 = vunpack.c.l.bf16 %v1884
      %v2238 = vunpack.c.l.bf16 %v1893
      %v2239 = vunpack.c.l.bf16 %v1902
      %v2240 = vunpack.c.l.bf16 %v1911
      %v2241 = vunpack.c.l.bf16 %v1920
      %v2242 = vunpack.c.l.bf16 %v1929
      %v2243 = vunpack.c.l.bf16 %v1938
      %v2244 = vunpack.c.l.bf16 %v1947
      %v2245 = vunpack.c.l.bf16 %v1956
      %v2246 = vunpack.c.l.bf16 %v1965
      %v2247 = vunpack.c.l.bf16 %v1974
      %v2248 = vunpack.c.l.bf16 %v1983
      %v2249 = vunpack.c.l.bf16 %v1992
      %v2250 = vunpack.c.l.bf16 %v2001
      %v2251 = vunpack.c.l.bf16 %v2010
      %v2252 = vunpack.c.l.bf16 %v2019
      %v2253 = vunpack.c.l.bf16 %v2028
      %v2254 = vunpack.c.l.bf16 %v2037
      %v2255 = vunpack.c.l.bf16 %v2046
      %v2256 = vunpack.c.l.bf16 %v2055
      %v2257 = vunpack.c.l.bf16 %v2064
      %v2258 = vunpack.c.l.bf16 %v2073
      %v2259 = vunpack.c.l.bf16 %v2082
      %v2260 = vunpack.c.l.bf16 %v2091
      %v2261 = vunpack.c.l.bf16 %v2100
      %v2262 = vunpack.c.l.bf16 %v2109
      %v2263 = vunpack.c.l.bf16 %v2118
      %v2264 = vunpack.c.l.bf16 %v2127
      %v2265 = vunpack.c.l.bf16 %v2136
      %v2266 = vunpack.c.l.bf16 %v2145
      %v2267 = vunpack.c.l.bf16 %v2154
      %v2268 = vunpack.c.l.bf16 %v2163
      %v2269 = vunpack.c.l.bf16 %v2172
      %v2270 = vunpack.c.l.bf16 %v2181
      %v2271 = vunpack.c.l.bf16 %v2190
      %v2272 = vunpack.c.l.bf16 %v2199
      %vm2309 = vcmask 1040384
      %v2310 = vrot.slane %v2237, 7
      %v2311 = vrot.slane %v2238, 7
      %v2312 = vsel %vm2309, %v2310, %v2311
      %v2313 = vrot.slane %v2239, 7
      %v2314 = vsel %vm2309, %v2311, %v2313
      %v2315 = vrot.slane %v2240, 7
      %v2316 = vsel %vm2309, %v2313, %v2315
      %v2317 = vrot.slane %v2241, 7
      %v2318 = vsel %vm2309, %v2315, %v2317
      %v2319 = vrot.slane %v2242, 7
      %v2320 = vsel %vm2309, %v2317, %v2319
      %v2321 = vrot.slane %v2243, 7
      %v2322 = vsel %vm2309, %v2319, %v2321
      %v2323 = vrot.slane %v2244, 7
      %v2324 = vsel %vm2309, %v2321, %v2323
      %v2325 = vrot.slane %v2245, 7
      %v2326 = vsel %vm2309, %v2323, %v2325
      %v2327 = vrot.slane %v2246, 7
      %v2328 = vsel %vm2309, %v2325, %v2327
      %v2329 = vrot.slane %v2247, 7
      %v2330 = vsel %vm2309, %v2327, %v2329
      %v2331 = vrot.slane %v2248, 7
      %v2332 = vsel %vm2309, %v2329, %v2331
      %v2333 = vrot.slane %v2249, 7
      %v2334 = vsel %vm2309, %v2331, %v2333
      %v2335 = vrot.slane %v2250, 7
      %v2336 = vsel %vm2309, %v2333, %v2335
      %v2337 = vrot.slane %v2251, 7
      %v2338 = vsel %vm2309, %v2335, %v2337
      %v2339 = vrot.slane %v2252, 7
      %v2340 = vsel %vm2309, %v2337, %v2339
      %v2341 = vrot.slane %v2253, 7
      %v2342 = vsel %vm2309, %v2339, %v2341
      %v2343 = vrot.slane %v2254, 7
      %v2344 = vsel %vm2309, %v2341, %v2343
      %v2345 = vrot.slane %v2255, 7
      %v2346 = vsel %vm2309, %v2343, %v2345
      %v2347 = vrot.slane %v2256, 7
      %v2348 = vsel %vm2309, %v2345, %v2347
      %v2349 = vrot.slane %v2257, 7
      %v2350 = vsel %vm2309, %v2347, %v2349
      %v2351 = vrot.slane %v2258, 7
      %v2352 = vsel %vm2309, %v2349, %v2351
      %v2353 = vrot.slane %v2259, 7
      %v2354 = vsel %vm2309, %v2351, %v2353
      %v2355 = vrot.slane %v2260, 7
      %v2356 = vsel %vm2309, %v2353, %v2355
      %v2357 = vrot.slane %v2261, 7
      %v2358 = vsel %vm2309, %v2355, %v2357
      %v2359 = vrot.slane %v2262, 7
      %v2360 = vsel %vm2309, %v2357, %v2359
      %v2361 = vrot.slane %v2263, 7
      %v2362 = vsel %vm2309, %v2359, %v2361
      %v2363 = vrot.slane %v2264, 7
      %v2364 = vsel %vm2309, %v2361, %v2363
      %v2365 = vrot.slane %v2265, 7
      %v2366 = vsel %vm2309, %v2363, %v2365
      %v2367 = vrot.slane %v2266, 7
      %v2368 = vsel %vm2309, %v2365, %v2367
      %v2369 = vrot.slane %v2267, 7
      %v2370 = vsel %vm2309, %v2367, %v2369
      %v2371 = vrot.slane %v2268, 7
      %v2372 = vsel %vm2309, %v2369, %v2371
      %v2373 = vrot.slane %v2269, 7
      %v2374 = vsel %vm2309, %v2371, %v2373
      %v2375 = vrot.slane %v2270, 7
      %v2376 = vsel %vm2309, %v2373, %v2375
      %v2377 = vrot.slane %v2271, 7
      %v2378 = vsel %vm2309, %v2375, %v2377
      %v2379 = vrot.slane %v2272, 7
      %v2380 = vsel %vm2309, %v2377, %v2379
      %v2418 = vmul.f32 %v2200, %v2310
      %v2419 = vmul.f32 %v2201, %v2312
      %v2420 = vmul.f32 %v2202, %v2314
      %v2421 = vmul.f32 %v2203, %v2316
      %v2422 = vmul.f32 %v2204, %v2318
      %v2423 = vmul.f32 %v2205, %v2320
      %v2424 = vmul.f32 %v2206, %v2322
      %v2425 = vmul.f32 %v2207, %v2324
      %v2426 = vmul.f32 %v2208, %v2326
      %v2427 = vmul.f32 %v2209, %v2328
      %v2428 = vmul.f32 %v2210, %v2330
      %v2429 = vmul.f32 %v2211, %v2332
      %v2430 = vmul.f32 %v2212, %v2334
      %v2431 = vmul.f32 %v2213, %v2336
      %v2432 = vmul.f32 %v2214, %v2338
      %v2433 = vmul.f32 %v2215, %v2340
      %v2434 = vmul.f32 %v2216, %v2342
      %v2435 = vmul.f32 %v2217, %v2344
      %v2436 = vmul.f32 %v2218, %v2346
      %v2437 = vmul.f32 %v2219, %v2348
      %v2438 = vmul.f32 %v2220, %v2350
      %v2439 = vmul.f32 %v2221, %v2352
      %v2440 = vmul.f32 %v2222, %v2354
      %v2441 = vmul.f32 %v2223, %v2356
      %v2442 = vmul.f32 %v2224, %v2358
      %v2443 = vmul.f32 %v2225, %v2360
      %v2444 = vmul.f32 %v2226, %v2362
      %v2445 = vmul.f32 %v2227, %v2364
      %v2446 = vmul.f32 %v2228, %v2366
      %v2447 = vmul.f32 %v2229, %v2368
      %v2448 = vmul.f32 %v2230, %v2370
      %v2449 = vmul.f32 %v2231, %v2372
      %v2450 = vmul.f32 %v2232, %v2374
      %v2451 = vmul.f32 %v2233, %v2376
      %v2452 = vmul.f32 %v2234, %v2378
      %v2453 = vmul.f32 %v2235, %v2380
      %v2454 = vmul.f32 %v2236, %v2379
      %v2455 = vpack.c.bf16 %v2418, %v2418
      %v2456 = vpack.c.bf16 %v2419, %v2419
      %v2457 = vpack.c.bf16 %v2420, %v2420
      %v2458 = vpack.c.bf16 %v2421, %v2421
      %v2459 = vpack.c.bf16 %v2422, %v2422
      %v2460 = vpack.c.bf16 %v2423, %v2423
      %v2461 = vpack.c.bf16 %v2424, %v2424
      %v2462 = vpack.c.bf16 %v2425, %v2425
      %v2463 = vpack.c.bf16 %v2426, %v2426
      %v2464 = vpack.c.bf16 %v2427, %v2427
      %v2465 = vpack.c.bf16 %v2428, %v2428
      %v2466 = vpack.c.bf16 %v2429, %v2429
      %v2467 = vpack.c.bf16 %v2430, %v2430
      %v2468 = vpack.c.bf16 %v2431, %v2431
      %v2469 = vpack.c.bf16 %v2432, %v2432
      %v2470 = vpack.c.bf16 %v2433, %v2433
      %v2471 = vpack.c.bf16 %v2434, %v2434
      %v2472 = vpack.c.bf16 %v2435, %v2435
      %v2473 = vpack.c.bf16 %v2436, %v2436
      %v2474 = vpack.c.bf16 %v2437, %v2437
      %v2475 = vpack.c.bf16 %v2438, %v2438
      %v2476 = vpack.c.bf16 %v2439, %v2439
      %v2477 = vpack.c.bf16 %v2440, %v2440
      %v2478 = vpack.c.bf16 %v2441, %v2441
      %v2479 = vpack.c.bf16 %v2442, %v2442
      %v2480 = vpack.c.bf16 %v2443, %v2443
      %v2481 = vpack.c.bf16 %v2444, %v2444
      %v2482 = vpack.c.bf16 %v2445, %v2445
      %v2483 = vpack.c.bf16 %v2446, %v2446
      %v2484 = vpack.c.bf16 %v2447, %v2447
      %v2485 = vpack.c.bf16 %v2448, %v2448
      %v2486 = vpack.c.bf16 %v2449, %v2449
      %v2487 = vpack.c.bf16 %v2450, %v2450
      %v2488 = vpack.c.bf16 %v2451, %v2451
      %v2489 = vpack.c.bf16 %v2452, %v2452
      %v2490 = vpack.c.bf16 %v2453, %v2453
      %v2491 = vpack.c.bf16 %v2454, %v2454
      %vm2492 = vsmask.f32 3328
      %vm2493 = vsmask.f32 7440
      %vm2494 = vmor %vm2492, %vm2493
      %v2496 = vshrl.u32 %v2455, 16
      %v2498 = vrot.slane %v2496, 4
      %v2499 = vshll.u32 %v2455, 16
      %v2501 = vrot.slane %v2499, 5
      %v2502 = vor.u32 %v2498, %v2501
      %v2503 = vrot.slane %v2502, 4
      %v2505 = vshll.u32 %v2456, 16
      %v2507 = vrot.slane %v2505, 5
      %v2508 = vsel %vm2494, %v2503, %v2507
      %v2509 = vshrl.u32 %v2456, 16
      %v2511 = vrot.slane %v2509, 4
      %v2512 = vor.u32 %v2511, %v2507
      %v2513 = vrot.slane %v2512, 4
      %v2515 = vshll.u32 %v2457, 16
      %v2517 = vrot.slane %v2515, 5
      %v2518 = vsel %vm2494, %v2513, %v2517
      %v2519 = vshrl.u32 %v2457, 16
      %v2521 = vrot.slane %v2519, 4
      %v2522 = vor.u32 %v2521, %v2517
      %v2523 = vrot.slane %v2522, 4
      %v2525 = vshll.u32 %v2458, 16
      %v2527 = vrot.slane %v2525, 5
      %v2528 = vsel %vm2494, %v2523, %v2527
      %v2529 = vshrl.u32 %v2458, 16
      %v2531 = vrot.slane %v2529, 4
      %v2532 = vor.u32 %v2531, %v2527
      %v2533 = vrot.slane %v2532, 4
      %v2535 = vshll.u32 %v2459, 16
      %v2537 = vrot.slane %v2535, 5
      %v2538 = vsel %vm2494, %v2533, %v2537
      %v2539 = vshrl.u32 %v2459, 16
      %v2541 = vrot.slane %v2539, 4
      %v2542 = vor.u32 %v2541, %v2537
      %v2543 = vrot.slane %v2542, 4
      %v2545 = vshll.u32 %v2460, 16
      %v2547 = vrot.slane %v2545, 5
      %v2548 = vsel %vm2494, %v2543, %v2547
      %v2549 = vshrl.u32 %v2460, 16
      %v2551 = vrot.slane %v2549, 4
      %v2552 = vor.u32 %v2551, %v2547
      %v2553 = vrot.slane %v2552, 4
      %v2555 = vshll.u32 %v2461, 16
      %v2557 = vrot.slane %v2555, 5
      %v2558 = vsel %vm2494, %v2553, %v2557
      %v2559 = vshrl.u32 %v2461, 16
      %v2561 = vrot.slane %v2559, 4
      %v2562 = vor.u32 %v2561, %v2557
      %v2563 = vrot.slane %v2562, 4
      %v2565 = vshll.u32 %v2462, 16
      %v2567 = vrot.slane %v2565, 5
      %v2568 = vsel %vm2494, %v2563, %v2567
      %v2569 = vshrl.u32 %v2462, 16
      %v2571 = vrot.slane %v2569, 4
      %v2572 = vor.u32 %v2571, %v2567
      %v2573 = vrot.slane %v2572, 4
      %v2575 = vshll.u32 %v2463, 16
      %v2577 = vrot.slane %v2575, 5
      %v2578 = vsel %vm2494, %v2573, %v2577
      %v2579 = vshrl.u32 %v2463, 16
      %v2581 = vrot.slane %v2579, 4
      %v2582 = vor.u32 %v2581, %v2577
      %v2583 = vrot.slane %v2582, 4
      %v2585 = vshll.u32 %v2464, 16
      %v2587 = vrot.slane %v2585, 5
      %v2588 = vsel %vm2494, %v2583, %v2587
      %v2589 = vshrl.u32 %v2464, 16
      %v2591 = vrot.slane %v2589, 4
      %v2592 = vor.u32 %v2591, %v2587
      %v2593 = vrot.slane %v2592, 4
      %v2595 = vshll.u32 %v2465, 16
      %v2597 = vrot.slane %v2595, 5
      %v2598 = vsel %vm2494, %v2593, %v2597
      %v2599 = vshrl.u32 %v2465, 16
      %v2601 = vrot.slane %v2599, 4
      %v2602 = vor.u32 %v2601, %v2597
      %v2603 = vrot.slane %v2602, 4
      %v2605 = vshll.u32 %v2466, 16
      %v2607 = vrot.slane %v2605, 5
      %v2608 = vsel %vm2494, %v2603, %v2607
      %v2609 = vshrl.u32 %v2466, 16
      %v2611 = vrot.slane %v2609, 4
      %v2612 = vor.u32 %v2611, %v2607
      %v2613 = vrot.slane %v2612, 4
      %v2615 = vshll.u32 %v2467, 16
      %v2617 = vrot.slane %v2615, 5
      %v2618 = vsel %vm2494, %v2613, %v2617
      %v2619 = vshrl.u32 %v2467, 16
      %v2621 = vrot.slane %v2619, 4
      %v2622 = vor.u32 %v2621, %v2617
      %v2623 = vrot.slane %v2622, 4
      %v2625 = vshll.u32 %v2468, 16
      %v2627 = vrot.slane %v2625, 5
      %v2628 = vsel %vm2494, %v2623, %v2627
      %v2629 = vshrl.u32 %v2468, 16
      %v2631 = vrot.slane %v2629, 4
      %v2632 = vor.u32 %v2631, %v2627
      %v2633 = vrot.slane %v2632, 4
      %v2635 = vshll.u32 %v2469, 16
      %v2637 = vrot.slane %v2635, 5
      %v2638 = vsel %vm2494, %v2633, %v2637
      %v2639 = vshrl.u32 %v2469, 16
      %v2641 = vrot.slane %v2639, 4
      %v2642 = vor.u32 %v2641, %v2637
      %v2643 = vrot.slane %v2642, 4
      %v2645 = vshll.u32 %v2470, 16
      %v2647 = vrot.slane %v2645, 5
      %v2648 = vsel %vm2494, %v2643, %v2647
      %v2649 = vshrl.u32 %v2470, 16
      %v2651 = vrot.slane %v2649, 4
      %v2652 = vor.u32 %v2651, %v2647
      %v2653 = vrot.slane %v2652, 4
      %v2655 = vshll.u32 %v2471, 16
      %v2657 = vrot.slane %v2655, 5
      %v2658 = vsel %vm2494, %v2653, %v2657
      %v2659 = vshrl.u32 %v2471, 16
      %v2661 = vrot.slane %v2659, 4
      %v2662 = vor.u32 %v2661, %v2657
      %v2663 = vrot.slane %v2662, 4
      %v2665 = vshll.u32 %v2472, 16
      %v2667 = vrot.slane %v2665, 5
      %v2668 = vsel %vm2494, %v2663, %v2667
      %v2669 = vshrl.u32 %v2472, 16
      %v2671 = vrot.slane %v2669, 4
      %v2672 = vor.u32 %v2671, %v2667
      %v2673 = vrot.slane %v2672, 4
      %v2675 = vshll.u32 %v2473, 16
      %v2677 = vrot.slane %v2675, 5
      %v2678 = vsel %vm2494, %v2673, %v2677
      %v2679 = vshrl.u32 %v2473, 16
      %v2681 = vrot.slane %v2679, 4
      %v2682 = vor.u32 %v2681, %v2677
      %v2683 = vrot.slane %v2682, 4
      %v2685 = vshll.u32 %v2474, 16
      %v2687 = vrot.slane %v2685, 5
      %v2688 = vsel %vm2494, %v2683, %v2687
      %v2689 = vshrl.u32 %v2474, 16
      %v2691 = vrot.slane %v2689, 4
      %v2692 = vor.u32 %v2691, %v2687
      %v2693 = vrot.slane %v2692, 4
      %v2695 = vshll.u32 %v2475, 16
      %v2697 = vrot.slane %v2695, 5
      %v2698 = vsel %vm2494, %v2693, %v2697
      %v2699 = vshrl.u32 %v2475, 16
      %v2701 = vrot.slane %v2699, 4
      %v2702 = vor.u32 %v2701, %v2697
      %v2703 = vrot.slane %v2702, 4
      %v2705 = vshll.u32 %v2476, 16
      %v2707 = vrot.slane %v2705, 5
      %v2708 = vsel %vm2494, %v2703, %v2707
      %v2709 = vshrl.u32 %v2476, 16
      %v2711 = vrot.slane %v2709, 4
      %v2712 = vor.u32 %v2711, %v2707
      %v2713 = vrot.slane %v2712, 4
      %v2715 = vshll.u32 %v2477, 16
      %v2717 = vrot.slane %v2715, 5
      %v2718 = vsel %vm2494, %v2713, %v2717
      %v2719 = vshrl.u32 %v2477, 16
      %v2721 = vrot.slane %v2719, 4
      %v2722 = vor.u32 %v2721, %v2717
      %v2723 = vrot.slane %v2722, 4
      %v2725 = vshll.u32 %v2478, 16
      %v2727 = vrot.slane %v2725, 5
      %v2728 = vsel %vm2494, %v2723, %v2727
      %v2729 = vshrl.u32 %v2478, 16
      %v2731 = vrot.slane %v2729, 4
      %v2732 = vor.u32 %v2731, %v2727
      %v2733 = vrot.slane %v2732, 4
      %v2735 = vshll.u32 %v2479, 16
      %v2737 = vrot.slane %v2735, 5
      %v2738 = vsel %vm2494, %v2733, %v2737
      %v2739 = vshrl.u32 %v2479, 16
      %v2741 = vrot.slane %v2739, 4
      %v2742 = vor.u32 %v2741, %v2737
      %v2743 = vrot.slane %v2742, 4
      %v2745 = vshll.u32 %v2480, 16
      %v2747 = vrot.slane %v2745, 5
      %v2748 = vsel %vm2494, %v2743, %v2747
      %v2749 = vshrl.u32 %v2480, 16
      %v2751 = vrot.slane %v2749, 4
      %v2752 = vor.u32 %v2751, %v2747
      %v2753 = vrot.slane %v2752, 4
      %v2755 = vshll.u32 %v2481, 16
      %v2757 = vrot.slane %v2755, 5
      %v2758 = vsel %vm2494, %v2753, %v2757
      %v2759 = vshrl.u32 %v2481, 16
      %v2761 = vrot.slane %v2759, 4
      %v2762 = vor.u32 %v2761, %v2757
      %v2763 = vrot.slane %v2762, 4
      %v2765 = vshll.u32 %v2482, 16
      %v2767 = vrot.slane %v2765, 5
      %v2768 = vsel %vm2494, %v2763, %v2767
      %v2769 = vshrl.u32 %v2482, 16
      %v2771 = vrot.slane %v2769, 4
      %v2772 = vor.u32 %v2771, %v2767
      %v2773 = vrot.slane %v2772, 4
      %v2775 = vshll.u32 %v2483, 16
      %v2777 = vrot.slane %v2775, 5
      %v2778 = vsel %vm2494, %v2773, %v2777
      %v2779 = vshrl.u32 %v2483, 16
      %v2781 = vrot.slane %v2779, 4
      %v2782 = vor.u32 %v2781, %v2777
      %v2783 = vrot.slane %v2782, 4
      %v2785 = vshll.u32 %v2484, 16
      %v2787 = vrot.slane %v2785, 5
      %v2788 = vsel %vm2494, %v2783, %v2787
      %v2789 = vshrl.u32 %v2484, 16
      %v2791 = vrot.slane %v2789, 4
      %v2792 = vor.u32 %v2791, %v2787
      %v2793 = vrot.slane %v2792, 4
      %v2795 = vshll.u32 %v2485, 16
      %v2797 = vrot.slane %v2795, 5
      %v2798 = vsel %vm2494, %v2793, %v2797
      %v2799 = vshrl.u32 %v2485, 16
      %v2801 = vrot.slane %v2799, 4
      %v2802 = vor.u32 %v2801, %v2797
      %v2803 = vrot.slane %v2802, 4
      %v2805 = vshll.u32 %v2486, 16
      %v2807 = vrot.slane %v2805, 5
      %v2808 = vsel %vm2494, %v2803, %v2807
      %v2809 = vshrl.u32 %v2486, 16
      %v2811 = vrot.slane %v2809, 4
      %v2812 = vor.u32 %v2811, %v2807
      %v2813 = vrot.slane %v2812, 4
      %v2815 = vshll.u32 %v2487, 16
      %v2817 = vrot.slane %v2815, 5
      %v2818 = vsel %vm2494, %v2813, %v2817
      %v2819 = vshrl.u32 %v2487, 16
      %v2821 = vrot.slane %v2819, 4
      %v2822 = vor.u32 %v2821, %v2817
      %v2823 = vrot.slane %v2822, 4
      %v2825 = vshll.u32 %v2488, 16
      %v2827 = vrot.slane %v2825, 5
      %v2828 = vsel %vm2494, %v2823, %v2827
      %v2829 = vshrl.u32 %v2488, 16
      %v2831 = vrot.slane %v2829, 4
      %v2832 = vor.u32 %v2831, %v2827
      %v2833 = vrot.slane %v2832, 4
      %v2835 = vshll.u32 %v2489, 16
      %v2837 = vrot.slane %v2835, 5
      %v2838 = vsel %vm2494, %v2833, %v2837
      %v2839 = vshrl.u32 %v2489, 16
      %v2841 = vrot.slane %v2839, 4
      %v2842 = vor.u32 %v2841, %v2837
      %v2843 = vrot.slane %v2842, 4
      %v2845 = vshll.u32 %v2490, 16
      %v2847 = vrot.slane %v2845, 5
      %v2848 = vsel %vm2494, %v2843, %v2847
      %v2849 = vshrl.u32 %v2490, 16
      %v2851 = vrot.slane %v2849, 4
      %v2852 = vor.u32 %v2851, %v2847
      %v2853 = vrot.slane %v2852, 4
      %v2855 = vshll.u32 %v2491, 16
      %v2857 = vrot.slane %v2855, 5
      %v2858 = vsel %vm2494, %v2853, %v2857
      %2895 = vst [vmem:[#allocation4] sm:$0xf] %v2508
      %2896 = vst [vmem:[#allocation4 + $0x4] sm:$0xf] %v2518
      %2897 = vst [vmem:[#allocation4 + $0x8] sm:$0xf] %v2528
      %2898 = vst [vmem:[#allocation4 + $0xc] sm:$0xf] %v2538
      %2899 = vst [vmem:[#allocation4 + $0x10] sm:$0xf] %v2548
      %2900 = vst [vmem:[#allocation4 + $0x14] sm:$0xf] %v2558
      %2901 = vst [vmem:[#allocation4 + $0x18] sm:$0xf] %v2568
      %2902 = vst [vmem:[#allocation4 + $0x1c] sm:$0xf] %v2578
      %2903 = vst [vmem:[#allocation4 + $0x20] sm:$0xf] %v2588
      %2904 = vst [vmem:[#allocation4 + $0x24] sm:$0xf] %v2598
      %2905 = vst [vmem:[#allocation4 + $0x28] sm:$0xf] %v2608
      %2906 = vst [vmem:[#allocation4 + $0x2c] sm:$0xf] %v2618
      %2907 = vst [vmem:[#allocation4 + $0x30] sm:$0xf] %v2628
      %2908 = vst [vmem:[#allocation4 + $0x34] sm:$0xf] %v2638
      %2909 = vst [vmem:[#allocation4 + $0x38] sm:$0xf] %v2648
      %2910 = vst [vmem:[#allocation4 + $0x3c] sm:$0xf] %v2658
      %2911 = vst [vmem:[#allocation4 + $0x40] sm:$0xf] %v2668
      %2912 = vst [vmem:[#allocation4 + $0x44] sm:$0xf] %v2678
      %2913 = vst [vmem:[#allocation4 + $0x48] sm:$0xf] %v2688
      %2914 = vst [vmem:[#allocation4 + $0x4c] sm:$0xf] %v2698
      %2915 = vst [vmem:[#allocation4 + $0x50] sm:$0xf] %v2708
      %2916 = vst [vmem:[#allocation4 + $0x54] sm:$0xf] %v2718
      %2917 = vst [vmem:[#allocation4 + $0x58] sm:$0xf] %v2728
      %2918 = vst [vmem:[#allocation4 + $0x5c] sm:$0xf] %v2738
      %2919 = vst [vmem:[#allocation4 + $0x60] sm:$0xf] %v2748
      %2920 = vst [vmem:[#allocation4 + $0x64] sm:$0xf] %v2758
      %2921 = vst [vmem:[#allocation4 + $0x68] sm:$0xf] %v2768
      %2922 = vst [vmem:[#allocation4 + $0x6c] sm:$0xf] %v2778
      %2923 = vst [vmem:[#allocation4 + $0x70] sm:$0xf] %v2788
      %2924 = vst [vmem:[#allocation4 + $0x74] sm:$0xf] %v2798
      %2925 = vst [vmem:[#allocation4 + $0x78] sm:$0xf] %v2808
      %2926 = vst [vmem:[#allocation4 + $0x7c] sm:$0xf] %v2818
      %2927 = vst [vmem:[#allocation4 + $0x80] sm:$0xf] %v2828
      %2928 = vst [vmem:[#allocation4 + $0x84] sm:$0xf] %v2838
      %2929 = vst [vmem:[#allocation4 + $0x88] sm:$0xf] %v2848
      %2930 = vst [vmem:[#allocation4 + $0x8c] sm:$0xf] %v2858
      %v2931 = vld [vmem:[#allocation3] sm:$0xf]
      %v2932 = vld [vmem:[#allocation3 + $0x4] sm:$0xf]
      %v2933 = vld [vmem:[#allocation3 + $0x8] sm:$0xf]
      %v2934 = vld [vmem:[#allocation3 + $0xc] sm:$0xf]
      %v2935 = vld [vmem:[#allocation3 + $0x10] sm:$0xf]
      %v2936 = vld [vmem:[#allocation3 + $0x14] sm:$0xf]
      %v2937 = vld [vmem:[#allocation3 + $0x18] sm:$0xf]
      %v2938 = vld [vmem:[#allocation3 + $0x1c] sm:$0xf]
      %v2939 = vld [vmem:[#allocation3 + $0x20] sm:$0xf]
      %v2940 = vld [vmem:[#allocation3 + $0x24] sm:$0xf]
      %v2941 = vld [vmem:[#allocation3 + $0x28] sm:$0xf]
      %v2942 = vld [vmem:[#allocation3 + $0x2c] sm:$0xf]
      %v2943 = vld [vmem:[#allocation3 + $0x30] sm:$0xf]
      %v2944 = vld [vmem:[#allocation3 + $0x34] sm:$0xf]
      %v2945 = vld [vmem:[#allocation3 + $0x38] sm:$0xf]
      %v2946 = vld [vmem:[#allocation3 + $0x3c] sm:$0xf]
      %v2947 = vld [vmem:[#allocation3 + $0x40] sm:$0xf]
      %v2948 = vld [vmem:[#allocation3 + $0x44] sm:$0xf]
      %v2949 = vld [vmem:[#allocation3 + $0x48] sm:$0xf]
      %v2950 = vld [vmem:[#allocation3 + $0x4c] sm:$0xf]
      %v2951 = vld [vmem:[#allocation3 + $0x50] sm:$0xf]
      %v2952 = vld [vmem:[#allocation3 + $0x54] sm:$0xf]
      %v2953 = vld [vmem:[#allocation3 + $0x58] sm:$0xf]
      %v2954 = vld [vmem:[#allocation3 + $0x5c] sm:$0xf]
      %v2955 = vld [vmem:[#allocation3 + $0x60] sm:$0xf]
      %v2956 = vld [vmem:[#allocation3 + $0x64] sm:$0xf]
      %v2957 = vld [vmem:[#allocation3 + $0x68] sm:$0xf]
      %v2958 = vld [vmem:[#allocation3 + $0x6c] sm:$0xf]
      %v2959 = vld [vmem:[#allocation3 + $0x70] sm:$0xf]
      %v2960 = vld [vmem:[#allocation3 + $0x74] sm:$0xf]
      %v2961 = vld [vmem:[#allocation3 + $0x78] sm:$0xf]
      %v2962 = vld [vmem:[#allocation3 + $0x7c] sm:$0xf]
      %v2963 = vld [vmem:[%s4] sm:$0xf]
      %v2964 = vld [vmem:[%s4 + $0x4] sm:$0xf]
      %v2965 = vld [vmem:[%s4 + $0x8] sm:$0xf]
      %v2966 = vld [vmem:[%s4 + $0xc] sm:$0xf]
      %v2967 = vld [vmem:[%s4 + $0x10] sm:$0xf]
      %v2968 = vld [vmem:[%s4 + $0x14] sm:$0xf]
      %v2969 = vld [vmem:[%s4 + $0x18] sm:$0xf]
      %v2970 = vld [vmem:[%s4 + $0x1c] sm:$0xf]
      %v2971 = vld [vmem:[%s4 + $0x20] sm:$0xf]
      %v2972 = vld [vmem:[%s4 + $0x24] sm:$0xf]
      %v2973 = vld [vmem:[%s4 + $0x28] sm:$0xf]
      %v2974 = vld [vmem:[%s4 + $0x2c] sm:$0xf]
      %v2975 = vld [vmem:[%s4 + $0x30] sm:$0xf]
      %v2976 = vld [vmem:[%s4 + $0x34] sm:$0xf]
      %v2977 = vld [vmem:[%s4 + $0x38] sm:$0xf]
      %v2978 = vld [vmem:[%s4 + $0x3c] sm:$0xf]
      %v2979 = vld [vmem:[#allocation2 + $0x4] sm:$0xf]
      %v2980 = vld [vmem:[#allocation2 + $0x8] sm:$0xf]
      %v2981 = vld [vmem:[#allocation2 + $0xc] sm:$0xf]
      %v2982 = vld [vmem:[#allocation2 + $0x10] sm:$0xf]
      %v2983 = vld [vmem:[#allocation2 + $0x14] sm:$0xf]
      %v2984 = vld [vmem:[#allocation2 + $0x18] sm:$0xf]
      %v2985 = vld [vmem:[#allocation2 + $0x1c] sm:$0xf]
      %v2986 = vld [vmem:[#allocation2 + $0x20] sm:$0xf]
      %v2987 = vld [vmem:[#allocation2 + $0x24] sm:$0xf]
      %v2988 = vld [vmem:[#allocation2 + $0x28] sm:$0xf]
      %v2989 = vld [vmem:[#allocation2 + $0x2c] sm:$0xf]
      %v2990 = vld [vmem:[#allocation2 + $0x30] sm:$0xf]
      %v2991 = vld [vmem:[#allocation2 + $0x34] sm:$0xf]
      %v2992 = vld [vmem:[#allocation2 + $0x38] sm:$0xf]
      %v2993 = vld [vmem:[#allocation2 + $0x3c] sm:$0xf]
      %v2994 = vld [vmem:[#allocation2 + $0x40] sm:$0xf]
      %v2995 = vld [vmem:[#allocation2 + $0x44] sm:$0xf]
      %v2996 = vld [vmem:[#allocation2 + $0x48] sm:$0xf]
      %v2997 = vld [vmem:[#allocation2 + $0x4c] sm:$0xf]
      %v2998 = vld [vmem:[#allocation2 + $0x50] sm:$0xf]
      %v2999 = vld [vmem:[#allocation2 + $0x54] sm:$0xf]
      %v3000 = vld [vmem:[#allocation2 + $0x58] sm:$0xf]
      %v3001 = vld [vmem:[#allocation2 + $0x5c] sm:$0xf]
      %v3002 = vld [vmem:[#allocation2 + $0x60] sm:$0xf]
      %v3003 = vld [vmem:[#allocation2 + $0x64] sm:$0xf]
      %v3004 = vld [vmem:[#allocation2 + $0x68] sm:$0xf]
      %v3005 = vld [vmem:[#allocation2 + $0x6c] sm:$0xf]
      %v3006 = vld [vmem:[#allocation2 + $0x70] sm:$0xf]
      %v3007 = vld [vmem:[#allocation2 + $0x74] sm:$0xf]
      %v3008 = vld [vmem:[#allocation2 + $0x78] sm:$0xf]
      %v3009 = vld [vmem:[#allocation2 + $0x7c] sm:$0xf]
      %v3010 = vld [vmem:[#allocation2 + $0x80] sm:$0xf]
      %v3011 = vld [vmem:[%s4 + $0x40] sm:$0xf]
      %v3012 = vld [vmem:[%s4 + $0x44] sm:$0xf]
      %v3013 = vld [vmem:[%s4 + $0x48] sm:$0xf]
      %v3014 = vld [vmem:[%s4 + $0x4c] sm:$0xf]
      %v3015 = vld [vmem:[%s4 + $0x50] sm:$0xf]
      %v3016 = vld [vmem:[%s4 + $0x54] sm:$0xf]
      %v3017 = vld [vmem:[%s4 + $0x58] sm:$0xf]
      %v3018 = vld [vmem:[%s4 + $0x5c] sm:$0xf]
      %v3019 = vld [vmem:[%s4 + $0x60] sm:$0xf]
      %v3020 = vld [vmem:[%s4 + $0x64] sm:$0xf]
      %v3021 = vld [vmem:[%s4 + $0x68] sm:$0xf]
      %v3022 = vld [vmem:[%s4 + $0x6c] sm:$0xf]
      %v3023 = vld [vmem:[%s4 + $0x70] sm:$0xf]
      %v3024 = vld [vmem:[%s4 + $0x74] sm:$0xf]
      %v3025 = vld [vmem:[%s4 + $0x78] sm:$0xf]
      %v3026 = vld [vmem:[%s4 + $0x7c] sm:$0xf]
      %v3059 = vunpack.c.l.b16 %v2979
      %v3060 = vunpack.c.l.b16 %v2980
      %v3061 = vunpack.c.l.b16 %v2981
      %v3062 = vunpack.c.l.b16 %v2982
      %v3063 = vunpack.c.l.b16 %v2983
      %v3064 = vunpack.c.l.b16 %v2984
      %v3065 = vunpack.c.l.b16 %v2985
      %v3066 = vunpack.c.l.b16 %v2986
      %v3067 = vunpack.c.l.b16 %v2987
      %v3068 = vunpack.c.l.b16 %v2988
      %v3069 = vunpack.c.l.b16 %v2989
      %v3070 = vunpack.c.l.b16 %v2990
      %v3071 = vunpack.c.l.b16 %v2991
      %v3072 = vunpack.c.l.b16 %v2992
      %v3073 = vunpack.c.l.b16 %v2993
      %v3074 = vunpack.c.l.b16 %v2994
      %v3075 = vunpack.c.l.b16 %v2995
      %v3076 = vunpack.c.l.b16 %v2996
      %v3077 = vunpack.c.l.b16 %v2997
      %v3078 = vunpack.c.l.b16 %v2998
      %v3079 = vunpack.c.l.b16 %v2999
      %v3080 = vunpack.c.l.b16 %v3000
      %v3081 = vunpack.c.l.b16 %v3001
      %v3082 = vunpack.c.l.b16 %v3002
      %v3083 = vunpack.c.l.b16 %v3003
      %v3084 = vunpack.c.l.b16 %v3004
      %v3085 = vunpack.c.l.b16 %v3005
      %v3086 = vunpack.c.l.b16 %v3006
      %v3087 = vunpack.c.l.b16 %v3007
      %v3088 = vunpack.c.l.b16 %v3008
      %v3089 = vunpack.c.l.b16 %v3009
      %v3090 = vunpack.c.l.b16 %v3010
      %v3091 = vpack.c.b16 %v3060, %v3059
      %v3092 = vpack.c.b16 %v3062, %v3061
      %v3093 = vpack.c.b16 %v3064, %v3063
      %v3094 = vpack.c.b16 %v3066, %v3065
      %v3095 = vpack.c.b16 %v3068, %v3067
      %v3096 = vpack.c.b16 %v3070, %v3069
      %v3097 = vpack.c.b16 %v3072, %v3071
      %v3098 = vpack.c.b16 %v3074, %v3073
      %v3099 = vpack.c.b16 %v3076, %v3075
      %v3100 = vpack.c.b16 %v3078, %v3077
      %v3101 = vpack.c.b16 %v3080, %v3079
      %v3102 = vpack.c.b16 %v3082, %v3081
      %v3103 = vpack.c.b16 %v3084, %v3083
      %v3104 = vpack.c.b16 %v3086, %v3085
      %v3105 = vpack.c.b16 %v3088, %v3087
      %v3106 = vpack.c.b16 %v3090, %v3089
      %v3139 = vunpack.c.l.b16 %v3011
      %v3140 = vunpack.c.l.b16 %v3012
      %v3141 = vunpack.c.l.b16 %v3013
      %v3142 = vunpack.c.l.b16 %v3014
      %v3143 = vunpack.c.l.b16 %v3015
      %v3144 = vunpack.c.l.b16 %v3016
      %v3145 = vunpack.c.l.b16 %v3017
      %v3146 = vunpack.c.l.b16 %v3018
      %v3147 = vunpack.c.l.b16 %v3019
      %v3148 = vunpack.c.l.b16 %v3020
      %v3149 = vunpack.c.l.b16 %v3021
      %v3150 = vunpack.c.l.b16 %v3022
      %v3151 = vunpack.c.l.b16 %v3023
      %v3152 = vunpack.c.l.b16 %v3024
      %v3153 = vunpack.c.l.b16 %v3025
      %v3154 = vunpack.c.l.b16 %v3026
      %v3155 = vpack.c.b16 %v3140, %v3139
      %v3156 = vpack.c.b16 %v3142, %v3141
      %v3157 = vpack.c.b16 %v3144, %v3143
      %v3158 = vpack.c.b16 %v3146, %v3145
      %v3159 = vpack.c.b16 %v3148, %v3147
      %v3160 = vpack.c.b16 %v3150, %v3149
      %v3161 = vpack.c.b16 %v3152, %v3151
      %v3162 = vpack.c.b16 %v3154, %v3153
      %3171 = vmatpush.bf16.msra.mxu0 %v3162
      %3172 = vmatpush.bf16.msra.mxu0 %v3161
      %3173 = vmatpush.bf16.msra.mxu0 %v3160
      %3174 = vmatpush.bf16.msra.mxu0 %v3159
      %3175 = vmatpush.bf16.msra.mxu0 %v3158
      %3176 = vmatpush.bf16.msra.mxu0 %v3157
      %3177 = vmatpush.bf16.msra.mxu0 %v3156
      %3178 = vmatpush.bf16.msra.mxu0 %v3155
      %3179 = vmatmul.bf16.gmra.mxu0 %v3091
      %v3180 = vpop.f32.mrf.mxu0
      %v3181 = vadd.f32 0.0, %v3180
      %v3182 = vpop.f32.mrf.mxu0
      %v3183 = vadd.f32 0.0, %v3182
      %3184 = vmatmul.bf16.gmra.mxu0 %v3092
      %v3185 = vpop.f32.mrf.mxu0
      %v3186 = vadd.f32 0.0, %v3185
      %v3187 = vpop.f32.mrf.mxu0
      %v3188 = vadd.f32 0.0, %v3187
      %3189 = vmatmul.bf16.gmra.mxu0 %v3093
      %v3190 = vpop.f32.mrf.mxu0
      %v3191 = vadd.f32 0.0, %v3190
      %v3192 = vpop.f32.mrf.mxu0
      %v3193 = vadd.f32 0.0, %v3192
      %3194 = vmatmul.bf16.gmra.mxu0 %v3094
      %v3195 = vpop.f32.mrf.mxu0
      %v3196 = vadd.f32 0.0, %v3195
      %v3197 = vpop.f32.mrf.mxu0
      %v3198 = vadd.f32 0.0, %v3197
      %3199 = vmatmul.bf16.gmra.mxu0 %v3095
      %v3200 = vpop.f32.mrf.mxu0
      %v3201 = vadd.f32 0.0, %v3200
      %v3202 = vpop.f32.mrf.mxu0
      %v3203 = vadd.f32 0.0, %v3202
      %3204 = vmatmul.bf16.gmra.mxu0 %v3096
      %v3205 = vpop.f32.mrf.mxu0
      %v3206 = vadd.f32 0.0, %v3205
      %v3207 = vpop.f32.mrf.mxu0
      %v3208 = vadd.f32 0.0, %v3207
      %3209 = vmatmul.bf16.gmra.mxu0 %v3097
      %v3210 = vpop.f32.mrf.mxu0
      %v3211 = vadd.f32 0.0, %v3210
      %v3212 = vpop.f32.mrf.mxu0
      %v3213 = vadd.f32 0.0, %v3212
      %3214 = vmatmul.bf16.gmra.mxu0 %v3098
      %v3215 = vpop.f32.mrf.mxu0
      %v3216 = vadd.f32 0.0, %v3215
      %v3217 = vpop.f32.mrf.mxu0
      %v3218 = vadd.f32 0.0, %v3217
      %3219 = vmatmul.bf16.gmra.mxu0 %v3099
      %v3220 = vpop.f32.mrf.mxu0
      %v3221 = vadd.f32 0.0, %v3220
      %v3222 = vpop.f32.mrf.mxu0
      %v3223 = vadd.f32 0.0, %v3222
      %3224 = vmatmul.bf16.gmra.mxu0 %v3100
      %v3225 = vpop.f32.mrf.mxu0
      %v3226 = vadd.f32 0.0, %v3225
      %v3227 = vpop.f32.mrf.mxu0
      %v3228 = vadd.f32 0.0, %v3227
      %3229 = vmatmul.bf16.gmra.mxu0 %v3101
      %v3230 = vpop.f32.mrf.mxu0
      %v3231 = vadd.f32 0.0, %v3230
      %v3232 = vpop.f32.mrf.mxu0
      %v3233 = vadd.f32 0.0, %v3232
      %3234 = vmatmul.bf16.gmra.mxu0 %v3102
      %v3235 = vpop.f32.mrf.mxu0
      %v3236 = vadd.f32 0.0, %v3235
      %v3237 = vpop.f32.mrf.mxu0
      %v3238 = vadd.f32 0.0, %v3237
      %3239 = vmatmul.bf16.gmra.mxu0 %v3103
      %v3240 = vpop.f32.mrf.mxu0
      %v3241 = vadd.f32 0.0, %v3240
      %v3242 = vpop.f32.mrf.mxu0
      %v3243 = vadd.f32 0.0, %v3242
      %3244 = vmatmul.bf16.gmra.mxu0 %v3104
      %v3245 = vpop.f32.mrf.mxu0
      %v3246 = vadd.f32 0.0, %v3245
      %v3247 = vpop.f32.mrf.mxu0
      %v3248 = vadd.f32 0.0, %v3247
      %3249 = vmatmul.bf16.gmra.mxu0 %v3105
      %v3250 = vpop.f32.mrf.mxu0
      %v3251 = vadd.f32 0.0, %v3250
      %v3252 = vpop.f32.mrf.mxu0
      %v3253 = vadd.f32 0.0, %v3252
      %3254 = vmatmul.bf16.gmra.mxu0 %v3106
      %v3255 = vpop.f32.mrf.mxu0
      %v3256 = vadd.f32 0.0, %v3255
      %v3257 = vpop.f32.mrf.mxu0
      %v3258 = vadd.f32 0.0, %v3257
      %3259 = vdwg.mxu0
      %v3292 = vunpack.c.l.b16 %v2931
      %v3293 = vunpack.c.l.b16 %v2932
      %v3294 = vunpack.c.l.b16 %v2933
      %v3295 = vunpack.c.l.b16 %v2934
      %v3296 = vunpack.c.l.b16 %v2935
      %v3297 = vunpack.c.l.b16 %v2936
      %v3298 = vunpack.c.l.b16 %v2937
      %v3299 = vunpack.c.l.b16 %v2938
      %v3300 = vunpack.c.l.b16 %v2939
      %v3301 = vunpack.c.l.b16 %v2940
      %v3302 = vunpack.c.l.b16 %v2941
      %v3303 = vunpack.c.l.b16 %v2942
      %v3304 = vunpack.c.l.b16 %v2943
      %v3305 = vunpack.c.l.b16 %v2944
      %v3306 = vunpack.c.l.b16 %v2945
      %v3307 = vunpack.c.l.b16 %v2946
      %v3308 = vunpack.c.l.b16 %v2947
      %v3309 = vunpack.c.l.b16 %v2948
      %v3310 = vunpack.c.l.b16 %v2949
      %v3311 = vunpack.c.l.b16 %v2950
      %v3312 = vunpack.c.l.b16 %v2951
      %v3313 = vunpack.c.l.b16 %v2952
      %v3314 = vunpack.c.l.b16 %v2953
      %v3315 = vunpack.c.l.b16 %v2954
      %v3316 = vunpack.c.l.b16 %v2955
      %v3317 = vunpack.c.l.b16 %v2956
      %v3318 = vunpack.c.l.b16 %v2957
      %v3319 = vunpack.c.l.b16 %v2958
      %v3320 = vunpack.c.l.b16 %v2959
      %v3321 = vunpack.c.l.b16 %v2960
      %v3322 = vunpack.c.l.b16 %v2961
      %v3323 = vunpack.c.l.b16 %v2962
      %v3324 = vpack.c.b16 %v3293, %v3292
      %v3325 = vpack.c.b16 %v3295, %v3294
      %v3326 = vpack.c.b16 %v3297, %v3296
      %v3327 = vpack.c.b16 %v3299, %v3298
      %v3328 = vpack.c.b16 %v3301, %v3300
      %v3329 = vpack.c.b16 %v3303, %v3302
      %v3330 = vpack.c.b16 %v3305, %v3304
      %v3331 = vpack.c.b16 %v3307, %v3306
      %v3332 = vpack.c.b16 %v3309, %v3308
      %v3333 = vpack.c.b16 %v3311, %v3310
      %v3334 = vpack.c.b16 %v3313, %v3312
      %v3335 = vpack.c.b16 %v3315, %v3314
      %v3336 = vpack.c.b16 %v3317, %v3316
      %v3337 = vpack.c.b16 %v3319, %v3318
      %v3338 = vpack.c.b16 %v3321, %v3320
      %v3339 = vpack.c.b16 %v3323, %v3322
      %v3372 = vunpack.c.l.b16 %v2963
      %v3373 = vunpack.c.l.b16 %v2964
      %v3374 = vunpack.c.l.b16 %v2965
      %v3375 = vunpack.c.l.b16 %v2966
      %v3376 = vunpack.c.l.b16 %v2967
      %v3377 = vunpack.c.l.b16 %v2968
      %v3378 = vunpack.c.l.b16 %v2969
      %v3379 = vunpack.c.l.b16 %v2970
      %v3380 = vunpack.c.l.b16 %v2971
      %v3381 = vunpack.c.l.b16 %v2972
      %v3382 = vunpack.c.l.b16 %v2973
      %v3383 = vunpack.c.l.b16 %v2974
      %v3384 = vunpack.c.l.b16 %v2975
      %v3385 = vunpack.c.l.b16 %v2976
      %v3386 = vunpack.c.l.b16 %v2977
      %v3387 = vunpack.c.l.b16 %v2978
      %v3388 = vpack.c.b16 %v3373, %v3372
      %v3389 = vpack.c.b16 %v3375, %v3374
      %v3390 = vpack.c.b16 %v3377, %v3376
      %v3391 = vpack.c.b16 %v3379, %v3378
      %v3392 = vpack.c.b16 %v3381, %v3380
      %v3393 = vpack.c.b16 %v3383, %v3382
      %v3394 = vpack.c.b16 %v3385, %v3384
      %v3395 = vpack.c.b16 %v3387, %v3386
      %3404 = vmatpush.bf16.msra.mxu0 %v3395
      %3405 = vmatpush.bf16.msra.mxu0 %v3394
      %3406 = vmatpush.bf16.msra.mxu0 %v3393
      %3407 = vmatpush.bf16.msra.mxu0 %v3392
      %3408 = vmatpush.bf16.msra.mxu0 %v3391
      %3409 = vmatpush.bf16.msra.mxu0 %v3390
      %3410 = vmatpush.bf16.msra.mxu0 %v3389
      %3411 = vmatpush.bf16.msra.mxu0 %v3388
      %3412 = vmatmul.bf16.gmra.mxu0 %v3324
      %v3413 = vpop.f32.mrf.mxu0
      %v3414 = vadd.f32 %v3181, %v3413
      %v3415 = vpop.f32.mrf.mxu0
      %v3416 = vadd.f32 %v3183, %v3415
      %3417 = vmatmul.bf16.gmra.mxu0 %v3325
      %v3418 = vpop.f32.mrf.mxu0
      %v3419 = vadd.f32 %v3186, %v3418
      %v3420 = vpop.f32.mrf.mxu0
      %v3421 = vadd.f32 %v3188, %v3420
      %3422 = vmatmul.bf16.gmra.mxu0 %v3326
      %v3423 = vpop.f32.mrf.mxu0
      %v3424 = vadd.f32 %v3191, %v3423
      %v3425 = vpop.f32.mrf.mxu0
      %v3426 = vadd.f32 %v3193, %v3425
      %3427 = vmatmul.bf16.gmra.mxu0 %v3327
      %v3428 = vpop.f32.mrf.mxu0
      %v3429 = vadd.f32 %v3196, %v3428
      %v3430 = vpop.f32.mrf.mxu0
      %v3431 = vadd.f32 %v3198, %v3430
      %3432 = vmatmul.bf16.gmra.mxu0 %v3328
      %v3433 = vpop.f32.mrf.mxu0
      %v3434 = vadd.f32 %v3201, %v3433
      %v3435 = vpop.f32.mrf.mxu0
      %v3436 = vadd.f32 %v3203, %v3435
      %3437 = vmatmul.bf16.gmra.mxu0 %v3329
      %v3438 = vpop.f32.mrf.mxu0
      %v3439 = vadd.f32 %v3206, %v3438
      %v3440 = vpop.f32.mrf.mxu0
      %v3441 = vadd.f32 %v3208, %v3440
      %3442 = vmatmul.bf16.gmra.mxu0 %v3330
      %v3443 = vpop.f32.mrf.mxu0
      %v3444 = vadd.f32 %v3211, %v3443
      %v3445 = vpop.f32.mrf.mxu0
      %v3446 = vadd.f32 %v3213, %v3445
      %3447 = vmatmul.bf16.gmra.mxu0 %v3331
      %v3448 = vpop.f32.mrf.mxu0
      %v3449 = vadd.f32 %v3216, %v3448
      %v3450 = vpop.f32.mrf.mxu0
      %v3451 = vadd.f32 %v3218, %v3450
      %3452 = vmatmul.bf16.gmra.mxu0 %v3332
      %v3453 = vpop.f32.mrf.mxu0
      %v3454 = vadd.f32 %v3221, %v3453
      %v3455 = vpop.f32.mrf.mxu0
      %v3456 = vadd.f32 %v3223, %v3455
      %3457 = vmatmul.bf16.gmra.mxu0 %v3333
      %v3458 = vpop.f32.mrf.mxu0
      %v3459 = vadd.f32 %v3226, %v3458
      %v3460 = vpop.f32.mrf.mxu0
      %v3461 = vadd.f32 %v3228, %v3460
      %3462 = vmatmul.bf16.gmra.mxu0 %v3334
      %v3463 = vpop.f32.mrf.mxu0
      %v3464 = vadd.f32 %v3231, %v3463
      %v3465 = vpop.f32.mrf.mxu0
      %v3466 = vadd.f32 %v3233, %v3465
      %3467 = vmatmul.bf16.gmra.mxu0 %v3335
      %v3468 = vpop.f32.mrf.mxu0
      %v3469 = vadd.f32 %v3236, %v3468
      %v3470 = vpop.f32.mrf.mxu0
      %v3471 = vadd.f32 %v3238, %v3470
      %3472 = vmatmul.bf16.gmra.mxu0 %v3336
      %v3473 = vpop.f32.mrf.mxu0
      %v3474 = vadd.f32 %v3241, %v3473
      %v3475 = vpop.f32.mrf.mxu0
      %v3476 = vadd.f32 %v3243, %v3475
      %3477 = vmatmul.bf16.gmra.mxu0 %v3337
      %v3478 = vpop.f32.mrf.mxu0
      %v3479 = vadd.f32 %v3246, %v3478
      %v3480 = vpop.f32.mrf.mxu0
      %v3481 = vadd.f32 %v3248, %v3480
      %3482 = vmatmul.bf16.gmra.mxu0 %v3338
      %v3483 = vpop.f32.mrf.mxu0
      %v3484 = vadd.f32 %v3251, %v3483
      %v3485 = vpop.f32.mrf.mxu0
      %v3486 = vadd.f32 %v3253, %v3485
      %3487 = vmatmul.bf16.gmra.mxu0 %v3339
      %v3488 = vpop.f32.mrf.mxu0
      %v3489 = vadd.f32 %v3256, %v3488
      %v3490 = vpop.f32.mrf.mxu0
      %v3491 = vadd.f32 %v3258, %v3490
      %3492 = vdwg.mxu0
      %v3493 = vld [vmem:[#allocation4] sm:$0xf]
      %v3494 = vld [vmem:[#allocation4 + $0x4] sm:$0xf]
      %v3495 = vld [vmem:[#allocation4 + $0x8] sm:$0xf]
      %v3496 = vld [vmem:[#allocation4 + $0xc] sm:$0xf]
      %v3497 = vld [vmem:[#allocation4 + $0x10] sm:$0xf]
      %v3498 = vld [vmem:[#allocation4 + $0x14] sm:$0xf]
      %v3499 = vld [vmem:[#allocation4 + $0x18] sm:$0xf]
      %v3500 = vld [vmem:[#allocation4 + $0x1c] sm:$0xf]
      %v3501 = vld [vmem:[#allocation4 + $0x20] sm:$0xf]
      %v3502 = vld [vmem:[#allocation4 + $0x24] sm:$0xf]
      %v3503 = vld [vmem:[#allocation4 + $0x28] sm:$0xf]
      %v3504 = vld [vmem:[#allocation4 + $0x2c] sm:$0xf]
      %v3505 = vld [vmem:[#allocation4 + $0x30] sm:$0xf]
      %v3506 = vld [vmem:[#allocation4 + $0x34] sm:$0xf]
      %v3507 = vld [vmem:[#allocation4 + $0x38] sm:$0xf]
      %v3508 = vld [vmem:[#allocation4 + $0x3c] sm:$0xf]
      %v3509 = vld [vmem:[#allocation4 + $0x40] sm:$0xf]
      %v3510 = vld [vmem:[#allocation4 + $0x44] sm:$0xf]
      %v3511 = vld [vmem:[#allocation4 + $0x48] sm:$0xf]
      %v3512 = vld [vmem:[#allocation4 + $0x4c] sm:$0xf]
      %v3513 = vld [vmem:[#allocation4 + $0x50] sm:$0xf]
      %v3514 = vld [vmem:[#allocation4 + $0x54] sm:$0xf]
      %v3515 = vld [vmem:[#allocation4 + $0x58] sm:$0xf]
      %v3516 = vld [vmem:[#allocation4 + $0x5c] sm:$0xf]
      %v3517 = vld [vmem:[#allocation4 + $0x60] sm:$0xf]
      %v3518 = vld [vmem:[#allocation4 + $0x64] sm:$0xf]
      %v3519 = vld [vmem:[#allocation4 + $0x68] sm:$0xf]
      %v3520 = vld [vmem:[#allocation4 + $0x6c] sm:$0xf]
      %v3521 = vld [vmem:[#allocation4 + $0x70] sm:$0xf]
      %v3522 = vld [vmem:[#allocation4 + $0x74] sm:$0xf]
      %v3523 = vld [vmem:[#allocation4 + $0x78] sm:$0xf]
      %v3524 = vld [vmem:[#allocation4 + $0x7c] sm:$0xf]
      %v3525 = vld [vmem:[%s4 + $0x80] sm:$0xf]
      %v3526 = vld [vmem:[%s4 + $0x84] sm:$0xf]
      %v3527 = vld [vmem:[%s4 + $0x88] sm:$0xf]
      %v3528 = vld [vmem:[%s4 + $0x8c] sm:$0xf]
      %v3529 = vld [vmem:[%s4 + $0x90] sm:$0xf]
      %v3530 = vld [vmem:[%s4 + $0x94] sm:$0xf]
      %v3531 = vld [vmem:[%s4 + $0x98] sm:$0xf]
      %v3532 = vld [vmem:[%s4 + $0x9c] sm:$0xf]
      %v3533 = vld [vmem:[%s4 + $0xa0] sm:$0xf]
      %v3534 = vld [vmem:[%s4 + $0xa4] sm:$0xf]
      %v3535 = vld [vmem:[%s4 + $0xa8] sm:$0xf]
      %v3536 = vld [vmem:[%s4 + $0xac] sm:$0xf]
      %v3537 = vld [vmem:[%s4 + $0xb0] sm:$0xf]
      %v3538 = vld [vmem:[%s4 + $0xb4] sm:$0xf]
      %v3539 = vld [vmem:[%s4 + $0xb8] sm:$0xf]
      %v3540 = vld [vmem:[%s4 + $0xbc] sm:$0xf]
      %v3573 = vunpack.c.l.b16 %v3493
      %v3574 = vunpack.c.l.b16 %v3494
      %v3575 = vunpack.c.l.b16 %v3495
      %v3576 = vunpack.c.l.b16 %v3496
      %v3577 = vunpack.c.l.b16 %v3497
      %v3578 = vunpack.c.l.b16 %v3498
      %v3579 = vunpack.c.l.b16 %v3499
      %v3580 = vunpack.c.l.b16 %v3500
      %v3581 = vunpack.c.l.b16 %v3501
      %v3582 = vunpack.c.l.b16 %v3502
      %v3583 = vunpack.c.l.b16 %v3503
      %v3584 = vunpack.c.l.b16 %v3504
      %v3585 = vunpack.c.l.b16 %v3505
      %v3586 = vunpack.c.l.b16 %v3506
      %v3587 = vunpack.c.l.b16 %v3507
      %v3588 = vunpack.c.l.b16 %v3508
      %v3589 = vunpack.c.l.b16 %v3509
      %v3590 = vunpack.c.l.b16 %v3510
      %v3591 = vunpack.c.l.b16 %v3511
      %v3592 = vunpack.c.l.b16 %v3512
      %v3593 = vunpack.c.l.b16 %v3513
      %v3594 = vunpack.c.l.b16 %v3514
      %v3595 = vunpack.c.l.b16 %v3515
      %v3596 = vunpack.c.l.b16 %v3516
      %v3597 = vunpack.c.l.b16 %v3517
      %v3598 = vunpack.c.l.b16 %v3518
      %v3599 = vunpack.c.l.b16 %v3519
      %v3600 = vunpack.c.l.b16 %v3520
      %v3601 = vunpack.c.l.b16 %v3521
      %v3602 = vunpack.c.l.b16 %v3522
      %v3603 = vunpack.c.l.b16 %v3523
      %v3604 = vunpack.c.l.b16 %v3524
      %v3605 = vpack.c.b16 %v3574, %v3573
      %v3606 = vpack.c.b16 %v3576, %v3575
      %v3607 = vpack.c.b16 %v3578, %v3577
      %v3608 = vpack.c.b16 %v3580, %v3579
      %v3609 = vpack.c.b16 %v3582, %v3581
      %v3610 = vpack.c.b16 %v3584, %v3583
      %v3611 = vpack.c.b16 %v3586, %v3585
      %v3612 = vpack.c.b16 %v3588, %v3587
      %v3613 = vpack.c.b16 %v3590, %v3589
      %v3614 = vpack.c.b16 %v3592, %v3591
      %v3615 = vpack.c.b16 %v3594, %v3593
      %v3616 = vpack.c.b16 %v3596, %v3595
      %v3617 = vpack.c.b16 %v3598, %v3597
      %v3618 = vpack.c.b16 %v3600, %v3599
      %v3619 = vpack.c.b16 %v3602, %v3601
      %v3620 = vpack.c.b16 %v3604, %v3603
      %v3653 = vunpack.c.l.b16 %v3525
      %v3654 = vunpack.c.l.b16 %v3526
      %v3655 = vunpack.c.l.b16 %v3527
      %v3656 = vunpack.c.l.b16 %v3528
      %v3657 = vunpack.c.l.b16 %v3529
      %v3658 = vunpack.c.l.b16 %v3530
      %v3659 = vunpack.c.l.b16 %v3531
      %v3660 = vunpack.c.l.b16 %v3532
      %v3661 = vunpack.c.l.b16 %v3533
      %v3662 = vunpack.c.l.b16 %v3534
      %v3663 = vunpack.c.l.b16 %v3535
      %v3664 = vunpack.c.l.b16 %v3536
      %v3665 = vunpack.c.l.b16 %v3537
      %v3666 = vunpack.c.l.b16 %v3538
      %v3667 = vunpack.c.l.b16 %v3539
      %v3668 = vunpack.c.l.b16 %v3540
      %v3669 = vpack.c.b16 %v3654, %v3653
      %v3670 = vpack.c.b16 %v3656, %v3655
      %v3671 = vpack.c.b16 %v3658, %v3657
      %v3672 = vpack.c.b16 %v3660, %v3659
      %v3673 = vpack.c.b16 %v3662, %v3661
      %v3674 = vpack.c.b16 %v3664, %v3663
      %v3675 = vpack.c.b16 %v3666, %v3665
      %v3676 = vpack.c.b16 %v3668, %v3667
      %3685 = vmatpush.bf16.msra.mxu0 %v3676
      %3686 = vmatpush.bf16.msra.mxu0 %v3675
      %3687 = vmatpush.bf16.msra.mxu0 %v3674
      %3688 = vmatpush.bf16.msra.mxu0 %v3673
      %3689 = vmatpush.bf16.msra.mxu0 %v3672
      %3690 = vmatpush.bf16.msra.mxu0 %v3671
      %3691 = vmatpush.bf16.msra.mxu0 %v3670
      %3692 = vmatpush.bf16.msra.mxu0 %v3669
      %3693 = vmatmul.bf16.gmra.mxu0 %v3605
      %v3694 = vpop.f32.mrf.mxu0
      %v3695 = vadd.f32 0.0, %v3694
      %v3696 = vpop.f32.mrf.mxu0
      %v3697 = vadd.f32 0.0, %v3696
      %3698 = vmatmul.bf16.gmra.mxu0 %v3606
      %v3699 = vpop.f32.mrf.mxu0
      %v3700 = vadd.f32 0.0, %v3699
      %v3701 = vpop.f32.mrf.mxu0
      %v3702 = vadd.f32 0.0, %v3701
      %3703 = vmatmul.bf16.gmra.mxu0 %v3607
      %v3704 = vpop.f32.mrf.mxu0
      %v3705 = vadd.f32 0.0, %v3704
      %v3706 = vpop.f32.mrf.mxu0
      %v3707 = vadd.f32 0.0, %v3706
      %3708 = vmatmul.bf16.gmra.mxu0 %v3608
      %v3709 = vpop.f32.mrf.mxu0
      %v3710 = vadd.f32 0.0, %v3709
      %v3711 = vpop.f32.mrf.mxu0
      %v3712 = vadd.f32 0.0, %v3711
      %3713 = vmatmul.bf16.gmra.mxu0 %v3609
      %v3714 = vpop.f32.mrf.mxu0
      %v3715 = vadd.f32 0.0, %v3714
      %v3716 = vpop.f32.mrf.mxu0
      %v3717 = vadd.f32 0.0, %v3716
      %3718 = vmatmul.bf16.gmra.mxu0 %v3610
      %v3719 = vpop.f32.mrf.mxu0
      %v3720 = vadd.f32 0.0, %v3719
      %v3721 = vpop.f32.mrf.mxu0
      %v3722 = vadd.f32 0.0, %v3721
      %3723 = vmatmul.bf16.gmra.mxu0 %v3611
      %v3724 = vpop.f32.mrf.mxu0
      %v3725 = vadd.f32 0.0, %v3724
      %v3726 = vpop.f32.mrf.mxu0
      %v3727 = vadd.f32 0.0, %v3726
      %3728 = vmatmul.bf16.gmra.mxu0 %v3612
      %v3729 = vpop.f32.mrf.mxu0
      %v3730 = vadd.f32 0.0, %v3729
      %v3731 = vpop.f32.mrf.mxu0
      %v3732 = vadd.f32 0.0, %v3731
      %3733 = vmatmul.bf16.gmra.mxu0 %v3613
      %v3734 = vpop.f32.mrf.mxu0
      %v3735 = vadd.f32 0.0, %v3734
      %v3736 = vpop.f32.mrf.mxu0
      %v3737 = vadd.f32 0.0, %v3736
      %3738 = vmatmul.bf16.gmra.mxu0 %v3614
      %v3739 = vpop.f32.mrf.mxu0
      %v3740 = vadd.f32 0.0, %v3739
      %v3741 = vpop.f32.mrf.mxu0
      %v3742 = vadd.f32 0.0, %v3741
      %3743 = vmatmul.bf16.gmra.mxu0 %v3615
      %v3744 = vpop.f32.mrf.mxu0
      %v3745 = vadd.f32 0.0, %v3744
      %v3746 = vpop.f32.mrf.mxu0
      %v3747 = vadd.f32 0.0, %v3746
      %3748 = vmatmul.bf16.gmra.mxu0 %v3616
      %v3749 = vpop.f32.mrf.mxu0
      %v3750 = vadd.f32 0.0, %v3749
      %v3751 = vpop.f32.mrf.mxu0
      %v3752 = vadd.f32 0.0, %v3751
      %3753 = vmatmul.bf16.gmra.mxu0 %v3617
      %v3754 = vpop.f32.mrf.mxu0
      %v3755 = vadd.f32 0.0, %v3754
      %v3756 = vpop.f32.mrf.mxu0
      %v3757 = vadd.f32 0.0, %v3756
      %3758 = vmatmul.bf16.gmra.mxu0 %v3618
      %v3759 = vpop.f32.mrf.mxu0
      %v3760 = vadd.f32 0.0, %v3759
      %v3761 = vpop.f32.mrf.mxu0
      %v3762 = vadd.f32 0.0, %v3761
      %3763 = vmatmul.bf16.gmra.mxu0 %v3619
      %v3764 = vpop.f32.mrf.mxu0
      %v3765 = vadd.f32 0.0, %v3764
      %v3766 = vpop.f32.mrf.mxu0
      %v3767 = vadd.f32 0.0, %v3766
      %3768 = vmatmul.bf16.gmra.mxu0 %v3620
      %v3769 = vpop.f32.mrf.mxu0
      %v3770 = vadd.f32 0.0, %v3769
      %v3771 = vpop.f32.mrf.mxu0
      %v3772 = vadd.f32 0.0, %v3771
      %3773 = vdwg.mxu0
      %v3774 = vadd.f32 %v3414, %v3695
      %v3775 = vadd.f32 %v3416, %v3697
      %v3776 = vadd.f32 %v3419, %v3700
      %v3777 = vadd.f32 %v3421, %v3702
      %v3778 = vadd.f32 %v3424, %v3705
      %v3779 = vadd.f32 %v3426, %v3707
      %v3780 = vadd.f32 %v3429, %v3710
      %v3781 = vadd.f32 %v3431, %v3712
      %v3782 = vadd.f32 %v3434, %v3715
      %v3783 = vadd.f32 %v3436, %v3717
      %v3784 = vadd.f32 %v3439, %v3720
      %v3785 = vadd.f32 %v3441, %v3722
      %v3786 = vadd.f32 %v3444, %v3725
      %v3787 = vadd.f32 %v3446, %v3727
      %v3788 = vadd.f32 %v3449, %v3730
      %v3789 = vadd.f32 %v3451, %v3732
      %v3790 = vadd.f32 %v3454, %v3735
      %v3791 = vadd.f32 %v3456, %v3737
      %v3792 = vadd.f32 %v3459, %v3740
      %v3793 = vadd.f32 %v3461, %v3742
      %v3794 = vadd.f32 %v3464, %v3745
      %v3795 = vadd.f32 %v3466, %v3747
      %v3796 = vadd.f32 %v3469, %v3750
      %v3797 = vadd.f32 %v3471, %v3752
      %v3798 = vadd.f32 %v3474, %v3755
      %v3799 = vadd.f32 %v3476, %v3757
      %v3800 = vadd.f32 %v3479, %v3760
      %v3801 = vadd.f32 %v3481, %v3762
      %v3802 = vadd.f32 %v3484, %v3765
      %v3803 = vadd.f32 %v3486, %v3767
      %v3804 = vadd.f32 %v3489, %v3770
      %v3805 = vadd.f32 %v3491, %v3772
      %v3806 = vld [vmem:[#allocation3 + $0x8] sm:$0xf]
      %v3807 = vld [vmem:[#allocation3 + $0xc] sm:$0xf]
      %v3808 = vld [vmem:[#allocation3 + $0x10] sm:$0xf]
      %v3809 = vld [vmem:[#allocation3 + $0x14] sm:$0xf]
      %v3810 = vld [vmem:[#allocation3 + $0x18] sm:$0xf]
      %v3811 = vld [vmem:[#allocation3 + $0x1c] sm:$0xf]
      %v3812 = vld [vmem:[#allocation3 + $0x20] sm:$0xf]
      %v3813 = vld [vmem:[#allocation3 + $0x24] sm:$0xf]
      %v3814 = vld [vmem:[#allocation3 + $0x28] sm:$0xf]
      %v3815 = vld [vmem:[#allocation3 + $0x2c] sm:$0xf]
      %v3816 = vld [vmem:[#allocation3 + $0x30] sm:$0xf]
      %v3817 = vld [vmem:[#allocation3 + $0x34] sm:$0xf]
      %v3818 = vld [vmem:[#allocation3 + $0x38] sm:$0xf]
      %v3819 = vld [vmem:[#allocation3 + $0x3c] sm:$0xf]
      %v3820 = vld [vmem:[#allocation3 + $0x40] sm:$0xf]
      %v3821 = vld [vmem:[#allocation3 + $0x44] sm:$0xf]
      %v3822 = vld [vmem:[#allocation3 + $0x48] sm:$0xf]
      %v3823 = vld [vmem:[#allocation3 + $0x4c] sm:$0xf]
      %v3824 = vld [vmem:[#allocation3 + $0x50] sm:$0xf]
      %v3825 = vld [vmem:[#allocation3 + $0x54] sm:$0xf]
      %v3826 = vld [vmem:[#allocation3 + $0x58] sm:$0xf]
      %v3827 = vld [vmem:[#allocation3 + $0x5c] sm:$0xf]
      %v3828 = vld [vmem:[#allocation3 + $0x60] sm:$0xf]
      %v3829 = vld [vmem:[#allocation3 + $0x64] sm:$0xf]
      %v3830 = vld [vmem:[#allocation3 + $0x68] sm:$0xf]
      %v3831 = vld [vmem:[#allocation3 + $0x6c] sm:$0xf]
      %v3832 = vld [vmem:[#allocation3 + $0x70] sm:$0xf]
      %v3833 = vld [vmem:[#allocation3 + $0x74] sm:$0xf]
      %v3834 = vld [vmem:[#allocation3 + $0x78] sm:$0xf]
      %v3835 = vld [vmem:[#allocation3 + $0x7c] sm:$0xf]
      %v3836 = vld [vmem:[#allocation3 + $0x80] sm:$0xf]
      %v3837 = vld [vmem:[#allocation3 + $0x84] sm:$0xf]
      %v3838 = vld [vmem:[%s4 + $0xc0] sm:$0xf]
      %v3839 = vld [vmem:[%s4 + $0xc4] sm:$0xf]
      %v3840 = vld [vmem:[%s4 + $0xc8] sm:$0xf]
      %v3841 = vld [vmem:[%s4 + $0xcc] sm:$0xf]
      %v3842 = vld [vmem:[%s4 + $0xd0] sm:$0xf]
      %v3843 = vld [vmem:[%s4 + $0xd4] sm:$0xf]
      %v3844 = vld [vmem:[%s4 + $0xd8] sm:$0xf]
      %v3845 = vld [vmem:[%s4 + $0xdc] sm:$0xf]
      %v3846 = vld [vmem:[%s4 + $0xe0] sm:$0xf]
      %v3847 = vld [vmem:[%s4 + $0xe4] sm:$0xf]
      %v3848 = vld [vmem:[%s4 + $0xe8] sm:$0xf]
      %v3849 = vld [vmem:[%s4 + $0xec] sm:$0xf]
      %v3850 = vld [vmem:[%s4 + $0xf0] sm:$0xf]
      %v3851 = vld [vmem:[%s4 + $0xf4] sm:$0xf]
      %v3852 = vld [vmem:[%s4 + $0xf8] sm:$0xf]
      %v3853 = vld [vmem:[%s4 + $0xfc] sm:$0xf]
      %v3886 = vunpack.c.l.b16 %v3806
      %v3887 = vunpack.c.l.b16 %v3807
      %v3888 = vunpack.c.l.b16 %v3808
      %v3889 = vunpack.c.l.b16 %v3809
      %v3890 = vunpack.c.l.b16 %v3810
      %v3891 = vunpack.c.l.b16 %v3811
      %v3892 = vunpack.c.l.b16 %v3812
      %v3893 = vunpack.c.l.b16 %v3813
      %v3894 = vunpack.c.l.b16 %v3814
      %v3895 = vunpack.c.l.b16 %v3815
      %v3896 = vunpack.c.l.b16 %v3816
      %v3897 = vunpack.c.l.b16 %v3817
      %v3898 = vunpack.c.l.b16 %v3818
      %v3899 = vunpack.c.l.b16 %v3819
      %v3900 = vunpack.c.l.b16 %v3820
      %v3901 = vunpack.c.l.b16 %v3821
      %v3902 = vunpack.c.l.b16 %v3822
      %v3903 = vunpack.c.l.b16 %v3823
      %v3904 = vunpack.c.l.b16 %v3824
      %v3905 = vunpack.c.l.b16 %v3825
      %v3906 = vunpack.c.l.b16 %v3826
      %v3907 = vunpack.c.l.b16 %v3827
      %v3908 = vunpack.c.l.b16 %v3828
      %v3909 = vunpack.c.l.b16 %v3829
      %v3910 = vunpack.c.l.b16 %v3830
      %v3911 = vunpack.c.l.b16 %v3831
      %v3912 = vunpack.c.l.b16 %v3832
      %v3913 = vunpack.c.l.b16 %v3833
      %v3914 = vunpack.c.l.b16 %v3834
      %v3915 = vunpack.c.l.b16 %v3835
      %v3916 = vunpack.c.l.b16 %v3836
      %v3917 = vunpack.c.l.b16 %v3837
      %v3918 = vpack.c.b16 %v3887, %v3886
      %v3919 = vpack.c.b16 %v3889, %v3888
      %v3920 = vpack.c.b16 %v3891, %v3890
      %v3921 = vpack.c.b16 %v3893, %v3892
      %v3922 = vpack.c.b16 %v3895, %v3894
      %v3923 = vpack.c.b16 %v3897, %v3896
      %v3924 = vpack.c.b16 %v3899, %v3898
      %v3925 = vpack.c.b16 %v3901, %v3900
      %v3926 = vpack.c.b16 %v3903, %v3902
      %v3927 = vpack.c.b16 %v3905, %v3904
      %v3928 = vpack.c.b16 %v3907, %v3906
      %v3929 = vpack.c.b16 %v3909, %v3908
      %v3930 = vpack.c.b16 %v3911, %v3910
      %v3931 = vpack.c.b16 %v3913, %v3912
      %v3932 = vpack.c.b16 %v3915, %v3914
      %v3933 = vpack.c.b16 %v3917, %v3916
      %v3966 = vunpack.c.l.b16 %v3838
      %v3967 = vunpack.c.l.b16 %v3839
      %v3968 = vunpack.c.l.b16 %v3840
      %v3969 = vunpack.c.l.b16 %v3841
      %v3970 = vunpack.c.l.b16 %v3842
      %v3971 = vunpack.c.l.b16 %v3843
      %v3972 = vunpack.c.l.b16 %v3844
      %v3973 = vunpack.c.l.b16 %v3845
      %v3974 = vunpack.c.l.b16 %v3846
      %v3975 = vunpack.c.l.b16 %v3847
      %v3976 = vunpack.c.l.b16 %v3848
      %v3977 = vunpack.c.l.b16 %v3849
      %v3978 = vunpack.c.l.b16 %v3850
      %v3979 = vunpack.c.l.b16 %v3851
      %v3980 = vunpack.c.l.b16 %v3852
      %v3981 = vunpack.c.l.b16 %v3853
      %v3982 = vpack.c.b16 %v3967, %v3966
      %v3983 = vpack.c.b16 %v3969, %v3968
      %v3984 = vpack.c.b16 %v3971, %v3970
      %v3985 = vpack.c.b16 %v3973, %v3972
      %v3986 = vpack.c.b16 %v3975, %v3974
      %v3987 = vpack.c.b16 %v3977, %v3976
      %v3988 = vpack.c.b16 %v3979, %v3978
      %v3989 = vpack.c.b16 %v3981, %v3980
      %3998 = vmatpush.bf16.msra.mxu0 %v3989
      %3999 = vmatpush.bf16.msra.mxu0 %v3988
      %4000 = vmatpush.bf16.msra.mxu0 %v3987
      %4001 = vmatpush.bf16.msra.mxu0 %v3986
      %4002 = vmatpush.bf16.msra.mxu0 %v3985
      %4003 = vmatpush.bf16.msra.mxu0 %v3984
      %4004 = vmatpush.bf16.msra.mxu0 %v3983
      %4005 = vmatpush.bf16.msra.mxu0 %v3982
      %4006 = vmatmul.bf16.gmra.mxu0 %v3918
      %v4007 = vpop.f32.mrf.mxu0
      %v4008 = vadd.f32 0.0, %v4007
      %v4009 = vpop.f32.mrf.mxu0
      %v4010 = vadd.f32 0.0, %v4009
      %4011 = vmatmul.bf16.gmra.mxu0 %v3919
      %v4012 = vpop.f32.mrf.mxu0
      %v4013 = vadd.f32 0.0, %v4012
      %v4014 = vpop.f32.mrf.mxu0
      %v4015 = vadd.f32 0.0, %v4014
      %4016 = vmatmul.bf16.gmra.mxu0 %v3920
      %v4017 = vpop.f32.mrf.mxu0
      %v4018 = vadd.f32 0.0, %v4017
      %v4019 = vpop.f32.mrf.mxu0
      %v4020 = vadd.f32 0.0, %v4019
      %4021 = vmatmul.bf16.gmra.mxu0 %v3921
      %v4022 = vpop.f32.mrf.mxu0
      %v4023 = vadd.f32 0.0, %v4022
      %v4024 = vpop.f32.mrf.mxu0
      %v4025 = vadd.f32 0.0, %v4024
      %4026 = vmatmul.bf16.gmra.mxu0 %v3922
      %v4027 = vpop.f32.mrf.mxu0
      %v4028 = vadd.f32 0.0, %v4027
      %v4029 = vpop.f32.mrf.mxu0
      %v4030 = vadd.f32 0.0, %v4029
      %4031 = vmatmul.bf16.gmra.mxu0 %v3923
      %v4032 = vpop.f32.mrf.mxu0
      %v4033 = vadd.f32 0.0, %v4032
      %v4034 = vpop.f32.mrf.mxu0
      %v4035 = vadd.f32 0.0, %v4034
      %4036 = vmatmul.bf16.gmra.mxu0 %v3924
      %v4037 = vpop.f32.mrf.mxu0
      %v4038 = vadd.f32 0.0, %v4037
      %v4039 = vpop.f32.mrf.mxu0
      %v4040 = vadd.f32 0.0, %v4039
      %4041 = vmatmul.bf16.gmra.mxu0 %v3925
      %v4042 = vpop.f32.mrf.mxu0
      %v4043 = vadd.f32 0.0, %v4042
      %v4044 = vpop.f32.mrf.mxu0
      %v4045 = vadd.f32 0.0, %v4044
      %4046 = vmatmul.bf16.gmra.mxu0 %v3926
      %v4047 = vpop.f32.mrf.mxu0
      %v4048 = vadd.f32 0.0, %v4047
      %v4049 = vpop.f32.mrf.mxu0
      %v4050 = vadd.f32 0.0, %v4049
      %4051 = vmatmul.bf16.gmra.mxu0 %v3927
      %v4052 = vpop.f32.mrf.mxu0
      %v4053 = vadd.f32 0.0, %v4052
      %v4054 = vpop.f32.mrf.mxu0
      %v4055 = vadd.f32 0.0, %v4054
      %4056 = vmatmul.bf16.gmra.mxu0 %v3928
      %v4057 = vpop.f32.mrf.mxu0
      %v4058 = vadd.f32 0.0, %v4057
      %v4059 = vpop.f32.mrf.mxu0
      %v4060 = vadd.f32 0.0, %v4059
      %4061 = vmatmul.bf16.gmra.mxu0 %v3929
      %v4062 = vpop.f32.mrf.mxu0
      %v4063 = vadd.f32 0.0, %v4062
      %v4064 = vpop.f32.mrf.mxu0
      %v4065 = vadd.f32 0.0, %v4064
      %4066 = vmatmul.bf16.gmra.mxu0 %v3930
      %v4067 = vpop.f32.mrf.mxu0
      %v4068 = vadd.f32 0.0, %v4067
      %v4069 = vpop.f32.mrf.mxu0
      %v4070 = vadd.f32 0.0, %v4069
      %4071 = vmatmul.bf16.gmra.mxu0 %v3931
      %v4072 = vpop.f32.mrf.mxu0
      %v4073 = vadd.f32 0.0, %v4072
      %v4074 = vpop.f32.mrf.mxu0
      %v4075 = vadd.f32 0.0, %v4074
      %4076 = vmatmul.bf16.gmra.mxu0 %v3932
      %v4077 = vpop.f32.mrf.mxu0
      %v4078 = vadd.f32 0.0, %v4077
      %v4079 = vpop.f32.mrf.mxu0
      %v4080 = vadd.f32 0.0, %v4079
      %4081 = vmatmul.bf16.gmra.mxu0 %v3933
      %v4082 = vpop.f32.mrf.mxu0
      %v4083 = vadd.f32 0.0, %v4082
      %v4084 = vpop.f32.mrf.mxu0
      %v4085 = vadd.f32 0.0, %v4084
      %4086 = vdwg.mxu0
      %v4087 = vadd.f32 %v3774, %v4008
      %v4088 = vadd.f32 %v3775, %v4010
      %v4089 = vadd.f32 %v3776, %v4013
      %v4090 = vadd.f32 %v3777, %v4015
      %v4091 = vadd.f32 %v3778, %v4018
      %v4092 = vadd.f32 %v3779, %v4020
      %v4093 = vadd.f32 %v3780, %v4023
      %v4094 = vadd.f32 %v3781, %v4025
      %v4095 = vadd.f32 %v3782, %v4028
      %v4096 = vadd.f32 %v3783, %v4030
      %v4097 = vadd.f32 %v3784, %v4033
      %v4098 = vadd.f32 %v3785, %v4035
      %v4099 = vadd.f32 %v3786, %v4038
      %v4100 = vadd.f32 %v3787, %v4040
      %v4101 = vadd.f32 %v3788, %v4043
      %v4102 = vadd.f32 %v3789, %v4045
      %v4103 = vadd.f32 %v3790, %v4048
      %v4104 = vadd.f32 %v3791, %v4050
      %v4105 = vadd.f32 %v3792, %v4053
      %v4106 = vadd.f32 %v3793, %v4055
      %v4107 = vadd.f32 %v3794, %v4058
      %v4108 = vadd.f32 %v3795, %v4060
      %v4109 = vadd.f32 %v3796, %v4063
      %v4110 = vadd.f32 %v3797, %v4065
      %v4111 = vadd.f32 %v3798, %v4068
      %v4112 = vadd.f32 %v3799, %v4070
      %v4113 = vadd.f32 %v3800, %v4073
      %v4114 = vadd.f32 %v3801, %v4075
      %v4115 = vadd.f32 %v3802, %v4078
      %v4116 = vadd.f32 %v3803, %v4080
      %v4117 = vadd.f32 %v3804, %v4083
      %v4118 = vadd.f32 %v3805, %v4085
      %v4119 = vld [vmem:[#allocation2 + $0xc] sm:$0xf]
      %v4120 = vld [vmem:[#allocation2 + $0x10] sm:$0xf]
      %v4121 = vld [vmem:[#allocation2 + $0x14] sm:$0xf]
      %v4122 = vld [vmem:[#allocation2 + $0x18] sm:$0xf]
      %v4123 = vld [vmem:[#allocation2 + $0x1c] sm:$0xf]
      %v4124 = vld [vmem:[#allocation2 + $0x20] sm:$0xf]
      %v4125 = vld [vmem:[#allocation2 + $0x24] sm:$0xf]
      %v4126 = vld [vmem:[#allocation2 + $0x28] sm:$0xf]
      %v4127 = vld [vmem:[#allocation2 + $0x2c] sm:$0xf]
      %v4128 = vld [vmem:[#allocation2 + $0x30] sm:$0xf]
      %v4129 = vld [vmem:[#allocation2 + $0x34] sm:$0xf]
      %v4130 = vld [vmem:[#allocation2 + $0x38] sm:$0xf]
      %v4131 = vld [vmem:[#allocation2 + $0x3c] sm:$0xf]
      %v4132 = vld [vmem:[#allocation2 + $0x40] sm:$0xf]
      %v4133 = vld [vmem:[#allocation2 + $0x44] sm:$0xf]
      %v4134 = vld [vmem:[#allocation2 + $0x48] sm:$0xf]
      %v4135 = vld [vmem:[#allocation2 + $0x4c] sm:$0xf]
      %v4136 = vld [vmem:[#allocation2 + $0x50] sm:$0xf]
      %v4137 = vld [vmem:[#allocation2 + $0x54] sm:$0xf]
      %v4138 = vld [vmem:[#allocation2 + $0x58] sm:$0xf]
      %v4139 = vld [vmem:[#allocation2 + $0x5c] sm:$0xf]
      %v4140 = vld [vmem:[#allocation2 + $0x60] sm:$0xf]
      %v4141 = vld [vmem:[#allocation2 + $0x64] sm:$0xf]
      %v4142 = vld [vmem:[#allocation2 + $0x68] sm:$0xf]
      %v4143 = vld [vmem:[#allocation2 + $0x6c] sm:$0xf]
      %v4144 = vld [vmem:[#allocation2 + $0x70] sm:$0xf]
      %v4145 = vld [vmem:[#allocation2 + $0x74] sm:$0xf]
      %v4146 = vld [vmem:[#allocation2 + $0x78] sm:$0xf]
      %v4147 = vld [vmem:[#allocation2 + $0x7c] sm:$0xf]
      %v4148 = vld [vmem:[#allocation2 + $0x80] sm:$0xf]
      %v4149 = vld [vmem:[#allocation2 + $0x84] sm:$0xf]
      %v4150 = vld [vmem:[#allocation2 + $0x88] sm:$0xf]
      %v4151 = vld [vmem:[%s4 + $0x100] sm:$0xf]
      %v4152 = vld [vmem:[%s4 + $0x104] sm:$0xf]
      %v4153 = vld [vmem:[%s4 + $0x108] sm:$0xf]
      %v4154 = vld [vmem:[%s4 + $0x10c] sm:$0xf]
      %v4155 = vld [vmem:[%s4 + $0x110] sm:$0xf]
      %v4156 = vld [vmem:[%s4 + $0x114] sm:$0xf]
      %v4157 = vld [vmem:[%s4 + $0x118] sm:$0xf]
      %v4158 = vld [vmem:[%s4 + $0x11c] sm:$0xf]
      %v4159 = vld [vmem:[%s4 + $0x120] sm:$0xf]
      %v4160 = vld [vmem:[%s4 + $0x124] sm:$0xf]
      %v4161 = vld [vmem:[%s4 + $0x128] sm:$0xf]
      %v4162 = vld [vmem:[%s4 + $0x12c] sm:$0xf]
      %v4163 = vld [vmem:[%s4 + $0x130] sm:$0xf]
      %v4164 = vld [vmem:[%s4 + $0x134] sm:$0xf]
      %v4165 = vld [vmem:[%s4 + $0x138] sm:$0xf]
      %v4166 = vld [vmem:[%s4 + $0x13c] sm:$0xf]
      %v4199 = vunpack.c.l.b16 %v4119
      %v4200 = vunpack.c.l.b16 %v4120
      %v4201 = vunpack.c.l.b16 %v4121
      %v4202 = vunpack.c.l.b16 %v4122
      %v4203 = vunpack.c.l.b16 %v4123
      %v4204 = vunpack.c.l.b16 %v4124
      %v4205 = vunpack.c.l.b16 %v4125
      %v4206 = vunpack.c.l.b16 %v4126
      %v4207 = vunpack.c.l.b16 %v4127
      %v4208 = vunpack.c.l.b16 %v4128
      %v4209 = vunpack.c.l.b16 %v4129
      %v4210 = vunpack.c.l.b16 %v4130
      %v4211 = vunpack.c.l.b16 %v4131
      %v4212 = vunpack.c.l.b16 %v4132
      %v4213 = vunpack.c.l.b16 %v4133
      %v4214 = vunpack.c.l.b16 %v4134
      %v4215 = vunpack.c.l.b16 %v4135
      %v4216 = vunpack.c.l.b16 %v4136
      %v4217 = vunpack.c.l.b16 %v4137
      %v4218 = vunpack.c.l.b16 %v4138
      %v4219 = vunpack.c.l.b16 %v4139
      %v4220 = vunpack.c.l.b16 %v4140
      %v4221 = vunpack.c.l.b16 %v4141
      %v4222 = vunpack.c.l.b16 %v4142
      %v4223 = vunpack.c.l.b16 %v4143
      %v4224 = vunpack.c.l.b16 %v4144
      %v4225 = vunpack.c.l.b16 %v4145
      %v4226 = vunpack.c.l.b16 %v4146
      %v4227 = vunpack.c.l.b16 %v4147
      %v4228 = vunpack.c.l.b16 %v4148
      %v4229 = vunpack.c.l.b16 %v4149
      %v4230 = vunpack.c.l.b16 %v4150
      %v4231 = vpack.c.b16 %v4200, %v4199
      %v4232 = vpack.c.b16 %v4202, %v4201
      %v4233 = vpack.c.b16 %v4204, %v4203
      %v4234 = vpack.c.b16 %v4206, %v4205
      %v4235 = vpack.c.b16 %v4208, %v4207
      %v4236 = vpack.c.b16 %v4210, %v4209
      %v4237 = vpack.c.b16 %v4212, %v4211
      %v4238 = vpack.c.b16 %v4214, %v4213
      %v4239 = vpack.c.b16 %v4216, %v4215
      %v4240 = vpack.c.b16 %v4218, %v4217
      %v4241 = vpack.c.b16 %v4220, %v4219
      %v4242 = vpack.c.b16 %v4222, %v4221
      %v4243 = vpack.c.b16 %v4224, %v4223
      %v4244 = vpack.c.b16 %v4226, %v4225
      %v4245 = vpack.c.b16 %v4228, %v4227
      %v4246 = vpack.c.b16 %v4230, %v4229
      %v4279 = vunpack.c.l.b16 %v4151
      %v4280 = vunpack.c.l.b16 %v4152
      %v4281 = vunpack.c.l.b16 %v4153
      %v4282 = vunpack.c.l.b16 %v4154
      %v4283 = vunpack.c.l.b16 %v4155
      %v4284 = vunpack.c.l.b16 %v4156
      %v4285 = vunpack.c.l.b16 %v4157
      %v4286 = vunpack.c.l.b16 %v4158
      %v4287 = vunpack.c.l.b16 %v4159
      %v4288 = vunpack.c.l.b16 %v4160
      %v4289 = vunpack.c.l.b16 %v4161
      %v4290 = vunpack.c.l.b16 %v4162
      %v4291 = vunpack.c.l.b16 %v4163
      %v4292 = vunpack.c.l.b16 %v4164
      %v4293 = vunpack.c.l.b16 %v4165
      %v4294 = vunpack.c.l.b16 %v4166
      %v4295 = vpack.c.b16 %v4280, %v4279
      %v4296 = vpack.c.b16 %v4282, %v4281
      %v4297 = vpack.c.b16 %v4284, %v4283
      %v4298 = vpack.c.b16 %v4286, %v4285
      %v4299 = vpack.c.b16 %v4288, %v4287
      %v4300 = vpack.c.b16 %v4290, %v4289
      %v4301 = vpack.c.b16 %v4292, %v4291
      %v4302 = vpack.c.b16 %v4294, %v4293
      %4311 = vmatpush.bf16.msra.mxu0 %v4302
      %4312 = vmatpush.bf16.msra.mxu0 %v4301
      %4313 = vmatpush.bf16.msra.mxu0 %v4300
      %4314 = vmatpush.bf16.msra.mxu0 %v4299
      %4315 = vmatpush.bf16.msra.mxu0 %v4298
      %4316 = vmatpush.bf16.msra.mxu0 %v4297
      %4317 = vmatpush.bf16.msra.mxu0 %v4296
      %4318 = vmatpush.bf16.msra.mxu0 %v4295
      %4319 = vmatmul.bf16.gmra.mxu0 %v4231
      %v4320 = vpop.f32.mrf.mxu0
      %v4321 = vadd.f32 0.0, %v4320
      %v4322 = vpop.f32.mrf.mxu0
      %v4323 = vadd.f32 0.0, %v4322
      %4324 = vmatmul.bf16.gmra.mxu0 %v4232
      %v4325 = vpop.f32.mrf.mxu0
      %v4326 = vadd.f32 0.0, %v4325
      %v4327 = vpop.f32.mrf.mxu0
      %v4328 = vadd.f32 0.0, %v4327
      %4329 = vmatmul.bf16.gmra.mxu0 %v4233
      %v4330 = vpop.f32.mrf.mxu0
      %v4331 = vadd.f32 0.0, %v4330
      %v4332 = vpop.f32.mrf.mxu0
      %v4333 = vadd.f32 0.0, %v4332
      %4334 = vmatmul.bf16.gmra.mxu0 %v4234
      %v4335 = vpop.f32.mrf.mxu0
      %v4336 = vadd.f32 0.0, %v4335
      %v4337 = vpop.f32.mrf.mxu0
      %v4338 = vadd.f32 0.0, %v4337
      %4339 = vmatmul.bf16.gmra.mxu0 %v4235
      %v4340 = vpop.f32.mrf.mxu0
      %v4341 = vadd.f32 0.0, %v4340
      %v4342 = vpop.f32.mrf.mxu0
      %v4343 = vadd.f32 0.0, %v4342
      %4344 = vmatmul.bf16.gmra.mxu0 %v4236
      %v4345 = vpop.f32.mrf.mxu0
      %v4346 = vadd.f32 0.0, %v4345
      %v4347 = vpop.f32.mrf.mxu0
      %v4348 = vadd.f32 0.0, %v4347
      %4349 = vmatmul.bf16.gmra.mxu0 %v4237
      %v4350 = vpop.f32.mrf.mxu0
      %v4351 = vadd.f32 0.0, %v4350
      %v4352 = vpop.f32.mrf.mxu0
      %v4353 = vadd.f32 0.0, %v4352
      %4354 = vmatmul.bf16.gmra.mxu0 %v4238
      %v4355 = vpop.f32.mrf.mxu0
      %v4356 = vadd.f32 0.0, %v4355
      %v4357 = vpop.f32.mrf.mxu0
      %v4358 = vadd.f32 0.0, %v4357
      %4359 = vmatmul.bf16.gmra.mxu0 %v4239
      %v4360 = vpop.f32.mrf.mxu0
      %v4361 = vadd.f32 0.0, %v4360
      %v4362 = vpop.f32.mrf.mxu0
      %v4363 = vadd.f32 0.0, %v4362
      %4364 = vmatmul.bf16.gmra.mxu0 %v4240
      %v4365 = vpop.f32.mrf.mxu0
      %v4366 = vadd.f32 0.0, %v4365
      %v4367 = vpop.f32.mrf.mxu0
      %v4368 = vadd.f32 0.0, %v4367
      %4369 = vmatmul.bf16.gmra.mxu0 %v4241
      %v4370 = vpop.f32.mrf.mxu0
      %v4371 = vadd.f32 0.0, %v4370
      %v4372 = vpop.f32.mrf.mxu0
      %v4373 = vadd.f32 0.0, %v4372
      %4374 = vmatmul.bf16.gmra.mxu0 %v4242
      %v4375 = vpop.f32.mrf.mxu0
      %v4376 = vadd.f32 0.0, %v4375
      %v4377 = vpop.f32.mrf.mxu0
      %v4378 = vadd.f32 0.0, %v4377
      %4379 = vmatmul.bf16.gmra.mxu0 %v4243
      %v4380 = vpop.f32.mrf.mxu0
      %v4381 = vadd.f32 0.0, %v4380
      %v4382 = vpop.f32.mrf.mxu0
      %v4383 = vadd.f32 0.0, %v4382
      %4384 = vmatmul.bf16.gmra.mxu0 %v4244
      %v4385 = vpop.f32.mrf.mxu0
      %v4386 = vadd.f32 0.0, %v4385
      %v4387 = vpop.f32.mrf.mxu0
      %v4388 = vadd.f32 0.0, %v4387
      %4389 = vmatmul.bf16.gmra.mxu0 %v4245
      %v4390 = vpop.f32.mrf.mxu0
      %v4391 = vadd.f32 0.0, %v4390
      %v4392 = vpop.f32.mrf.mxu0
      %v4393 = vadd.f32 0.0, %v4392
      %4394 = vmatmul.bf16.gmra.mxu0 %v4246
      %v4395 = vpop.f32.mrf.mxu0
      %v4396 = vadd.f32 0.0, %v4395
      %v4397 = vpop.f32.mrf.mxu0
      %v4398 = vadd.f32 0.0, %v4397
      %4399 = vdwg.mxu0
      %v4400 = vadd.f32 %v4087, %v4321
      %v4401 = vadd.f32 %v4088, %v4323
      %v4402 = vadd.f32 %v4089, %v4326
      %v4403 = vadd.f32 %v4090, %v4328
      %v4404 = vadd.f32 %v4091, %v4331
      %v4405 = vadd.f32 %v4092, %v4333
      %v4406 = vadd.f32 %v4093, %v4336
      %v4407 = vadd.f32 %v4094, %v4338
      %v4408 = vadd.f32 %v4095, %v4341
      %v4409 = vadd.f32 %v4096, %v4343
      %v4410 = vadd.f32 %v4097, %v4346
      %v4411 = vadd.f32 %v4098, %v4348
      %v4412 = vadd.f32 %v4099, %v4351
      %v4413 = vadd.f32 %v4100, %v4353
      %v4414 = vadd.f32 %v4101, %v4356
      %v4415 = vadd.f32 %v4102, %v4358
      %v4416 = vadd.f32 %v4103, %v4361
      %v4417 = vadd.f32 %v4104, %v4363
      %v4418 = vadd.f32 %v4105, %v4366
      %v4419 = vadd.f32 %v4106, %v4368
      %v4420 = vadd.f32 %v4107, %v4371
      %v4421 = vadd.f32 %v4108, %v4373
      %v4422 = vadd.f32 %v4109, %v4376
      %v4423 = vadd.f32 %v4110, %v4378
      %v4424 = vadd.f32 %v4111, %v4381
      %v4425 = vadd.f32 %v4112, %v4383
      %v4426 = vadd.f32 %v4113, %v4386
      %v4427 = vadd.f32 %v4114, %v4388
      %v4428 = vadd.f32 %v4115, %v4391
      %v4429 = vadd.f32 %v4116, %v4393
      %v4430 = vadd.f32 %v4117, %v4396
      %v4431 = vadd.f32 %v4118, %v4398
      %v4432 = vld [vmem:[#allocation4 + $0x8] sm:$0xf]
      %v4433 = vld [vmem:[#allocation4 + $0xc] sm:$0xf]
      %v4434 = vld [vmem:[#allocation4 + $0x10] sm:$0xf]
      %v4435 = vld [vmem:[#allocation4 + $0x14] sm:$0xf]
      %v4436 = vld [vmem:[#allocation4 + $0x18] sm:$0xf]
      %v4437 = vld [vmem:[#allocation4 + $0x1c] sm:$0xf]
      %v4438 = vld [vmem:[#allocation4 + $0x20] sm:$0xf]
      %v4439 = vld [vmem:[#allocation4 + $0x24] sm:$0xf]
      %v4440 = vld [vmem:[#allocation4 + $0x28] sm:$0xf]
      %v4441 = vld [vmem:[#allocation4 + $0x2c] sm:$0xf]
      %v4442 = vld [vmem:[#allocation4 + $0x30] sm:$0xf]
      %v4443 = vld [vmem:[#allocation4 + $0x34] sm:$0xf]
      %v4444 = vld [vmem:[#allocation4 + $0x38] sm:$0xf]
      %v4445 = vld [vmem:[#allocation4 + $0x3c] sm:$0xf]
      %v4446 = vld [vmem:[#allocation4 + $0x40] sm:$0xf]
      %v4447 = vld [vmem:[#allocation4 + $0x44] sm:$0xf]
      %v4448 = vld [vmem:[#allocation4 + $0x48] sm:$0xf]
      %v4449 = vld [vmem:[#allocation4 + $0x4c] sm:$0xf]
      %v4450 = vld [vmem:[#allocation4 + $0x50] sm:$0xf]
      %v4451 = vld [vmem:[#allocation4 + $0x54] sm:$0xf]
      %v4452 = vld [vmem:[#allocation4 + $0x58] sm:$0xf]
      %v4453 = vld [vmem:[#allocation4 + $0x5c] sm:$0xf]
      %v4454 = vld [vmem:[#allocation4 + $0x60] sm:$0xf]
      %v4455 = vld [vmem:[#allocation4 + $0x64] sm:$0xf]
      %v4456 = vld [vmem:[#allocation4 + $0x68] sm:$0xf]
      %v4457 = vld [vmem:[#allocation4 + $0x6c] sm:$0xf]
      %v4458 = vld [vmem:[#allocation4 + $0x70] sm:$0xf]
      %v4459 = vld [vmem:[#allocation4 + $0x74] sm:$0xf]
      %v4460 = vld [vmem:[#allocation4 + $0x78] sm:$0xf]
      %v4461 = vld [vmem:[#allocation4 + $0x7c] sm:$0xf]
      %v4462 = vld [vmem:[#allocation4 + $0x80] sm:$0xf]
      %v4463 = vld [vmem:[#allocation4 + $0x84] sm:$0xf]
      %v4464 = vld [vmem:[%s4 + $0x140] sm:$0xf]
      %v4465 = vld [vmem:[%s4 + $0x144] sm:$0xf]
      %v4466 = vld [vmem:[%s4 + $0x148] sm:$0xf]
      %v4467 = vld [vmem:[%s4 + $0x14c] sm:$0xf]
      %v4468 = vld [vmem:[%s4 + $0x150] sm:$0xf]
      %v4469 = vld [vmem:[%s4 + $0x154] sm:$0xf]
      %v4470 = vld [vmem:[%s4 + $0x158] sm:$0xf]
      %v4471 = vld [vmem:[%s4 + $0x15c] sm:$0xf]
      %v4472 = vld [vmem:[%s4 + $0x160] sm:$0xf]
      %v4473 = vld [vmem:[%s4 + $0x164] sm:$0xf]
      %v4474 = vld [vmem:[%s4 + $0x168] sm:$0xf]
      %v4475 = vld [vmem:[%s4 + $0x16c] sm:$0xf]
      %v4476 = vld [vmem:[%s4 + $0x170] sm:$0xf]
      %v4477 = vld [vmem:[%s4 + $0x174] sm:$0xf]
      %v4478 = vld [vmem:[%s4 + $0x178] sm:$0xf]
      %v4479 = vld [vmem:[%s4 + $0x17c] sm:$0xf]
      %v4512 = vunpack.c.l.b16 %v4432
      %v4513 = vunpack.c.l.b16 %v4433
      %v4514 = vunpack.c.l.b16 %v4434
      %v4515 = vunpack.c.l.b16 %v4435
      %v4516 = vunpack.c.l.b16 %v4436
      %v4517 = vunpack.c.l.b16 %v4437
      %v4518 = vunpack.c.l.b16 %v4438
      %v4519 = vunpack.c.l.b16 %v4439
      %v4520 = vunpack.c.l.b16 %v4440
      %v4521 = vunpack.c.l.b16 %v4441
      %v4522 = vunpack.c.l.b16 %v4442
      %v4523 = vunpack.c.l.b16 %v4443
      %v4524 = vunpack.c.l.b16 %v4444
      %v4525 = vunpack.c.l.b16 %v4445
      %v4526 = vunpack.c.l.b16 %v4446
      %v4527 = vunpack.c.l.b16 %v4447
      %v4528 = vunpack.c.l.b16 %v4448
      %v4529 = vunpack.c.l.b16 %v4449
      %v4530 = vunpack.c.l.b16 %v4450
      %v4531 = vunpack.c.l.b16 %v4451
      %v4532 = vunpack.c.l.b16 %v4452
      %v4533 = vunpack.c.l.b16 %v4453
      %v4534 = vunpack.c.l.b16 %v4454
      %v4535 = vunpack.c.l.b16 %v4455
      %v4536 = vunpack.c.l.b16 %v4456
      %v4537 = vunpack.c.l.b16 %v4457
      %v4538 = vunpack.c.l.b16 %v4458
      %v4539 = vunpack.c.l.b16 %v4459
      %v4540 = vunpack.c.l.b16 %v4460
      %v4541 = vunpack.c.l.b16 %v4461
      %v4542 = vunpack.c.l.b16 %v4462
      %v4543 = vunpack.c.l.b16 %v4463
      %v4544 = vpack.c.b16 %v4513, %v4512
      %v4545 = vpack.c.b16 %v4515, %v4514
      %v4546 = vpack.c.b16 %v4517, %v4516
      %v4547 = vpack.c.b16 %v4519, %v4518
      %v4548 = vpack.c.b16 %v4521, %v4520
      %v4549 = vpack.c.b16 %v4523, %v4522
      %v4550 = vpack.c.b16 %v4525, %v4524
      %v4551 = vpack.c.b16 %v4527, %v4526
      %v4552 = vpack.c.b16 %v4529, %v4528
      %v4553 = vpack.c.b16 %v4531, %v4530
      %v4554 = vpack.c.b16 %v4533, %v4532
      %v4555 = vpack.c.b16 %v4535, %v4534
      %v4556 = vpack.c.b16 %v4537, %v4536
      %v4557 = vpack.c.b16 %v4539, %v4538
      %v4558 = vpack.c.b16 %v4541, %v4540
      %v4559 = vpack.c.b16 %v4543, %v4542
      %v4592 = vunpack.c.l.b16 %v4464
      %v4593 = vunpack.c.l.b16 %v4465
      %v4594 = vunpack.c.l.b16 %v4466
      %v4595 = vunpack.c.l.b16 %v4467
      %v4596 = vunpack.c.l.b16 %v4468
      %v4597 = vunpack.c.l.b16 %v4469
      %v4598 = vunpack.c.l.b16 %v4470
      %v4599 = vunpack.c.l.b16 %v4471
      %v4600 = vunpack.c.l.b16 %v4472
      %v4601 = vunpack.c.l.b16 %v4473
      %v4602 = vunpack.c.l.b16 %v4474
      %v4603 = vunpack.c.l.b16 %v4475
      %v4604 = vunpack.c.l.b16 %v4476
      %v4605 = vunpack.c.l.b16 %v4477
      %v4606 = vunpack.c.l.b16 %v4478
      %v4607 = vunpack.c.l.b16 %v4479
      %v4608 = vpack.c.b16 %v4593, %v4592
      %v4609 = vpack.c.b16 %v4595, %v4594
      %v4610 = vpack.c.b16 %v4597, %v4596
      %v4611 = vpack.c.b16 %v4599, %v4598
      %v4612 = vpack.c.b16 %v4601, %v4600
      %v4613 = vpack.c.b16 %v4603, %v4602
      %v4614 = vpack.c.b16 %v4605, %v4604
      %v4615 = vpack.c.b16 %v4607, %v4606
      %4624 = vmatpush.bf16.msra.mxu0 %v4615
      %4625 = vmatpush.bf16.msra.mxu0 %v4614
      %4626 = vmatpush.bf16.msra.mxu0 %v4613
      %4627 = vmatpush.bf16.msra.mxu0 %v4612
      %4628 = vmatpush.bf16.msra.mxu0 %v4611
      %4629 = vmatpush.bf16.msra.mxu0 %v4610
      %4630 = vmatpush.bf16.msra.mxu0 %v4609
      %4631 = vmatpush.bf16.msra.mxu0 %v4608
      %4632 = vmatmul.bf16.gmra.mxu0 %v4544
      %v4633 = vpop.f32.mrf.mxu0
      %v4634 = vadd.f32 0.0, %v4633
      %v4635 = vpop.f32.mrf.mxu0
      %v4636 = vadd.f32 0.0, %v4635
      %4637 = vmatmul.bf16.gmra.mxu0 %v4545
      %v4638 = vpop.f32.mrf.mxu0
      %v4639 = vadd.f32 0.0, %v4638
      %v4640 = vpop.f32.mrf.mxu0
      %v4641 = vadd.f32 0.0, %v4640
      %4642 = vmatmul.bf16.gmra.mxu0 %v4546
      %v4643 = vpop.f32.mrf.mxu0
      %v4644 = vadd.f32 0.0, %v4643
      %v4645 = vpop.f32.mrf.mxu0
      %v4646 = vadd.f32 0.0, %v4645
      %4647 = vmatmul.bf16.gmra.mxu0 %v4547
      %v4648 = vpop.f32.mrf.mxu0
      %v4649 = vadd.f32 0.0, %v4648
      %v4650 = vpop.f32.mrf.mxu0
      %v4651 = vadd.f32 0.0, %v4650
      %4652 = vmatmul.bf16.gmra.mxu0 %v4548
      %v4653 = vpop.f32.mrf.mxu0
      %v4654 = vadd.f32 0.0, %v4653
      %v4655 = vpop.f32.mrf.mxu0
      %v4656 = vadd.f32 0.0, %v4655
      %4657 = vmatmul.bf16.gmra.mxu0 %v4549
      %v4658 = vpop.f32.mrf.mxu0
      %v4659 = vadd.f32 0.0, %v4658
      %v4660 = vpop.f32.mrf.mxu0
      %v4661 = vadd.f32 0.0, %v4660
      %4662 = vmatmul.bf16.gmra.mxu0 %v4550
      %v4663 = vpop.f32.mrf.mxu0
      %v4664 = vadd.f32 0.0, %v4663
      %v4665 = vpop.f32.mrf.mxu0
      %v4666 = vadd.f32 0.0, %v4665
      %4667 = vmatmul.bf16.gmra.mxu0 %v4551
      %v4668 = vpop.f32.mrf.mxu0
      %v4669 = vadd.f32 0.0, %v4668
      %v4670 = vpop.f32.mrf.mxu0
      %v4671 = vadd.f32 0.0, %v4670
      %4672 = vmatmul.bf16.gmra.mxu0 %v4552
      %v4673 = vpop.f32.mrf.mxu0
      %v4674 = vadd.f32 0.0, %v4673
      %v4675 = vpop.f32.mrf.mxu0
      %v4676 = vadd.f32 0.0, %v4675
      %4677 = vmatmul.bf16.gmra.mxu0 %v4553
      %v4678 = vpop.f32.mrf.mxu0
      %v4679 = vadd.f32 0.0, %v4678
      %v4680 = vpop.f32.mrf.mxu0
      %v4681 = vadd.f32 0.0, %v4680
      %4682 = vmatmul.bf16.gmra.mxu0 %v4554
      %v4683 = vpop.f32.mrf.mxu0
      %v4684 = vadd.f32 0.0, %v4683
      %v4685 = vpop.f32.mrf.mxu0
      %v4686 = vadd.f32 0.0, %v4685
      %4687 = vmatmul.bf16.gmra.mxu0 %v4555
      %v4688 = vpop.f32.mrf.mxu0
      %v4689 = vadd.f32 0.0, %v4688
      %v4690 = vpop.f32.mrf.mxu0
      %v4691 = vadd.f32 0.0, %v4690
      %4692 = vmatmul.bf16.gmra.mxu0 %v4556
      %v4693 = vpop.f32.mrf.mxu0
      %v4694 = vadd.f32 0.0, %v4693
      %v4695 = vpop.f32.mrf.mxu0
      %v4696 = vadd.f32 0.0, %v4695
      %4697 = vmatmul.bf16.gmra.mxu0 %v4557
      %v4698 = vpop.f32.mrf.mxu0
      %v4699 = vadd.f32 0.0, %v4698
      %v4700 = vpop.f32.mrf.mxu0
      %v4701 = vadd.f32 0.0, %v4700
      %4702 = vmatmul.bf16.gmra.mxu0 %v4558
      %v4703 = vpop.f32.mrf.mxu0
      %v4704 = vadd.f32 0.0, %v4703
      %v4705 = vpop.f32.mrf.mxu0
      %v4706 = vadd.f32 0.0, %v4705
      %4707 = vmatmul.bf16.gmra.mxu0 %v4559
      %v4708 = vpop.f32.mrf.mxu0
      %v4709 = vadd.f32 0.0, %v4708
      %v4710 = vpop.f32.mrf.mxu0
      %v4711 = vadd.f32 0.0, %v4710
      %4712 = vdwg.mxu0
      %v4713 = vadd.f32 %v4400, %v4634
      %v4714 = vadd.f32 %v4401, %v4636
      %v4715 = vadd.f32 %v4402, %v4639
      %v4716 = vadd.f32 %v4403, %v4641
      %v4717 = vadd.f32 %v4404, %v4644
      %v4718 = vadd.f32 %v4405, %v4646
      %v4719 = vadd.f32 %v4406, %v4649
      %v4720 = vadd.f32 %v4407, %v4651
      %v4721 = vadd.f32 %v4408, %v4654
      %v4722 = vadd.f32 %v4409, %v4656
      %v4723 = vadd.f32 %v4410, %v4659
      %v4724 = vadd.f32 %v4411, %v4661
      %v4725 = vadd.f32 %v4412, %v4664
      %v4726 = vadd.f32 %v4413, %v4666
      %v4727 = vadd.f32 %v4414, %v4669
      %v4728 = vadd.f32 %v4415, %v4671
      %v4729 = vadd.f32 %v4416, %v4674
      %v4730 = vadd.f32 %v4417, %v4676
      %v4731 = vadd.f32 %v4418, %v4679
      %v4732 = vadd.f32 %v4419, %v4681
      %v4733 = vadd.f32 %v4420, %v4684
      %v4734 = vadd.f32 %v4421, %v4686
      %v4735 = vadd.f32 %v4422, %v4689
      %v4736 = vadd.f32 %v4423, %v4691
      %v4737 = vadd.f32 %v4424, %v4694
      %v4738 = vadd.f32 %v4425, %v4696
      %v4739 = vadd.f32 %v4426, %v4699
      %v4740 = vadd.f32 %v4427, %v4701
      %v4741 = vadd.f32 %v4428, %v4704
      %v4742 = vadd.f32 %v4429, %v4706
      %v4743 = vadd.f32 %v4430, %v4709
      %v4744 = vadd.f32 %v4431, %v4711
      %v4745 = vld [vmem:[#allocation3 + $0x10] sm:$0xf]
      %v4746 = vld [vmem:[#allocation3 + $0x14] sm:$0xf]
      %v4747 = vld [vmem:[#allocation3 + $0x18] sm:$0xf]
      %v4748 = vld [vmem:[#allocation3 + $0x1c] sm:$0xf]
      %v4749 = vld [vmem:[#allocation3 + $0x20] sm:$0xf]
      %v4750 = vld [vmem:[#allocation3 + $0x24] sm:$0xf]
      %v4751 = vld [vmem:[#allocation3 + $0x28] sm:$0xf]
      %v4752 = vld [vmem:[#allocation3 + $0x2c] sm:$0xf]
      %v4753 = vld [vmem:[#allocation3 + $0x30] sm:$0xf]
      %v4754 = vld [vmem:[#allocation3 + $0x34] sm:$0xf]
      %v4755 = vld [vmem:[#allocation3 + $0x38] sm:$0xf]
      %v4756 = vld [vmem:[#allocation3 + $0x3c] sm:$0xf]
      %v4757 = vld [vmem:[#allocation3 + $0x40] sm:$0xf]
      %v4758 = vld [vmem:[#allocation3 + $0x44] sm:$0xf]
      %v4759 = vld [vmem:[#allocation3 + $0x48] sm:$0xf]
      %v4760 = vld [vmem:[#allocation3 + $0x4c] sm:$0xf]
      %v4761 = vld [vmem:[#allocation3 + $0x50] sm:$0xf]
      %v4762 = vld [vmem:[#allocation3 + $0x54] sm:$0xf]
      %v4763 = vld [vmem:[#allocation3 + $0x58] sm:$0xf]
      %v4764 = vld [vmem:[#allocation3 + $0x5c] sm:$0xf]
      %v4765 = vld [vmem:[#allocation3 + $0x60] sm:$0xf]
      %v4766 = vld [vmem:[#allocation3 + $0x64] sm:$0xf]
      %v4767 = vld [vmem:[#allocation3 + $0x68] sm:$0xf]
      %v4768 = vld [vmem:[#allocation3 + $0x6c] sm:$0xf]
      %v4769 = vld [vmem:[#allocation3 + $0x70] sm:$0xf]
      %v4770 = vld [vmem:[#allocation3 + $0x74] sm:$0xf]
      %v4771 = vld [vmem:[#allocation3 + $0x78] sm:$0xf]
      %v4772 = vld [vmem:[#allocation3 + $0x7c] sm:$0xf]
      %v4773 = vld [vmem:[#allocation3 + $0x80] sm:$0xf]
      %v4774 = vld [vmem:[#allocation3 + $0x84] sm:$0xf]
      %v4775 = vld [vmem:[#allocation3 + $0x88] sm:$0xf]
      %v4776 = vld [vmem:[#allocation3 + $0x8c] sm:$0xf]
      %v4777 = vld [vmem:[%s4 + $0x180] sm:$0xf]
      %v4778 = vld [vmem:[%s4 + $0x184] sm:$0xf]
      %v4779 = vld [vmem:[%s4 + $0x188] sm:$0xf]
      %v4780 = vld [vmem:[%s4 + $0x18c] sm:$0xf]
      %v4781 = vld [vmem:[%s4 + $0x190] sm:$0xf]
      %v4782 = vld [vmem:[%s4 + $0x194] sm:$0xf]
      %v4783 = vld [vmem:[%s4 + $0x198] sm:$0xf]
      %v4784 = vld [vmem:[%s4 + $0x19c] sm:$0xf]
      %v4785 = vld [vmem:[%s4 + $0x1a0] sm:$0xf]
      %v4786 = vld [vmem:[%s4 + $0x1a4] sm:$0xf]
      %v4787 = vld [vmem:[%s4 + $0x1a8] sm:$0xf]
      %v4788 = vld [vmem:[%s4 + $0x1ac] sm:$0xf]
      %v4789 = vld [vmem:[%s4 + $0x1b0] sm:$0xf]
      %v4790 = vld [vmem:[%s4 + $0x1b4] sm:$0xf]
      %v4791 = vld [vmem:[%s4 + $0x1b8] sm:$0xf]
      %v4792 = vld [vmem:[%s4 + $0x1bc] sm:$0xf]
      %v4825 = vunpack.c.l.b16 %v4745
      %v4826 = vunpack.c.l.b16 %v4746
      %v4827 = vunpack.c.l.b16 %v4747
      %v4828 = vunpack.c.l.b16 %v4748
      %v4829 = vunpack.c.l.b16 %v4749
      %v4830 = vunpack.c.l.b16 %v4750
      %v4831 = vunpack.c.l.b16 %v4751
      %v4832 = vunpack.c.l.b16 %v4752
      %v4833 = vunpack.c.l.b16 %v4753
      %v4834 = vunpack.c.l.b16 %v4754
      %v4835 = vunpack.c.l.b16 %v4755
      %v4836 = vunpack.c.l.b16 %v4756
      %v4837 = vunpack.c.l.b16 %v4757
      %v4838 = vunpack.c.l.b16 %v4758
      %v4839 = vunpack.c.l.b16 %v4759
      %v4840 = vunpack.c.l.b16 %v4760
      %v4841 = vunpack.c.l.b16 %v4761
      %v4842 = vunpack.c.l.b16 %v4762
      %v4843 = vunpack.c.l.b16 %v4763
      %v4844 = vunpack.c.l.b16 %v4764
      %v4845 = vunpack.c.l.b16 %v4765
      %v4846 = vunpack.c.l.b16 %v4766
      %v4847 = vunpack.c.l.b16 %v4767
      %v4848 = vunpack.c.l.b16 %v4768
      %v4849 = vunpack.c.l.b16 %v4769
      %v4850 = vunpack.c.l.b16 %v4770
      %v4851 = vunpack.c.l.b16 %v4771
      %v4852 = vunpack.c.l.b16 %v4772
      %v4853 = vunpack.c.l.b16 %v4773
      %v4854 = vunpack.c.l.b16 %v4774
      %v4855 = vunpack.c.l.b16 %v4775
      %v4856 = vunpack.c.l.b16 %v4776
      %v4857 = vpack.c.b16 %v4826, %v4825
      %v4858 = vpack.c.b16 %v4828, %v4827
      %v4859 = vpack.c.b16 %v4830, %v4829
      %v4860 = vpack.c.b16 %v4832, %v4831
      %v4861 = vpack.c.b16 %v4834, %v4833
      %v4862 = vpack.c.b16 %v4836, %v4835
      %v4863 = vpack.c.b16 %v4838, %v4837
      %v4864 = vpack.c.b16 %v4840, %v4839
      %v4865 = vpack.c.b16 %v4842, %v4841
      %v4866 = vpack.c.b16 %v4844, %v4843
      %v4867 = vpack.c.b16 %v4846, %v4845
      %v4868 = vpack.c.b16 %v4848, %v4847
      %v4869 = vpack.c.b16 %v4850, %v4849
      %v4870 = vpack.c.b16 %v4852, %v4851
      %v4871 = vpack.c.b16 %v4854, %v4853
      %v4872 = vpack.c.b16 %v4856, %v4855
      %v4905 = vunpack.c.l.b16 %v4777
      %v4906 = vunpack.c.l.b16 %v4778
      %v4907 = vunpack.c.l.b16 %v4779
      %v4908 = vunpack.c.l.b16 %v4780
      %v4909 = vunpack.c.l.b16 %v4781
      %v4910 = vunpack.c.l.b16 %v4782
      %v4911 = vunpack.c.l.b16 %v4783
      %v4912 = vunpack.c.l.b16 %v4784
      %v4913 = vunpack.c.l.b16 %v4785
      %v4914 = vunpack.c.l.b16 %v4786
      %v4915 = vunpack.c.l.b16 %v4787
      %v4916 = vunpack.c.l.b16 %v4788
      %v4917 = vunpack.c.l.b16 %v4789
      %v4918 = vunpack.c.l.b16 %v4790
      %v4919 = vunpack.c.l.b16 %v4791
      %v4920 = vunpack.c.l.b16 %v4792
      %v4921 = vpack.c.b16 %v4906, %v4905
      %v4922 = vpack.c.b16 %v4908, %v4907
      %v4923 = vpack.c.b16 %v4910, %v4909
      %v4924 = vpack.c.b16 %v4912, %v4911
      %v4925 = vpack.c.b16 %v4914, %v4913
      %v4926 = vpack.c.b16 %v4916, %v4915
      %v4927 = vpack.c.b16 %v4918, %v4917
      %v4928 = vpack.c.b16 %v4920, %v4919
      %4937 = vmatpush.bf16.msra.mxu0 %v4928
      %4938 = vmatpush.bf16.msra.mxu0 %v4927
      %4939 = vmatpush.bf16.msra.mxu0 %v4926
      %4940 = vmatpush.bf16.msra.mxu0 %v4925
      %4941 = vmatpush.bf16.msra.mxu0 %v4924
      %4942 = vmatpush.bf16.msra.mxu0 %v4923
      %4943 = vmatpush.bf16.msra.mxu0 %v4922
      %4944 = vmatpush.bf16.msra.mxu0 %v4921
      %4945 = vmatmul.bf16.gmra.mxu0 %v4857
      %v4946 = vpop.f32.mrf.mxu0
      %v4947 = vadd.f32 0.0, %v4946
      %v4948 = vpop.f32.mrf.mxu0
      %v4949 = vadd.f32 0.0, %v4948
      %4950 = vmatmul.bf16.gmra.mxu0 %v4858
      %v4951 = vpop.f32.mrf.mxu0
      %v4952 = vadd.f32 0.0, %v4951
      %v4953 = vpop.f32.mrf.mxu0
      %v4954 = vadd.f32 0.0, %v4953
      %4955 = vmatmul.bf16.gmra.mxu0 %v4859
      %v4956 = vpop.f32.mrf.mxu0
      %v4957 = vadd.f32 0.0, %v4956
      %v4958 = vpop.f32.mrf.mxu0
      %v4959 = vadd.f32 0.0, %v4958
      %4960 = vmatmul.bf16.gmra.mxu0 %v4860
      %v4961 = vpop.f32.mrf.mxu0
      %v4962 = vadd.f32 0.0, %v4961
      %v4963 = vpop.f32.mrf.mxu0
      %v4964 = vadd.f32 0.0, %v4963
      %4965 = vmatmul.bf16.gmra.mxu0 %v4861
      %v4966 = vpop.f32.mrf.mxu0
      %v4967 = vadd.f32 0.0, %v4966
      %v4968 = vpop.f32.mrf.mxu0
      %v4969 = vadd.f32 0.0, %v4968
      %4970 = vmatmul.bf16.gmra.mxu0 %v4862
      %v4971 = vpop.f32.mrf.mxu0
      %v4972 = vadd.f32 0.0, %v4971
      %v4973 = vpop.f32.mrf.mxu0
      %v4974 = vadd.f32 0.0, %v4973
      %4975 = vmatmul.bf16.gmra.mxu0 %v4863
      %v4976 = vpop.f32.mrf.mxu0
      %v4977 = vadd.f32 0.0, %v4976
      %v4978 = vpop.f32.mrf.mxu0
      %v4979 = vadd.f32 0.0, %v4978
      %4980 = vmatmul.bf16.gmra.mxu0 %v4864
      %v4981 = vpop.f32.mrf.mxu0
      %v4982 = vadd.f32 0.0, %v4981
      %v4983 = vpop.f32.mrf.mxu0
      %v4984 = vadd.f32 0.0, %v4983
      %4985 = vmatmul.bf16.gmra.mxu0 %v4865
      %v4986 = vpop.f32.mrf.mxu0
      %v4987 = vadd.f32 0.0, %v4986
      %v4988 = vpop.f32.mrf.mxu0
      %v4989 = vadd.f32 0.0, %v4988
      %4990 = vmatmul.bf16.gmra.mxu0 %v4866
      %v4991 = vpop.f32.mrf.mxu0
      %v4992 = vadd.f32 0.0, %v4991
      %v4993 = vpop.f32.mrf.mxu0
      %v4994 = vadd.f32 0.0, %v4993
      %4995 = vmatmul.bf16.gmra.mxu0 %v4867
      %v4996 = vpop.f32.mrf.mxu0
      %v4997 = vadd.f32 0.0, %v4996
      %v4998 = vpop.f32.mrf.mxu0
      %v4999 = vadd.f32 0.0, %v4998
      %5000 = vmatmul.bf16.gmra.mxu0 %v4868
      %v5001 = vpop.f32.mrf.mxu0
      %v5002 = vadd.f32 0.0, %v5001
      %v5003 = vpop.f32.mrf.mxu0
      %v5004 = vadd.f32 0.0, %v5003
      %5005 = vmatmul.bf16.gmra.mxu0 %v4869
      %v5006 = vpop.f32.mrf.mxu0
      %v5007 = vadd.f32 0.0, %v5006
      %v5008 = vpop.f32.mrf.mxu0
      %v5009 = vadd.f32 0.0, %v5008
      %5010 = vmatmul.bf16.gmra.mxu0 %v4870
      %v5011 = vpop.f32.mrf.mxu0
      %v5012 = vadd.f32 0.0, %v5011
      %v5013 = vpop.f32.mrf.mxu0
      %v5014 = vadd.f32 0.0, %v5013
      %5015 = vmatmul.bf16.gmra.mxu0 %v4871
      %v5016 = vpop.f32.mrf.mxu0
      %v5017 = vadd.f32 0.0, %v5016
      %v5018 = vpop.f32.mrf.mxu0
      %v5019 = vadd.f32 0.0, %v5018
      %5020 = vmatmul.bf16.gmra.mxu0 %v4872
      %v5021 = vpop.f32.mrf.mxu0
      %v5022 = vadd.f32 0.0, %v5021
      %v5023 = vpop.f32.mrf.mxu0
      %v5024 = vadd.f32 0.0, %v5023
      %5025 = vdwg.mxu0
      %v5026 = vadd.f32 %v4713, %v4947
      %v5027 = vadd.f32 %v4714, %v4949
      %v5028 = vadd.f32 %v4715, %v4952
      %v5029 = vadd.f32 %v4716, %v4954
      %v5030 = vadd.f32 %v4717, %v4957
      %v5031 = vadd.f32 %v4718, %v4959
      %v5032 = vadd.f32 %v4719, %v4962
      %v5033 = vadd.f32 %v4720, %v4964
      %v5034 = vadd.f32 %v4721, %v4967
      %v5035 = vadd.f32 %v4722, %v4969
      %v5036 = vadd.f32 %v4723, %v4972
      %v5037 = vadd.f32 %v4724, %v4974
      %v5038 = vadd.f32 %v4725, %v4977
      %v5039 = vadd.f32 %v4726, %v4979
      %v5040 = vadd.f32 %v4727, %v4982
      %v5041 = vadd.f32 %v4728, %v4984
      %v5042 = vadd.f32 %v4729, %v4987
      %v5043 = vadd.f32 %v4730, %v4989
      %v5044 = vadd.f32 %v4731, %v4992
      %v5045 = vadd.f32 %v4732, %v4994
      %v5046 = vadd.f32 %v4733, %v4997
      %v5047 = vadd.f32 %v4734, %v4999
      %v5048 = vadd.f32 %v4735, %v5002
      %v5049 = vadd.f32 %v4736, %v5004
      %v5050 = vadd.f32 %v4737, %v5007
      %v5051 = vadd.f32 %v4738, %v5009
      %v5052 = vadd.f32 %v4739, %v5012
      %v5053 = vadd.f32 %v4740, %v5014
      %v5054 = vadd.f32 %v4741, %v5017
      %v5055 = vadd.f32 %v4742, %v5019
      %v5056 = vadd.f32 %v4743, %v5022
      %v5057 = vadd.f32 %v4744, %v5024
      %v5058 = vld [vmem:[#allocation2 + $0x14] sm:$0xf]
      %v5059 = vld [vmem:[#allocation2 + $0x18] sm:$0xf]
      %v5060 = vld [vmem:[#allocation2 + $0x1c] sm:$0xf]
      %v5061 = vld [vmem:[#allocation2 + $0x20] sm:$0xf]
      %v5062 = vld [vmem:[#allocation2 + $0x24] sm:$0xf]
      %v5063 = vld [vmem:[#allocation2 + $0x28] sm:$0xf]
      %v5064 = vld [vmem:[#allocation2 + $0x2c] sm:$0xf]
      %v5065 = vld [vmem:[#allocation2 + $0x30] sm:$0xf]
      %v5066 = vld [vmem:[#allocation2 + $0x34] sm:$0xf]
      %v5067 = vld [vmem:[#allocation2 + $0x38] sm:$0xf]
      %v5068 = vld [vmem:[#allocation2 + $0x3c] sm:$0xf]
      %v5069 = vld [vmem:[#allocation2 + $0x40] sm:$0xf]
      %v5070 = vld [vmem:[#allocation2 + $0x44] sm:$0xf]
      %v5071 = vld [vmem:[#allocation2 + $0x48] sm:$0xf]
      %v5072 = vld [vmem:[#allocation2 + $0x4c] sm:$0xf]
      %v5073 = vld [vmem:[#allocation2 + $0x50] sm:$0xf]
      %v5074 = vld [vmem:[#allocation2 + $0x54] sm:$0xf]
      %v5075 = vld [vmem:[#allocation2 + $0x58] sm:$0xf]
      %v5076 = vld [vmem:[#allocation2 + $0x5c] sm:$0xf]
      %v5077 = vld [vmem:[#allocation2 + $0x60] sm:$0xf]
      %v5078 = vld [vmem:[#allocation2 + $0x64] sm:$0xf]
      %v5079 = vld [vmem:[#allocation2 + $0x68] sm:$0xf]
      %v5080 = vld [vmem:[#allocation2 + $0x6c] sm:$0xf]
      %v5081 = vld [vmem:[#allocation2 + $0x70] sm:$0xf]
      %v5082 = vld [vmem:[#allocation2 + $0x74] sm:$0xf]
      %v5083 = vld [vmem:[#allocation2 + $0x78] sm:$0xf]
      %v5084 = vld [vmem:[#allocation2 + $0x7c] sm:$0xf]
      %v5085 = vld [vmem:[#allocation2 + $0x80] sm:$0xf]
      %v5086 = vld [vmem:[#allocation2 + $0x84] sm:$0xf]
      %v5087 = vld [vmem:[#allocation2 + $0x88] sm:$0xf]
      %v5088 = vld [vmem:[#allocation2 + $0x8c] sm:$0xf]
      %v5089 = vld [vmem:[#allocation2 + $0x90] sm:$0xf]
      %v5090 = vld [vmem:[%s4 + $0x1c0] sm:$0xf]
      %v5091 = vld [vmem:[%s4 + $0x1c4] sm:$0xf]
      %v5092 = vld [vmem:[%s4 + $0x1c8] sm:$0xf]
      %v5093 = vld [vmem:[%s4 + $0x1cc] sm:$0xf]
      %v5094 = vld [vmem:[%s4 + $0x1d0] sm:$0xf]
      %v5095 = vld [vmem:[%s4 + $0x1d4] sm:$0xf]
      %v5096 = vld [vmem:[%s4 + $0x1d8] sm:$0xf]
      %v5097 = vld [vmem:[%s4 + $0x1dc] sm:$0xf]
      %v5098 = vld [vmem:[%s4 + $0x1e0] sm:$0xf]
      %v5099 = vld [vmem:[%s4 + $0x1e4] sm:$0xf]
      %v5100 = vld [vmem:[%s4 + $0x1e8] sm:$0xf]
      %v5101 = vld [vmem:[%s4 + $0x1ec] sm:$0xf]
      %v5102 = vld [vmem:[%s4 + $0x1f0] sm:$0xf]
      %v5103 = vld [vmem:[%s4 + $0x1f4] sm:$0xf]
      %v5104 = vld [vmem:[%s4 + $0x1f8] sm:$0xf]
      %v5105 = vld [vmem:[%s4 + $0x1fc] sm:$0xf]
      %v5138 = vunpack.c.l.b16 %v5058
      %v5139 = vunpack.c.l.b16 %v5059
      %v5140 = vunpack.c.l.b16 %v5060
      %v5141 = vunpack.c.l.b16 %v5061
      %v5142 = vunpack.c.l.b16 %v5062
      %v5143 = vunpack.c.l.b16 %v5063
      %v5144 = vunpack.c.l.b16 %v5064
      %v5145 = vunpack.c.l.b16 %v5065
      %v5146 = vunpack.c.l.b16 %v5066
      %v5147 = vunpack.c.l.b16 %v5067
      %v5148 = vunpack.c.l.b16 %v5068
      %v5149 = vunpack.c.l.b16 %v5069
      %v5150 = vunpack.c.l.b16 %v5070
      %v5151 = vunpack.c.l.b16 %v5071
      %v5152 = vunpack.c.l.b16 %v5072
      %v5153 = vunpack.c.l.b16 %v5073
      %v5154 = vunpack.c.l.b16 %v5074
      %v5155 = vunpack.c.l.b16 %v5075
      %v5156 = vunpack.c.l.b16 %v5076
      %v5157 = vunpack.c.l.b16 %v5077
      %v5158 = vunpack.c.l.b16 %v5078
      %v5159 = vunpack.c.l.b16 %v5079
      %v5160 = vunpack.c.l.b16 %v5080
      %v5161 = vunpack.c.l.b16 %v5081
      %v5162 = vunpack.c.l.b16 %v5082
      %v5163 = vunpack.c.l.b16 %v5083
      %v5164 = vunpack.c.l.b16 %v5084
      %v5165 = vunpack.c.l.b16 %v5085
      %v5166 = vunpack.c.l.b16 %v5086
      %v5167 = vunpack.c.l.b16 %v5087
      %v5168 = vunpack.c.l.b16 %v5088
      %v5169 = vunpack.c.l.b16 %v5089
      %v5170 = vpack.c.b16 %v5139, %v5138
      %v5171 = vpack.c.b16 %v5141, %v5140
      %v5172 = vpack.c.b16 %v5143, %v5142
      %v5173 = vpack.c.b16 %v5145, %v5144
      %v5174 = vpack.c.b16 %v5147, %v5146
      %v5175 = vpack.c.b16 %v5149, %v5148
      %v5176 = vpack.c.b16 %v5151, %v5150
      %v5177 = vpack.c.b16 %v5153, %v5152
      %v5178 = vpack.c.b16 %v5155, %v5154
      %v5179 = vpack.c.b16 %v5157, %v5156
      %v5180 = vpack.c.b16 %v5159, %v5158
      %v5181 = vpack.c.b16 %v5161, %v5160
      %v5182 = vpack.c.b16 %v5163, %v5162
      %v5183 = vpack.c.b16 %v5165, %v5164
      %v5184 = vpack.c.b16 %v5167, %v5166
      %v5185 = vpack.c.b16 %v5169, %v5168
      %v5218 = vunpack.c.l.b16 %v5090
      %v5219 = vunpack.c.l.b16 %v5091
      %v5220 = vunpack.c.l.b16 %v5092
      %v5221 = vunpack.c.l.b16 %v5093
      %v5222 = vunpack.c.l.b16 %v5094
      %v5223 = vunpack.c.l.b16 %v5095
      %v5224 = vunpack.c.l.b16 %v5096
      %v5225 = vunpack.c.l.b16 %v5097
      %v5226 = vunpack.c.l.b16 %v5098
      %v5227 = vunpack.c.l.b16 %v5099
      %v5228 = vunpack.c.l.b16 %v5100
      %v5229 = vunpack.c.l.b16 %v5101
      %v5230 = vunpack.c.l.b16 %v5102
      %v5231 = vunpack.c.l.b16 %v5103
      %v5232 = vunpack.c.l.b16 %v5104
      %v5233 = vunpack.c.l.b16 %v5105
      %v5234 = vpack.c.b16 %v5219, %v5218
      %v5235 = vpack.c.b16 %v5221, %v5220
      %v5236 = vpack.c.b16 %v5223, %v5222
      %v5237 = vpack.c.b16 %v5225, %v5224
      %v5238 = vpack.c.b16 %v5227, %v5226
      %v5239 = vpack.c.b16 %v5229, %v5228
      %v5240 = vpack.c.b16 %v5231, %v5230
      %v5241 = vpack.c.b16 %v5233, %v5232
      %5250 = vmatpush.bf16.msra.mxu0 %v5241
      %5251 = vmatpush.bf16.msra.mxu0 %v5240
      %5252 = vmatpush.bf16.msra.mxu0 %v5239
      %5253 = vmatpush.bf16.msra.mxu0 %v5238
      %5254 = vmatpush.bf16.msra.mxu0 %v5237
      %5255 = vmatpush.bf16.msra.mxu0 %v5236
      %5256 = vmatpush.bf16.msra.mxu0 %v5235
      %5257 = vmatpush.bf16.msra.mxu0 %v5234
      %5258 = vmatmul.bf16.gmra.mxu0 %v5170
      %v5259 = vpop.f32.mrf.mxu0
      %v5260 = vadd.f32 0.0, %v5259
      %v5261 = vpop.f32.mrf.mxu0
      %v5262 = vadd.f32 0.0, %v5261
      %5263 = vmatmul.bf16.gmra.mxu0 %v5171
      %v5264 = vpop.f32.mrf.mxu0
      %v5265 = vadd.f32 0.0, %v5264
      %v5266 = vpop.f32.mrf.mxu0
      %v5267 = vadd.f32 0.0, %v5266
      %5268 = vmatmul.bf16.gmra.mxu0 %v5172
      %v5269 = vpop.f32.mrf.mxu0
      %v5270 = vadd.f32 0.0, %v5269
      %v5271 = vpop.f32.mrf.mxu0
      %v5272 = vadd.f32 0.0, %v5271
      %5273 = vmatmul.bf16.gmra.mxu0 %v5173
      %v5274 = vpop.f32.mrf.mxu0
      %v5275 = vadd.f32 0.0, %v5274
      %v5276 = vpop.f32.mrf.mxu0
      %v5277 = vadd.f32 0.0, %v5276
      %5278 = vmatmul.bf16.gmra.mxu0 %v5174
      %v5279 = vpop.f32.mrf.mxu0
      %v5280 = vadd.f32 0.0, %v5279
      %v5281 = vpop.f32.mrf.mxu0
      %v5282 = vadd.f32 0.0, %v5281
      %5283 = vmatmul.bf16.gmra.mxu0 %v5175
      %v5284 = vpop.f32.mrf.mxu0
      %v5285 = vadd.f32 0.0, %v5284
      %v5286 = vpop.f32.mrf.mxu0
      %v5287 = vadd.f32 0.0, %v5286
      %5288 = vmatmul.bf16.gmra.mxu0 %v5176
      %v5289 = vpop.f32.mrf.mxu0
      %v5290 = vadd.f32 0.0, %v5289
      %v5291 = vpop.f32.mrf.mxu0
      %v5292 = vadd.f32 0.0, %v5291
      %5293 = vmatmul.bf16.gmra.mxu0 %v5177
      %v5294 = vpop.f32.mrf.mxu0
      %v5295 = vadd.f32 0.0, %v5294
      %v5296 = vpop.f32.mrf.mxu0
      %v5297 = vadd.f32 0.0, %v5296
      %5298 = vmatmul.bf16.gmra.mxu0 %v5178
      %v5299 = vpop.f32.mrf.mxu0
      %v5300 = vadd.f32 0.0, %v5299
      %v5301 = vpop.f32.mrf.mxu0
      %v5302 = vadd.f32 0.0, %v5301
      %5303 = vmatmul.bf16.gmra.mxu0 %v5179
      %v5304 = vpop.f32.mrf.mxu0
      %v5305 = vadd.f32 0.0, %v5304
      %v5306 = vpop.f32.mrf.mxu0
      %v5307 = vadd.f32 0.0, %v5306
      %5308 = vmatmul.bf16.gmra.mxu0 %v5180
      %v5309 = vpop.f32.mrf.mxu0
      %v5310 = vadd.f32 0.0, %v5309
      %v5311 = vpop.f32.mrf.mxu0
      %v5312 = vadd.f32 0.0, %v5311
      %5313 = vmatmul.bf16.gmra.mxu0 %v5181
      %v5314 = vpop.f32.mrf.mxu0
      %v5315 = vadd.f32 0.0, %v5314
      %v5316 = vpop.f32.mrf.mxu0
      %v5317 = vadd.f32 0.0, %v5316
      %5318 = vmatmul.bf16.gmra.mxu0 %v5182
      %v5319 = vpop.f32.mrf.mxu0
      %v5320 = vadd.f32 0.0, %v5319
      %v5321 = vpop.f32.mrf.mxu0
      %v5322 = vadd.f32 0.0, %v5321
      %5323 = vmatmul.bf16.gmra.mxu0 %v5183
      %v5324 = vpop.f32.mrf.mxu0
      %v5325 = vadd.f32 0.0, %v5324
      %v5326 = vpop.f32.mrf.mxu0
      %v5327 = vadd.f32 0.0, %v5326
      %5328 = vmatmul.bf16.gmra.mxu0 %v5184
      %v5329 = vpop.f32.mrf.mxu0
      %v5330 = vadd.f32 0.0, %v5329
      %v5331 = vpop.f32.mrf.mxu0
      %v5332 = vadd.f32 0.0, %v5331
      %5333 = vmatmul.bf16.gmra.mxu0 %v5185
      %v5334 = vpop.f32.mrf.mxu0
      %v5335 = vadd.f32 0.0, %v5334
      %v5336 = vpop.f32.mrf.mxu0
      %v5337 = vadd.f32 0.0, %v5336
      %5338 = vdwg.mxu0
      %v5339 = vadd.f32 %v5026, %v5260
      %v5340 = vadd.f32 %v5027, %v5262
      %v5341 = vadd.f32 %v5028, %v5265
      %v5342 = vadd.f32 %v5029, %v5267
      %v5343 = vadd.f32 %v5030, %v5270
      %v5344 = vadd.f32 %v5031, %v5272
      %v5345 = vadd.f32 %v5032, %v5275
      %v5346 = vadd.f32 %v5033, %v5277
      %v5347 = vadd.f32 %v5034, %v5280
      %v5348 = vadd.f32 %v5035, %v5282
      %v5349 = vadd.f32 %v5036, %v5285
      %v5350 = vadd.f32 %v5037, %v5287
      %v5351 = vadd.f32 %v5038, %v5290
      %v5352 = vadd.f32 %v5039, %v5292
      %v5353 = vadd.f32 %v5040, %v5295
      %v5354 = vadd.f32 %v5041, %v5297
      %v5355 = vadd.f32 %v5042, %v5300
      %v5356 = vadd.f32 %v5043, %v5302
      %v5357 = vadd.f32 %v5044, %v5305
      %v5358 = vadd.f32 %v5045, %v5307
      %v5359 = vadd.f32 %v5046, %v5310
      %v5360 = vadd.f32 %v5047, %v5312
      %v5361 = vadd.f32 %v5048, %v5315
      %v5362 = vadd.f32 %v5049, %v5317
      %v5363 = vadd.f32 %v5050, %v5320
      %v5364 = vadd.f32 %v5051, %v5322
      %v5365 = vadd.f32 %v5052, %v5325
      %v5366 = vadd.f32 %v5053, %v5327
      %v5367 = vadd.f32 %v5054, %v5330
      %v5368 = vadd.f32 %v5055, %v5332
      %v5369 = vadd.f32 %v5056, %v5335
      %v5370 = vadd.f32 %v5057, %v5337
      %v5371 = vld [vmem:[#allocation4 + $0x10] sm:$0xf]
      %v5372 = vld [vmem:[#allocation4 + $0x14] sm:$0xf]
      %v5373 = vld [vmem:[#allocation4 + $0x18] sm:$0xf]
      %v5374 = vld [vmem:[#allocation4 + $0x1c] sm:$0xf]
      %v5375 = vld [vmem:[#allocation4 + $0x20] sm:$0xf]
      %v5376 = vld [vmem:[#allocation4 + $0x24] sm:$0xf]
      %v5377 = vld [vmem:[#allocation4 + $0x28] sm:$0xf]
      %v5378 = vld [vmem:[#allocation4 + $0x2c] sm:$0xf]
      %v5379 = vld [vmem:[#allocation4 + $0x30] sm:$0xf]
      %v5380 = vld [vmem:[#allocation4 + $0x34] sm:$0xf]
      %v5381 = vld [vmem:[#allocation4 + $0x38] sm:$0xf]
      %v5382 = vld [vmem:[#allocation4 + $0x3c] sm:$0xf]
      %v5383 = vld [vmem:[#allocation4 + $0x40] sm:$0xf]
      %v5384 = vld [vmem:[#allocation4 + $0x44] sm:$0xf]
      %v5385 = vld [vmem:[#allocation4 + $0x48] sm:$0xf]
      %v5386 = vld [vmem:[#allocation4 + $0x4c] sm:$0xf]
      %v5387 = vld [vmem:[#allocation4 + $0x50] sm:$0xf]
      %v5388 = vld [vmem:[#allocation4 + $0x54] sm:$0xf]
      %v5389 = vld [vmem:[#allocation4 + $0x58] sm:$0xf]
      %v5390 = vld [vmem:[#allocation4 + $0x5c] sm:$0xf]
      %v5391 = vld [vmem:[#allocation4 + $0x60] sm:$0xf]
      %v5392 = vld [vmem:[#allocation4 + $0x64] sm:$0xf]
      %v5393 = vld [vmem:[#allocation4 + $0x68] sm:$0xf]
      %v5394 = vld [vmem:[#allocation4 + $0x6c] sm:$0xf]
      %v5395 = vld [vmem:[#allocation4 + $0x70] sm:$0xf]
      %v5396 = vld [vmem:[#allocation4 + $0x74] sm:$0xf]
      %v5397 = vld [vmem:[#allocation4 + $0x78] sm:$0xf]
      %v5398 = vld [vmem:[#allocation4 + $0x7c] sm:$0xf]
      %v5399 = vld [vmem:[#allocation4 + $0x80] sm:$0xf]
      %v5400 = vld [vmem:[#allocation4 + $0x84] sm:$0xf]
      %v5401 = vld [vmem:[#allocation4 + $0x88] sm:$0xf]
      %v5402 = vld [vmem:[#allocation4 + $0x8c] sm:$0xf]
      %v5403 = vld [vmem:[%s4 + $0x200] sm:$0xf]
      %v5404 = vld [vmem:[%s4 + $0x204] sm:$0xf]
      %v5405 = vld [vmem:[%s4 + $0x208] sm:$0xf]
      %v5406 = vld [vmem:[%s4 + $0x20c] sm:$0xf]
      %v5407 = vld [vmem:[%s4 + $0x210] sm:$0xf]
      %v5408 = vld [vmem:[%s4 + $0x214] sm:$0xf]
      %v5409 = vld [vmem:[%s4 + $0x218] sm:$0xf]
      %v5410 = vld [vmem:[%s4 + $0x21c] sm:$0xf]
      %v5411 = vld [vmem:[%s4 + $0x220] sm:$0xf]
      %v5412 = vld [vmem:[%s4 + $0x224] sm:$0xf]
      %v5413 = vld [vmem:[%s4 + $0x228] sm:$0xf]
      %v5414 = vld [vmem:[%s4 + $0x22c] sm:$0xf]
      %v5415 = vld [vmem:[%s4 + $0x230] sm:$0xf]
      %v5416 = vld [vmem:[%s4 + $0x234] sm:$0xf]
      %v5417 = vld [vmem:[%s4 + $0x238] sm:$0xf]
      %v5418 = vld [vmem:[%s4 + $0x23c] sm:$0xf]
      %v5451 = vunpack.c.l.b16 %v5371
      %v5452 = vunpack.c.l.b16 %v5372
      %v5453 = vunpack.c.l.b16 %v5373
      %v5454 = vunpack.c.l.b16 %v5374
      %v5455 = vunpack.c.l.b16 %v5375
      %v5456 = vunpack.c.l.b16 %v5376
      %v5457 = vunpack.c.l.b16 %v5377
      %v5458 = vunpack.c.l.b16 %v5378
      %v5459 = vunpack.c.l.b16 %v5379
      %v5460 = vunpack.c.l.b16 %v5380
      %v5461 = vunpack.c.l.b16 %v5381
      %v5462 = vunpack.c.l.b16 %v5382
      %v5463 = vunpack.c.l.b16 %v5383
      %v5464 = vunpack.c.l.b16 %v5384
      %v5465 = vunpack.c.l.b16 %v5385
      %v5466 = vunpack.c.l.b16 %v5386
      %v5467 = vunpack.c.l.b16 %v5387
      %v5468 = vunpack.c.l.b16 %v5388
      %v5469 = vunpack.c.l.b16 %v5389
      %v5470 = vunpack.c.l.b16 %v5390
      %v5471 = vunpack.c.l.b16 %v5391
      %v5472 = vunpack.c.l.b16 %v5392
      %v5473 = vunpack.c.l.b16 %v5393
      %v5474 = vunpack.c.l.b16 %v5394
      %v5475 = vunpack.c.l.b16 %v5395
      %v5476 = vunpack.c.l.b16 %v5396
      %v5477 = vunpack.c.l.b16 %v5397
      %v5478 = vunpack.c.l.b16 %v5398
      %v5479 = vunpack.c.l.b16 %v5399
      %v5480 = vunpack.c.l.b16 %v5400
      %v5481 = vunpack.c.l.b16 %v5401
      %v5482 = vunpack.c.l.b16 %v5402
      %v5483 = vpack.c.b16 %v5452, %v5451
      %v5484 = vpack.c.b16 %v5454, %v5453
      %v5485 = vpack.c.b16 %v5456, %v5455
      %v5486 = vpack.c.b16 %v5458, %v5457
      %v5487 = vpack.c.b16 %v5460, %v5459
      %v5488 = vpack.c.b16 %v5462, %v5461
      %v5489 = vpack.c.b16 %v5464, %v5463
      %v5490 = vpack.c.b16 %v5466, %v5465
      %v5491 = vpack.c.b16 %v5468, %v5467
      %v5492 = vpack.c.b16 %v5470, %v5469
      %v5493 = vpack.c.b16 %v5472, %v5471
      %v5494 = vpack.c.b16 %v5474, %v5473
      %v5495 = vpack.c.b16 %v5476, %v5475
      %v5496 = vpack.c.b16 %v5478, %v5477
      %v5497 = vpack.c.b16 %v5480, %v5479
      %v5498 = vpack.c.b16 %v5482, %v5481
      %v5531 = vunpack.c.l.b16 %v5403
      %v5532 = vunpack.c.l.b16 %v5404
      %v5533 = vunpack.c.l.b16 %v5405
      %v5534 = vunpack.c.l.b16 %v5406
      %v5535 = vunpack.c.l.b16 %v5407
      %v5536 = vunpack.c.l.b16 %v5408
      %v5537 = vunpack.c.l.b16 %v5409
      %v5538 = vunpack.c.l.b16 %v5410
      %v5539 = vunpack.c.l.b16 %v5411
      %v5540 = vunpack.c.l.b16 %v5412
      %v5541 = vunpack.c.l.b16 %v5413
      %v5542 = vunpack.c.l.b16 %v5414
      %v5543 = vunpack.c.l.b16 %v5415
      %v5544 = vunpack.c.l.b16 %v5416
      %v5545 = vunpack.c.l.b16 %v5417
      %v5546 = vunpack.c.l.b16 %v5418
      %v5547 = vpack.c.b16 %v5532, %v5531
      %v5548 = vpack.c.b16 %v5534, %v5533
      %v5549 = vpack.c.b16 %v5536, %v5535
      %v5550 = vpack.c.b16 %v5538, %v5537
      %v5551 = vpack.c.b16 %v5540, %v5539
      %v5552 = vpack.c.b16 %v5542, %v5541
      %v5553 = vpack.c.b16 %v5544, %v5543
      %v5554 = vpack.c.b16 %v5546, %v5545
      %5563 = vmatpush.bf16.msra.mxu0 %v5554
      %5564 = vmatpush.bf16.msra.mxu0 %v5553
      %5565 = vmatpush.bf16.msra.mxu0 %v5552
      %5566 = vmatpush.bf16.msra.mxu0 %v5551
      %5567 = vmatpush.bf16.msra.mxu0 %v5550
      %5568 = vmatpush.bf16.msra.mxu0 %v5549
      %5569 = vmatpush.bf16.msra.mxu0 %v5548
      %5570 = vmatpush.bf16.msra.mxu0 %v5547
      %5571 = vmatmul.bf16.gmra.mxu0 %v5483
      %v5572 = vpop.f32.mrf.mxu0
      %v5573 = vadd.f32 0.0, %v5572
      %v5574 = vpop.f32.mrf.mxu0
      %v5575 = vadd.f32 0.0, %v5574
      %5576 = vmatmul.bf16.gmra.mxu0 %v5484
      %v5577 = vpop.f32.mrf.mxu0
      %v5578 = vadd.f32 0.0, %v5577
      %v5579 = vpop.f32.mrf.mxu0
      %v5580 = vadd.f32 0.0, %v5579
      %5581 = vmatmul.bf16.gmra.mxu0 %v5485
      %v5582 = vpop.f32.mrf.mxu0
      %v5583 = vadd.f32 0.0, %v5582
      %v5584 = vpop.f32.mrf.mxu0
      %v5585 = vadd.f32 0.0, %v5584
      %5586 = vmatmul.bf16.gmra.mxu0 %v5486
      %v5587 = vpop.f32.mrf.mxu0
      %v5588 = vadd.f32 0.0, %v5587
      %v5589 = vpop.f32.mrf.mxu0
      %v5590 = vadd.f32 0.0, %v5589
      %5591 = vmatmul.bf16.gmra.mxu0 %v5487
      %v5592 = vpop.f32.mrf.mxu0
      %v5593 = vadd.f32 0.0, %v5592
      %v5594 = vpop.f32.mrf.mxu0
      %v5595 = vadd.f32 0.0, %v5594
      %5596 = vmatmul.bf16.gmra.mxu0 %v5488
      %v5597 = vpop.f32.mrf.mxu0
      %v5598 = vadd.f32 0.0, %v5597
      %v5599 = vpop.f32.mrf.mxu0
      %v5600 = vadd.f32 0.0, %v5599
      %5601 = vmatmul.bf16.gmra.mxu0 %v5489
      %v5602 = vpop.f32.mrf.mxu0
      %v5603 = vadd.f32 0.0, %v5602
      %v5604 = vpop.f32.mrf.mxu0
      %v5605 = vadd.f32 0.0, %v5604
      %5606 = vmatmul.bf16.gmra.mxu0 %v5490
      %v5607 = vpop.f32.mrf.mxu0
      %v5608 = vadd.f32 0.0, %v5607
      %v5609 = vpop.f32.mrf.mxu0
      %v5610 = vadd.f32 0.0, %v5609
      %5611 = vmatmul.bf16.gmra.mxu0 %v5491
      %v5612 = vpop.f32.mrf.mxu0
      %v5613 = vadd.f32 0.0, %v5612
      %v5614 = vpop.f32.mrf.mxu0
      %v5615 = vadd.f32 0.0, %v5614
      %5616 = vmatmul.bf16.gmra.mxu0 %v5492
      %v5617 = vpop.f32.mrf.mxu0
      %v5618 = vadd.f32 0.0, %v5617
      %v5619 = vpop.f32.mrf.mxu0
      %v5620 = vadd.f32 0.0, %v5619
      %5621 = vmatmul.bf16.gmra.mxu0 %v5493
      %v5622 = vpop.f32.mrf.mxu0
      %v5623 = vadd.f32 0.0, %v5622
      %v5624 = vpop.f32.mrf.mxu0
      %v5625 = vadd.f32 0.0, %v5624
      %5626 = vmatmul.bf16.gmra.mxu0 %v5494
      %v5627 = vpop.f32.mrf.mxu0
      %v5628 = vadd.f32 0.0, %v5627
      %v5629 = vpop.f32.mrf.mxu0
      %v5630 = vadd.f32 0.0, %v5629
      %5631 = vmatmul.bf16.gmra.mxu0 %v5495
      %v5632 = vpop.f32.mrf.mxu0
      %v5633 = vadd.f32 0.0, %v5632
      %v5634 = vpop.f32.mrf.mxu0
      %v5635 = vadd.f32 0.0, %v5634
      %5636 = vmatmul.bf16.gmra.mxu0 %v5496
      %v5637 = vpop.f32.mrf.mxu0
      %v5638 = vadd.f32 0.0, %v5637
      %v5639 = vpop.f32.mrf.mxu0
      %v5640 = vadd.f32 0.0, %v5639
      %5641 = vmatmul.bf16.gmra.mxu0 %v5497
      %v5642 = vpop.f32.mrf.mxu0
      %v5643 = vadd.f32 0.0, %v5642
      %v5644 = vpop.f32.mrf.mxu0
      %v5645 = vadd.f32 0.0, %v5644
      %5646 = vmatmul.bf16.gmra.mxu0 %v5498
      %v5647 = vpop.f32.mrf.mxu0
      %v5648 = vadd.f32 0.0, %v5647
      %v5649 = vpop.f32.mrf.mxu0
      %v5650 = vadd.f32 0.0, %v5649
      %5651 = vdwg.mxu0
      %v5652 = vadd.f32 %v5339, %v5573
      %v5653 = vadd.f32 %v5340, %v5575
      %v5654 = vadd.f32 %v5341, %v5578
      %v5655 = vadd.f32 %v5342, %v5580
      %v5656 = vadd.f32 %v5343, %v5583
      %v5657 = vadd.f32 %v5344, %v5585
      %v5658 = vadd.f32 %v5345, %v5588
      %v5659 = vadd.f32 %v5346, %v5590
      %v5660 = vadd.f32 %v5347, %v5593
      %v5661 = vadd.f32 %v5348, %v5595
      %v5662 = vadd.f32 %v5349, %v5598
      %v5663 = vadd.f32 %v5350, %v5600
      %v5664 = vadd.f32 %v5351, %v5603
      %v5665 = vadd.f32 %v5352, %v5605
      %v5666 = vadd.f32 %v5353, %v5608
      %v5667 = vadd.f32 %v5354, %v5610
      %v5668 = vadd.f32 %v5355, %v5613
      %v5669 = vadd.f32 %v5356, %v5615
      %v5670 = vadd.f32 %v5357, %v5618
      %v5671 = vadd.f32 %v5358, %v5620
      %v5672 = vadd.f32 %v5359, %v5623
      %v5673 = vadd.f32 %v5360, %v5625
      %v5674 = vadd.f32 %v5361, %v5628
      %v5675 = vadd.f32 %v5362, %v5630
      %v5676 = vadd.f32 %v5363, %v5633
      %v5677 = vadd.f32 %v5364, %v5635
      %v5678 = vadd.f32 %v5365, %v5638
      %v5679 = vadd.f32 %v5366, %v5640
      %v5680 = vadd.f32 %v5367, %v5643
      %v5681 = vadd.f32 %v5368, %v5645
      %v5682 = vadd.f32 %v5369, %v5648
      %v5683 = vadd.f32 %v5370, %v5650
      %v5684 = vpack.c.bf16 %v5652, %v5652
      %v5685 = vpack.c.bf16 %v5653, %v5653
      %v5686 = vpack.c.bf16 %v5654, %v5654
      %v5687 = vpack.c.bf16 %v5655, %v5655
      %v5688 = vpack.c.bf16 %v5656, %v5656
      %v5689 = vpack.c.bf16 %v5657, %v5657
      %v5690 = vpack.c.bf16 %v5658, %v5658
      %v5691 = vpack.c.bf16 %v5659, %v5659
      %v5692 = vpack.c.bf16 %v5660, %v5660
      %v5693 = vpack.c.bf16 %v5661, %v5661
      %v5694 = vpack.c.bf16 %v5662, %v5662
      %v5695 = vpack.c.bf16 %v5663, %v5663
      %v5696 = vpack.c.bf16 %v5664, %v5664
      %v5697 = vpack.c.bf16 %v5665, %v5665
      %v5698 = vpack.c.bf16 %v5666, %v5666
      %v5699 = vpack.c.bf16 %v5667, %v5667
      %v5700 = vpack.c.bf16 %v5668, %v5668
      %v5701 = vpack.c.bf16 %v5669, %v5669
      %v5702 = vpack.c.bf16 %v5670, %v5670
      %v5703 = vpack.c.bf16 %v5671, %v5671
      %v5704 = vpack.c.bf16 %v5672, %v5672
      %v5705 = vpack.c.bf16 %v5673, %v5673
      %v5706 = vpack.c.bf16 %v5674, %v5674
      %v5707 = vpack.c.bf16 %v5675, %v5675
      %v5708 = vpack.c.bf16 %v5676, %v5676
      %v5709 = vpack.c.bf16 %v5677, %v5677
      %v5710 = vpack.c.bf16 %v5678, %v5678
      %v5711 = vpack.c.bf16 %v5679, %v5679
      %v5712 = vpack.c.bf16 %v5680, %v5680
      %v5713 = vpack.c.bf16 %v5681, %v5681
      %v5714 = vpack.c.bf16 %v5682, %v5682
      %v5715 = vpack.c.bf16 %v5683, %v5683
      %5716 = vst [vmem:[%s302] sm:$0xf] %v5684
      %5717 = vst [vmem:[%s302 + $0x4] sm:$0xf] %v5685
      %5718 = vst [vmem:[%s302 + $0x8] sm:$0xf] %v5686
      %5719 = vst [vmem:[%s302 + $0xc] sm:$0xf] %v5687
      %5720 = vst [vmem:[%s302 + $0x10] sm:$0xf] %v5688
      %5721 = vst [vmem:[%s302 + $0x14] sm:$0xf] %v5689
      %5722 = vst [vmem:[%s302 + $0x18] sm:$0xf] %v5690
      %5723 = vst [vmem:[%s302 + $0x1c] sm:$0xf] %v5691
      %5724 = vst [vmem:[%s302 + $0x20] sm:$0xf] %v5692
      %5725 = vst [vmem:[%s302 + $0x24] sm:$0xf] %v5693
      %5726 = vst [vmem:[%s302 + $0x28] sm:$0xf] %v5694
      %5727 = vst [vmem:[%s302 + $0x2c] sm:$0xf] %v5695
      %5728 = vst [vmem:[%s302 + $0x30] sm:$0xf] %v5696
      %5729 = vst [vmem:[%s302 + $0x34] sm:$0xf] %v5697
      %5730 = vst [vmem:[%s302 + $0x38] sm:$0xf] %v5698
      %5731 = vst [vmem:[%s302 + $0x3c] sm:$0xf] %v5699
      %5732 = vst [vmem:[%s302 + $0x40] sm:$0xf] %v5700
      %5733 = vst [vmem:[%s302 + $0x44] sm:$0xf] %v5701
      %5734 = vst [vmem:[%s302 + $0x48] sm:$0xf] %v5702
      %5735 = vst [vmem:[%s302 + $0x4c] sm:$0xf] %v5703
      %5736 = vst [vmem:[%s302 + $0x50] sm:$0xf] %v5704
      %5737 = vst [vmem:[%s302 + $0x54] sm:$0xf] %v5705
      %5738 = vst [vmem:[%s302 + $0x58] sm:$0xf] %v5706
      %5739 = vst [vmem:[%s302 + $0x5c] sm:$0xf] %v5707
      %5740 = vst [vmem:[%s302 + $0x60] sm:$0xf] %v5708
      %5741 = vst [vmem:[%s302 + $0x64] sm:$0xf] %v5709
      %5742 = vst [vmem:[%s302 + $0x68] sm:$0xf] %v5710
      %5743 = vst [vmem:[%s302 + $0x6c] sm:$0xf] %v5711
      %5744 = vst [vmem:[%s302 + $0x70] sm:$0xf] %v5712
      %5745 = vst [vmem:[%s302 + $0x74] sm:$0xf] %v5713
      %5746 = vst [vmem:[%s302 + $0x78] sm:$0xf] %v5714
      %5747 = vst [vmem:[%s302 + $0x7c] sm:$0xf] %v5715
      %s5748 = smul.u32 32, %s18
      %p5749 = scmp.lt.s32.totalorder %s5748, 63
      %s5750 = scalar_select %p5749, %s5748, 63
      %s5751 = smul.addr %s5750, 4
      %s5752 = scalar_lea.vmem %s7, %s5751
      // Predicated region
      $region49: #{dappm_forward.7} parent=47 // pred_check
        %p5753 = pneg %p193
      $region50: #{dappm_forward.7} parent=47 // pred_check_branch
        %5755 = sbr.rel (%p5753) target = $region52
      $region51: #{dappm_forward.7} parent=47 // pred_region
        %s5756 = smul.u32 32, %s18
      $region52: #{dappm_forward.7} parent=47 // pred_fallthru
        _
    $region48: #{dappm_forward.7} parent=5 // pred_fallthru
      _
    %p5757 = scmp.le.s32.totalorder 2, %s13
    // Predicated region
    $region53: #{dappm_forward.7} parent=5 // pred_check
      %p5758 = pneg %p5757
    $region54: #{dappm_forward.7} parent=5 // pred_check_branch
      %5760 = sbr.rel (%p5758) target = $region56
    $region55: #{dappm_forward.7} parent=5 // pred_region
      %s5761 = ssub.s32 %s13, 2
      // Predicated region
      $region57: #{dappm_forward.7} parent=55 // pred_check
        %p5762 = pneg %p199
      $region58: #{dappm_forward.7} parent=55 // pred_check_branch
        %5764 = sbr.rel (%p5762) target = $region60
      $region59: #{dappm_forward.7} parent=55 // pred_region
        %s5765 = smul.u32 32, %s19
        %p5766 = scmp.lt.s32.totalorder %s5765, 63
        %s5767 = scalar_select %p5766, %s5765, 63
        %s5768 = smul.addr %s5767, 4
        %s5769 = scalar_lea.vmem %s7, %s5768
      $region60: #{dappm_forward.7} parent=55 // pred_fallthru
        _
    $region56: #{dappm_forward.7} parent=5 // pred_fallthru
      _
  $region6: #{dappm_forward.7} parent=0 // loop_footer
    %s17 = sadd.s32 1, %s13
  $region7: #{dappm_forward.7} parent=0 // loop_footer_branch
    %12 = sbr.rel target = $region3
  $region8: #{dappm_forward.7} parent=0 // loop_exit
    _

</llo_original>
